<compile_context>
chip_gen: v5e
topology: v5e:2x2
jax: 0.10.0
libtpu: 0.0.40
codegen_flags: <defaults>
</compile_context>

<pallas_src>
import math
import functools

import numpy as np
import jax
import jax.numpy as jnp
from jax.experimental import pallas as pl
from jax.experimental.pallas import tpu as pltpu

NEG_INF = -1e9  # finite stand-in for fill_with_neg_inf / masked_fill(-inf)


def _round_up(x, m):
    return ((x + m - 1) // m) * m


def _cost(flops, transcendentals, *arrays):
    nbytes = sum(int(np.prod(a.shape)) * 4 for a in arrays)
    return pl.CostEstimate(flops=int(flops), transcendentals=int(transcendentals),
                           bytes_accessed=int(nbytes))


def _full2d(shape):
    """BlockSpec for a small weight/bias that is fully resident every grid step."""
    return pl.BlockSpec(shape, lambda b: (0, 0))


# --------------------------- in-kernel math helpers ---------------------------

def _ln(x, g, b, eps=1e-5):
    mu = jnp.mean(x, axis=-1, keepdims=True)
    xc = x - mu
    var = jnp.mean(xc * xc, axis=-1, keepdims=True)
    return xc * jax.lax.rsqrt(var + eps) * g + b


def _dot_t(a, b):
    # a: (M, K), b: (N, K) -> (M, N); contract shared K on the MXU.
    return jax.lax.dot_general(a, b, (((1,), (1,)), ((), ())),
                               preferred_element_type=jnp.float32)


def _mha(q, k, v, bias, wo, bo, num_heads):
    """Multi-head attention core on (Tq,H)/(Tk,H) slabs.

    Scale is already folded into q.  `bias` broadcasts to (Tq, Tk).  The output
    projection is accumulated per head (ctx_h @ wo[h]) so no lane-concat of head
    contexts is needed.
    """
    tq, h_dim = q.shape
    hd = h_dim // num_heads
    out = jnp.zeros((tq, h_dim), jnp.float32)
    for h in range(num_heads):
        sl = slice(h * hd, (h + 1) * hd)
        s = _dot_t(q[:, sl], k[:, sl]) + bias
        s = s - jnp.max(s, axis=-1, keepdims=True)
        p = jnp.exp(s)
        p = p * pl.reciprocal(jnp.sum(p, axis=-1, keepdims=True), approx=True)
        ctx = jnp.dot(p, v[:, sl], preferred_element_type=jnp.float32)
        out = out + jnp.dot(ctx, wo[sl, :], preferred_element_type=jnp.float32)
    return out + bo


# ------------------------------- Pallas kernels -------------------------------

def _layernorm_kernel(x_ref, g_ref, b_ref, o_ref):
    o_ref[0] = _ln(x_ref[0].astype(jnp.float32), g_ref[...], b_ref[...]).astype(o_ref.dtype)


def _encoder_layer_kernel(num_heads,
                          x_ref, kb_ref,
                          wqkv_ref, bqkv_ref, wo_ref, bo_ref, ln1g_ref, ln1b_ref,
                          w1_ref, b1_ref, w2_ref, b2_ref, ln2g_ref, ln2b_ref,
                          o_ref):
    x = x_ref[0].astype(jnp.float32)                 # (T, H)
    h_dim = x.shape[-1]
    qkv = jnp.dot(x, wqkv_ref[...], preferred_element_type=jnp.float32) + bqkv_ref[...]
    attn = _mha(qkv[:, :h_dim], qkv[:, h_dim:2 * h_dim], qkv[:, 2 * h_dim:],
                kb_ref[0], wo_ref[...], bo_ref[...], num_heads)
    x = _ln(x + attn, ln1g_ref[...], ln1b_ref[...])
    hid = jnp.maximum(jnp.dot(x, w1_ref[...], preferred_element_type=jnp.float32)
                      + b1_ref[...], 0.0)            # fairseq default activation: relu
    y = jnp.dot(hid, w2_ref[...], preferred_element_type=jnp.float32) + b2_ref[...]
    o_ref[0] = _ln(x + y, ln2g_ref[...], ln2b_ref[...]).astype(o_ref.dtype)


def _decoder_layer_kernel(num_heads,
                          x_ref, enc_ref, causal_ref, ckb_ref,
                          swqkv_ref, sbqkv_ref, swo_ref, sbo_ref, ln1g_ref, ln1b_ref,
                          cwq_ref, cbq_ref, cwkv_ref, cbkv_ref, cwo_ref, cbo_ref,
                          ln2g_ref, ln2b_ref,
                          w1_ref, b1_ref, w2_ref, b2_ref, ln3g_ref, ln3b_ref,
                          o_ref):
    x = x_ref[0].astype(jnp.float32)                 # (T, H)
    enc = enc_ref[0].astype(jnp.float32)             # (S, H)
    h_dim = x.shape[-1]

    # --- masked (causal) self-attention ---
    qkv = jnp.dot(x, swqkv_ref[...], preferred_element_type=jnp.float32) + sbqkv_ref[...]
    attn = _mha(qkv[:, :h_dim], qkv[:, h_dim:2 * h_dim], qkv[:, 2 * h_dim:],
                causal_ref[0], swo_ref[...], sbo_ref[...], num_heads)
    x = _ln(x + attn, ln1g_ref[...], ln1b_ref[...])

    # --- cross attention over encoder output ---
    q = jnp.dot(x, cwq_ref[...], preferred_element_type=jnp.float32) + cbq_ref[...]
    kv = jnp.dot(enc, cwkv_ref[...], preferred_element_type=jnp.float32) + cbkv_ref[...]
    attn = _mha(q, kv[:, :h_dim], kv[:, h_dim:],
                ckb_ref[0], cwo_ref[...], cbo_ref[...], num_heads)
    x = _ln(x + attn, ln2g_ref[...], ln2b_ref[...])

    # --- FFN ---
    hid = jnp.maximum(jnp.dot(x, w1_ref[...], preferred_element_type=jnp.float32)
                      + b1_ref[...], 0.0)
    y = jnp.dot(hid, w2_ref[...], preferred_element_type=jnp.float32) + b2_ref[...]
    o_ref[0] = _ln(x + y, ln3g_ref[...], ln3b_ref[...]).astype(o_ref.dtype)


def _score_kernel(dec_ref, w_ref, b_ref, sent_ref, o_ref):
    # output_fc + bmm(dec, sent_reps^T) + softmax  (exact divide for row-sum==1)
    d = jnp.dot(dec_ref[0].astype(jnp.float32), w_ref[...],
                preferred_element_type=jnp.float32) + b_ref[...]
    s = _dot_t(d, sent_ref[0].astype(jnp.float32))
    s = s - jnp.max(s, axis=-1, keepdims=True)
    p = jnp.exp(s)
    o_ref[0] = (p / jnp.sum(p, axis=-1, keepdims=True)).astype(o_ref.dtype)


# ------------------------------ kernel wrappers ------------------------------

def layer_norm(x, g, b):
    B, T, H = x.shape
    return pl.pallas_call(
        _layernorm_kernel,
        out_shape=jax.ShapeDtypeStruct((B, T, H), x.dtype),
        grid=(B,),
        in_specs=[pl.BlockSpec((1, T, H), lambda i: (i, 0, 0)),
                  _full2d((1, H)), _full2d((1, H))],
        out_specs=pl.BlockSpec((1, T, H), lambda i: (i, 0, 0)),
        compiler_params=pltpu.CompilerParams(dimension_semantics=("parallel",)),
    )(x, g, b)


def encoder_layer(x, key_bias, lp, num_heads):
    """Fused post-norm TransformerEncoderLayer (one grid step per batch element)."""
    B, T, H = x.shape
    Tk = key_bias.shape[-1]
    F = lp["fc1_w"].shape[1]
    flops = 2 * B * T * (3 * H * H + 2 * Tk * H + H * H + 2 * H * F)
    trans = B * num_heads * T * Tk + 2 * B * T
    kern = functools.partial(_encoder_layer_kernel, num_heads)
    return pl.pallas_call(
        kern,
        out_shape=jax.ShapeDtypeStruct((B, T, H), x.dtype),
        grid=(B,),
        in_specs=[
            pl.BlockSpec((1, T, H), lambda b: (b, 0, 0)),
            pl.BlockSpec((1, 1, Tk), lambda b: (b, 0, 0)),
            _full2d((H, 3 * H)), _full2d((1, 3 * H)),
            _full2d((H, H)), _full2d((1, H)),
            _full2d((1, H)), _full2d((1, H)),
            _full2d((H, F)), _full2d((1, F)),
            _full2d((F, H)), _full2d((1, H)),
            _full2d((1, H)), _full2d((1, H)),
        ],
        out_specs=pl.BlockSpec((1, T, H), lambda b: (b, 0, 0)),
        compiler_params=pltpu.CompilerParams(dimension_semantics=("parallel",)),
        cost_estimate=_cost(flops, trans, x, x, key_bias,
                            lp["wqkv"], lp["wo"], lp["fc1_w"], lp["fc2_w"]),
    )(x, key_bias,
      lp["wqkv"], lp["bqkv"], lp["wo"], lp["bo"],
      lp["ln1_g"], lp["ln1_b"],
      lp["fc1_w"], lp["fc1_b"], lp["fc2_w"], lp["fc2_b"],
      lp["ln2_g"], lp["ln2_b"])


def decoder_layer(x, enc, causal, cross_kbias, lp, num_heads):
    """Fused post-norm TransformerDecoderLayer (self-attn + cross-attn + FFN)."""
    B, T, H = x.shape
    S = enc.shape[1]
    F = lp["fc1_w"].shape[1]
    flops = 2 * B * (3 * T * H * H + 2 * T * T * H + T * H * H            # self-attn
                     + T * H * H + 2 * S * H * H + 2 * T * S * H + T * H * H  # cross
                     + 2 * T * H * F)                                     # ffn
    trans = B * num_heads * (T * T + T * S) + 3 * B * T
    kern = functools.partial(_decoder_layer_kernel, num_heads)
    return pl.pallas_call(
        kern,
        out_shape=jax.ShapeDtypeStruct((B, T, H), x.dtype),
        grid=(B,),
        in_specs=[
            pl.BlockSpec((1, T, H), lambda b: (b, 0, 0)),
            pl.BlockSpec((1, S, H), lambda b: (b, 0, 0)),
            pl.BlockSpec((1, T, T), lambda b: (0, 0, 0)),
            pl.BlockSpec((1, 1, S), lambda b: (b, 0, 0)),
            _full2d((H, 3 * H)), _full2d((1, 3 * H)),
            _full2d((H, H)), _full2d((1, H)),
            _full2d((1, H)), _full2d((1, H)),
            _full2d((H, H)), _full2d((1, H)),
            _full2d((H, 2 * H)), _full2d((1, 2 * H)),
            _full2d((H, H)), _full2d((1, H)),
            _full2d((1, H)), _full2d((1, H)),
            _full2d((H, F)), _full2d((1, F)),
            _full2d((F, H)), _full2d((1, H)),
            _full2d((1, H)), _full2d((1, H)),
        ],
        out_specs=pl.BlockSpec((1, T, H), lambda b: (b, 0, 0)),
        compiler_params=pltpu.CompilerParams(dimension_semantics=("parallel",)),
        cost_estimate=_cost(flops, trans, x, x, enc, lp["s_wqkv"], lp["c_wkv"],
                            lp["fc1_w"], lp["fc2_w"]),
    )(x, enc, causal, cross_kbias,
      lp["s_wqkv"], lp["s_bqkv"], lp["s_wo"], lp["s_bo"], lp["ln1_g"], lp["ln1_b"],
      lp["c_wq"], lp["c_bq"], lp["c_wkv"], lp["c_bkv"], lp["c_wo"], lp["c_bo"],
      lp["ln2_g"], lp["ln2_b"],
      lp["fc1_w"], lp["fc1_b"], lp["fc2_w"], lp["fc2_b"], lp["ln3_g"], lp["ln3_b"])


def output_scores(dec, sent_reps, w, b):
    """softmax(output_fc(dec) @ sent_reps^T, axis=-1)."""
    B, T, H = dec.shape
    N = sent_reps.shape[1]
    flops = 2 * B * (T * H * H + T * N * H)
    return pl.pallas_call(
        _score_kernel,
        out_shape=jax.ShapeDtypeStruct((B, T, N), dec.dtype),
        grid=(B,),
        in_specs=[pl.BlockSpec((1, T, H), lambda i: (i, 0, 0)),
                  _full2d((H, H)), _full2d((1, H)),
                  pl.BlockSpec((1, N, H), lambda i: (i, 0, 0))],
        out_specs=pl.BlockSpec((1, T, N), lambda i: (i, 0, 0)),
        compiler_params=pltpu.CompilerParams(dimension_semantics=("parallel",)),
        cost_estimate=_cost(flops, B * T * N, dec, sent_reps, w),
    )(dec, w, b, sent_reps)


# --------------------------------- JAX glue ---------------------------------

def key_padding_bias(mask):
    """mask: (B, Tk) with 1=valid / 0=pad  ->  additive bias (B, 1, Tk)."""
    return ((1.0 - mask.astype(jnp.float32)) * NEG_INF)[:, None, :]


def causal_bias(T):
    return jnp.triu(jnp.full((T, T), NEG_INF, jnp.float32), k=1)[None]


def positional_encoding_table(max_len, dim):
    # PreSumm/OpenNMT PositionalEncoding used by SentTransformerEncoder.pos_emb
    position = np.arange(max_len, dtype=np.float32)[:, None]
    div_term = np.exp(np.arange(0, dim, 2, dtype=np.float32) * -(math.log(10000.0) / dim))
    pe = np.zeros((max_len, dim), np.float32)
    pe[:, 0::2] = np.sin(position * div_term)
    pe[:, 1::2] = np.cos(position * div_term)
    return jnp.asarray(pe)


def fairseq_sinusoidal_table(num_embeddings, dim, padding_idx=0):
    # fairseq SinusoidalPositionalEmbedding.get_embedding
    half = dim // 2
    emb = math.log(10000.0) / (half - 1)
    emb = np.exp(np.arange(half, dtype=np.float32) * -emb)
    emb = np.arange(num_embeddings, dtype=np.float32)[:, None] * emb[None, :]
    table = np.concatenate([np.sin(emb), np.cos(emb)], axis=1).astype(np.float32)
    table[padding_idx, :] = 0.0
    return jnp.asarray(table)


# ------------------------------ parameter init ------------------------------

def init_linear_params(key, din, dout):
    w = jax.random.normal(key, (din, dout), jnp.float32) * 0.02
    b = jnp.zeros((dout,), jnp.float32)
    return w, b


def init_attn_params(key, dim):
    ks = jax.random.split(key, 4)
    p = {}
    for name, k in zip(("q", "k", "v", "o"), ks):
        w, b = init_linear_params(k, dim, dim)
        p["w" + name], p["b" + name] = w, b
    return p


def init_encoder_layer_params(key, dim, ffn_dim):
    k1, k2, k3 = jax.random.split(key, 3)
    fc1_w, fc1_b = init_linear_params(k2, dim, ffn_dim)
    fc2_w, fc2_b = init_linear_params(k3, ffn_dim, dim)
    return {"attn": init_attn_params(k1, dim),
            "ln1_g": jnp.ones((dim,)), "ln1_b": jnp.zeros((dim,)),
            "fc1_w": fc1_w, "fc1_b": fc1_b, "fc2_w": fc2_w, "fc2_b": fc2_b,
            "ln2_g": jnp.ones((dim,)), "ln2_b": jnp.zeros((dim,))}


def init_decoder_layer_params(key, dim, ffn_dim):
    k1, k2, k3, k4 = jax.random.split(key, 4)
    fc1_w, fc1_b = init_linear_params(k3, dim, ffn_dim)
    fc2_w, fc2_b = init_linear_params(k4, ffn_dim, dim)
    return {"self_attn": init_attn_params(k1, dim),
            "ln1_g": jnp.ones((dim,)), "ln1_b": jnp.zeros((dim,)),
            "cross_attn": init_attn_params(k2, dim),
            "ln2_g": jnp.ones((dim,)), "ln2_b": jnp.zeros((dim,)),
            "fc1_w": fc1_w, "fc1_b": fc1_b, "fc2_w": fc2_w, "fc2_b": fc2_b,
            "ln3_g": jnp.ones((dim,)), "ln3_b": jnp.zeros((dim,))}


def init_params(key, *, vocab, n_segments, max_pos, dim, ffn_dim,
                bert_layers, enc_layers, dec_layers):
    keys = jax.random.split(key, 7)
    params = {
        "bert": {
            "tok_emb": jax.random.normal(keys[0], (vocab, dim), jnp.float32) * 0.02,
            "pos_emb": jax.random.normal(keys[1], (max_pos, dim), jnp.float32) * 0.02,
            "seg_emb": jax.random.normal(keys[2], (n_segments, dim), jnp.float32) * 0.02,
            "emb_ln_g": jnp.ones((dim,)), "emb_ln_b": jnp.zeros((dim,)),
            "layers": [init_encoder_layer_params(k, dim, ffn_dim)
                       for k in jax.random.split(keys[3], bert_layers)],
        },
        "encoder": {"layers": [init_encoder_layer_params(k, dim, ffn_dim)
                               for k in jax.random.split(keys[4], enc_layers)]},
        "decoder": {"layers": [init_decoder_layer_params(k, dim, ffn_dim)
                               for k in jax.random.split(keys[5], dec_layers)]},
    }
    ow, ob = init_linear_params(keys[6], dim, dim)
    params["output_fc"] = {"w": ow, "b": ob}
    return params


# ------------- parameter preparation (QKV fusion, scale folding) -------------

def _prep_self_attn(a, num_heads):
    dim = a["wq"].shape[0]
    scale = (dim // num_heads) ** -0.5
    return {"wqkv": jnp.concatenate([a["wq"] * scale, a["wk"], a["wv"]], axis=1),
            "bqkv": jnp.concatenate([a["bq"] * scale, a["bk"], a["bv"]])[None, :],
            "wo": a["wo"], "bo": a["bo"][None, :]}


def _prep_cross_attn(a, num_heads):
    dim = a["wq"].shape[0]
    scale = (dim // num_heads) ** -0.5
    return {"wq": a["wq"] * scale, "bq": (a["bq"] * scale)[None, :],
            "wkv": jnp.concatenate([a["wk"], a["wv"]], axis=1),
            "bkv": jnp.concatenate([a["bk"], a["bv"]])[None, :],
            "wo": a["wo"], "bo": a["bo"][None, :]}


def _prep_enc_layer(lp, num_heads):
    a = _prep_self_attn(lp["attn"], num_heads)
    return {"wqkv": a["wqkv"], "bqkv": a["bqkv"], "wo": a["wo"], "bo": a["bo"],
            "ln1_g": lp["ln1_g"][None, :], "ln1_b": lp["ln1_b"][None, :],
            "fc1_w": lp["fc1_w"], "fc1_b": lp["fc1_b"][None, :],
            "fc2_w": lp["fc2_w"], "fc2_b": lp["fc2_b"][None, :],
            "ln2_g": lp["ln2_g"][None, :], "ln2_b": lp["ln2_b"][None, :]}


def _prep_dec_layer(lp, num_heads):
    sa = _prep_self_attn(lp["self_attn"], num_heads)
    ca = _prep_cross_attn(lp["cross_attn"], num_heads)
    return {"s_wqkv": sa["wqkv"], "s_bqkv": sa["bqkv"], "s_wo": sa["wo"], "s_bo": sa["bo"],
            "ln1_g": lp["ln1_g"][None, :], "ln1_b": lp["ln1_b"][None, :],
            "c_wq": ca["wq"], "c_bq": ca["bq"], "c_wkv": ca["wkv"], "c_bkv": ca["bkv"],
            "c_wo": ca["wo"], "c_bo": ca["bo"],
            "ln2_g": lp["ln2_g"][None, :], "ln2_b": lp["ln2_b"][None, :],
            "fc1_w": lp["fc1_w"], "fc1_b": lp["fc1_b"][None, :],
            "fc2_w": lp["fc2_w"], "fc2_b": lp["fc2_b"][None, :],
            "ln3_g": lp["ln3_g"][None, :], "ln3_b": lp["ln3_b"][None, :]}


def prepare_params(p, num_heads):
    """One-time re-layout: fuse QKV, fold attention scale, reshape biases to (1, d)."""
    return {
        "bert": {
            "tok_emb": p["bert"]["tok_emb"],
            "pos_emb": p["bert"]["pos_emb"],
            "seg_emb": p["bert"]["seg_emb"],
            "emb_ln_g": p["bert"]["emb_ln_g"][None, :],
            "emb_ln_b": p["bert"]["emb_ln_b"][None, :],
            "layers": [_prep_enc_layer(lp, num_heads) for lp in p["bert"]["layers"]],
        },
        "encoder": {"layers": [_prep_enc_layer(lp, num_heads)
                               for lp in p["encoder"]["layers"]]},
        "decoder": {"layers": [_prep_dec_layer(lp, num_heads)
                               for lp in p["decoder"]["layers"]]},
        "output_fc": {"w": p["output_fc"]["w"], "b": p["output_fc"]["b"][None, :]},
    }


# ------------------------------- model forward -------------------------------

def bert_forward(p, src, segs, src_kbias, num_heads):
    # TODO(synk): synthetic stand-in for the pretrained HF BERT backbone.
    B, S = src.shape
    x = p["tok_emb"][src] + p["pos_emb"][:S][None, :, :] + p["seg_emb"][segs]
    x = layer_norm(x, p["emb_ln_g"], p["emb_ln_b"])
    for lp in p["layers"]:
        x = encoder_layer(x, src_kbias, lp, num_heads)
    return x                                            # (B, Sp, H)


def sent_encoder_forward(p, sents_vec, mask_cls, cls_kbias, pe_table, num_heads):
    # SentTransformerEncoder (sent_pos_emb_enc=True, normalize_before=False)
    B, N, H = sents_vec.shape
    x = sents_vec * mask_cls[:, :, None]
    x = x + pe_table[:N][None, :, :]
    for lp in p["layers"]:
        x = encoder_layer(x, cls_kbias, lp, num_heads)
    return x                                            # (B, Np, H)


def sent_decoder_forward(p, prev_rep, enc_out, causal, cross_kbias, num_heads):
    # SentTransformerDecoder (sinusoidal positions added by caller, post-norm)
    x = prev_rep
    for lp in p["layers"]:
        x = decoder_layer(x, enc_out, causal, cross_kbias, lp, num_heads)
    return x                                            # (B, Tp, H)


def sentence_transformer_forward(params, src, segs, clss, mask_src, mask_cls, labels,
                                 *, num_heads, pe_table, dec_pos_table):
    B, S = src.shape
    N = clss.shape[1]

    # ---- pad sequence dims ONCE at entry (no per-kernel pad/slice churn) ----
    Sp = _round_up(S, 8)
    if Sp != S:
        src = jnp.pad(src, ((0, 0), (0, Sp - S)))
        segs = jnp.pad(segs, ((0, 0), (0, Sp - S)))
        mask_src = jnp.pad(mask_src, ((0, 0), (0, Sp - S)))
    src_kbias = key_padding_bias(mask_src)               # (B, 1, Sp)

    top_vec = bert_forward(params["bert"], src, segs, src_kbias, num_heads)

    sents_vec = top_vec[jnp.arange(B)[:, None], clss]    # (B, N, H)
    sents_vec = sents_vec * mask_cls[:, :, None]

    Np = _round_up(N, 8)
    if Np != N:
        sents_vec_p = jnp.pad(sents_vec, ((0, 0), (0, Np - N), (0, 0)))
        mask_cls_p = jnp.pad(mask_cls, ((0, 0), (0, Np - N)))
    else:
        sents_vec_p, mask_cls_p = sents_vec, mask_cls
    cls_kbias = key_padding_bias(mask_cls_p)             # (B, 1, Np)

    enc_out_p = sent_encoder_forward(params["encoder"], sents_vec_p, mask_cls_p,
                                     cls_kbias, pe_table, num_heads)
    enc_out = enc_out_p[:, :N]                           # valid sentences only

    # doc_symbol == 0 path
    bos = jnp.mean(enc_out, axis=1)                      # mean over sentence axis
    sent_reps = enc_out * mask_cls[:, :, None]
    # bos_fc is None in this config

    # sum_or_jigsaw == 0 path
    tgt_len = 3
    _, labels_id = jax.lax.top_k(labels, tgt_len)
    labels_id = jnp.sort(labels_id, axis=-1)
    input_embeddings = sent_reps
    labels_rep = input_embeddings[jnp.arange(B)[:, None], labels_id]   # batched_index_select
    prev_output_rep = jnp.concatenate(
        [bos[:, None, :], labels_rep[:, :tgt_len - 1]], axis=1)        # (B, 3, H)

    Tp = _round_up(tgt_len, 8)
    prev_p = jnp.pad(prev_output_rep, ((0, 0), (0, Tp - tgt_len), (0, 0)))
    prev_p = prev_p + dec_pos_table[1:Tp + 1][None, :, :]  # prev tokens all non-pad
    causal = causal_bias(Tp)                               # buffered_future_mask

    dec_rep = sent_decoder_forward(params["decoder"], prev_p, enc_out_p,
                                   causal, cls_kbias, num_heads)

    # qr == 'none' path: scores = softmax(output_fc(dec_rep) @ input_embeddings^T)
    scores_p = output_scores(dec_rep, input_embeddings,
                             params["output_fc"]["w"], params["output_fc"]["b"])
    scores = scores_p[:, :tgt_len]
    return scores, mask_cls


# ----------------------------------- main -----------------------------------

if __name__ == "__main__":
    B, S, N, H = 2, 16, 8, 32          # batch, src tokens, sentences, hidden
    num_heads, ffn_dim = 4, 64
    vocab, n_segments, max_pos = 64, 2, 64

    key = jax.random.PRNGKey(0)
    k_params, k_src, k_labels = jax.random.split(key, 3)

    raw_params = init_params(k_params, vocab=vocab, n_segments=n_segments,
                             max_pos=max_pos, dim=H, ffn_dim=ffn_dim,
                             bert_layers=2, enc_layers=2, dec_layers=2)
    params = prepare_params(raw_params, num_heads)   # fused QKV / folded scale, once

    src = jax.random.randint(k_src, (B, S), 1, vocab, dtype=jnp.int32)
    segs = jnp.concatenate([jnp.zeros((B, S // 2), jnp.int32),
                            jnp.ones((B, S // 2), jnp.int32)], axis=1)
    mask_src = jnp.ones((B, S), jnp.float32).at[1, -2:].set(0.0)
    clss = jnp.broadcast_to(jnp.arange(0, S, 2, dtype=jnp.int32), (B, N))
    mask_cls = jnp.ones((B, N), jnp.float32).at[1, -2:].set(0.0)
    labels = jax.random.uniform(k_labels, (B, N), jnp.float32)

    pe_table = positional_encoding_table(max_pos, H)
    dec_pos_table = fairseq_sinusoidal_table(max_pos, H, padding_idx=0)

    fwd = jax.jit(functools.partial(sentence_transformer_forward,
                                    num_heads=num_heads,
                                    pe_table=pe_table,
                                    dec_pos_table=dec_pos_table))

    scores, out_mask = fwd(params, src, segs, clss, mask_src, mask_cls, labels)
    jax.block_until_ready((scores, out_mask))

    assert scores.shape == (B, 3, N), scores.shape
    assert out_mask.shape == (B, N), out_mask.shape
    assert bool(jnp.all(jnp.isfinite(scores)))
    # softmax rows sum to 1
    assert bool(jnp.allclose(jnp.sum(scores, axis=-1), 1.0, atol=1e-5))
    print("KERNEL_OK")
</pallas_src>

<mosaic_0001>
module attributes {stable_mosaic.version = 11 : i64} {
  func.func @_encoder_layer_kernel(%arg0: i32, %arg1: memref<1x16x32xf32, #tpu.memory_space<vmem>>, %arg2: memref<1x1x16xf32, #tpu.memory_space<vmem>>, %arg3: memref<32x96xf32, #tpu.memory_space<vmem>>, %arg4: memref<1x96xf32, #tpu.memory_space<vmem>>, %arg5: memref<32x32xf32, #tpu.memory_space<vmem>>, %arg6: memref<1x32xf32, #tpu.memory_space<vmem>>, %arg7: memref<1x32xf32, #tpu.memory_space<vmem>>, %arg8: memref<1x32xf32, #tpu.memory_space<vmem>>, %arg9: memref<32x64xf32, #tpu.memory_space<vmem>>, %arg10: memref<1x64xf32, #tpu.memory_space<vmem>>, %arg11: memref<64x32xf32, #tpu.memory_space<vmem>>, %arg12: memref<1x32xf32, #tpu.memory_space<vmem>>, %arg13: memref<1x32xf32, #tpu.memory_space<vmem>>, %arg14: memref<1x32xf32, #tpu.memory_space<vmem>>, %arg15: memref<1x16x32xf32, #tpu.memory_space<vmem>>) attributes {dimension_semantics = [#tpu.dimension_semantics<parallel>], iteration_bounds = array<i64: 2>, scalar_prefetch = 0 : i64, scratch_operands = 0 : i64, tpu.core_type = #tpu.core_type<tc>, window_params = [{transform_indices = @transform_0, window_bounds = array<i64: 1, 16, 32>}, {transform_indices = @transform_1, window_bounds = array<i64: 1, 1, 16>}, {pipeline_mode = #tpu.pipeline_mode<synchronous>, transform_indices = @transform_2, window_bounds = array<i64: 32, 96>}, {pipeline_mode = #tpu.pipeline_mode<synchronous>, transform_indices = @transform_3, window_bounds = array<i64: 1, 96>}, {pipeline_mode = #tpu.pipeline_mode<synchronous>, transform_indices = @transform_4, window_bounds = array<i64: 32, 32>}, {pipeline_mode = #tpu.pipeline_mode<synchronous>, transform_indices = @transform_5, window_bounds = array<i64: 1, 32>}, {pipeline_mode = #tpu.pipeline_mode<synchronous>, transform_indices = @transform_6, window_bounds = array<i64: 1, 32>}, {pipeline_mode = #tpu.pipeline_mode<synchronous>, transform_indices = @transform_7, window_bounds = array<i64: 1, 32>}, {pipeline_mode = #tpu.pipeline_mode<synchronous>, transform_indices = @transform_8, window_bounds = array<i64: 32, 64>}, {pipeline_mode = #tpu.pipeline_mode<synchronous>, transform_indices = @transform_9, window_bounds = array<i64: 1, 64>}, {pipeline_mode = #tpu.pipeline_mode<synchronous>, transform_indices = @transform_10, window_bounds = array<i64: 64, 32>}, {pipeline_mode = #tpu.pipeline_mode<synchronous>, transform_indices = @transform_11, window_bounds = array<i64: 1, 32>}, {pipeline_mode = #tpu.pipeline_mode<synchronous>, transform_indices = @transform_12, window_bounds = array<i64: 1, 32>}, {pipeline_mode = #tpu.pipeline_mode<synchronous>, transform_indices = @transform_13, window_bounds = array<i64: 1, 32>}, {transform_indices = @transform_14, window_bounds = array<i64: 1, 16, 32>}]} {
    %c0 = arith.constant 0 : index
    %c0_0 = arith.constant 0 : index
    %c0_1 = arith.constant 0 : index
    %0 = vector.load %arg1[%c0, %c0_0, %c0_1] : memref<1x16x32xf32, #tpu.memory_space<vmem>>, vector<1x16x32xf32>
    %1 = vector.shape_cast %0 : vector<1x16x32xf32> to vector<16x32xf32>
    %c0_2 = arith.constant 0 : index
    %c0_3 = arith.constant 0 : index
    %2 = vector.load %arg3[%c0_2, %c0_3] : memref<32x96xf32, #tpu.memory_space<vmem>>, vector<32x96xf32>
    %cst = arith.constant dense<0.000000e+00> : vector<16x96xf32>
    %3 = tpu.matmul %1, %2, %cst {dimension_numbers = #tpu.dot_dimension_numbers<[1], [0], [0], [1], [0, 0, 1, 1], [], []>} : vector<16x32xf32>, vector<32x96xf32>, vector<16x96xf32> -> vector<16x96xf32>
    %c0_4 = arith.constant 0 : index
    %c0_5 = arith.constant 0 : index
    %4 = vector.load %arg4[%c0_4, %c0_5] : memref<1x96xf32, #tpu.memory_space<vmem>>, vector<1x96xf32>
    %5 = vector.broadcast %4 : vector<1x96xf32> to vector<16x96xf32>
    %6 = arith.addf %3, %5 : vector<16x96xf32>
    %7 = vector.extract_strided_slice %6 {offsets = [0, 0], sizes = [16, 32], strides = [1, 1]} : vector<16x96xf32> to vector<16x32xf32>
    %8 = vector.extract_strided_slice %6 {offsets = [0, 32], sizes = [16, 32], strides = [1, 1]} : vector<16x96xf32> to vector<16x32xf32>
    %9 = vector.extract_strided_slice %6 {offsets = [0, 64], sizes = [16, 32], strides = [1, 1]} : vector<16x96xf32> to vector<16x32xf32>
    %c0_6 = arith.constant 0 : index
    %c0_7 = arith.constant 0 : index
    %c0_8 = arith.constant 0 : index
    %10 = vector.load %arg2[%c0_6, %c0_7, %c0_8] : memref<1x1x16xf32, #tpu.memory_space<vmem>>, vector<1x1x16xf32>
    %11 = vector.shape_cast %10 : vector<1x1x16xf32> to vector<1x16xf32>
    %c0_9 = arith.constant 0 : index
    %c0_10 = arith.constant 0 : index
    %12 = vector.load %arg5[%c0_9, %c0_10] : memref<32x32xf32, #tpu.memory_space<vmem>>, vector<32x32xf32>
    %c0_11 = arith.constant 0 : index
    %c0_12 = arith.constant 0 : index
    %13 = vector.load %arg6[%c0_11, %c0_12] : memref<1x32xf32, #tpu.memory_space<vmem>>, vector<1x32xf32>
    %cst_13 = arith.constant 0.000000e+00 : f32
    %14 = vector.broadcast %cst_13 : f32 to vector<16x32xf32>
    %15 = vector.extract_strided_slice %7 {offsets = [0, 0], sizes = [16, 8], strides = [1, 1]} : vector<16x32xf32> to vector<16x8xf32>
    %16 = vector.extract_strided_slice %8 {offsets = [0, 0], sizes = [16, 8], strides = [1, 1]} : vector<16x32xf32> to vector<16x8xf32>
    %cst_14 = arith.constant dense<0.000000e+00> : vector<16x16xf32>
    %17 = tpu.matmul %15, %16, %cst_14 {dimension_numbers = #tpu.dot_dimension_numbers<[1], [1], [0], [0], [0, 0, 1, 0], [], []>} : vector<16x8xf32>, vector<16x8xf32>, vector<16x16xf32> -> vector<16x16xf32>
    %18 = vector.broadcast %11 : vector<1x16xf32> to vector<16x16xf32>
    %19 = arith.addf %17, %18 : vector<16x16xf32>
    %cst_15 = arith.constant dense<0xFF800000> : vector<16xf32>
    %20 = vector.multi_reduction <maximumf>, %19, %cst_15 [1] : vector<16x16xf32> to vector<16xf32>
    %21 = vector.shape_cast %20 : vector<16xf32> to vector<16x1xf32>
    %22 = vector.broadcast %21 : vector<16x1xf32> to vector<16x16xf32>
    %23 = arith.subf %19, %22 : vector<16x16xf32>
    %24 = math.exp %23 : vector<16x16xf32>
    %cst_16 = arith.constant dense<0.000000e+00> : vector<16xf32>
    %25 = vector.multi_reduction <add>, %24, %cst_16 [1] : vector<16x16xf32> to vector<16xf32>
    %26 = vector.shape_cast %25 : vector<16xf32> to vector<16x1xf32>
    %27 = tpu.reciprocal %26 {approx = true} : vector<16x1xf32> -> vector<16x1xf32>
    %28 = vector.broadcast %27 : vector<16x1xf32> to vector<16x16xf32>
    %29 = arith.mulf %24, %28 : vector<16x16xf32>
    %30 = vector.extract_strided_slice %9 {offsets = [0, 0], sizes = [16, 8], strides = [1, 1]} : vector<16x32xf32> to vector<16x8xf32>
    %cst_17 = arith.constant dense<0.000000e+00> : vector<16x8xf32>
    %31 = tpu.matmul %29, %30, %cst_17 {dimension_numbers = #tpu.dot_dimension_numbers<[1], [0], [0], [1], [0, 0, 1, 1], [], []>} : vector<16x16xf32>, vector<16x8xf32>, vector<16x8xf32> -> vector<16x8xf32>
    %32 = vector.extract_strided_slice %12 {offsets = [0, 0], sizes = [8, 32], strides = [1, 1]} : vector<32x32xf32> to vector<8x32xf32>
    %cst_18 = arith.constant dense<0.000000e+00> : vector<16x32xf32>
    %33 = tpu.matmul %31, %32, %cst_18 {dimension_numbers = #tpu.dot_dimension_numbers<[1], [0], [0], [1], [0, 0, 1, 1], [], []>} : vector<16x8xf32>, vector<8x32xf32>, vector<16x32xf32> -> vector<16x32xf32>
    %34 = arith.addf %14, %33 : vector<16x32xf32>
    %35 = vector.extract_strided_slice %7 {offsets = [0, 8], sizes = [16, 8], strides = [1, 1]} : vector<16x32xf32> to vector<16x8xf32>
    %36 = vector.extract_strided_slice %8 {offsets = [0, 8], sizes = [16, 8], strides = [1, 1]} : vector<16x32xf32> to vector<16x8xf32>
    %cst_19 = arith.constant dense<0.000000e+00> : vector<16x16xf32>
    %37 = tpu.matmul %35, %36, %cst_19 {dimension_numbers = #tpu.dot_dimension_numbers<[1], [1], [0], [0], [0, 0, 1, 0], [], []>} : vector<16x8xf32>, vector<16x8xf32>, vector<16x16xf32> -> vector<16x16xf32>
    %38 = vector.broadcast %11 : vector<1x16xf32> to vector<16x16xf32>
    %39 = arith.addf %37, %38 : vector<16x16xf32>
    %cst_20 = arith.constant dense<0xFF800000> : vector<16xf32>
    %40 = vector.multi_reduction <maximumf>, %39, %cst_20 [1] : vector<16x16xf32> to vector<16xf32>
    %41 = vector.shape_cast %40 : vector<16xf32> to vector<16x1xf32>
    %42 = vector.broadcast %41 : vector<16x1xf32> to vector<16x16xf32>
    %43 = arith.subf %39, %42 : vector<16x16xf32>
    %44 = math.exp %43 : vector<16x16xf32>
    %cst_21 = arith.constant dense<0.000000e+00> : vector<16xf32>
    %45 = vector.multi_reduction <add>, %44, %cst_21 [1] : vector<16x16xf32> to vector<16xf32>
    %46 = vector.shape_cast %45 : vector<16xf32> to vector<16x1xf32>
    %47 = tpu.reciprocal %46 {approx = true} : vector<16x1xf32> -> vector<16x1xf32>
    %48 = vector.broadcast %47 : vector<16x1xf32> to vector<16x16xf32>
    %49 = arith.mulf %44, %48 : vector<16x16xf32>
    %50 = vector.extract_strided_slice %9 {offsets = [0, 8], sizes = [16, 8], strides = [1, 1]} : vector<16x32xf32> to vector<16x8xf32>
    %cst_22 = arith.constant dense<0.000000e+00> : vector<16x8xf32>
    %51 = tpu.matmul %49, %50, %cst_22 {dimension_numbers = #tpu.dot_dimension_numbers<[1], [0], [0], [1], [0, 0, 1, 1], [], []>} : vector<16x16xf32>, vector<16x8xf32>, vector<16x8xf32> -> vector<16x8xf32>
    %52 = vector.extract_strided_slice %12 {offsets = [8, 0], sizes = [8, 32], strides = [1, 1]} : vector<32x32xf32> to vector<8x32xf32>
    %cst_23 = arith.constant dense<0.000000e+00> : vector<16x32xf32>
    %53 = tpu.matmul %51, %52, %cst_23 {dimension_numbers = #tpu.dot_dimension_numbers<[1], [0], [0], [1], [0, 0, 1, 1], [], []>} : vector<16x8xf32>, vector<8x32xf32>, vector<16x32xf32> -> vector<16x32xf32>
    %54 = arith.addf %34, %53 : vector<16x32xf32>
    %55 = vector.extract_strided_slice %7 {offsets = [0, 16], sizes = [16, 8], strides = [1, 1]} : vector<16x32xf32> to vector<16x8xf32>
    %56 = vector.extract_strided_slice %8 {offsets = [0, 16], sizes = [16, 8], strides = [1, 1]} : vector<16x32xf32> to vector<16x8xf32>
    %cst_24 = arith.constant dense<0.000000e+00> : vector<16x16xf32>
    %57 = tpu.matmul %55, %56, %cst_24 {dimension_numbers = #tpu.dot_dimension_numbers<[1], [1], [0], [0], [0, 0, 1, 0], [], []>} : vector<16x8xf32>, vector<16x8xf32>, vector<16x16xf32> -> vector<16x16xf32>
    %58 = vector.broadcast %11 : vector<1x16xf32> to vector<16x16xf32>
    %59 = arith.addf %57, %58 : vector<16x16xf32>
    %cst_25 = arith.constant dense<0xFF800000> : vector<16xf32>
    %60 = vector.multi_reduction <maximumf>, %59, %cst_25 [1] : vector<16x16xf32> to vector<16xf32>
    %61 = vector.shape_cast %60 : vector<16xf32> to vector<16x1xf32>
    %62 = vector.broadcast %61 : vector<16x1xf32> to vector<16x16xf32>
    %63 = arith.subf %59, %62 : vector<16x16xf32>
    %64 = math.exp %63 : vector<16x16xf32>
    %cst_26 = arith.constant dense<0.000000e+00> : vector<16xf32>
    %65 = vector.multi_reduction <add>, %64, %cst_26 [1] : vector<16x16xf32> to vector<16xf32>
    %66 = vector.shape_cast %65 : vector<16xf32> to vector<16x1xf32>
    %67 = tpu.reciprocal %66 {approx = true} : vector<16x1xf32> -> vector<16x1xf32>
    %68 = vector.broadcast %67 : vector<16x1xf32> to vector<16x16xf32>
    %69 = arith.mulf %64, %68 : vector<16x16xf32>
    %70 = vector.extract_strided_slice %9 {offsets = [0, 16], sizes = [16, 8], strides = [1, 1]} : vector<16x32xf32> to vector<16x8xf32>
    %cst_27 = arith.constant dense<0.000000e+00> : vector<16x8xf32>
    %71 = tpu.matmul %69, %70, %cst_27 {dimension_numbers = #tpu.dot_dimension_numbers<[1], [0], [0], [1], [0, 0, 1, 1], [], []>} : vector<16x16xf32>, vector<16x8xf32>, vector<16x8xf32> -> vector<16x8xf32>
    %72 = vector.extract_strided_slice %12 {offsets = [16, 0], sizes = [8, 32], strides = [1, 1]} : vector<32x32xf32> to vector<8x32xf32>
    %cst_28 = arith.constant dense<0.000000e+00> : vector<16x32xf32>
    %73 = tpu.matmul %71, %72, %cst_28 {dimension_numbers = #tpu.dot_dimension_numbers<[1], [0], [0], [1], [0, 0, 1, 1], [], []>} : vector<16x8xf32>, vector<8x32xf32>, vector<16x32xf32> -> vector<16x32xf32>
    %74 = arith.addf %54, %73 : vector<16x32xf32>
    %75 = vector.extract_strided_slice %7 {offsets = [0, 24], sizes = [16, 8], strides = [1, 1]} : vector<16x32xf32> to vector<16x8xf32>
    %76 = vector.extract_strided_slice %8 {offsets = [0, 24], sizes = [16, 8], strides = [1, 1]} : vector<16x32xf32> to vector<16x8xf32>
    %cst_29 = arith.constant dense<0.000000e+00> : vector<16x16xf32>
    %77 = tpu.matmul %75, %76, %cst_29 {dimension_numbers = #tpu.dot_dimension_numbers<[1], [1], [0], [0], [0, 0, 1, 0], [], []>} : vector<16x8xf32>, vector<16x8xf32>, vector<16x16xf32> -> vector<16x16xf32>
    %78 = vector.broadcast %11 : vector<1x16xf32> to vector<16x16xf32>
    %79 = arith.addf %77, %78 : vector<16x16xf32>
    %cst_30 = arith.constant dense<0xFF800000> : vector<16xf32>
    %80 = vector.multi_reduction <maximumf>, %79, %cst_30 [1] : vector<16x16xf32> to vector<16xf32>
    %81 = vector.shape_cast %80 : vector<16xf32> to vector<16x1xf32>
    %82 = vector.broadcast %81 : vector<16x1xf32> to vector<16x16xf32>
    %83 = arith.subf %79, %82 : vector<16x16xf32>
    %84 = math.exp %83 : vector<16x16xf32>
    %cst_31 = arith.constant dense<0.000000e+00> : vector<16xf32>
    %85 = vector.multi_reduction <add>, %84, %cst_31 [1] : vector<16x16xf32> to vector<16xf32>
    %86 = vector.shape_cast %85 : vector<16xf32> to vector<16x1xf32>
    %87 = tpu.reciprocal %86 {approx = true} : vector<16x1xf32> -> vector<16x1xf32>
    %88 = vector.broadcast %87 : vector<16x1xf32> to vector<16x16xf32>
    %89 = arith.mulf %84, %88 : vector<16x16xf32>
    %90 = vector.extract_strided_slice %9 {offsets = [0, 24], sizes = [16, 8], strides = [1, 1]} : vector<16x32xf32> to vector<16x8xf32>
    %cst_32 = arith.constant dense<0.000000e+00> : vector<16x8xf32>
    %91 = tpu.matmul %89, %90, %cst_32 {dimension_numbers = #tpu.dot_dimension_numbers<[1], [0], [0], [1], [0, 0, 1, 1], [], []>} : vector<16x16xf32>, vector<16x8xf32>, vector<16x8xf32> -> vector<16x8xf32>
    %92 = vector.extract_strided_slice %12 {offsets = [24, 0], sizes = [8, 32], strides = [1, 1]} : vector<32x32xf32> to vector<8x32xf32>
    %cst_33 = arith.constant dense<0.000000e+00> : vector<16x32xf32>
    %93 = tpu.matmul %91, %92, %cst_33 {dimension_numbers = #tpu.dot_dimension_numbers<[1], [0], [0], [1], [0, 0, 1, 1], [], []>} : vector<16x8xf32>, vector<8x32xf32>, vector<16x32xf32> -> vector<16x32xf32>
    %94 = arith.addf %74, %93 : vector<16x32xf32>
    %95 = vector.broadcast %13 : vector<1x32xf32> to vector<16x32xf32>
    %96 = arith.addf %94, %95 : vector<16x32xf32>
    %97 = arith.addf %1, %96 : vector<16x32xf32>
    %c0_34 = arith.constant 0 : index
    %c0_35 = arith.constant 0 : index
    %98 = vector.load %arg7[%c0_34, %c0_35] : memref<1x32xf32, #tpu.memory_space<vmem>>, vector<1x32xf32>
    %c0_36 = arith.constant 0 : index
    %c0_37 = arith.constant 0 : index
    %99 = vector.load %arg8[%c0_36, %c0_37] : memref<1x32xf32, #tpu.memory_space<vmem>>, vector<1x32xf32>
    %cst_38 = arith.constant dense<0.000000e+00> : vector<16xf32>
    %100 = vector.multi_reduction <add>, %97, %cst_38 [1] : vector<16x32xf32> to vector<16xf32>
    %101 = vector.shape_cast %100 : vector<16xf32> to vector<16x1xf32>
    %cst_39 = arith.constant 3.200000e+01 : f32
    %102 = vector.broadcast %cst_39 : f32 to vector<16x1xf32>
    %103 = arith.divf %101, %102 : vector<16x1xf32>
    %104 = vector.broadcast %103 : vector<16x1xf32> to vector<16x32xf32>
    %105 = arith.subf %97, %104 : vector<16x32xf32>
    %106 = arith.mulf %105, %105 : vector<16x32xf32>
    %cst_40 = arith.constant dense<0.000000e+00> : vector<16xf32>
    %107 = vector.multi_reduction <add>, %106, %cst_40 [1] : vector<16x32xf32> to vector<16xf32>
    %108 = vector.shape_cast %107 : vector<16xf32> to vector<16x1xf32>
    %cst_41 = arith.constant 3.200000e+01 : f32
    %109 = vector.broadcast %cst_41 : f32 to vector<16x1xf32>
    %110 = arith.divf %108, %109 : vector<16x1xf32>
    %cst_42 = arith.constant 9.99999974E-6 : f32
    %111 = vector.broadcast %cst_42 : f32 to vector<16x1xf32>
    %112 = arith.addf %110, %111 : vector<16x1xf32>
    %113 = math.rsqrt %112 : vector<16x1xf32>
    %114 = vector.broadcast %113 : vector<16x1xf32> to vector<16x32xf32>
    %115 = arith.mulf %105, %114 : vector<16x32xf32>
    %116 = vector.broadcast %98 : vector<1x32xf32> to vector<16x32xf32>
    %117 = arith.mulf %115, %116 : vector<16x32xf32>
    %118 = vector.broadcast %99 : vector<1x32xf32> to vector<16x32xf32>
    %119 = arith.addf %117, %118 : vector<16x32xf32>
    %c0_43 = arith.constant 0 : index
    %c0_44 = arith.constant 0 : index
    %120 = vector.load %arg9[%c0_43, %c0_44] : memref<32x64xf32, #tpu.memory_space<vmem>>, vector<32x64xf32>
    %cst_45 = arith.constant dense<0.000000e+00> : vector<16x64xf32>
    %121 = tpu.matmul %119, %120, %cst_45 {dimension_numbers = #tpu.dot_dimension_numbers<[1], [0], [0], [1], [0, 0, 1, 1], [], []>} : vector<16x32xf32>, vector<32x64xf32>, vector<16x64xf32> -> vector<16x64xf32>
    %c0_46 = arith.constant 0 : index
    %c0_47 = arith.constant 0 : index
    %122 = vector.load %arg10[%c0_46, %c0_47] : memref<1x64xf32, #tpu.memory_space<vmem>>, vector<1x64xf32>
    %123 = vector.broadcast %122 : vector<1x64xf32> to vector<16x64xf32>
    %124 = arith.addf %121, %123 : vector<16x64xf32>
    %cst_48 = arith.constant 0.000000e+00 : f32
    %125 = vector.broadcast %cst_48 : f32 to vector<16x64xf32>
    %126 = arith.maximumf %124, %125 : vector<16x64xf32>
    %c0_49 = arith.constant 0 : index
    %c0_50 = arith.constant 0 : index
    %127 = vector.load %arg11[%c0_49, %c0_50] : memref<64x32xf32, #tpu.memory_space<vmem>>, vector<64x32xf32>
    %cst_51 = arith.constant dense<0.000000e+00> : vector<16x32xf32>
    %128 = tpu.matmul %126, %127, %cst_51 {dimension_numbers = #tpu.dot_dimension_numbers<[1], [0], [0], [1], [0, 0, 1, 1], [], []>} : vector<16x64xf32>, vector<64x32xf32>, vector<16x32xf32> -> vector<16x32xf32>
    %c0_52 = arith.constant 0 : index
    %c0_53 = arith.constant 0 : index
    %129 = vector.load %arg12[%c0_52, %c0_53] : memref<1x32xf32, #tpu.memory_space<vmem>>, vector<1x32xf32>
    %130 = vector.broadcast %129 : vector<1x32xf32> to vector<16x32xf32>
    %131 = arith.addf %128, %130 : vector<16x32xf32>
    %132 = arith.addf %119, %131 : vector<16x32xf32>
    %c0_54 = arith.constant 0 : index
    %c0_55 = arith.constant 0 : index
    %133 = vector.load %arg13[%c0_54, %c0_55] : memref<1x32xf32, #tpu.memory_space<vmem>>, vector<1x32xf32>
    %c0_56 = arith.constant 0 : index
    %c0_57 = arith.constant 0 : index
    %134 = vector.load %arg14[%c0_56, %c0_57] : memref<1x32xf32, #tpu.memory_space<vmem>>, vector<1x32xf32>
    %cst_58 = arith.constant dense<0.000000e+00> : vector<16xf32>
    %135 = vector.multi_reduction <add>, %132, %cst_58 [1] : vector<16x32xf32> to vector<16xf32>
    %136 = vector.shape_cast %135 : vector<16xf32> to vector<16x1xf32>
    %cst_59 = arith.constant 3.200000e+01 : f32
    %137 = vector.broadcast %cst_59 : f32 to vector<16x1xf32>
    %138 = arith.divf %136, %137 : vector<16x1xf32>
    %139 = vector.broadcast %138 : vector<16x1xf32> to vector<16x32xf32>
    %140 = arith.subf %132, %139 : vector<16x32xf32>
    %141 = arith.mulf %140, %140 : vector<16x32xf32>
    %cst_60 = arith.constant dense<0.000000e+00> : vector<16xf32>
    %142 = vector.multi_reduction <add>, %141, %cst_60 [1] : vector<16x32xf32> to vector<16xf32>
    %143 = vector.shape_cast %142 : vector<16xf32> to vector<16x1xf32>
    %cst_61 = arith.constant 3.200000e+01 : f32
    %144 = vector.broadcast %cst_61 : f32 to vector<16x1xf32>
    %145 = arith.divf %143, %144 : vector<16x1xf32>
    %cst_62 = arith.constant 9.99999974E-6 : f32
    %146 = vector.broadcast %cst_62 : f32 to vector<16x1xf32>
    %147 = arith.addf %145, %146 : vector<16x1xf32>
    %148 = math.rsqrt %147 : vector<16x1xf32>
    %149 = vector.broadcast %148 : vector<16x1xf32> to vector<16x32xf32>
    %150 = arith.mulf %140, %149 : vector<16x32xf32>
    %151 = vector.broadcast %133 : vector<1x32xf32> to vector<16x32xf32>
    %152 = arith.mulf %150, %151 : vector<16x32xf32>
    %153 = vector.broadcast %134 : vector<1x32xf32> to vector<16x32xf32>
    %154 = arith.addf %152, %153 : vector<16x32xf32>
    %c0_63 = arith.constant 0 : index
    %c0_64 = arith.constant 0 : index
    %c0_65 = arith.constant 0 : index
    %155 = vector.load %arg15[%c0_63, %c0_64, %c0_65] : memref<1x16x32xf32, #tpu.memory_space<vmem>>, vector<1x16x32xf32>
    %156 = vector.shape_cast %155 : vector<1x16x32xf32> to vector<16x32xf32>
    %157 = vector.shape_cast %154 : vector<16x32xf32> to vector<1x16x32xf32>
    tpu.vector_store %arg15[%c0_63, %c0_64, %c0_65], %157 {strides = array<i32>} : memref<1x16x32xf32, #tpu.memory_space<vmem>>, vector<1x16x32xf32>,
    return
  }
  func.func @transform_0(%arg0: i32) -> (i32, i32, i32) {
    %c0_i32 = arith.constant 0 : i32
    %c0_i32_0 = arith.constant 0 : i32
    %c0_i32_1 = arith.constant 0 : i32
    return %arg0, %c0_i32, %c0_i32_0 : i32, i32, i32
  }
  func.func @transform_1(%arg0: i32) -> (i32, i32, i32) {
    %c0_i32 = arith.constant 0 : i32
    %c0_i32_0 = arith.constant 0 : i32
    %c0_i32_1 = arith.constant 0 : i32
    return %arg0, %c0_i32, %c0_i32_0 : i32, i32, i32
  }
  func.func @transform_2(%arg0: i32) -> (i32, i32) {
    %c0_i32 = arith.constant 0 : i32
    %c0_i32_0 = arith.constant 0 : i32
    %c0_i32_1 = arith.constant 0 : i32
    return %c0_i32, %c0_i32_0 : i32, i32
  }
  func.func @transform_3(%arg0: i32) -> (i32, i32) {
    %c0_i32 = arith.constant 0 : i32
    %c0_i32_0 = arith.constant 0 : i32
    %c0_i32_1 = arith.constant 0 : i32
    return %c0_i32, %c0_i32_0 : i32, i32
  }
  func.func @transform_4(%arg0: i32) -> (i32, i32) {
    %c0_i32 = arith.constant 0 : i32
    %c0_i32_0 = arith.constant 0 : i32
    %c0_i32_1 = arith.constant 0 : i32
    return %c0_i32, %c0_i32_0 : i32, i32
  }
  func.func @transform_5(%arg0: i32) -> (i32, i32) {
    %c0_i32 = arith.constant 0 : i32
    %c0_i32_0 = arith.constant 0 : i32
    %c0_i32_1 = arith.constant 0 : i32
    return %c0_i32, %c0_i32_0 : i32, i32
  }
  func.func @transform_6(%arg0: i32) -> (i32, i32) {
    %c0_i32 = arith.constant 0 : i32
    %c0_i32_0 = arith.constant 0 : i32
    %c0_i32_1 = arith.constant 0 : i32
    return %c0_i32, %c0_i32_0 : i32, i32
  }
  func.func @transform_7(%arg0: i32) -> (i32, i32) {
    %c0_i32 = arith.constant 0 : i32
    %c0_i32_0 = arith.constant 0 : i32
    %c0_i32_1 = arith.constant 0 : i32
    return %c0_i32, %c0_i32_0 : i32, i32
  }
  func.func @transform_8(%arg0: i32) -> (i32, i32) {
    %c0_i32 = arith.constant 0 : i32
    %c0_i32_0 = arith.constant 0 : i32
    %c0_i32_1 = arith.constant 0 : i32
    return %c0_i32, %c0_i32_0 : i32, i32
  }
  func.func @transform_9(%arg0: i32) -> (i32, i32) {
    %c0_i32 = arith.constant 0 : i32
    %c0_i32_0 = arith.constant 0 : i32
    %c0_i32_1 = arith.constant 0 : i32
    return %c0_i32, %c0_i32_0 : i32, i32
  }
  func.func @transform_10(%arg0: i32) -> (i32, i32) {
    %c0_i32 = arith.constant 0 : i32
    %c0_i32_0 = arith.constant 0 : i32
    %c0_i32_1 = arith.constant 0 : i32
    return %c0_i32, %c0_i32_0 : i32, i32
  }
  func.func @transform_11(%arg0: i32) -> (i32, i32) {
    %c0_i32 = arith.constant 0 : i32
    %c0_i32_0 = arith.constant 0 : i32
    %c0_i32_1 = arith.constant 0 : i32
    return %c0_i32, %c0_i32_0 : i32, i32
  }
  func.func @transform_12(%arg0: i32) -> (i32, i32) {
    %c0_i32 = arith.constant 0 : i32
    %c0_i32_0 = arith.constant 0 : i32
    %c0_i32_1 = arith.constant 0 : i32
    return %c0_i32, %c0_i32_0 : i32, i32
  }
  func.func @transform_13(%arg0: i32) -> (i32, i32) {
    %c0_i32 = arith.constant 0 : i32
    %c0_i32_0 = arith.constant 0 : i32
    %c0_i32_1 = arith.constant 0 : i32
    return %c0_i32, %c0_i32_0 : i32, i32
  }
  func.func @transform_14(%arg0: i32) -> (i32, i32, i32) {
    %c0_i32 = arith.constant 0 : i32
    %c0_i32_0 = arith.constant 0 : i32
    %c0_i32_1 = arith.constant 0 : i32
    return %arg0, %c0_i32, %c0_i32_0 : i32, i32, i32
  }
}

module attributes {stable_mosaic.version = 11 : i64} {
  func.func @_encoder_layer_kernel(%arg0: i32, %arg1: memref<1x8x32xf32, #tpu.memory_space<vmem>>, %arg2: memref<1x1x8xf32, #tpu.memory_space<vmem>>, %arg3: memref<32x96xf32, #tpu.memory_space<vmem>>, %arg4: memref<1x96xf32, #tpu.memory_space<vmem>>, %arg5: memref<32x32xf32, #tpu.memory_space<vmem>>, %arg6: memref<1x32xf32, #tpu.memory_space<vmem>>, %arg7: memref<1x32xf32, #tpu.memory_space<vmem>>, %arg8: memref<1x32xf32, #tpu.memory_space<vmem>>, %arg9: memref<32x64xf32, #tpu.memory_space<vmem>>, %arg10: memref<1x64xf32, #tpu.memory_space<vmem>>, %arg11: memref<64x32xf32, #tpu.memory_space<vmem>>, %arg12: memref<1x32xf32, #tpu.memory_space<vmem>>, %arg13: memref<1x32xf32, #tpu.memory_space<vmem>>, %arg14: memref<1x32xf32, #tpu.memory_space<vmem>>, %arg15: memref<1x8x32xf32, #tpu.memory_space<vmem>>) attributes {dimension_semantics = [#tpu.dimension_semantics<parallel>], iteration_bounds = array<i64: 2>, scalar_prefetch = 0 : i64, scratch_operands = 0 : i64, tpu.core_type = #tpu.core_type<tc>, window_params = [{transform_indices = @transform_0, window_bounds = array<i64: 1, 8, 32>}, {transform_indices = @transform_1, window_bounds = array<i64: 1, 1, 8>}, {pipeline_mode = #tpu.pipeline_mode<synchronous>, transform_indices = @transform_2, window_bounds = array<i64: 32, 96>}, {pipeline_mode = #tpu.pipeline_mode<synchronous>, transform_indices = @transform_3, window_bounds = array<i64: 1, 96>}, {pipeline_mode = #tpu.pipeline_mode<synchronous>, transform_indices = @transform_4, window_bounds = array<i64: 32, 32>}, {pipeline_mode = #tpu.pipeline_mode<synchronous>, transform_indices = @transform_5, window_bounds = array<i64: 1, 32>}, {pipeline_mode = #tpu.pipeline_mode<synchronous>, transform_indices = @transform_6, window_bounds = array<i64: 1, 32>}, {pipeline_mode = #tpu.pipeline_mode<synchronous>, transform_indices = @transform_7, window_bounds = array<i64: 1, 32>}, {pipeline_mode = #tpu.pipeline_mode<synchronous>, transform_indices = @transform_8, window_bounds = array<i64: 32, 64>}, {pipeline_mode = #tpu.pipeline_mode<synchronous>, transform_indices = @transform_9, window_bounds = array<i64: 1, 64>}, {pipeline_mode = #tpu.pipeline_mode<synchronous>, transform_indices = @transform_10, window_bounds = array<i64: 64, 32>}, {pipeline_mode = #tpu.pipeline_mode<synchronous>, transform_indices = @transform_11, window_bounds = array<i64: 1, 32>}, {pipeline_mode = #tpu.pipeline_mode<synchronous>, transform_indices = @transform_12, window_bounds = array<i64: 1, 32>}, {pipeline_mode = #tpu.pipeline_mode<synchronous>, transform_indices = @transform_13, window_bounds = array<i64: 1, 32>}, {transform_indices = @transform_14, window_bounds = array<i64: 1, 8, 32>}]} {
    %c0 = arith.constant 0 : index
    %c0_0 = arith.constant 0 : index
    %c0_1 = arith.constant 0 : index
    %0 = vector.load %arg1[%c0, %c0_0, %c0_1] : memref<1x8x32xf32, #tpu.memory_space<vmem>>, vector<1x8x32xf32>
    %1 = vector.shape_cast %0 : vector<1x8x32xf32> to vector<8x32xf32>
    %c0_2 = arith.constant 0 : index
    %c0_3 = arith.constant 0 : index
    %2 = vector.load %arg3[%c0_2, %c0_3] : memref<32x96xf32, #tpu.memory_space<vmem>>, vector<32x96xf32>
    %cst = arith.constant dense<0.000000e+00> : vector<8x96xf32>
    %3 = tpu.matmul %1, %2, %cst {dimension_numbers = #tpu.dot_dimension_numbers<[1], [0], [0], [1], [0, 0, 1, 1], [], []>} : vector<8x32xf32>, vector<32x96xf32>, vector<8x96xf32> -> vector<8x96xf32>
    %c0_4 = arith.constant 0 : index
    %c0_5 = arith.constant 0 : index
    %4 = vector.load %arg4[%c0_4, %c0_5] : memref<1x96xf32, #tpu.memory_space<vmem>>, vector<1x96xf32>
    %5 = vector.broadcast %4 : vector<1x96xf32> to vector<8x96xf32>
    %6 = arith.addf %3, %5 : vector<8x96xf32>
    %7 = vector.extract_strided_slice %6 {offsets = [0, 0], sizes = [8, 32], strides = [1, 1]} : vector<8x96xf32> to vector<8x32xf32>
    %8 = vector.extract_strided_slice %6 {offsets = [0, 32], sizes = [8, 32], strides = [1, 1]} : vector<8x96xf32> to vector<8x32xf32>
    %9 = vector.extract_strided_slice %6 {offsets = [0, 64], sizes = [8, 32], strides = [1, 1]} : vector<8x96xf32> to vector<8x32xf32>
    %c0_6 = arith.constant 0 : index
    %c0_7 = arith.constant 0 : index
    %c0_8 = arith.constant 0 : index
    %10 = vector.load %arg2[%c0_6, %c0_7, %c0_8] : memref<1x1x8xf32, #tpu.memory_space<vmem>>, vector<1x1x8xf32>
    %11 = vector.shape_cast %10 : vector<1x1x8xf32> to vector<1x8xf32>
    %c0_9 = arith.constant 0 : index
    %c0_10 = arith.constant 0 : index
    %12 = vector.load %arg5[%c0_9, %c0_10] : memref<32x32xf32, #tpu.memory_space<vmem>>, vector<32x32xf32>
    %c0_11 = arith.constant 0 : index
    %c0_12 = arith.constant 0 : index
    %13 = vector.load %arg6[%c0_11, %c0_12] : memref<1x32xf32, #tpu.memory_space<vmem>>, vector<1x32xf32>
    %cst_13 = arith.constant 0.000000e+00 : f32
    %14 = vector.broadcast %cst_13 : f32 to vector<8x32xf32>
    %15 = vector.extract_strided_slice %7 {offsets = [0, 0], sizes = [8, 8], strides = [1, 1]} : vector<8x32xf32> to vector<8x8xf32>
    %16 = vector.extract_strided_slice %8 {offsets = [0, 0], sizes = [8, 8], strides = [1, 1]} : vector<8x32xf32> to vector<8x8xf32>
    %cst_14 = arith.constant dense<0.000000e+00> : vector<8x8xf32>
    %17 = tpu.matmul %15, %16, %cst_14 {dimension_numbers = #tpu.dot_dimension_numbers<[1], [1], [0], [0], [0, 0, 1, 0], [], []>} : vector<8x8xf32>, vector<8x8xf32>, vector<8x8xf32> -> vector<8x8xf32>
    %18 = vector.broadcast %11 : vector<1x8xf32> to vector<8x8xf32>
    %19 = arith.addf %17, %18 : vector<8x8xf32>
    %cst_15 = arith.constant dense<0xFF800000> : vector<8xf32>
    %20 = vector.multi_reduction <maximumf>, %19, %cst_15 [1] : vector<8x8xf32> to vector<8xf32>
    %21 = vector.shape_cast %20 : vector<8xf32> to vector<8x1xf32>
    %22 = vector.broadcast %21 : vector<8x1xf32> to vector<8x8xf32>
    %23 = arith.subf %19, %22 : vector<8x8xf32>
    %24 = math.exp %23 : vector<8x8xf32>
    %cst_16 = arith.constant dense<0.000000e+00> : vector<8xf32>
    %25 = vector.multi_reduction <add>, %24, %cst_16 [1] : vector<8x8xf32> to vector<8xf32>
    %26 = vector.shape_cast %25 : vector<8xf32> to vector<8x1xf32>
    %27 = tpu.reciprocal %26 {approx = true} : vector<8x1xf32> -> vector<8x1xf32>
    %28 = vector.broadcast %27 : vector<8x1xf32> to vector<8x8xf32>
    %29 = arith.mulf %24, %28 : vector<8x8xf32>
    %30 = vector.extract_strided_slice %9 {offsets = [0, 0], sizes = [8, 8], strides = [1, 1]} : vector<8x32xf32> to vector<8x8xf32>
    %cst_17 = arith.constant dense<0.000000e+00> : vector<8x8xf32>
    %31 = tpu.matmul %29, %30, %cst_17 {dimension_numbers = #tpu.dot_dimension_numbers<[1], [0], [0], [1], [0, 0, 1, 1], [], []>} : vector<8x8xf32>, vector<8x8xf32>, vector<8x8xf32> -> vector<8x8xf32>
    %32 = vector.extract_strided_slice %12 {offsets = [0, 0], sizes = [8, 32], strides = [1, 1]} : vector<32x32xf32> to vector<8x32xf32>
    %cst_18 = arith.constant dense<0.000000e+00> : vector<8x32xf32>
    %33 = tpu.matmul %31, %32, %cst_18 {dimension_numbers = #tpu.dot_dimension_numbers<[1], [0], [0], [1], [0, 0, 1, 1], [], []>} : vector<8x8xf32>, vector<8x32xf32>, vector<8x32xf32> -> vector<8x32xf32>
    %34 = arith.addf %14, %33 : vector<8x32xf32>
    %35 = vector.extract_strided_slice %7 {offsets = [0, 8], sizes = [8, 8], strides = [1, 1]} : vector<8x32xf32> to vector<8x8xf32>
    %36 = vector.extract_strided_slice %8 {offsets = [0, 8], sizes = [8, 8], strides = [1, 1]} : vector<8x32xf32> to vector<8x8xf32>
    %cst_19 = arith.constant dense<0.000000e+00> : vector<8x8xf32>
    %37 = tpu.matmul %35, %36, %cst_19 {dimension_numbers = #tpu.dot_dimension_numbers<[1], [1], [0], [0], [0, 0, 1, 0], [], []>} : vector<8x8xf32>, vector<8x8xf32>, vector<8x8xf32> -> vector<8x8xf32>
    %38 = vector.broadcast %11 : vector<1x8xf32> to vector<8x8xf32>
    %39 = arith.addf %37, %38 : vector<8x8xf32>
    %cst_20 = arith.constant dense<0xFF800000> : vector<8xf32>
    %40 = vector.multi_reduction <maximumf>, %39, %cst_20 [1] : vector<8x8xf32> to vector<8xf32>
    %41 = vector.shape_cast %40 : vector<8xf32> to vector<8x1xf32>
    %42 = vector.broadcast %41 : vector<8x1xf32> to vector<8x8xf32>
    %43 = arith.subf %39, %42 : vector<8x8xf32>
    %44 = math.exp %43 : vector<8x8xf32>
    %cst_21 = arith.constant dense<0.000000e+00> : vector<8xf32>
    %45 = vector.multi_reduction <add>, %44, %cst_21 [1] : vector<8x8xf32> to vector<8xf32>
    %46 = vector.shape_cast %45 : vector<8xf32> to vector<8x1xf32>
    %47 = tpu.reciprocal %46 {approx = true} : vector<8x1xf32> -> vector<8x1xf32>
    %48 = vector.broadcast %47 : vector<8x1xf32> to vector<8x8xf32>
    %49 = arith.mulf %44, %48 : vector<8x8xf32>
    %50 = vector.extract_strided_slice %9 {offsets = [0, 8], sizes = [8, 8], strides = [1, 1]} : vector<8x32xf32> to vector<8x8xf32>
    %cst_22 = arith.constant dense<0.000000e+00> : vector<8x8xf32>
    %51 = tpu.matmul %49, %50, %cst_22 {dimension_numbers = #tpu.dot_dimension_numbers<[1], [0], [0], [1], [0, 0, 1, 1], [], []>} : vector<8x8xf32>, vector<8x8xf32>, vector<8x8xf32> -> vector<8x8xf32>
    %52 = vector.extract_strided_slice %12 {offsets = [8, 0], sizes = [8, 32], strides = [1, 1]} : vector<32x32xf32> to vector<8x32xf32>
    %cst_23 = arith.constant dense<0.000000e+00> : vector<8x32xf32>
    %53 = tpu.matmul %51, %52, %cst_23 {dimension_numbers = #tpu.dot_dimension_numbers<[1], [0], [0], [1], [0, 0, 1, 1], [], []>} : vector<8x8xf32>, vector<8x32xf32>, vector<8x32xf32> -> vector<8x32xf32>
    %54 = arith.addf %34, %53 : vector<8x32xf32>
    %55 = vector.extract_strided_slice %7 {offsets = [0, 16], sizes = [8, 8], strides = [1, 1]} : vector<8x32xf32> to vector<8x8xf32>
    %56 = vector.extract_strided_slice %8 {offsets = [0, 16], sizes = [8, 8], strides = [1, 1]} : vector<8x32xf32> to vector<8x8xf32>
    %cst_24 = arith.constant dense<0.000000e+00> : vector<8x8xf32>
    %57 = tpu.matmul %55, %56, %cst_24 {dimension_numbers = #tpu.dot_dimension_numbers<[1], [1], [0], [0], [0, 0, 1, 0], [], []>} : vector<8x8xf32>, vector<8x8xf32>, vector<8x8xf32> -> vector<8x8xf32>
    %58 = vector.broadcast %11 : vector<1x8xf32> to vector<8x8xf32>
    %59 = arith.addf %57, %58 : vector<8x8xf32>
    %cst_25 = arith.constant dense<0xFF800000> : vector<8xf32>
    %60 = vector.multi_reduction <maximumf>, %59, %cst_25 [1] : vector<8x8xf32> to vector<8xf32>
    %61 = vector.shape_cast %60 : vector<8xf32> to vector<8x1xf32>
    %62 = vector.broadcast %61 : vector<8x1xf32> to vector<8x8xf32>
    %63 = arith.subf %59, %62 : vector<8x8xf32>
    %64 = math.exp %63 : vector<8x8xf32>
    %cst_26 = arith.constant dense<0.000000e+00> : vector<8xf32>
    %65 = vector.multi_reduction <add>, %64, %cst_26 [1] : vector<8x8xf32> to vector<8xf32>
    %66 = vector.shape_cast %65 : vector<8xf32> to vector<8x1xf32>
    %67 = tpu.reciprocal %66 {approx = true} : vector<8x1xf32> -> vector<8x1xf32>
    %68 = vector.broadcast %67 : vector<8x1xf32> to vector<8x8xf32>
    %69 = arith.mulf %64, %68 : vector<8x8xf32>
    %70 = vector.extract_strided_slice %9 {offsets = [0, 16], sizes = [8, 8], strides = [1, 1]} : vector<8x32xf32> to vector<8x8xf32>
    %cst_27 = arith.constant dense<0.000000e+00> : vector<8x8xf32>
    %71 = tpu.matmul %69, %70, %cst_27 {dimension_numbers = #tpu.dot_dimension_numbers<[1], [0], [0], [1], [0, 0, 1, 1], [], []>} : vector<8x8xf32>, vector<8x8xf32>, vector<8x8xf32> -> vector<8x8xf32>
    %72 = vector.extract_strided_slice %12 {offsets = [16, 0], sizes = [8, 32], strides = [1, 1]} : vector<32x32xf32> to vector<8x32xf32>
    %cst_28 = arith.constant dense<0.000000e+00> : vector<8x32xf32>
    %73 = tpu.matmul %71, %72, %cst_28 {dimension_numbers = #tpu.dot_dimension_numbers<[1], [0], [0], [1], [0, 0, 1, 1], [], []>} : vector<8x8xf32>, vector<8x32xf32>, vector<8x32xf32> -> vector<8x32xf32>
    %74 = arith.addf %54, %73 : vector<8x32xf32>
    %75 = vector.extract_strided_slice %7 {offsets = [0, 24], sizes = [8, 8], strides = [1, 1]} : vector<8x32xf32> to vector<8x8xf32>
    %76 = vector.extract_strided_slice %8 {offsets = [0, 24], sizes = [8, 8], strides = [1, 1]} : vector<8x32xf32> to vector<8x8xf32>
    %cst_29 = arith.constant dense<0.000000e+00> : vector<8x8xf32>
    %77 = tpu.matmul %75, %76, %cst_29 {dimension_numbers = #tpu.dot_dimension_numbers<[1], [1], [0], [0], [0, 0, 1, 0], [], []>} : vector<8x8xf32>, vector<8x8xf32>, vector<8x8xf32> -> vector<8x8xf32>
    %78 = vector.broadcast %11 : vector<1x8xf32> to vector<8x8xf32>
    %79 = arith.addf %77, %78 : vector<8x8xf32>
    %cst_30 = arith.constant dense<0xFF800000> : vector<8xf32>
    %80 = vector.multi_reduction <maximumf>, %79, %cst_30 [1] : vector<8x8xf32> to vector<8xf32>
    %81 = vector.shape_cast %80 : vector<8xf32> to vector<8x1xf32>
    %82 = vector.broadcast %81 : vector<8x1xf32> to vector<8x8xf32>
    %83 = arith.subf %79, %82 : vector<8x8xf32>
    %84 = math.exp %83 : vector<8x8xf32>
    %cst_31 = arith.constant dense<0.000000e+00> : vector<8xf32>
    %85 = vector.multi_reduction <add>, %84, %cst_31 [1] : vector<8x8xf32> to vector<8xf32>
    %86 = vector.shape_cast %85 : vector<8xf32> to vector<8x1xf32>
    %87 = tpu.reciprocal %86 {approx = true} : vector<8x1xf32> -> vector<8x1xf32>
    %88 = vector.broadcast %87 : vector<8x1xf32> to vector<8x8xf32>
    %89 = arith.mulf %84, %88 : vector<8x8xf32>
    %90 = vector.extract_strided_slice %9 {offsets = [0, 24], sizes = [8, 8], strides = [1, 1]} : vector<8x32xf32> to vector<8x8xf32>
    %cst_32 = arith.constant dense<0.000000e+00> : vector<8x8xf32>
    %91 = tpu.matmul %89, %90, %cst_32 {dimension_numbers = #tpu.dot_dimension_numbers<[1], [0], [0], [1], [0, 0, 1, 1], [], []>} : vector<8x8xf32>, vector<8x8xf32>, vector<8x8xf32> -> vector<8x8xf32>
    %92 = vector.extract_strided_slice %12 {offsets = [24, 0], sizes = [8, 32], strides = [1, 1]} : vector<32x32xf32> to vector<8x32xf32>
    %cst_33 = arith.constant dense<0.000000e+00> : vector<8x32xf32>
    %93 = tpu.matmul %91, %92, %cst_33 {dimension_numbers = #tpu.dot_dimension_numbers<[1], [0], [0], [1], [0, 0, 1, 1], [], []>} : vector<8x8xf32>, vector<8x32xf32>, vector<8x32xf32> -> vector<8x32xf32>
    %94 = arith.addf %74, %93 : vector<8x32xf32>
    %95 = vector.broadcast %13 : vector<1x32xf32> to vector<8x32xf32>
    %96 = arith.addf %94, %95 : vector<8x32xf32>
    %97 = arith.addf %1, %96 : vector<8x32xf32>
    %c0_34 = arith.constant 0 : index
    %c0_35 = arith.constant 0 : index
    %98 = vector.load %arg7[%c0_34, %c0_35] : memref<1x32xf32, #tpu.memory_space<vmem>>, vector<1x32xf32>
    %c0_36 = arith.constant 0 : index
    %c0_37 = arith.constant 0 : index
    %99 = vector.load %arg8[%c0_36, %c0_37] : memref<1x32xf32, #tpu.memory_space<vmem>>, vector<1x32xf32>
    %cst_38 = arith.constant dense<0.000000e+00> : vector<8xf32>
    %100 = vector.multi_reduction <add>, %97, %cst_38 [1] : vector<8x32xf32> to vector<8xf32>
    %101 = vector.shape_cast %100 : vector<8xf32> to vector<8x1xf32>
    %cst_39 = arith.constant 3.200000e+01 : f32
    %102 = vector.broadcast %cst_39 : f32 to vector<8x1xf32>
    %103 = arith.divf %101, %102 : vector<8x1xf32>
    %104 = vector.broadcast %103 : vector<8x1xf32> to vector<8x32xf32>
    %105 = arith.subf %97, %104 : vector<8x32xf32>
    %106 = arith.mulf %105, %105 : vector<8x32xf32>
    %cst_40 = arith.constant dense<0.000000e+00> : vector<8xf32>
    %107 = vector.multi_reduction <add>, %106, %cst_40 [1] : vector<8x32xf32> to vector<8xf32>
    %108 = vector.shape_cast %107 : vector<8xf32> to vector<8x1xf32>
    %cst_41 = arith.constant 3.200000e+01 : f32
    %109 = vector.broadcast %cst_41 : f32 to vector<8x1xf32>
    %110 = arith.divf %108, %109 : vector<8x1xf32>
    %cst_42 = arith.constant 9.99999974E-6 : f32
    %111 = vector.broadcast %cst_42 : f32 to vector<8x1xf32>
    %112 = arith.addf %110, %111 : vector<8x1xf32>
    %113 = math.rsqrt %112 : vector<8x1xf32>
    %114 = vector.broadcast %113 : vector<8x1xf32> to vector<8x32xf32>
    %115 = arith.mulf %105, %114 : vector<8x32xf32>
    %116 = vector.broadcast %98 : vector<1x32xf32> to vector<8x32xf32>
    %117 = arith.mulf %115, %116 : vector<8x32xf32>
    %118 = vector.broadcast %99 : vector<1x32xf32> to vector<8x32xf32>
    %119 = arith.addf %117, %118 : vector<8x32xf32>
    %c0_43 = arith.constant 0 : index
    %c0_44 = arith.constant 0 : index
    %120 = vector.load %arg9[%c0_43, %c0_44] : memref<32x64xf32, #tpu.memory_space<vmem>>, vector<32x64xf32>
    %cst_45 = arith.constant dense<0.000000e+00> : vector<8x64xf32>
    %121 = tpu.matmul %119, %120, %cst_45 {dimension_numbers = #tpu.dot_dimension_numbers<[1], [0], [0], [1], [0, 0, 1, 1], [], []>} : vector<8x32xf32>, vector<32x64xf32>, vector<8x64xf32> -> vector<8x64xf32>
    %c0_46 = arith.constant 0 : index
    %c0_47 = arith.constant 0 : index
    %122 = vector.load %arg10[%c0_46, %c0_47] : memref<1x64xf32, #tpu.memory_space<vmem>>, vector<1x64xf32>
    %123 = vector.broadcast %122 : vector<1x64xf32> to vector<8x64xf32>
    %124 = arith.addf %121, %123 : vector<8x64xf32>
    %cst_48 = arith.constant 0.000000e+00 : f32
    %125 = vector.broadcast %cst_48 : f32 to vector<8x64xf32>
    %126 = arith.maximumf %124, %125 : vector<8x64xf32>
    %c0_49 = arith.constant 0 : index
    %c0_50 = arith.constant 0 : index
    %127 = vector.load %arg11[%c0_49, %c0_50] : memref<64x32xf32, #tpu.memory_space<vmem>>, vector<64x32xf32>
    %cst_51 = arith.constant dense<0.000000e+00> : vector<8x32xf32>
    %128 = tpu.matmul %126, %127, %cst_51 {dimension_numbers = #tpu.dot_dimension_numbers<[1], [0], [0], [1], [0, 0, 1, 1], [], []>} : vector<8x64xf32>, vector<64x32xf32>, vector<8x32xf32> -> vector<8x32xf32>
    %c0_52 = arith.constant 0 : index
    %c0_53 = arith.constant 0 : index
    %129 = vector.load %arg12[%c0_52, %c0_53] : memref<1x32xf32, #tpu.memory_space<vmem>>, vector<1x32xf32>
    %130 = vector.broadcast %129 : vector<1x32xf32> to vector<8x32xf32>
    %131 = arith.addf %128, %130 : vector<8x32xf32>
    %132 = arith.addf %119, %131 : vector<8x32xf32>
    %c0_54 = arith.constant 0 : index
    %c0_55 = arith.constant 0 : index
    %133 = vector.load %arg13[%c0_54, %c0_55] : memref<1x32xf32, #tpu.memory_space<vmem>>, vector<1x32xf32>
    %c0_56 = arith.constant 0 : index
    %c0_57 = arith.constant 0 : index
    %134 = vector.load %arg14[%c0_56, %c0_57] : memref<1x32xf32, #tpu.memory_space<vmem>>, vector<1x32xf32>
    %cst_58 = arith.constant dense<0.000000e+00> : vector<8xf32>
    %135 = vector.multi_reduction <add>, %132, %cst_58 [1] : vector<8x32xf32> to vector<8xf32>
    %136 = vector.shape_cast %135 : vector<8xf32> to vector<8x1xf32>
    %cst_59 = arith.constant 3.200000e+01 : f32
    %137 = vector.broadcast %cst_59 : f32 to vector<8x1xf32>
    %138 = arith.divf %136, %137 : vector<8x1xf32>
    %139 = vector.broadcast %138 : vector<8x1xf32> to vector<8x32xf32>
    %140 = arith.subf %132, %139 : vector<8x32xf32>
    %141 = arith.mulf %140, %140 : vector<8x32xf32>
    %cst_60 = arith.constant dense<0.000000e+00> : vector<8xf32>
    %142 = vector.multi_reduction <add>, %141, %cst_60 [1] : vector<8x32xf32> to vector<8xf32>
    %143 = vector.shape_cast %142 : vector<8xf32> to vector<8x1xf32>
    %cst_61 = arith.constant 3.200000e+01 : f32
    %144 = vector.broadcast %cst_61 : f32 to vector<8x1xf32>
    %145 = arith.divf %143, %144 : vector<8x1xf32>
    %cst_62 = arith.constant 9.99999974E-6 : f32
    %146 = vector.broadcast %cst_62 : f32 to vector<8x1xf32>
    %147 = arith.addf %145, %146 : vector<8x1xf32>
    %148 = math.rsqrt %147 : vector<8x1xf32>
    %149 = vector.broadcast %148 : vector<8x1xf32> to vector<8x32xf32>
    %150 = arith.mulf %140, %149 : vector<8x32xf32>
    %151 = vector.broadcast %133 : vector<1x32xf32> to vector<8x32xf32>
    %152 = arith.mulf %150, %151 : vector<8x32xf32>
    %153 = vector.broadcast %134 : vector<1x32xf32> to vector<8x32xf32>
    %154 = arith.addf %152, %153 : vector<8x32xf32>
    %c0_63 = arith.constant 0 : index
    %c0_64 = arith.constant 0 : index
    %c0_65 = arith.constant 0 : index
    %155 = vector.load %arg15[%c0_63, %c0_64, %c0_65] : memref<1x8x32xf32, #tpu.memory_space<vmem>>, vector<1x8x32xf32>
    %156 = vector.shape_cast %155 : vector<1x8x32xf32> to vector<8x32xf32>
    %157 = vector.shape_cast %154 : vector<8x32xf32> to vector<1x8x32xf32>
    tpu.vector_store %arg15[%c0_63, %c0_64, %c0_65], %157 {strides = array<i32>} : memref<1x8x32xf32, #tpu.memory_space<vmem>>, vector<1x8x32xf32>,
    return
  }
  func.func @transform_0(%arg0: i32) -> (i32, i32, i32) {
    %c0_i32 = arith.constant 0 : i32
    %c0_i32_0 = arith.constant 0 : i32
    %c0_i32_1 = arith.constant 0 : i32
    return %arg0, %c0_i32, %c0_i32_0 : i32, i32, i32
  }
  func.func @transform_1(%arg0: i32) -> (i32, i32, i32) {
    %c0_i32 = arith.constant 0 : i32
    %c0_i32_0 = arith.constant 0 : i32
    %c0_i32_1 = arith.constant 0 : i32
    return %arg0, %c0_i32, %c0_i32_0 : i32, i32, i32
  }
  func.func @transform_2(%arg0: i32) -> (i32, i32) {
    %c0_i32 = arith.constant 0 : i32
    %c0_i32_0 = arith.constant 0 : i32
    %c0_i32_1 = arith.constant 0 : i32
    return %c0_i32, %c0_i32_0 : i32, i32
  }
  func.func @transform_3(%arg0: i32) -> (i32, i32) {
    %c0_i32 = arith.constant 0 : i32
    %c0_i32_0 = arith.constant 0 : i32
    %c0_i32_1 = arith.constant 0 : i32
    return %c0_i32, %c0_i32_0 : i32, i32
  }
  func.func @transform_4(%arg0: i32) -> (i32, i32) {
    %c0_i32 = arith.constant 0 : i32
    %c0_i32_0 = arith.constant 0 : i32
    %c0_i32_1 = arith.constant 0 : i32
    return %c0_i32, %c0_i32_0 : i32, i32
  }
  func.func @transform_5(%arg0: i32) -> (i32, i32) {
    %c0_i32 = arith.constant 0 : i32
    %c0_i32_0 = arith.constant 0 : i32
    %c0_i32_1 = arith.constant 0 : i32
    return %c0_i32, %c0_i32_0 : i32, i32
  }
  func.func @transform_6(%arg0: i32) -> (i32, i32) {
    %c0_i32 = arith.constant 0 : i32
    %c0_i32_0 = arith.constant 0 : i32
    %c0_i32_1 = arith.constant 0 : i32
    return %c0_i32, %c0_i32_0 : i32, i32
  }
  func.func @transform_7(%arg0: i32) -> (i32, i32) {
    %c0_i32 = arith.constant 0 : i32
    %c0_i32_0 = arith.constant 0 : i32
    %c0_i32_1 = arith.constant 0 : i32
    return %c0_i32, %c0_i32_0 : i32, i32
  }
  func.func @transform_8(%arg0: i32) -> (i32, i32) {
    %c0_i32 = arith.constant 0 : i32
    %c0_i32_0 = arith.constant 0 : i32
    %c0_i32_1 = arith.constant 0 : i32
    return %c0_i32, %c0_i32_0 : i32, i32
  }
  func.func @transform_9(%arg0: i32) -> (i32, i32) {
    %c0_i32 = arith.constant 0 : i32
    %c0_i32_0 = arith.constant 0 : i32
    %c0_i32_1 = arith.constant 0 : i32
    return %c0_i32, %c0_i32_0 : i32, i32
  }
  func.func @transform_10(%arg0: i32) -> (i32, i32) {
    %c0_i32 = arith.constant 0 : i32
    %c0_i32_0 = arith.constant 0 : i32
    %c0_i32_1 = arith.constant 0 : i32
    return %c0_i32, %c0_i32_0 : i32, i32
  }
  func.func @transform_11(%arg0: i32) -> (i32, i32) {
    %c0_i32 = arith.constant 0 : i32
    %c0_i32_0 = arith.constant 0 : i32
    %c0_i32_1 = arith.constant 0 : i32
    return %c0_i32, %c0_i32_0 : i32, i32
  }
  func.func @transform_12(%arg0: i32) -> (i32, i32) {
    %c0_i32 = arith.constant 0 : i32
    %c0_i32_0 = arith.constant 0 : i32
    %c0_i32_1 = arith.constant 0 : i32
    return %c0_i32, %c0_i32_0 : i32, i32
  }
  func.func @transform_13(%arg0: i32) -> (i32, i32) {
    %c0_i32 = arith.constant 0 : i32
    %c0_i32_0 = arith.constant 0 : i32
    %c0_i32_1 = arith.constant 0 : i32
    return %c0_i32, %c0_i32_0 : i32, i32
  }
  func.func @transform_14(%arg0: i32) -> (i32, i32, i32) {
    %c0_i32 = arith.constant 0 : i32
    %c0_i32_0 = arith.constant 0 : i32
    %c0_i32_1 = arith.constant 0 : i32
    return %arg0, %c0_i32, %c0_i32_0 : i32, i32, i32
  }
}

module attributes {stable_mosaic.version = 11 : i64} {
  func.func @_layernorm_kernel(%arg0: i32, %arg1: memref<1x16x32xf32, #tpu.memory_space<vmem>>, %arg2: memref<1x32xf32, #tpu.memory_space<vmem>>, %arg3: memref<1x32xf32, #tpu.memory_space<vmem>>, %arg4: memref<1x16x32xf32, #tpu.memory_space<vmem>>) attributes {dimension_semantics = [#tpu.dimension_semantics<parallel>], iteration_bounds = array<i64: 2>, scalar_prefetch = 0 : i64, scratch_operands = 0 : i64, tpu.core_type = #tpu.core_type<tc>, window_params = [{transform_indices = @transform_0, window_bounds = array<i64: 1, 16, 32>}, {pipeline_mode = #tpu.pipeline_mode<synchronous>, transform_indices = @transform_1, window_bounds = array<i64: 1, 32>}, {pipeline_mode = #tpu.pipeline_mode<synchronous>, transform_indices = @transform_2, window_bounds = array<i64: 1, 32>}, {transform_indices = @transform_3, window_bounds = array<i64: 1, 16, 32>}]} {
    %c0 = arith.constant 0 : index
    %c0_0 = arith.constant 0 : index
    %c0_1 = arith.constant 0 : index
    %0 = vector.load %arg1[%c0, %c0_0, %c0_1] : memref<1x16x32xf32, #tpu.memory_space<vmem>>, vector<1x16x32xf32>
    %1 = vector.shape_cast %0 : vector<1x16x32xf32> to vector<16x32xf32>
    %c0_2 = arith.constant 0 : index
    %c0_3 = arith.constant 0 : index
    %2 = vector.load %arg2[%c0_2, %c0_3] : memref<1x32xf32, #tpu.memory_space<vmem>>, vector<1x32xf32>
    %c0_4 = arith.constant 0 : index
    %c0_5 = arith.constant 0 : index
    %3 = vector.load %arg3[%c0_4, %c0_5] : memref<1x32xf32, #tpu.memory_space<vmem>>, vector<1x32xf32>
    %cst = arith.constant dense<0.000000e+00> : vector<16xf32>
    %4 = vector.multi_reduction <add>, %1, %cst [1] : vector<16x32xf32> to vector<16xf32>
    %5 = vector.shape_cast %4 : vector<16xf32> to vector<16x1xf32>
    %cst_6 = arith.constant 3.200000e+01 : f32
    %6 = vector.broadcast %cst_6 : f32 to vector<16x1xf32>
    %7 = arith.divf %5, %6 : vector<16x1xf32>
    %8 = vector.broadcast %7 : vector<16x1xf32> to vector<16x32xf32>
    %9 = arith.subf %1, %8 : vector<16x32xf32>
    %10 = arith.mulf %9, %9 : vector<16x32xf32>
    %cst_7 = arith.constant dense<0.000000e+00> : vector<16xf32>
    %11 = vector.multi_reduction <add>, %10, %cst_7 [1] : vector<16x32xf32> to vector<16xf32>
    %12 = vector.shape_cast %11 : vector<16xf32> to vector<16x1xf32>
    %cst_8 = arith.constant 3.200000e+01 : f32
    %13 = vector.broadcast %cst_8 : f32 to vector<16x1xf32>
    %14 = arith.divf %12, %13 : vector<16x1xf32>
    %cst_9 = arith.constant 9.99999974E-6 : f32
    %15 = vector.broadcast %cst_9 : f32 to vector<16x1xf32>
    %16 = arith.addf %14, %15 : vector<16x1xf32>
    %17 = math.rsqrt %16 : vector<16x1xf32>
    %18 = vector.broadcast %17 : vector<16x1xf32> to vector<16x32xf32>
    %19 = arith.mulf %9, %18 : vector<16x32xf32>
    %20 = vector.broadcast %2 : vector<1x32xf32> to vector<16x32xf32>
    %21 = arith.mulf %19, %20 : vector<16x32xf32>
    %22 = vector.broadcast %3 : vector<1x32xf32> to vector<16x32xf32>
    %23 = arith.addf %21, %22 : vector<16x32xf32>
    %c0_10 = arith.constant 0 : index
    %c0_11 = arith.constant 0 : index
    %c0_12 = arith.constant 0 : index
    %24 = vector.load %arg4[%c0_10, %c0_11, %c0_12] : memref<1x16x32xf32, #tpu.memory_space<vmem>>, vector<1x16x32xf32>
    %25 = vector.shape_cast %24 : vector<1x16x32xf32> to vector<16x32xf32>
    %26 = vector.shape_cast %23 : vector<16x32xf32> to vector<1x16x32xf32>
    tpu.vector_store %arg4[%c0_10, %c0_11, %c0_12], %26 {strides = array<i32>} : memref<1x16x32xf32, #tpu.memory_space<vmem>>, vector<1x16x32xf32>,
    return
  }
  func.func @transform_0(%arg0: i32) -> (i32, i32, i32) {
    %c0_i32 = arith.constant 0 : i32
    %c0_i32_0 = arith.constant 0 : i32
    %c0_i32_1 = arith.constant 0 : i32
    return %arg0, %c0_i32, %c0_i32_0 : i32, i32, i32
  }
  func.func @transform_1(%arg0: i32) -> (i32, i32) {
    %c0_i32 = arith.constant 0 : i32
    %c0_i32_0 = arith.constant 0 : i32
    %c0_i32_1 = arith.constant 0 : i32
    return %c0_i32, %c0_i32_0 : i32, i32
  }
  func.func @transform_2(%arg0: i32) -> (i32, i32) {
    %c0_i32 = arith.constant 0 : i32
    %c0_i32_0 = arith.constant 0 : i32
    %c0_i32_1 = arith.constant 0 : i32
    return %c0_i32, %c0_i32_0 : i32, i32
  }
  func.func @transform_3(%arg0: i32) -> (i32, i32, i32) {
    %c0_i32 = arith.constant 0 : i32
    %c0_i32_0 = arith.constant 0 : i32
    %c0_i32_1 = arith.constant 0 : i32
    return %arg0, %c0_i32, %c0_i32_0 : i32, i32, i32
  }
}

module attributes {stable_mosaic.version = 11 : i64} {
  func.func @_score_kernel(%arg0: i32, %arg1: memref<1x8x32xf32, #tpu.memory_space<vmem>>, %arg2: memref<32x32xf32, #tpu.memory_space<vmem>>, %arg3: memref<1x32xf32, #tpu.memory_space<vmem>>, %arg4: memref<1x8x32xf32, #tpu.memory_space<vmem>>, %arg5: memref<1x8x8xf32, #tpu.memory_space<vmem>>) attributes {dimension_semantics = [#tpu.dimension_semantics<parallel>], iteration_bounds = array<i64: 2>, scalar_prefetch = 0 : i64, scratch_operands = 0 : i64, tpu.core_type = #tpu.core_type<tc>, window_params = [{transform_indices = @transform_0, window_bounds = array<i64: 1, 8, 32>}, {pipeline_mode = #tpu.pipeline_mode<synchronous>, transform_indices = @transform_1, window_bounds = array<i64: 32, 32>}, {pipeline_mode = #tpu.pipeline_mode<synchronous>, transform_indices = @transform_2, window_bounds = array<i64: 1, 32>}, {transform_indices = @transform_3, window_bounds = array<i64: 1, 8, 32>}, {transform_indices = @transform_4, window_bounds = array<i64: 1, 8, 8>}]} {
    %c0 = arith.constant 0 : index
    %c0_0 = arith.constant 0 : index
    %c0_1 = arith.constant 0 : index
    %0 = vector.load %arg1[%c0, %c0_0, %c0_1] : memref<1x8x32xf32, #tpu.memory_space<vmem>>, vector<1x8x32xf32>
    %1 = vector.shape_cast %0 : vector<1x8x32xf32> to vector<8x32xf32>
    %c0_2 = arith.constant 0 : index
    %c0_3 = arith.constant 0 : index
    %2 = vector.load %arg2[%c0_2, %c0_3] : memref<32x32xf32, #tpu.memory_space<vmem>>, vector<32x32xf32>
    %cst = arith.constant dense<0.000000e+00> : vector<8x32xf32>
    %3 = tpu.matmul %1, %2, %cst {dimension_numbers = #tpu.dot_dimension_numbers<[1], [0], [0], [1], [0, 0, 1, 1], [], []>} : vector<8x32xf32>, vector<32x32xf32>, vector<8x32xf32> -> vector<8x32xf32>
    %c0_4 = arith.constant 0 : index
    %c0_5 = arith.constant 0 : index
    %4 = vector.load %arg3[%c0_4, %c0_5] : memref<1x32xf32, #tpu.memory_space<vmem>>, vector<1x32xf32>
    %5 = vector.broadcast %4 : vector<1x32xf32> to vector<8x32xf32>
    %6 = arith.addf %3, %5 : vector<8x32xf32>
    %c0_6 = arith.constant 0 : index
    %c0_7 = arith.constant 0 : index
    %c0_8 = arith.constant 0 : index
    %7 = vector.load %arg4[%c0_6, %c0_7, %c0_8] : memref<1x8x32xf32, #tpu.memory_space<vmem>>, vector<1x8x32xf32>
    %8 = vector.shape_cast %7 : vector<1x8x32xf32> to vector<8x32xf32>
    %cst_9 = arith.constant dense<0.000000e+00> : vector<8x8xf32>
    %9 = tpu.matmul %6, %8, %cst_9 {dimension_numbers = #tpu.dot_dimension_numbers<[1], [1], [0], [0], [0, 0, 1, 0], [], []>} : vector<8x32xf32>, vector<8x32xf32>, vector<8x8xf32> -> vector<8x8xf32>
    %cst_10 = arith.constant dense<0xFF800000> : vector<8xf32>
    %10 = vector.multi_reduction <maximumf>, %9, %cst_10 [1] : vector<8x8xf32> to vector<8xf32>
    %11 = vector.shape_cast %10 : vector<8xf32> to vector<8x1xf32>
    %12 = vector.broadcast %11 : vector<8x1xf32> to vector<8x8xf32>
    %13 = arith.subf %9, %12 : vector<8x8xf32>
    %14 = math.exp %13 : vector<8x8xf32>
    %cst_11 = arith.constant dense<0.000000e+00> : vector<8xf32>
    %15 = vector.multi_reduction <add>, %14, %cst_11 [1] : vector<8x8xf32> to vector<8xf32>
    %16 = vector.shape_cast %15 : vector<8xf32> to vector<8x1xf32>
    %17 = vector.broadcast %16 : vector<8x1xf32> to vector<8x8xf32>
    %18 = arith.divf %14, %17 : vector<8x8xf32>
    %c0_12 = arith.constant 0 : index
    %c0_13 = arith.constant 0 : index
    %c0_14 = arith.constant 0 : index
    %19 = vector.load %arg5[%c0_12, %c0_13, %c0_14] : memref<1x8x8xf32, #tpu.memory_space<vmem>>, vector<1x8x8xf32>
    %20 = vector.shape_cast %19 : vector<1x8x8xf32> to vector<8x8xf32>
    %21 = vector.shape_cast %18 : vector<8x8xf32> to vector<1x8x8xf32>
    tpu.vector_store %arg5[%c0_12, %c0_13, %c0_14], %21 {strides = array<i32>} : memref<1x8x8xf32, #tpu.memory_space<vmem>>, vector<1x8x8xf32>,
    return
  }
  func.func @transform_0(%arg0: i32) -> (i32, i32, i32) {
    %c0_i32 = arith.constant 0 : i32
    %c0_i32_0 = arith.constant 0 : i32
    %c0_i32_1 = arith.constant 0 : i32
    return %arg0, %c0_i32, %c0_i32_0 : i32, i32, i32
  }
  func.func @transform_1(%arg0: i32) -> (i32, i32) {
    %c0_i32 = arith.constant 0 : i32
    %c0_i32_0 = arith.constant 0 : i32
    %c0_i32_1 = arith.constant 0 : i32
    return %c0_i32, %c0_i32_0 : i32, i32
  }
  func.func @transform_2(%arg0: i32) -> (i32, i32) {
    %c0_i32 = arith.constant 0 : i32
    %c0_i32_0 = arith.constant 0 : i32
    %c0_i32_1 = arith.constant 0 : i32
    return %c0_i32, %c0_i32_0 : i32, i32
  }
  func.func @transform_3(%arg0: i32) -> (i32, i32, i32) {
    %c0_i32 = arith.constant 0 : i32
    %c0_i32_0 = arith.constant 0 : i32
    %c0_i32_1 = arith.constant 0 : i32
    return %arg0, %c0_i32, %c0_i32_0 : i32, i32, i32
  }
  func.func @transform_4(%arg0: i32) -> (i32, i32, i32) {
    %c0_i32 = arith.constant 0 : i32
    %c0_i32_0 = arith.constant 0 : i32
    %c0_i32_1 = arith.constant 0 : i32
    return %arg0, %c0_i32, %c0_i32_0 : i32, i32, i32
  }
}

module attributes {stable_mosaic.version = 11 : i64} {
  func.func @_decoder_layer_kernel(%arg0: i32, %arg1: memref<1x8x32xf32, #tpu.memory_space<vmem>>, %arg2: memref<1x8x32xf32, #tpu.memory_space<vmem>>, %arg3: memref<1x8x8xf32, #tpu.memory_space<vmem>>, %arg4: memref<1x1x8xf32, #tpu.memory_space<vmem>>, %arg5: memref<32x96xf32, #tpu.memory_space<vmem>>, %arg6: memref<1x96xf32, #tpu.memory_space<vmem>>, %arg7: memref<32x32xf32, #tpu.memory_space<vmem>>, %arg8: memref<1x32xf32, #tpu.memory_space<vmem>>, %arg9: memref<1x32xf32, #tpu.memory_space<vmem>>, %arg10: memref<1x32xf32, #tpu.memory_space<vmem>>, %arg11: memref<32x32xf32, #tpu.memory_space<vmem>>, %arg12: memref<1x32xf32, #tpu.memory_space<vmem>>, %arg13: memref<32x64xf32, #tpu.memory_space<vmem>>, %arg14: memref<1x64xf32, #tpu.memory_space<vmem>>, %arg15: memref<32x32xf32, #tpu.memory_space<vmem>>, %arg16: memref<1x32xf32, #tpu.memory_space<vmem>>, %arg17: memref<1x32xf32, #tpu.memory_space<vmem>>, %arg18: memref<1x32xf32, #tpu.memory_space<vmem>>, %arg19: memref<32x64xf32, #tpu.memory_space<vmem>>, %arg20: memref<1x64xf32, #tpu.memory_space<vmem>>, %arg21: memref<64x32xf32, #tpu.memory_space<vmem>>, %arg22: memref<1x32xf32, #tpu.memory_space<vmem>>, %arg23: memref<1x32xf32, #tpu.memory_space<vmem>>, %arg24: memref<1x32xf32, #tpu.memory_space<vmem>>, %arg25: memref<1x8x32xf32, #tpu.memory_space<vmem>>) attributes {dimension_semantics = [#tpu.dimension_semantics<parallel>], iteration_bounds = array<i64: 2>, scalar_prefetch = 0 : i64, scratch_operands = 0 : i64, tpu.core_type = #tpu.core_type<tc>, window_params = [{transform_indices = @transform_0, window_bounds = array<i64: 1, 8, 32>}, {transform_indices = @transform_1, window_bounds = array<i64: 1, 8, 32>}, {pipeline_mode = #tpu.pipeline_mode<synchronous>, transform_indices = @transform_2, window_bounds = array<i64: 1, 8, 8>}, {transform_indices = @transform_3, window_bounds = array<i64: 1, 1, 8>}, {pipeline_mode = #tpu.pipeline_mode<synchronous>, transform_indices = @transform_4, window_bounds = array<i64: 32, 96>}, {pipeline_mode = #tpu.pipeline_mode<synchronous>, transform_indices = @transform_5, window_bounds = array<i64: 1, 96>}, {pipeline_mode = #tpu.pipeline_mode<synchronous>, transform_indices = @transform_6, window_bounds = array<i64: 32, 32>}, {pipeline_mode = #tpu.pipeline_mode<synchronous>, transform_indices = @transform_7, window_bounds = array<i64: 1, 32>}, {pipeline_mode = #tpu.pipeline_mode<synchronous>, transform_indices = @transform_8, window_bounds = array<i64: 1, 32>}, {pipeline_mode = #tpu.pipeline_mode<synchronous>, transform_indices = @transform_9, window_bounds = array<i64: 1, 32>}, {pipeline_mode = #tpu.pipeline_mode<synchronous>, transform_indices = @transform_10, window_bounds = array<i64: 32, 32>}, {pipeline_mode = #tpu.pipeline_mode<synchronous>, transform_indices = @transform_11, window_bounds = array<i64: 1, 32>}, {pipeline_mode = #tpu.pipeline_mode<synchronous>, transform_indices = @transform_12, window_bounds = array<i64: 32, 64>}, {pipeline_mode = #tpu.pipeline_mode<synchronous>, transform_indices = @transform_13, window_bounds = array<i64: 1, 64>}, {pipeline_mode = #tpu.pipeline_mode<synchronous>, transform_indices = @transform_14, window_bounds = array<i64: 32, 32>}, {pipeline_mode = #tpu.pipeline_mode<synchronous>, transform_indices = @transform_15, window_bounds = array<i64: 1, 32>}, {pipeline_mode = #tpu.pipeline_mode<synchronous>, transform_indices = @transform_16, window_bounds = array<i64: 1, 32>}, {pipeline_mode = #tpu.pipeline_mode<synchronous>, transform_indices = @transform_17, window_bounds = array<i64: 1, 32>}, {pipeline_mode = #tpu.pipeline_mode<synchronous>, transform_indices = @transform_18, window_bounds = array<i64: 32, 64>}, {pipeline_mode = #tpu.pipeline_mode<synchronous>, transform_indices = @transform_19, window_bounds = array<i64: 1, 64>}, {pipeline_mode = #tpu.pipeline_mode<synchronous>, transform_indices = @transform_20, window_bounds = array<i64: 64, 32>}, {pipeline_mode = #tpu.pipeline_mode<synchronous>, transform_indices = @transform_21, window_bounds = array<i64: 1, 32>}, {pipeline_mode = #tpu.pipeline_mode<synchronous>, transform_indices = @transform_22, window_bounds = array<i64: 1, 32>}, {pipeline_mode = #tpu.pipeline_mode<synchronous>, transform_indices = @transform_23, window_bounds = array<i64: 1, 32>}, {transform_indices = @transform_24, window_bounds = array<i64: 1, 8, 32>}]} {
    %c0 = arith.constant 0 : index
    %c0_0 = arith.constant 0 : index
    %c0_1 = arith.constant 0 : index
    %0 = vector.load %arg1[%c0, %c0_0, %c0_1] : memref<1x8x32xf32, #tpu.memory_space<vmem>>, vector<1x8x32xf32>
    %1 = vector.shape_cast %0 : vector<1x8x32xf32> to vector<8x32xf32>
    %c0_2 = arith.constant 0 : index
    %c0_3 = arith.constant 0 : index
    %c0_4 = arith.constant 0 : index
    %2 = vector.load %arg2[%c0_2, %c0_3, %c0_4] : memref<1x8x32xf32, #tpu.memory_space<vmem>>, vector<1x8x32xf32>
    %3 = vector.shape_cast %2 : vector<1x8x32xf32> to vector<8x32xf32>
    %c0_5 = arith.constant 0 : index
    %c0_6 = arith.constant 0 : index
    %4 = vector.load %arg5[%c0_5, %c0_6] : memref<32x96xf32, #tpu.memory_space<vmem>>, vector<32x96xf32>
    %cst = arith.constant dense<0.000000e+00> : vector<8x96xf32>
    %5 = tpu.matmul %1, %4, %cst {dimension_numbers = #tpu.dot_dimension_numbers<[1], [0], [0], [1], [0, 0, 1, 1], [], []>} : vector<8x32xf32>, vector<32x96xf32>, vector<8x96xf32> -> vector<8x96xf32>
    %c0_7 = arith.constant 0 : index
    %c0_8 = arith.constant 0 : index
    %6 = vector.load %arg6[%c0_7, %c0_8] : memref<1x96xf32, #tpu.memory_space<vmem>>, vector<1x96xf32>
    %7 = vector.broadcast %6 : vector<1x96xf32> to vector<8x96xf32>
    %8 = arith.addf %5, %7 : vector<8x96xf32>
    %9 = vector.extract_strided_slice %8 {offsets = [0, 0], sizes = [8, 32], strides = [1, 1]} : vector<8x96xf32> to vector<8x32xf32>
    %10 = vector.extract_strided_slice %8 {offsets = [0, 32], sizes = [8, 32], strides = [1, 1]} : vector<8x96xf32> to vector<8x32xf32>
    %11 = vector.extract_strided_slice %8 {offsets = [0, 64], sizes = [8, 32], strides = [1, 1]} : vector<8x96xf32> to vector<8x32xf32>
    %c0_9 = arith.constant 0 : index
    %c0_10 = arith.constant 0 : index
    %c0_11 = arith.constant 0 : index
    %12 = vector.load %arg3[%c0_9, %c0_10, %c0_11] : memref<1x8x8xf32, #tpu.memory_space<vmem>>, vector<1x8x8xf32>
    %13 = vector.shape_cast %12 : vector<1x8x8xf32> to vector<8x8xf32>
    %c0_12 = arith.constant 0 : index
    %c0_13 = arith.constant 0 : index
    %14 = vector.load %arg7[%c0_12, %c0_13] : memref<32x32xf32, #tpu.memory_space<vmem>>, vector<32x32xf32>
    %c0_14 = arith.constant 0 : index
    %c0_15 = arith.constant 0 : index
    %15 = vector.load %arg8[%c0_14, %c0_15] : memref<1x32xf32, #tpu.memory_space<vmem>>, vector<1x32xf32>
    %cst_16 = arith.constant 0.000000e+00 : f32
    %16 = vector.broadcast %cst_16 : f32 to vector<8x32xf32>
    %17 = vector.extract_strided_slice %9 {offsets = [0, 0], sizes = [8, 8], strides = [1, 1]} : vector<8x32xf32> to vector<8x8xf32>
    %18 = vector.extract_strided_slice %10 {offsets = [0, 0], sizes = [8, 8], strides = [1, 1]} : vector<8x32xf32> to vector<8x8xf32>
    %cst_17 = arith.constant dense<0.000000e+00> : vector<8x8xf32>
    %19 = tpu.matmul %17, %18, %cst_17 {dimension_numbers = #tpu.dot_dimension_numbers<[1], [1], [0], [0], [0, 0, 1, 0], [], []>} : vector<8x8xf32>, vector<8x8xf32>, vector<8x8xf32> -> vector<8x8xf32>
    %20 = arith.addf %19, %13 : vector<8x8xf32>
    %cst_18 = arith.constant dense<0xFF800000> : vector<8xf32>
    %21 = vector.multi_reduction <maximumf>, %20, %cst_18 [1] : vector<8x8xf32> to vector<8xf32>
    %22 = vector.shape_cast %21 : vector<8xf32> to vector<8x1xf32>
    %23 = vector.broadcast %22 : vector<8x1xf32> to vector<8x8xf32>
    %24 = arith.subf %20, %23 : vector<8x8xf32>
    %25 = math.exp %24 : vector<8x8xf32>
    %cst_19 = arith.constant dense<0.000000e+00> : vector<8xf32>
    %26 = vector.multi_reduction <add>, %25, %cst_19 [1] : vector<8x8xf32> to vector<8xf32>
    %27 = vector.shape_cast %26 : vector<8xf32> to vector<8x1xf32>
    %28 = tpu.reciprocal %27 {approx = true} : vector<8x1xf32> -> vector<8x1xf32>
    %29 = vector.broadcast %28 : vector<8x1xf32> to vector<8x8xf32>
    %30 = arith.mulf %25, %29 : vector<8x8xf32>
    %31 = vector.extract_strided_slice %11 {offsets = [0, 0], sizes = [8, 8], strides = [1, 1]} : vector<8x32xf32> to vector<8x8xf32>
    %cst_20 = arith.constant dense<0.000000e+00> : vector<8x8xf32>
    %32 = tpu.matmul %30, %31, %cst_20 {dimension_numbers = #tpu.dot_dimension_numbers<[1], [0], [0], [1], [0, 0, 1, 1], [], []>} : vector<8x8xf32>, vector<8x8xf32>, vector<8x8xf32> -> vector<8x8xf32>
    %33 = vector.extract_strided_slice %14 {offsets = [0, 0], sizes = [8, 32], strides = [1, 1]} : vector<32x32xf32> to vector<8x32xf32>
    %cst_21 = arith.constant dense<0.000000e+00> : vector<8x32xf32>
    %34 = tpu.matmul %32, %33, %cst_21 {dimension_numbers = #tpu.dot_dimension_numbers<[1], [0], [0], [1], [0, 0, 1, 1], [], []>} : vector<8x8xf32>, vector<8x32xf32>, vector<8x32xf32> -> vector<8x32xf32>
    %35 = arith.addf %16, %34 : vector<8x32xf32>
    %36 = vector.extract_strided_slice %9 {offsets = [0, 8], sizes = [8, 8], strides = [1, 1]} : vector<8x32xf32> to vector<8x8xf32>
    %37 = vector.extract_strided_slice %10 {offsets = [0, 8], sizes = [8, 8], strides = [1, 1]} : vector<8x32xf32> to vector<8x8xf32>
    %cst_22 = arith.constant dense<0.000000e+00> : vector<8x8xf32>
    %38 = tpu.matmul %36, %37, %cst_22 {dimension_numbers = #tpu.dot_dimension_numbers<[1], [1], [0], [0], [0, 0, 1, 0], [], []>} : vector<8x8xf32>, vector<8x8xf32>, vector<8x8xf32> -> vector<8x8xf32>
    %39 = arith.addf %38, %13 : vector<8x8xf32>
    %cst_23 = arith.constant dense<0xFF800000> : vector<8xf32>
    %40 = vector.multi_reduction <maximumf>, %39, %cst_23 [1] : vector<8x8xf32> to vector<8xf32>
    %41 = vector.shape_cast %40 : vector<8xf32> to vector<8x1xf32>
    %42 = vector.broadcast %41 : vector<8x1xf32> to vector<8x8xf32>
    %43 = arith.subf %39, %42 : vector<8x8xf32>
    %44 = math.exp %43 : vector<8x8xf32>
    %cst_24 = arith.constant dense<0.000000e+00> : vector<8xf32>
    %45 = vector.multi_reduction <add>, %44, %cst_24 [1] : vector<8x8xf32> to vector<8xf32>
    %46 = vector.shape_cast %45 : vector<8xf32> to vector<8x1xf32>
    %47 = tpu.reciprocal %46 {approx = true} : vector<8x1xf32> -> vector<8x1xf32>
    %48 = vector.broadcast %47 : vector<8x1xf32> to vector<8x8xf32>
    %49 = arith.mulf %44, %48 : vector<8x8xf32>
    %50 = vector.extract_strided_slice %11 {offsets = [0, 8], sizes = [8, 8], strides = [1, 1]} : vector<8x32xf32> to vector<8x8xf32>
    %cst_25 = arith.constant dense<0.000000e+00> : vector<8x8xf32>
    %51 = tpu.matmul %49, %50, %cst_25 {dimension_numbers = #tpu.dot_dimension_numbers<[1], [0], [0], [1], [0, 0, 1, 1], [], []>} : vector<8x8xf32>, vector<8x8xf32>, vector<8x8xf32> -> vector<8x8xf32>
    %52 = vector.extract_strided_slice %14 {offsets = [8, 0], sizes = [8, 32], strides = [1, 1]} : vector<32x32xf32> to vector<8x32xf32>
    %cst_26 = arith.constant dense<0.000000e+00> : vector<8x32xf32>
    %53 = tpu.matmul %51, %52, %cst_26 {dimension_numbers = #tpu.dot_dimension_numbers<[1], [0], [0], [1], [0, 0, 1, 1], [], []>} : vector<8x8xf32>, vector<8x32xf32>, vector<8x32xf32> -> vector<8x32xf32>
    %54 = arith.addf %35, %53 : vector<8x32xf32>
    %55 = vector.extract_strided_slice %9 {offsets = [0, 16], sizes = [8, 8], strides = [1, 1]} : vector<8x32xf32> to vector<8x8xf32>
    %56 = vector.extract_strided_slice %10 {offsets = [0, 16], sizes = [8, 8], strides = [1, 1]} : vector<8x32xf32> to vector<8x8xf32>
    %cst_27 = arith.constant dense<0.000000e+00> : vector<8x8xf32>
    %57 = tpu.matmul %55, %56, %cst_27 {dimension_numbers = #tpu.dot_dimension_numbers<[1], [1], [0], [0], [0, 0, 1, 0], [], []>} : vector<8x8xf32>, vector<8x8xf32>, vector<8x8xf32> -> vector<8x8xf32>
    %58 = arith.addf %57, %13 : vector<8x8xf32>
    %cst_28 = arith.constant dense<0xFF800000> : vector<8xf32>
    %59 = vector.multi_reduction <maximumf>, %58, %cst_28 [1] : vector<8x8xf32> to vector<8xf32>
    %60 = vector.shape_cast %59 : vector<8xf32> to vector<8x1xf32>
    %61 = vector.broadcast %60 : vector<8x1xf32> to vector<8x8xf32>
    %62 = arith.subf %58, %61 : vector<8x8xf32>
    %63 = math.exp %62 : vector<8x8xf32>
    %cst_29 = arith.constant dense<0.000000e+00> : vector<8xf32>
    %64 = vector.multi_reduction <add>, %63, %cst_29 [1] : vector<8x8xf32> to vector<8xf32>
    %65 = vector.shape_cast %64 : vector<8xf32> to vector<8x1xf32>
    %66 = tpu.reciprocal %65 {approx = true} : vector<8x1xf32> -> vector<8x1xf32>
    %67 = vector.broadcast %66 : vector<8x1xf32> to vector<8x8xf32>
    %68 = arith.mulf %63, %67 : vector<8x8xf32>
    %69 = vector.extract_strided_slice %11 {offsets = [0, 16], sizes = [8, 8], strides = [1, 1]} : vector<8x32xf32> to vector<8x8xf32>
    %cst_30 = arith.constant dense<0.000000e+00> : vector<8x8xf32>
    %70 = tpu.matmul %68, %69, %cst_30 {dimension_numbers = #tpu.dot_dimension_numbers<[1], [0], [0], [1], [0, 0, 1, 1], [], []>} : vector<8x8xf32>, vector<8x8xf32>, vector<8x8xf32> -> vector<8x8xf32>
    %71 = vector.extract_strided_slice %14 {offsets = [16, 0], sizes = [8, 32], strides = [1, 1]} : vector<32x32xf32> to vector<8x32xf32>
    %cst_31 = arith.constant dense<0.000000e+00> : vector<8x32xf32>
    %72 = tpu.matmul %70, %71, %cst_31 {dimension_numbers = #tpu.dot_dimension_numbers<[1], [0], [0], [1], [0, 0, 1, 1], [], []>} : vector<8x8xf32>, vector<8x32xf32>, vector<8x32xf32> -> vector<8x32xf32>
    %73 = arith.addf %54, %72 : vector<8x32xf32>
    %74 = vector.extract_strided_slice %9 {offsets = [0, 24], sizes = [8, 8], strides = [1, 1]} : vector<8x32xf32> to vector<8x8xf32>
    %75 = vector.extract_strided_slice %10 {offsets = [0, 24], sizes = [8, 8], strides = [1, 1]} : vector<8x32xf32> to vector<8x8xf32>
    %cst_32 = arith.constant dense<0.000000e+00> : vector<8x8xf32>
    %76 = tpu.matmul %74, %75, %cst_32 {dimension_numbers = #tpu.dot_dimension_numbers<[1], [1], [0], [0], [0, 0, 1, 0], [], []>} : vector<8x8xf32>, vector<8x8xf32>, vector<8x8xf32> -> vector<8x8xf32>
    %77 = arith.addf %76, %13 : vector<8x8xf32>
    %cst_33 = arith.constant dense<0xFF800000> : vector<8xf32>
    %78 = vector.multi_reduction <maximumf>, %77, %cst_33 [1] : vector<8x8xf32> to vector<8xf32>
    %79 = vector.shape_cast %78 : vector<8xf32> to vector<8x1xf32>
    %80 = vector.broadcast %79 : vector<8x1xf32> to vector<8x8xf32>
    %81 = arith.subf %77, %80 : vector<8x8xf32>
    %82 = math.exp %81 : vector<8x8xf32>
    %cst_34 = arith.constant dense<0.000000e+00> : vector<8xf32>
    %83 = vector.multi_reduction <add>, %82, %cst_34 [1] : vector<8x8xf32> to vector<8xf32>
    %84 = vector.shape_cast %83 : vector<8xf32> to vector<8x1xf32>
    %85 = tpu.reciprocal %84 {approx = true} : vector<8x1xf32> -> vector<8x1xf32>
    %86 = vector.broadcast %85 : vector<8x1xf32> to vector<8x8xf32>
    %87 = arith.mulf %82, %86 : vector<8x8xf32>
    %88 = vector.extract_strided_slice %11 {offsets = [0, 24], sizes = [8, 8], strides = [1, 1]} : vector<8x32xf32> to vector<8x8xf32>
    %cst_35 = arith.constant dense<0.000000e+00> : vector<8x8xf32>
    %89 = tpu.matmul %87, %88, %cst_35 {dimension_numbers = #tpu.dot_dimension_numbers<[1], [0], [0], [1], [0, 0, 1, 1], [], []>} : vector<8x8xf32>, vector<8x8xf32>, vector<8x8xf32> -> vector<8x8xf32>
    %90 = vector.extract_strided_slice %14 {offsets = [24, 0], sizes = [8, 32], strides = [1, 1]} : vector<32x32xf32> to vector<8x32xf32>
    %cst_36 = arith.constant dense<0.000000e+00> : vector<8x32xf32>
    %91 = tpu.matmul %89, %90, %cst_36 {dimension_numbers = #tpu.dot_dimension_numbers<[1], [0], [0], [1], [0, 0, 1, 1], [], []>} : vector<8x8xf32>, vector<8x32xf32>, vector<8x32xf32> -> vector<8x32xf32>
    %92 = arith.addf %73, %91 : vector<8x32xf32>
    %93 = vector.broadcast %15 : vector<1x32xf32> to vector<8x32xf32>
    %94 = arith.addf %92, %93 : vector<8x32xf32>
    %95 = arith.addf %1, %94 : vector<8x32xf32>
    %c0_37 = arith.constant 0 : index
    %c0_38 = arith.constant 0 : index
    %96 = vector.load %arg9[%c0_37, %c0_38] : memref<1x32xf32, #tpu.memory_space<vmem>>, vector<1x32xf32>
    %c0_39 = arith.constant 0 : index
    %c0_40 = arith.constant 0 : index
    %97 = vector.load %arg10[%c0_39, %c0_40] : memref<1x32xf32, #tpu.memory_space<vmem>>, vector<1x32xf32>
    %cst_41 = arith.constant dense<0.000000e+00> : vector<8xf32>
    %98 = vector.multi_reduction <add>, %95, %cst_41 [1] : vector<8x32xf32> to vector<8xf32>
    %99 = vector.shape_cast %98 : vector<8xf32> to vector<8x1xf32>
    %cst_42 = arith.constant 3.200000e+01 : f32
    %100 = vector.broadcast %cst_42 : f32 to vector<8x1xf32>
    %101 = arith.divf %99, %100 : vector<8x1xf32>
    %102 = vector.broadcast %101 : vector<8x1xf32> to vector<8x32xf32>
    %103 = arith.subf %95, %102 : vector<8x32xf32>
    %104 = arith.mulf %103, %103 : vector<8x32xf32>
    %cst_43 = arith.constant dense<0.000000e+00> : vector<8xf32>
    %105 = vector.multi_reduction <add>, %104, %cst_43 [1] : vector<8x32xf32> to vector<8xf32>
    %106 = vector.shape_cast %105 : vector<8xf32> to vector<8x1xf32>
    %cst_44 = arith.constant 3.200000e+01 : f32
    %107 = vector.broadcast %cst_44 : f32 to vector<8x1xf32>
    %108 = arith.divf %106, %107 : vector<8x1xf32>
    %cst_45 = arith.constant 9.99999974E-6 : f32
    %109 = vector.broadcast %cst_45 : f32 to vector<8x1xf32>
    %110 = arith.addf %108, %109 : vector<8x1xf32>
    %111 = math.rsqrt %110 : vector<8x1xf32>
    %112 = vector.broadcast %111 : vector<8x1xf32> to vector<8x32xf32>
    %113 = arith.mulf %103, %112 : vector<8x32xf32>
    %114 = vector.broadcast %96 : vector<1x32xf32> to vector<8x32xf32>
    %115 = arith.mulf %113, %114 : vector<8x32xf32>
    %116 = vector.broadcast %97 : vector<1x32xf32> to vector<8x32xf32>
    %117 = arith.addf %115, %116 : vector<8x32xf32>
    %c0_46 = arith.constant 0 : index
    %c0_47 = arith.constant 0 : index
    %118 = vector.load %arg11[%c0_46, %c0_47] : memref<32x32xf32, #tpu.memory_space<vmem>>, vector<32x32xf32>
    %cst_48 = arith.constant dense<0.000000e+00> : vector<8x32xf32>
    %119 = tpu.matmul %117, %118, %cst_48 {dimension_numbers = #tpu.dot_dimension_numbers<[1], [0], [0], [1], [0, 0, 1, 1], [], []>} : vector<8x32xf32>, vector<32x32xf32>, vector<8x32xf32> -> vector<8x32xf32>
    %c0_49 = arith.constant 0 : index
    %c0_50 = arith.constant 0 : index
    %120 = vector.load %arg12[%c0_49, %c0_50] : memref<1x32xf32, #tpu.memory_space<vmem>>, vector<1x32xf32>
    %121 = vector.broadcast %120 : vector<1x32xf32> to vector<8x32xf32>
    %122 = arith.addf %119, %121 : vector<8x32xf32>
    %c0_51 = arith.constant 0 : index
    %c0_52 = arith.constant 0 : index
    %123 = vector.load %arg13[%c0_51, %c0_52] : memref<32x64xf32, #tpu.memory_space<vmem>>, vector<32x64xf32>
    %cst_53 = arith.constant dense<0.000000e+00> : vector<8x64xf32>
    %124 = tpu.matmul %3, %123, %cst_53 {dimension_numbers = #tpu.dot_dimension_numbers<[1], [0], [0], [1], [0, 0, 1, 1], [], []>} : vector<8x32xf32>, vector<32x64xf32>, vector<8x64xf32> -> vector<8x64xf32>
    %c0_54 = arith.constant 0 : index
    %c0_55 = arith.constant 0 : index
    %125 = vector.load %arg14[%c0_54, %c0_55] : memref<1x64xf32, #tpu.memory_space<vmem>>, vector<1x64xf32>
    %126 = vector.broadcast %125 : vector<1x64xf32> to vector<8x64xf32>
    %127 = arith.addf %124, %126 : vector<8x64xf32>
    %128 = vector.extract_strided_slice %127 {offsets = [0, 0], sizes = [8, 32], strides = [1, 1]} : vector<8x64xf32> to vector<8x32xf32>
    %129 = vector.extract_strided_slice %127 {offsets = [0, 32], sizes = [8, 32], strides = [1, 1]} : vector<8x64xf32> to vector<8x32xf32>
    %c0_56 = arith.constant 0 : index
    %c0_57 = arith.constant 0 : index
    %c0_58 = arith.constant 0 : index
    %130 = vector.load %arg4[%c0_56, %c0_57, %c0_58] : memref<1x1x8xf32, #tpu.memory_space<vmem>>, vector<1x1x8xf32>
    %131 = vector.shape_cast %130 : vector<1x1x8xf32> to vector<1x8xf32>
    %c0_59 = arith.constant 0 : index
    %c0_60 = arith.constant 0 : index
    %132 = vector.load %arg15[%c0_59, %c0_60] : memref<32x32xf32, #tpu.memory_space<vmem>>, vector<32x32xf32>
    %c0_61 = arith.constant 0 : index
    %c0_62 = arith.constant 0 : index
    %133 = vector.load %arg16[%c0_61, %c0_62] : memref<1x32xf32, #tpu.memory_space<vmem>>, vector<1x32xf32>
    %cst_63 = arith.constant 0.000000e+00 : f32
    %134 = vector.broadcast %cst_63 : f32 to vector<8x32xf32>
    %135 = vector.extract_strided_slice %122 {offsets = [0, 0], sizes = [8, 8], strides = [1, 1]} : vector<8x32xf32> to vector<8x8xf32>
    %136 = vector.extract_strided_slice %128 {offsets = [0, 0], sizes = [8, 8], strides = [1, 1]} : vector<8x32xf32> to vector<8x8xf32>
    %cst_64 = arith.constant dense<0.000000e+00> : vector<8x8xf32>
    %137 = tpu.matmul %135, %136, %cst_64 {dimension_numbers = #tpu.dot_dimension_numbers<[1], [1], [0], [0], [0, 0, 1, 0], [], []>} : vector<8x8xf32>, vector<8x8xf32>, vector<8x8xf32> -> vector<8x8xf32>
    %138 = vector.broadcast %131 : vector<1x8xf32> to vector<8x8xf32>
    %139 = arith.addf %137, %138 : vector<8x8xf32>
    %cst_65 = arith.constant dense<0xFF800000> : vector<8xf32>
    %140 = vector.multi_reduction <maximumf>, %139, %cst_65 [1] : vector<8x8xf32> to vector<8xf32>
    %141 = vector.shape_cast %140 : vector<8xf32> to vector<8x1xf32>
    %142 = vector.broadcast %141 : vector<8x1xf32> to vector<8x8xf32>
    %143 = arith.subf %139, %142 : vector<8x8xf32>
    %144 = math.exp %143 : vector<8x8xf32>
    %cst_66 = arith.constant dense<0.000000e+00> : vector<8xf32>
    %145 = vector.multi_reduction <add>, %144, %cst_66 [1] : vector<8x8xf32> to vector<8xf32>
    %146 = vector.shape_cast %145 : vector<8xf32> to vector<8x1xf32>
    %147 = tpu.reciprocal %146 {approx = true} : vector<8x1xf32> -> vector<8x1xf32>
    %148 = vector.broadcast %147 : vector<8x1xf32> to vector<8x8xf32>
    %149 = arith.mulf %144, %148 : vector<8x8xf32>
    %150 = vector.extract_strided_slice %129 {offsets = [0, 0], sizes = [8, 8], strides = [1, 1]} : vector<8x32xf32> to vector<8x8xf32>
    %cst_67 = arith.constant dense<0.000000e+00> : vector<8x8xf32>
    %151 = tpu.matmul %149, %150, %cst_67 {dimension_numbers = #tpu.dot_dimension_numbers<[1], [0], [0], [1], [0, 0, 1, 1], [], []>} : vector<8x8xf32>, vector<8x8xf32>, vector<8x8xf32> -> vector<8x8xf32>
    %152 = vector.extract_strided_slice %132 {offsets = [0, 0], sizes = [8, 32], strides = [1, 1]} : vector<32x32xf32> to vector<8x32xf32>
    %cst_68 = arith.constant dense<0.000000e+00> : vector<8x32xf32>
    %153 = tpu.matmul %151, %152, %cst_68 {dimension_numbers = #tpu.dot_dimension_numbers<[1], [0], [0], [1], [0, 0, 1, 1], [], []>} : vector<8x8xf32>, vector<8x32xf32>, vector<8x32xf32> -> vector<8x32xf32>
    %154 = arith.addf %134, %153 : vector<8x32xf32>
    %155 = vector.extract_strided_slice %122 {offsets = [0, 8], sizes = [8, 8], strides = [1, 1]} : vector<8x32xf32> to vector<8x8xf32>
    %156 = vector.extract_strided_slice %128 {offsets = [0, 8], sizes = [8, 8], strides = [1, 1]} : vector<8x32xf32> to vector<8x8xf32>
    %cst_69 = arith.constant dense<0.000000e+00> : vector<8x8xf32>
    %157 = tpu.matmul %155, %156, %cst_69 {dimension_numbers = #tpu.dot_dimension_numbers<[1], [1], [0], [0], [0, 0, 1, 0], [], []>} : vector<8x8xf32>, vector<8x8xf32>, vector<8x8xf32> -> vector<8x8xf32>
    %158 = vector.broadcast %131 : vector<1x8xf32> to vector<8x8xf32>
    %159 = arith.addf %157, %158 : vector<8x8xf32>
    %cst_70 = arith.constant dense<0xFF800000> : vector<8xf32>
    %160 = vector.multi_reduction <maximumf>, %159, %cst_70 [1] : vector<8x8xf32> to vector<8xf32>
    %161 = vector.shape_cast %160 : vector<8xf32> to vector<8x1xf32>
    %162 = vector.broadcast %161 : vector<8x1xf32> to vector<8x8xf32>
    %163 = arith.subf %159, %162 : vector<8x8xf32>
    %164 = math.exp %163 : vector<8x8xf32>
    %cst_71 = arith.constant dense<0.000000e+00> : vector<8xf32>
    %165 = vector.multi_reduction <add>, %164, %cst_71 [1] : vector<8x8xf32> to vector<8xf32>
    %166 = vector.shape_cast %165 : vector<8xf32> to vector<8x1xf32>
    %167 = tpu.reciprocal %166 {approx = true} : vector<8x1xf32> -> vector<8x1xf32>
    %168 = vector.broadcast %167 : vector<8x1xf32> to vector<8x8xf32>
    %169 = arith.mulf %164, %168 : vector<8x8xf32>
    %170 = vector.extract_strided_slice %129 {offsets = [0, 8], sizes = [8, 8], strides = [1, 1]} : vector<8x32xf32> to vector<8x8xf32>
    %cst_72 = arith.constant dense<0.000000e+00> : vector<8x8xf32>
    %171 = tpu.matmul %169, %170, %cst_72 {dimension_numbers = #tpu.dot_dimension_numbers<[1], [0], [0], [1], [0, 0, 1, 1], [], []>} : vector<8x8xf32>, vector<8x8xf32>, vector<8x8xf32> -> vector<8x8xf32>
    %172 = vector.extract_strided_slice %132 {offsets = [8, 0], sizes = [8, 32], strides = [1, 1]} : vector<32x32xf32> to vector<8x32xf32>
    %cst_73 = arith.constant dense<0.000000e+00> : vector<8x32xf32>
    %173 = tpu.matmul %171, %172, %cst_73 {dimension_numbers = #tpu.dot_dimension_numbers<[1], [0], [0], [1], [0, 0, 1, 1], [], []>} : vector<8x8xf32>, vector<8x32xf32>, vector<8x32xf32> -> vector<8x32xf32>
    %174 = arith.addf %154, %173 : vector<8x32xf32>
    %175 = vector.extract_strided_slice %122 {offsets = [0, 16], sizes = [8, 8], strides = [1, 1]} : vector<8x32xf32> to vector<8x8xf32>
    %176 = vector.extract_strided_slice %128 {offsets = [0, 16], sizes = [8, 8], strides = [1, 1]} : vector<8x32xf32> to vector<8x8xf32>
    %cst_74 = arith.constant dense<0.000000e+00> : vector<8x8xf32>
    %177 = tpu.matmul %175, %176, %cst_74 {dimension_numbers = #tpu.dot_dimension_numbers<[1], [1], [0], [0], [0, 0, 1, 0], [], []>} : vector<8x8xf32>, vector<8x8xf32>, vector<8x8xf32> -> vector<8x8xf32>
    %178 = vector.broadcast %131 : vector<1x8xf32> to vector<8x8xf32>
    %179 = arith.addf %177, %178 : vector<8x8xf32>
    %cst_75 = arith.constant dense<0xFF800000> : vector<8xf32>
    %180 = vector.multi_reduction <maximumf>, %179, %cst_75 [1] : vector<8x8xf32> to vector<8xf32>
    %181 = vector.shape_cast %180 : vector<8xf32> to vector<8x1xf32>
    %182 = vector.broadcast %181 : vector<8x1xf32> to vector<8x8xf32>
    %183 = arith.subf %179, %182 : vector<8x8xf32>
    %184 = math.exp %183 : vector<8x8xf32>
    %cst_76 = arith.constant dense<0.000000e+00> : vector<8xf32>
    %185 = vector.multi_reduction <add>, %184, %cst_76 [1] : vector<8x8xf32> to vector<8xf32>
    %186 = vector.shape_cast %185 : vector<8xf32> to vector<8x1xf32>
    %187 = tpu.reciprocal %186 {approx = true} : vector<8x1xf32> -> vector<8x1xf32>
    %188 = vector.broadcast %187 : vector<8x1xf32> to vector<8x8xf32>
    %189 = arith.mulf %184, %188 : vector<8x8xf32>
    %190 = vector.extract_strided_slice %129 {offsets = [0, 16], sizes = [8, 8], strides = [1, 1]} : vector<8x32xf32> to vector<8x8xf32>
    %cst_77 = arith.constant dense<0.000000e+00> : vector<8x8xf32>
    %191 = tpu.matmul %189, %190, %cst_77 {dimension_numbers = #tpu.dot_dimension_numbers<[1], [0], [0], [1], [0, 0, 1, 1], [], []>} : vector<8x8xf32>, vector<8x8xf32>, vector<8x8xf32> -> vector<8x8xf32>
    %192 = vector.extract_strided_slice %132 {offsets = [16, 0], sizes = [8, 32], strides = [1, 1]} : vector<32x32xf32> to vector<8x32xf32>
    %cst_78 = arith.constant dense<0.000000e+00> : vector<8x32xf32>
    %193 = tpu.matmul %191, %192, %cst_78 {dimension_numbers = #tpu.dot_dimension_numbers<[1], [0], [0], [1], [0, 0, 1, 1], [], []>} : vector<8x8xf32>, vector<8x32xf32>, vector<8x32xf32> -> vector<8x32xf32>
    %194 = arith.addf %174, %193 : vector<8x32xf32>
    %195 = vector.extract_strided_slice %122 {offsets = [0, 24], sizes = [8, 8], strides = [1, 1]} : vector<8x32xf32> to vector<8x8xf32>
    %196 = vector.extract_strided_slice %128 {offsets = [0, 24], sizes = [8, 8], strides = [1, 1]} : vector<8x32xf32> to vector<8x8xf32>
    %cst_79 = arith.constant dense<0.000000e+00> : vector<8x8xf32>
    %197 = tpu.matmul %195, %196, %cst_79 {dimension_numbers = #tpu.dot_dimension_numbers<[1], [1], [0], [0], [0, 0, 1, 0], [], []>} : vector<8x8xf32>, vector<8x8xf32>, vector<8x8xf32> -> vector<8x8xf32>
    %198 = vector.broadcast %131 : vector<1x8xf32> to vector<8x8xf32>
    %199 = arith.addf %197, %198 : vector<8x8xf32>
    %cst_80 = arith.constant dense<0xFF800000> : vector<8xf32>
    %200 = vector.multi_reduction <maximumf>, %199, %cst_80 [1] : vector<8x8xf32> to vector<8xf32>
    %201 = vector.shape_cast %200 : vector<8xf32> to vector<8x1xf32>
    %202 = vector.broadcast %201 : vector<8x1xf32> to vector<8x8xf32>
    %203 = arith.subf %199, %202 : vector<8x8xf32>
    %204 = math.exp %203 : vector<8x8xf32>
    %cst_81 = arith.constant dense<0.000000e+00> : vector<8xf32>
    %205 = vector.multi_reduction <add>, %204, %cst_81 [1] : vector<8x8xf32> to vector<8xf32>
    %206 = vector.shape_cast %205 : vector<8xf32> to vector<8x1xf32>
    %207 = tpu.reciprocal %206 {approx = true} : vector<8x1xf32> -> vector<8x1xf32>
    %208 = vector.broadcast %207 : vector<8x1xf32> to vector<8x8xf32>
    %209 = arith.mulf %204, %208 : vector<8x8xf32>
    %210 = vector.extract_strided_slice %129 {offsets = [0, 24], sizes = [8, 8], strides = [1, 1]} : vector<8x32xf32> to vector<8x8xf32>
    %cst_82 = arith.constant dense<0.000000e+00> : vector<8x8xf32>
    %211 = tpu.matmul %209, %210, %cst_82 {dimension_numbers = #tpu.dot_dimension_numbers<[1], [0], [0], [1], [0, 0, 1, 1], [], []>} : vector<8x8xf32>, vector<8x8xf32>, vector<8x8xf32> -> vector<8x8xf32>
    %212 = vector.extract_strided_slice %132 {offsets = [24, 0], sizes = [8, 32], strides = [1, 1]} : vector<32x32xf32> to vector<8x32xf32>
    %cst_83 = arith.constant dense<0.000000e+00> : vector<8x32xf32>
    %213 = tpu.matmul %211, %212, %cst_83 {dimension_numbers = #tpu.dot_dimension_numbers<[1], [0], [0], [1], [0, 0, 1, 1], [], []>} : vector<8x8xf32>, vector<8x32xf32>, vector<8x32xf32> -> vector<8x32xf32>
    %214 = arith.addf %194, %213 : vector<8x32xf32>
    %215 = vector.broadcast %133 : vector<1x32xf32> to vector<8x32xf32>
    %216 = arith.addf %214, %215 : vector<8x32xf32>
    %217 = arith.addf %117, %216 : vector<8x32xf32>
    %c0_84 = arith.constant 0 : index
    %c0_85 = arith.constant 0 : index
    %218 = vector.load %arg17[%c0_84, %c0_85] : memref<1x32xf32, #tpu.memory_space<vmem>>, vector<1x32xf32>
    %c0_86 = arith.constant 0 : index
    %c0_87 = arith.constant 0 : index
    %219 = vector.load %arg18[%c0_86, %c0_87] : memref<1x32xf32, #tpu.memory_space<vmem>>, vector<1x32xf32>
    %cst_88 = arith.constant dense<0.000000e+00> : vector<8xf32>
    %220 = vector.multi_reduction <add>, %217, %cst_88 [1] : vector<8x32xf32> to vector<8xf32>
    %221 = vector.shape_cast %220 : vector<8xf32> to vector<8x1xf32>
    %cst_89 = arith.constant 3.200000e+01 : f32
    %222 = vector.broadcast %cst_89 : f32 to vector<8x1xf32>
    %223 = arith.divf %221, %222 : vector<8x1xf32>
    %224 = vector.broadcast %223 : vector<8x1xf32> to vector<8x32xf32>
    %225 = arith.subf %217, %224 : vector<8x32xf32>
    %226 = arith.mulf %225, %225 : vector<8x32xf32>
    %cst_90 = arith.constant dense<0.000000e+00> : vector<8xf32>
    %227 = vector.multi_reduction <add>, %226, %cst_90 [1] : vector<8x32xf32> to vector<8xf32>
    %228 = vector.shape_cast %227 : vector<8xf32> to vector<8x1xf32>
    %cst_91 = arith.constant 3.200000e+01 : f32
    %229 = vector.broadcast %cst_91 : f32 to vector<8x1xf32>
    %230 = arith.divf %228, %229 : vector<8x1xf32>
    %cst_92 = arith.constant 9.99999974E-6 : f32
    %231 = vector.broadcast %cst_92 : f32 to vector<8x1xf32>
    %232 = arith.addf %230, %231 : vector<8x1xf32>
    %233 = math.rsqrt %232 : vector<8x1xf32>
    %234 = vector.broadcast %233 : vector<8x1xf32> to vector<8x32xf32>
    %235 = arith.mulf %225, %234 : vector<8x32xf32>
    %236 = vector.broadcast %218 : vector<1x32xf32> to vector<8x32xf32>
    %237 = arith.mulf %235, %236 : vector<8x32xf32>
    %238 = vector.broadcast %219 : vector<1x32xf32> to vector<8x32xf32>
    %239 = arith.addf %237, %238 : vector<8x32xf32>
    %c0_93 = arith.constant 0 : index
    %c0_94 = arith.constant 0 : index
    %240 = vector.load %arg19[%c0_93, %c0_94] : memref<32x64xf32, #tpu.memory_space<vmem>>, vector<32x64xf32>
    %cst_95 = arith.constant dense<0.000000e+00> : vector<8x64xf32>
    %241 = tpu.matmul %239, %240, %cst_95 {dimension_numbers = #tpu.dot_dimension_numbers<[1], [0], [0], [1], [0, 0, 1, 1], [], []>} : vector<8x32xf32>, vector<32x64xf32>, vector<8x64xf32> -> vector<8x64xf32>
    %c0_96 = arith.constant 0 : index
    %c0_97 = arith.constant 0 : index
    %242 = vector.load %arg20[%c0_96, %c0_97] : memref<1x64xf32, #tpu.memory_space<vmem>>, vector<1x64xf32>
    %243 = vector.broadcast %242 : vector<1x64xf32> to vector<8x64xf32>
    %244 = arith.addf %241, %243 : vector<8x64xf32>
    %cst_98 = arith.constant 0.000000e+00 : f32
    %245 = vector.broadcast %cst_98 : f32 to vector<8x64xf32>
    %246 = arith.maximumf %244, %245 : vector<8x64xf32>
    %c0_99 = arith.constant 0 : index
    %c0_100 = arith.constant 0 : index
    %247 = vector.load %arg21[%c0_99, %c0_100] : memref<64x32xf32, #tpu.memory_space<vmem>>, vector<64x32xf32>
    %cst_101 = arith.constant dense<0.000000e+00> : vector<8x32xf32>
    %248 = tpu.matmul %246, %247, %cst_101 {dimension_numbers = #tpu.dot_dimension_numbers<[1], [0], [0], [1], [0, 0, 1, 1], [], []>} : vector<8x64xf32>, vector<64x32xf32>, vector<8x32xf32> -> vector<8x32xf32>
    %c0_102 = arith.constant 0 : index
    %c0_103 = arith.constant 0 : index
    %249 = vector.load %arg22[%c0_102, %c0_103] : memref<1x32xf32, #tpu.memory_space<vmem>>, vector<1x32xf32>
    %250 = vector.broadcast %249 : vector<1x32xf32> to vector<8x32xf32>
    %251 = arith.addf %248, %250 : vector<8x32xf32>
    %252 = arith.addf %239, %251 : vector<8x32xf32>
    %c0_104 = arith.constant 0 : index
    %c0_105 = arith.constant 0 : index
    %253 = vector.load %arg23[%c0_104, %c0_105] : memref<1x32xf32, #tpu.memory_space<vmem>>, vector<1x32xf32>
    %c0_106 = arith.constant 0 : index
    %c0_107 = arith.constant 0 : index
    %254 = vector.load %arg24[%c0_106, %c0_107] : memref<1x32xf32, #tpu.memory_space<vmem>>, vector<1x32xf32>
    %cst_108 = arith.constant dense<0.000000e+00> : vector<8xf32>
    %255 = vector.multi_reduction <add>, %252, %cst_108 [1] : vector<8x32xf32> to vector<8xf32>
    %256 = vector.shape_cast %255 : vector<8xf32> to vector<8x1xf32>
    %cst_109 = arith.constant 3.200000e+01 : f32
    %257 = vector.broadcast %cst_109 : f32 to vector<8x1xf32>
    %258 = arith.divf %256, %257 : vector<8x1xf32>
    %259 = vector.broadcast %258 : vector<8x1xf32> to vector<8x32xf32>
    %260 = arith.subf %252, %259 : vector<8x32xf32>
    %261 = arith.mulf %260, %260 : vector<8x32xf32>
    %cst_110 = arith.constant dense<0.000000e+00> : vector<8xf32>
    %262 = vector.multi_reduction <add>, %261, %cst_110 [1] : vector<8x32xf32> to vector<8xf32>
    %263 = vector.shape_cast %262 : vector<8xf32> to vector<8x1xf32>
    %cst_111 = arith.constant 3.200000e+01 : f32
    %264 = vector.broadcast %cst_111 : f32 to vector<8x1xf32>
    %265 = arith.divf %263, %264 : vector<8x1xf32>
    %cst_112 = arith.constant 9.99999974E-6 : f32
    %266 = vector.broadcast %cst_112 : f32 to vector<8x1xf32>
    %267 = arith.addf %265, %266 : vector<8x1xf32>
    %268 = math.rsqrt %267 : vector<8x1xf32>
    %269 = vector.broadcast %268 : vector<8x1xf32> to vector<8x32xf32>
    %270 = arith.mulf %260, %269 : vector<8x32xf32>
    %271 = vector.broadcast %253 : vector<1x32xf32> to vector<8x32xf32>
    %272 = arith.mulf %270, %271 : vector<8x32xf32>
    %273 = vector.broadcast %254 : vector<1x32xf32> to vector<8x32xf32>
    %274 = arith.addf %272, %273 : vector<8x32xf32>
    %c0_113 = arith.constant 0 : index
    %c0_114 = arith.constant 0 : index
    %c0_115 = arith.constant 0 : index
    %275 = vector.load %arg25[%c0_113, %c0_114, %c0_115] : memref<1x8x32xf32, #tpu.memory_space<vmem>>, vector<1x8x32xf32>
    %276 = vector.shape_cast %275 : vector<1x8x32xf32> to vector<8x32xf32>
    %277 = vector.shape_cast %274 : vector<8x32xf32> to vector<1x8x32xf32>
    tpu.vector_store %arg25[%c0_113, %c0_114, %c0_115], %277 {strides = array<i32>} : memref<1x8x32xf32, #tpu.memory_space<vmem>>, vector<1x8x32xf32>,
    return
  }
  func.func @transform_0(%arg0: i32) -> (i32, i32, i32) {
    %c0_i32 = arith.constant 0 : i32
    %c0_i32_0 = arith.constant 0 : i32
    %c0_i32_1 = arith.constant 0 : i32
    return %arg0, %c0_i32, %c0_i32_0 : i32, i32, i32
  }
  func.func @transform_1(%arg0: i32) -> (i32, i32, i32) {
    %c0_i32 = arith.constant 0 : i32
    %c0_i32_0 = arith.constant 0 : i32
    %c0_i32_1 = arith.constant 0 : i32
    return %arg0, %c0_i32, %c0_i32_0 : i32, i32, i32
  }
  func.func @transform_2(%arg0: i32) -> (i32, i32, i32) {
    %c0_i32 = arith.constant 0 : i32
    %c0_i32_0 = arith.constant 0 : i32
    %c0_i32_1 = arith.constant 0 : i32
    %c0_i32_2 = arith.constant 0 : i32
    return %c0_i32, %c0_i32_0, %c0_i32_1 : i32, i32, i32
  }
  func.func @transform_3(%arg0: i32) -> (i32, i32, i32) {
    %c0_i32 = arith.constant 0 : i32
    %c0_i32_0 = arith.constant 0 : i32
    %c0_i32_1 = arith.constant 0 : i32
    return %arg0, %c0_i32, %c0_i32_0 : i32, i32, i32
  }
  func.func @transform_4(%arg0: i32) -> (i32, i32) {
    %c0_i32 = arith.constant 0 : i32
    %c0_i32_0 = arith.constant 0 : i32
    %c0_i32_1 = arith.constant 0 : i32
    return %c0_i32, %c0_i32_0 : i32, i32
  }
  func.func @transform_5(%arg0: i32) -> (i32, i32) {
    %c0_i32 = arith.constant 0 : i32
    %c0_i32_0 = arith.constant 0 : i32
    %c0_i32_1 = arith.constant 0 : i32
    return %c0_i32, %c0_i32_0 : i32, i32
  }
  func.func @transform_6(%arg0: i32) -> (i32, i32) {
    %c0_i32 = arith.constant 0 : i32
    %c0_i32_0 = arith.constant 0 : i32
    %c0_i32_1 = arith.constant 0 : i32
    return %c0_i32, %c0_i32_0 : i32, i32
  }
  func.func @transform_7(%arg0: i32) -> (i32, i32) {
    %c0_i32 = arith.constant 0 : i32
    %c0_i32_0 = arith.constant 0 : i32
    %c0_i32_1 = arith.constant 0 : i32
    return %c0_i32, %c0_i32_0 : i32, i32
  }
  func.func @transform_8(%arg0: i32) -> (i32, i32) {
    %c0_i32 = arith.constant 0 : i32
    %c0_i32_0 = arith.constant 0 : i32
    %c0_i32_1 = arith.constant 0 : i32
    return %c0_i32, %c0_i32_0 : i32, i32
  }
  func.func @transform_9(%arg0: i32) -> (i32, i32) {
    %c0_i32 = arith.constant 0 : i32
    %c0_i32_0 = arith.constant 0 : i32
    %c0_i32_1 = arith.constant 0 : i32
    return %c0_i32, %c0_i32_0 : i32, i32
  }
  func.func @transform_10(%arg0: i32) -> (i32, i32) {
    %c0_i32 = arith.constant 0 : i32
    %c0_i32_0 = arith.constant 0 : i32
    %c0_i32_1 = arith.constant 0 : i32
    return %c0_i32, %c0_i32_0 : i32, i32
  }
  func.func @transform_11(%arg0: i32) -> (i32, i32) {
    %c0_i32 = arith.constant 0 : i32
    %c0_i32_0 = arith.constant 0 : i32
    %c0_i32_1 = arith.constant 0 : i32
    return %c0_i32, %c0_i32_0 : i32, i32
  }
  func.func @transform_12(%arg0: i32) -> (i32, i32) {
    %c0_i32 = arith.constant 0 : i32
    %c0_i32_0 = arith.constant 0 : i32
    %c0_i32_1 = arith.constant 0 : i32
    return %c0_i32, %c0_i32_0 : i32, i32
  }
  func.func @transform_13(%arg0: i32) -> (i32, i32) {
    %c0_i32 = arith.constant 0 : i32
    %c0_i32_0 = arith.constant 0 : i32
    %c0_i32_1 = arith.constant 0 : i32
    return %c0_i32, %c0_i32_0 : i32, i32
  }
  func.func @transform_14(%arg0: i32) -> (i32, i32) {
    %c0_i32 = arith.constant 0 : i32
    %c0_i32_0 = arith.constant 0 : i32
    %c0_i32_1 = arith.constant 0 : i32
    return %c0_i32, %c0_i32_0 : i32, i32
  }
  func.func @transform_15(%arg0: i32) -> (i32, i32) {
    %c0_i32 = arith.constant 0 : i32
    %c0_i32_0 = arith.constant 0 : i32
    %c0_i32_1 = arith.constant 0 : i32
    return %c0_i32, %c0_i32_0 : i32, i32
  }
  func.func @transform_16(%arg0: i32) -> (i32, i32) {
    %c0_i32 = arith.constant 0 : i32
    %c0_i32_0 = arith.constant 0 : i32
    %c0_i32_1 = arith.constant 0 : i32
    return %c0_i32, %c0_i32_0 : i32, i32
  }
  func.func @transform_17(%arg0: i32) -> (i32, i32) {
    %c0_i32 = arith.constant 0 : i32
    %c0_i32_0 = arith.constant 0 : i32
    %c0_i32_1 = arith.constant 0 : i32
    return %c0_i32, %c0_i32_0 : i32, i32
  }
  func.func @transform_18(%arg0: i32) -> (i32, i32) {
    %c0_i32 = arith.constant 0 : i32
    %c0_i32_0 = arith.constant 0 : i32
    %c0_i32_1 = arith.constant 0 : i32
    return %c0_i32, %c0_i32_0 : i32, i32
  }
  func.func @transform_19(%arg0: i32) -> (i32, i32) {
    %c0_i32 = arith.constant 0 : i32
    %c0_i32_0 = arith.constant 0 : i32
    %c0_i32_1 = arith.constant 0 : i32
    return %c0_i32, %c0_i32_0 : i32, i32
  }
  func.func @transform_20(%arg0: i32) -> (i32, i32) {
    %c0_i32 = arith.constant 0 : i32
    %c0_i32_0 = arith.constant 0 : i32
    %c0_i32_1 = arith.constant 0 : i32
    return %c0_i32, %c0_i32_0 : i32, i32
  }
  func.func @transform_21(%arg0: i32) -> (i32, i32) {
    %c0_i32 = arith.constant 0 : i32
    %c0_i32_0 = arith.constant 0 : i32
    %c0_i32_1 = arith.constant 0 : i32
    return %c0_i32, %c0_i32_0 : i32, i32
  }
  func.func @transform_22(%arg0: i32) -> (i32, i32) {
    %c0_i32 = arith.constant 0 : i32
    %c0_i32_0 = arith.constant 0 : i32
    %c0_i32_1 = arith.constant 0 : i32
    return %c0_i32, %c0_i32_0 : i32, i32
  }
  func.func @transform_23(%arg0: i32) -> (i32, i32) {
    %c0_i32 = arith.constant 0 : i32
    %c0_i32_0 = arith.constant 0 : i32
    %c0_i32_1 = arith.constant 0 : i32
    return %c0_i32, %c0_i32_0 : i32, i32
  }
  func.func @transform_24(%arg0: i32) -> (i32, i32, i32) {
    %c0_i32 = arith.constant 0 : i32
    %c0_i32_0 = arith.constant 0 : i32
    %c0_i32_1 = arith.constant 0 : i32
    return %arg0, %c0_i32, %c0_i32_0 : i32, i32, i32
  }
}

module attributes {stable_mosaic.version = 11 : i64} {
  func.func @_decoder_layer_kernel(%arg0: i32, %arg1: memref<1x8x32xf32, #tpu.memory_space<vmem>>, %arg2: memref<1x8x32xf32, #tpu.memory_space<vmem>>, %arg3: memref<1x8x8xf32, #tpu.memory_space<vmem>>, %arg4: memref<1x1x8xf32, #tpu.memory_space<vmem>>, %arg5: memref<32x96xf32, #tpu.memory_space<vmem>>, %arg6: memref<1x96xf32, #tpu.memory_space<vmem>>, %arg7: memref<32x32xf32, #tpu.memory_space<vmem>>, %arg8: memref<1x32xf32, #tpu.memory_space<vmem>>, %arg9: memref<1x32xf32, #tpu.memory_space<vmem>>, %arg10: memref<1x32xf32, #tpu.memory_space<vmem>>, %arg11: memref<32x32xf32, #tpu.memory_space<vmem>>, %arg12: memref<1x32xf32, #tpu.memory_space<vmem>>, %arg13: memref<32x64xf32, #tpu.memory_space<vmem>>, %arg14: memref<1x64xf32, #tpu.memory_space<vmem>>, %arg15: memref<32x32xf32, #tpu.memory_space<vmem>>, %arg16: memref<1x32xf32, #tpu.memory_space<vmem>>, %arg17: memref<1x32xf32, #tpu.memory_space<vmem>>, %arg18: memref<1x32xf32, #tpu.memory_space<vmem>>, %arg19: memref<32x64xf32, #tpu.memory_space<vmem>>, %arg20: memref<1x64xf32, #tpu.memory_space<vmem>>, %arg21: memref<64x32xf32, #tpu.memory_space<vmem>>, %arg22: memref<1x32xf32, #tpu.memory_space<vmem>>, %arg23: memref<1x32xf32, #tpu.memory_space<vmem>>, %arg24: memref<1x32xf32, #tpu.memory_space<vmem>>, %arg25: memref<1x8x32xf32, #tpu.memory_space<vmem>>) attributes {dimension_semantics = [#tpu.dimension_semantics<parallel>], iteration_bounds = array<i64: 2>, scalar_prefetch = 0 : i64, scratch_operands = 0 : i64, tpu.core_type = #tpu.core_type<tc>, window_params = [{transform_indices = @transform_0, window_bounds = array<i64: 1, 8, 32>}, {transform_indices = @transform_1, window_bounds = array<i64: 1, 8, 32>}, {pipeline_mode = #tpu.pipeline_mode<synchronous>, transform_indices = @transform_2, window_bounds = array<i64: 1, 8, 8>}, {transform_indices = @transform_3, window_bounds = array<i64: 1, 1, 8>}, {pipeline_mode = #tpu.pipeline_mode<synchronous>, transform_indices = @transform_4, window_bounds = array<i64: 32, 96>}, {pipeline_mode = #tpu.pipeline_mode<synchronous>, transform_indices = @transform_5, window_bounds = array<i64: 1, 96>}, {pipeline_mode = #tpu.pipeline_mode<synchronous>, transform_indices = @transform_6, window_bounds = array<i64: 32, 32>}, {pipeline_mode = #tpu.pipeline_mode<synchronous>, transform_indices = @transform_7, window_bounds = array<i64: 1, 32>}, {pipeline_mode = #tpu.pipeline_mode<synchronous>, transform_indices = @transform_8, window_bounds = array<i64: 1, 32>}, {pipeline_mode = #tpu.pipeline_mode<synchronous>, transform_indices = @transform_9, window_bounds = array<i64: 1, 32>}, {pipeline_mode = #tpu.pipeline_mode<synchronous>, transform_indices = @transform_10, window_bounds = array<i64: 32, 32>}, {pipeline_mode = #tpu.pipeline_mode<synchronous>, transform_indices = @transform_11, window_bounds = array<i64: 1, 32>}, {pipeline_mode = #tpu.pipeline_mode<synchronous>, transform_indices = @transform_12, window_bounds = array<i64: 32, 64>}, {pipeline_mode = #tpu.pipeline_mode<synchronous>, transform_indices = @transform_13, window_bounds = array<i64: 1, 64>}, {pipeline_mode = #tpu.pipeline_mode<synchronous>, transform_indices = @transform_14, window_bounds = array<i64: 32, 32>}, {pipeline_mode = #tpu.pipeline_mode<synchronous>, transform_indices = @transform_15, window_bounds = array<i64: 1, 32>}, {pipeline_mode = #tpu.pipeline_mode<synchronous>, transform_indices = @transform_16, window_bounds = array<i64: 1, 32>}, {pipeline_mode = #tpu.pipeline_mode<synchronous>, transform_indices = @transform_17, window_bounds = array<i64: 1, 32>}, {pipeline_mode = #tpu.pipeline_mode<synchronous>, transform_indices = @transform_18, window_bounds = array<i64: 32, 64>}, {pipeline_mode = #tpu.pipeline_mode<synchronous>, transform_indices = @transform_19, window_bounds = array<i64: 1, 64>}, {pipeline_mode = #tpu.pipeline_mode<synchronous>, transform_indices = @transform_20, window_bounds = array<i64: 64, 32>}, {pipeline_mode = #tpu.pipeline_mode<synchronous>, transform_indices = @transform_21, window_bounds = array<i64: 1, 32>}, {pipeline_mode = #tpu.pipeline_mode<synchronous>, transform_indices = @transform_22, window_bounds = array<i64: 1, 32>}, {pipeline_mode = #tpu.pipeline_mode<synchronous>, transform_indices = @transform_23, window_bounds = array<i64: 1, 32>}, {transform_indices = @transform_24, window_bounds = array<i64: 1, 8, 32>}]} {
    %c0 = arith.constant 0 : index
    %c0_0 = arith.constant 0 : index
    %c0_1 = arith.constant 0 : index
    %0 = vector.load %arg1[%c0, %c0_0, %c0_1] : memref<1x8x32xf32, #tpu.memory_space<vmem>>, vector<1x8x32xf32>
    %1 = vector.shape_cast %0 : vector<1x8x32xf32> to vector<8x32xf32>
    %c0_2 = arith.constant 0 : index
    %c0_3 = arith.constant 0 : index
    %c0_4 = arith.constant 0 : index
    %2 = vector.load %arg2[%c0_2, %c0_3, %c0_4] : memref<1x8x32xf32, #tpu.memory_space<vmem>>, vector<1x8x32xf32>
    %3 = vector.shape_cast %2 : vector<1x8x32xf32> to vector<8x32xf32>
    %c0_5 = arith.constant 0 : index
    %c0_6 = arith.constant 0 : index
    %4 = vector.load %arg5[%c0_5, %c0_6] : memref<32x96xf32, #tpu.memory_space<vmem>>, vector<32x96xf32>
    %cst = arith.constant dense<0.000000e+00> : vector<8x96xf32>
    %5 = tpu.matmul %1, %4, %cst {dimension_numbers = #tpu.dot_dimension_numbers<[1], [0], [0], [1], [0, 0, 1, 1], [], []>} : vector<8x32xf32>, vector<32x96xf32>, vector<8x96xf32> -> vector<8x96xf32>
    %c0_7 = arith.constant 0 : index
    %c0_8 = arith.constant 0 : index
    %6 = vector.load %arg6[%c0_7, %c0_8] : memref<1x96xf32, #tpu.memory_space<vmem>>, vector<1x96xf32>
    %7 = vector.broadcast %6 : vector<1x96xf32> to vector<8x96xf32>
    %8 = arith.addf %5, %7 : vector<8x96xf32>
    %9 = vector.extract_strided_slice %8 {offsets = [0, 0], sizes = [8, 32], strides = [1, 1]} : vector<8x96xf32> to vector<8x32xf32>
    %10 = vector.extract_strided_slice %8 {offsets = [0, 32], sizes = [8, 32], strides = [1, 1]} : vector<8x96xf32> to vector<8x32xf32>
    %11 = vector.extract_strided_slice %8 {offsets = [0, 64], sizes = [8, 32], strides = [1, 1]} : vector<8x96xf32> to vector<8x32xf32>
    %c0_9 = arith.constant 0 : index
    %c0_10 = arith.constant 0 : index
    %c0_11 = arith.constant 0 : index
    %12 = vector.load %arg3[%c0_9, %c0_10, %c0_11] : memref<1x8x8xf32, #tpu.memory_space<vmem>>, vector<1x8x8xf32>
    %13 = vector.shape_cast %12 : vector<1x8x8xf32> to vector<8x8xf32>
    %c0_12 = arith.constant 0 : index
    %c0_13 = arith.constant 0 : index
    %14 = vector.load %arg7[%c0_12, %c0_13] : memref<32x32xf32, #tpu.memory_space<vmem>>, vector<32x32xf32>
    %c0_14 = arith.constant 0 : index
    %c0_15 = arith.constant 0 : index
    %15 = vector.load %arg8[%c0_14, %c0_15] : memref<1x32xf32, #tpu.memory_space<vmem>>, vector<1x32xf32>
    %cst_16 = arith.constant 0.000000e+00 : f32
    %16 = vector.broadcast %cst_16 : f32 to vector<8x32xf32>
    %17 = vector.extract_strided_slice %9 {offsets = [0, 0], sizes = [8, 8], strides = [1, 1]} : vector<8x32xf32> to vector<8x8xf32>
    %18 = vector.extract_strided_slice %10 {offsets = [0, 0], sizes = [8, 8], strides = [1, 1]} : vector<8x32xf32> to vector<8x8xf32>
    %cst_17 = arith.constant dense<0.000000e+00> : vector<8x8xf32>
    %19 = tpu.matmul %17, %18, %cst_17 {dimension_numbers = #tpu.dot_dimension_numbers<[1], [1], [0], [0], [0, 0, 1, 0], [], []>} : vector<8x8xf32>, vector<8x8xf32>, vector<8x8xf32> -> vector<8x8xf32>
    %20 = arith.addf %19, %13 : vector<8x8xf32>
    %cst_18 = arith.constant dense<0xFF800000> : vector<8xf32>
    %21 = vector.multi_reduction <maximumf>, %20, %cst_18 [1] : vector<8x8xf32> to vector<8xf32>
    %22 = vector.shape_cast %21 : vector<8xf32> to vector<8x1xf32>
    %23 = vector.broadcast %22 : vector<8x1xf32> to vector<8x8xf32>
    %24 = arith.subf %20, %23 : vector<8x8xf32>
    %25 = math.exp %24 : vector<8x8xf32>
    %cst_19 = arith.constant dense<0.000000e+00> : vector<8xf32>
    %26 = vector.multi_reduction <add>, %25, %cst_19 [1] : vector<8x8xf32> to vector<8xf32>
    %27 = vector.shape_cast %26 : vector<8xf32> to vector<8x1xf32>
    %28 = tpu.reciprocal %27 {approx = true} : vector<8x1xf32> -> vector<8x1xf32>
    %29 = vector.broadcast %28 : vector<8x1xf32> to vector<8x8xf32>
    %30 = arith.mulf %25, %29 : vector<8x8xf32>
    %31 = vector.extract_strided_slice %11 {offsets = [0, 0], sizes = [8, 8], strides = [1, 1]} : vector<8x32xf32> to vector<8x8xf32>
    %cst_20 = arith.constant dense<0.000000e+00> : vector<8x8xf32>
    %32 = tpu.matmul %30, %31, %cst_20 {dimension_numbers = #tpu.dot_dimension_numbers<[1], [0], [0], [1], [0, 0, 1, 1], [], []>} : vector<8x8xf32>, vector<8x8xf32>, vector<8x8xf32> -> vector<8x8xf32>
    %33 = vector.extract_strided_slice %14 {offsets = [0, 0], sizes = [8, 32], strides = [1, 1]} : vector<32x32xf32> to vector<8x32xf32>
    %cst_21 = arith.constant dense<0.000000e+00> : vector<8x32xf32>
    %34 = tpu.matmul %32, %33, %cst_21 {dimension_numbers = #tpu.dot_dimension_numbers<[1], [0], [0], [1], [0, 0, 1, 1], [], []>} : vector<8x8xf32>, vector<8x32xf32>, vector<8x32xf32> -> vector<8x32xf32>
    %35 = arith.addf %16, %34 : vector<8x32xf32>
    %36 = vector.extract_strided_slice %9 {offsets = [0, 8], sizes = [8, 8], strides = [1, 1]} : vector<8x32xf32> to vector<8x8xf32>
    %37 = vector.extract_strided_slice %10 {offsets = [0, 8], sizes = [8, 8], strides = [1, 1]} : vector<8x32xf32> to vector<8x8xf32>
    %cst_22 = arith.constant dense<0.000000e+00> : vector<8x8xf32>
    %38 = tpu.matmul %36, %37, %cst_22 {dimension_numbers = #tpu.dot_dimension_numbers<[1], [1], [0], [0], [0, 0, 1, 0], [], []>} : vector<8x8xf32>, vector<8x8xf32>, vector<8x8xf32> -> vector<8x8xf32>
    %39 = arith.addf %38, %13 : vector<8x8xf32>
    %cst_23 = arith.constant dense<0xFF800000> : vector<8xf32>
    %40 = vector.multi_reduction <maximumf>, %39, %cst_23 [1] : vector<8x8xf32> to vector<8xf32>
    %41 = vector.shape_cast %40 : vector<8xf32> to vector<8x1xf32>
    %42 = vector.broadcast %41 : vector<8x1xf32> to vector<8x8xf32>
    %43 = arith.subf %39, %42 : vector<8x8xf32>
    %44 = math.exp %43 : vector<8x8xf32>
    %cst_24 = arith.constant dense<0.000000e+00> : vector<8xf32>
    %45 = vector.multi_reduction <add>, %44, %cst_24 [1] : vector<8x8xf32> to vector<8xf32>
    %46 = vector.shape_cast %45 : vector<8xf32> to vector<8x1xf32>
    %47 = tpu.reciprocal %46 {approx = true} : vector<8x1xf32> -> vector<8x1xf32>
    %48 = vector.broadcast %47 : vector<8x1xf32> to vector<8x8xf32>
    %49 = arith.mulf %44, %48 : vector<8x8xf32>
    %50 = vector.extract_strided_slice %11 {offsets = [0, 8], sizes = [8, 8], strides = [1, 1]} : vector<8x32xf32> to vector<8x8xf32>
    %cst_25 = arith.constant dense<0.000000e+00> : vector<8x8xf32>
    %51 = tpu.matmul %49, %50, %cst_25 {dimension_numbers = #tpu.dot_dimension_numbers<[1], [0], [0], [1], [0, 0, 1, 1], [], []>} : vector<8x8xf32>, vector<8x8xf32>, vector<8x8xf32> -> vector<8x8xf32>
    %52 = vector.extract_strided_slice %14 {offsets = [8, 0], sizes = [8, 32], strides = [1, 1]} : vector<32x32xf32> to vector<8x32xf32>
    %cst_26 = arith.constant dense<0.000000e+00> : vector<8x32xf32>
    %53 = tpu.matmul %51, %52, %cst_26 {dimension_numbers = #tpu.dot_dimension_numbers<[1], [0], [0], [1], [0, 0, 1, 1], [], []>} : vector<8x8xf32>, vector<8x32xf32>, vector<8x32xf32> -> vector<8x32xf32>
    %54 = arith.addf %35, %53 : vector<8x32xf32>
    %55 = vector.extract_strided_slice %9 {offsets = [0, 16], sizes = [8, 8], strides = [1, 1]} : vector<8x32xf32> to vector<8x8xf32>
    %56 = vector.extract_strided_slice %10 {offsets = [0, 16], sizes = [8, 8], strides = [1, 1]} : vector<8x32xf32> to vector<8x8xf32>
    %cst_27 = arith.constant dense<0.000000e+00> : vector<8x8xf32>
    %57 = tpu.matmul %55, %56, %cst_27 {dimension_numbers = #tpu.dot_dimension_numbers<[1], [1], [0], [0], [0, 0, 1, 0], [], []>} : vector<8x8xf32>, vector<8x8xf32>, vector<8x8xf32> -> vector<8x8xf32>
    %58 = arith.addf %57, %13 : vector<8x8xf32>
    %cst_28 = arith.constant dense<0xFF800000> : vector<8xf32>
    %59 = vector.multi_reduction <maximumf>, %58, %cst_28 [1] : vector<8x8xf32> to vector<8xf32>
    %60 = vector.shape_cast %59 : vector<8xf32> to vector<8x1xf32>
    %61 = vector.broadcast %60 : vector<8x1xf32> to vector<8x8xf32>
    %62 = arith.subf %58, %61 : vector<8x8xf32>
    %63 = math.exp %62 : vector<8x8xf32>
    %cst_29 = arith.constant dense<0.000000e+00> : vector<8xf32>
    %64 = vector.multi_reduction <add>, %63, %cst_29 [1] : vector<8x8xf32> to vector<8xf32>
    %65 = vector.shape_cast %64 : vector<8xf32> to vector<8x1xf32>
    %66 = tpu.reciprocal %65 {approx = true} : vector<8x1xf32> -> vector<8x1xf32>
    %67 = vector.broadcast %66 : vector<8x1xf32> to vector<8x8xf32>
    %68 = arith.mulf %63, %67 : vector<8x8xf32>
    %69 = vector.extract_strided_slice %11 {offsets = [0, 16], sizes = [8, 8], strides = [1, 1]} : vector<8x32xf32> to vector<8x8xf32>
    %cst_30 = arith.constant dense<0.000000e+00> : vector<8x8xf32>
    %70 = tpu.matmul %68, %69, %cst_30 {dimension_numbers = #tpu.dot_dimension_numbers<[1], [0], [0], [1], [0, 0, 1, 1], [], []>} : vector<8x8xf32>, vector<8x8xf32>, vector<8x8xf32> -> vector<8x8xf32>
    %71 = vector.extract_strided_slice %14 {offsets = [16, 0], sizes = [8, 32], strides = [1, 1]} : vector<32x32xf32> to vector<8x32xf32>
    %cst_31 = arith.constant dense<0.000000e+00> : vector<8x32xf32>
    %72 = tpu.matmul %70, %71, %cst_31 {dimension_numbers = #tpu.dot_dimension_numbers<[1], [0], [0], [1], [0, 0, 1, 1], [], []>} : vector<8x8xf32>, vector<8x32xf32>, vector<8x32xf32> -> vector<8x32xf32>
    %73 = arith.addf %54, %72 : vector<8x32xf32>
    %74 = vector.extract_strided_slice %9 {offsets = [0, 24], sizes = [8, 8], strides = [1, 1]} : vector<8x32xf32> to vector<8x8xf32>
    %75 = vector.extract_strided_slice %10 {offsets = [0, 24], sizes = [8, 8], strides = [1, 1]} : vector<8x32xf32> to vector<8x8xf32>
    %cst_32 = arith.constant dense<0.000000e+00> : vector<8x8xf32>
    %76 = tpu.matmul %74, %75, %cst_32 {dimension_numbers = #tpu.dot_dimension_numbers<[1], [1], [0], [0], [0, 0, 1, 0], [], []>} : vector<8x8xf32>, vector<8x8xf32>, vector<8x8xf32> -> vector<8x8xf32>
    %77 = arith.addf %76, %13 : vector<8x8xf32>
    %cst_33 = arith.constant dense<0xFF800000> : vector<8xf32>
    %78 = vector.multi_reduction <maximumf>, %77, %cst_33 [1] : vector<8x8xf32> to vector<8xf32>
    %79 = vector.shape_cast %78 : vector<8xf32> to vector<8x1xf32>
    %80 = vector.broadcast %79 : vector<8x1xf32> to vector<8x8xf32>
    %81 = arith.subf %77, %80 : vector<8x8xf32>
    %82 = math.exp %81 : vector<8x8xf32>
    %cst_34 = arith.constant dense<0.000000e+00> : vector<8xf32>
    %83 = vector.multi_reduction <add>, %82, %cst_34 [1] : vector<8x8xf32> to vector<8xf32>
    %84 = vector.shape_cast %83 : vector<8xf32> to vector<8x1xf32>
    %85 = tpu.reciprocal %84 {approx = true} : vector<8x1xf32> -> vector<8x1xf32>
    %86 = vector.broadcast %85 : vector<8x1xf32> to vector<8x8xf32>
    %87 = arith.mulf %82, %86 : vector<8x8xf32>
    %88 = vector.extract_strided_slice %11 {offsets = [0, 24], sizes = [8, 8], strides = [1, 1]} : vector<8x32xf32> to vector<8x8xf32>
    %cst_35 = arith.constant dense<0.000000e+00> : vector<8x8xf32>
    %89 = tpu.matmul %87, %88, %cst_35 {dimension_numbers = #tpu.dot_dimension_numbers<[1], [0], [0], [1], [0, 0, 1, 1], [], []>} : vector<8x8xf32>, vector<8x8xf32>, vector<8x8xf32> -> vector<8x8xf32>
    %90 = vector.extract_strided_slice %14 {offsets = [24, 0], sizes = [8, 32], strides = [1, 1]} : vector<32x32xf32> to vector<8x32xf32>
    %cst_36 = arith.constant dense<0.000000e+00> : vector<8x32xf32>
    %91 = tpu.matmul %89, %90, %cst_36 {dimension_numbers = #tpu.dot_dimension_numbers<[1], [0], [0], [1], [0, 0, 1, 1], [], []>} : vector<8x8xf32>, vector<8x32xf32>, vector<8x32xf32> -> vector<8x32xf32>
    %92 = arith.addf %73, %91 : vector<8x32xf32>
    %93 = vector.broadcast %15 : vector<1x32xf32> to vector<8x32xf32>
    %94 = arith.addf %92, %93 : vector<8x32xf32>
    %95 = arith.addf %1, %94 : vector<8x32xf32>
    %c0_37 = arith.constant 0 : index
    %c0_38 = arith.constant 0 : index
    %96 = vector.load %arg9[%c0_37, %c0_38] : memref<1x32xf32, #tpu.memory_space<vmem>>, vector<1x32xf32>
    %c0_39 = arith.constant 0 : index
    %c0_40 = arith.constant 0 : index
    %97 = vector.load %arg10[%c0_39, %c0_40] : memref<1x32xf32, #tpu.memory_space<vmem>>, vector<1x32xf32>
    %cst_41 = arith.constant dense<0.000000e+00> : vector<8xf32>
    %98 = vector.multi_reduction <add>, %95, %cst_41 [1] : vector<8x32xf32> to vector<8xf32>
    %99 = vector.shape_cast %98 : vector<8xf32> to vector<8x1xf32>
    %cst_42 = arith.constant 3.200000e+01 : f32
    %100 = vector.broadcast %cst_42 : f32 to vector<8x1xf32>
    %101 = arith.divf %99, %100 : vector<8x1xf32>
    %102 = vector.broadcast %101 : vector<8x1xf32> to vector<8x32xf32>
    %103 = arith.subf %95, %102 : vector<8x32xf32>
    %104 = arith.mulf %103, %103 : vector<8x32xf32>
    %cst_43 = arith.constant dense<0.000000e+00> : vector<8xf32>
    %105 = vector.multi_reduction <add>, %104, %cst_43 [1] : vector<8x32xf32> to vector<8xf32>
    %106 = vector.shape_cast %105 : vector<8xf32> to vector<8x1xf32>
    %cst_44 = arith.constant 3.200000e+01 : f32
    %107 = vector.broadcast %cst_44 : f32 to vector<8x1xf32>
    %108 = arith.divf %106, %107 : vector<8x1xf32>
    %cst_45 = arith.constant 9.99999974E-6 : f32
    %109 = vector.broadcast %cst_45 : f32 to vector<8x1xf32>
    %110 = arith.addf %108, %109 : vector<8x1xf32>
    %111 = math.rsqrt %110 : vector<8x1xf32>
    %112 = vector.broadcast %111 : vector<8x1xf32> to vector<8x32xf32>
    %113 = arith.mulf %103, %112 : vector<8x32xf32>
    %114 = vector.broadcast %96 : vector<1x32xf32> to vector<8x32xf32>
    %115 = arith.mulf %113, %114 : vector<8x32xf32>
    %116 = vector.broadcast %97 : vector<1x32xf32> to vector<8x32xf32>
    %117 = arith.addf %115, %116 : vector<8x32xf32>
    %c0_46 = arith.constant 0 : index
    %c0_47 = arith.constant 0 : index
    %118 = vector.load %arg11[%c0_46, %c0_47] : memref<32x32xf32, #tpu.memory_space<vmem>>, vector<32x32xf32>
    %cst_48 = arith.constant dense<0.000000e+00> : vector<8x32xf32>
    %119 = tpu.matmul %117, %118, %cst_48 {dimension_numbers = #tpu.dot_dimension_numbers<[1], [0], [0], [1], [0, 0, 1, 1], [], []>} : vector<8x32xf32>, vector<32x32xf32>, vector<8x32xf32> -> vector<8x32xf32>
    %c0_49 = arith.constant 0 : index
    %c0_50 = arith.constant 0 : index
    %120 = vector.load %arg12[%c0_49, %c0_50] : memref<1x32xf32, #tpu.memory_space<vmem>>, vector<1x32xf32>
    %121 = vector.broadcast %120 : vector<1x32xf32> to vector<8x32xf32>
    %122 = arith.addf %119, %121 : vector<8x32xf32>
    %c0_51 = arith.constant 0 : index
    %c0_52 = arith.constant 0 : index
    %123 = vector.load %arg13[%c0_51, %c0_52] : memref<32x64xf32, #tpu.memory_space<vmem>>, vector<32x64xf32>
    %cst_53 = arith.constant dense<0.000000e+00> : vector<8x64xf32>
    %124 = tpu.matmul %3, %123, %cst_53 {dimension_numbers = #tpu.dot_dimension_numbers<[1], [0], [0], [1], [0, 0, 1, 1], [], []>} : vector<8x32xf32>, vector<32x64xf32>, vector<8x64xf32> -> vector<8x64xf32>
    %c0_54 = arith.constant 0 : index
    %c0_55 = arith.constant 0 : index
    %125 = vector.load %arg14[%c0_54, %c0_55] : memref<1x64xf32, #tpu.memory_space<vmem>>, vector<1x64xf32>
    %126 = vector.broadcast %125 : vector<1x64xf32> to vector<8x64xf32>
    %127 = arith.addf %124, %126 : vector<8x64xf32>
    %128 = vector.extract_strided_slice %127 {offsets = [0, 0], sizes = [8, 32], strides = [1, 1]} : vector<8x64xf32> to vector<8x32xf32>
    %129 = vector.extract_strided_slice %127 {offsets = [0, 32], sizes = [8, 32], strides = [1, 1]} : vector<8x64xf32> to vector<8x32xf32>
    %c0_56 = arith.constant 0 : index
    %c0_57 = arith.constant 0 : index
    %c0_58 = arith.constant 0 : index
    %130 = vector.load %arg4[%c0_56, %c0_57, %c0_58] : memref<1x1x8xf32, #tpu.memory_space<vmem>>, vector<1x1x8xf32>
    %131 = vector.shape_cast %130 : vector<1x1x8xf32> to vector<1x8xf32>
    %c0_59 = arith.constant 0 : index
    %c0_60 = arith.constant 0 : index
    %132 = vector.load %arg15[%c0_59, %c0_60] : memref<32x32xf32, #tpu.memory_space<vmem>>, vector<32x32xf32>
    %c0_61 = arith.constant 0 : index
    %c0_62 = arith.constant 0 : index
    %133 = vector.load %arg16[%c0_61, %c0_62] : memref<1x32xf32, #tpu.memory_space<vmem>>, vector<1x32xf32>
    %cst_63 = arith.constant 0.000000e+00 : f32
    %134 = vector.broadcast %cst_63 : f32 to vector<8x32xf32>
    %135 = vector.extract_strided_slice %122 {offsets = [0, 0], sizes = [8, 8], strides = [1, 1]} : vector<8x32xf32> to vector<8x8xf32>
    %136 = vector.extract_strided_slice %128 {offsets = [0, 0], sizes = [8, 8], strides = [1, 1]} : vector<8x32xf32> to vector<8x8xf32>
    %cst_64 = arith.constant dense<0.000000e+00> : vector<8x8xf32>
    %137 = tpu.matmul %135, %136, %cst_64 {dimension_numbers = #tpu.dot_dimension_numbers<[1], [1], [0], [0], [0, 0, 1, 0], [], []>} : vector<8x8xf32>, vector<8x8xf32>, vector<8x8xf32> -> vector<8x8xf32>
    %138 = vector.broadcast %131 : vector<1x8xf32> to vector<8x8xf32>
    %139 = arith.addf %137, %138 : vector<8x8xf32>
    %cst_65 = arith.constant dense<0xFF800000> : vector<8xf32>
    %140 = vector.multi_reduction <maximumf>, %139, %cst_65 [1] : vector<8x8xf32> to vector<8xf32>
    %141 = vector.shape_cast %140 : vector<8xf32> to vector<8x1xf32>
    %142 = vector.broadcast %141 : vector<8x1xf32> to vector<8x8xf32>
    %143 = arith.subf %139, %142 : vector<8x8xf32>
    %144 = math.exp %143 : vector<8x8xf32>
    %cst_66 = arith.constant dense<0.000000e+00> : vector<8xf32>
    %145 = vector.multi_reduction <add>, %144, %cst_66 [1] : vector<8x8xf32> to vector<8xf32>
    %146 = vector.shape_cast %145 : vector<8xf32> to vector<8x1xf32>
    %147 = tpu.reciprocal %146 {approx = true} : vector<8x1xf32> -> vector<8x1xf32>
    %148 = vector.broadcast %147 : vector<8x1xf32> to vector<8x8xf32>
    %149 = arith.mulf %144, %148 : vector<8x8xf32>
    %150 = vector.extract_strided_slice %129 {offsets = [0, 0], sizes = [8, 8], strides = [1, 1]} : vector<8x32xf32> to vector<8x8xf32>
    %cst_67 = arith.constant dense<0.000000e+00> : vector<8x8xf32>
    %151 = tpu.matmul %149, %150, %cst_67 {dimension_numbers = #tpu.dot_dimension_numbers<[1], [0], [0], [1], [0, 0, 1, 1], [], []>} : vector<8x8xf32>, vector<8x8xf32>, vector<8x8xf32> -> vector<8x8xf32>
    %152 = vector.extract_strided_slice %132 {offsets = [0, 0], sizes = [8, 32], strides = [1, 1]} : vector<32x32xf32> to vector<8x32xf32>
    %cst_68 = arith.constant dense<0.000000e+00> : vector<8x32xf32>
    %153 = tpu.matmul %151, %152, %cst_68 {dimension_numbers = #tpu.dot_dimension_numbers<[1], [0], [0], [1], [0, 0, 1, 1], [], []>} : vector<8x8xf32>, vector<8x32xf32>, vector<8x32xf32> -> vector<8x32xf32>
    %154 = arith.addf %134, %153 : vector<8x32xf32>
    %155 = vector.extract_strided_slice %122 {offsets = [0, 8], sizes = [8, 8], strides = [1, 1]} : vector<8x32xf32> to vector<8x8xf32>
    %156 = vector.extract_strided_slice %128 {offsets = [0, 8], sizes = [8, 8], strides = [1, 1]} : vector<8x32xf32> to vector<8x8xf32>
    %cst_69 = arith.constant dense<0.000000e+00> : vector<8x8xf32>
    %157 = tpu.matmul %155, %156, %cst_69 {dimension_numbers = #tpu.dot_dimension_numbers<[1], [1], [0], [0], [0, 0, 1, 0], [], []>} : vector<8x8xf32>, vector<8x8xf32>, vector<8x8xf32> -> vector<8x8xf32>
    %158 = vector.broadcast %131 : vector<1x8xf32> to vector<8x8xf32>
    %159 = arith.addf %157, %158 : vector<8x8xf32>
    %cst_70 = arith.constant dense<0xFF800000> : vector<8xf32>
    %160 = vector.multi_reduction <maximumf>, %159, %cst_70 [1] : vector<8x8xf32> to vector<8xf32>
    %161 = vector.shape_cast %160 : vector<8xf32> to vector<8x1xf32>
    %162 = vector.broadcast %161 : vector<8x1xf32> to vector<8x8xf32>
    %163 = arith.subf %159, %162 : vector<8x8xf32>
    %164 = math.exp %163 : vector<8x8xf32>
    %cst_71 = arith.constant dense<0.000000e+00> : vector<8xf32>
    %165 = vector.multi_reduction <add>, %164, %cst_71 [1] : vector<8x8xf32> to vector<8xf32>
    %166 = vector.shape_cast %165 : vector<8xf32> to vector<8x1xf32>
    %167 = tpu.reciprocal %166 {approx = true} : vector<8x1xf32> -> vector<8x1xf32>
    %168 = vector.broadcast %167 : vector<8x1xf32> to vector<8x8xf32>
    %169 = arith.mulf %164, %168 : vector<8x8xf32>
    %170 = vector.extract_strided_slice %129 {offsets = [0, 8], sizes = [8, 8], strides = [1, 1]} : vector<8x32xf32> to vector<8x8xf32>
    %cst_72 = arith.constant dense<0.000000e+00> : vector<8x8xf32>
    %171 = tpu.matmul %169, %170, %cst_72 {dimension_numbers = #tpu.dot_dimension_numbers<[1], [0], [0], [1], [0, 0, 1, 1], [], []>} : vector<8x8xf32>, vector<8x8xf32>, vector<8x8xf32> -> vector<8x8xf32>
    %172 = vector.extract_strided_slice %132 {offsets = [8, 0], sizes = [8, 32], strides = [1, 1]} : vector<32x32xf32> to vector<8x32xf32>
    %cst_73 = arith.constant dense<0.000000e+00> : vector<8x32xf32>
    %173 = tpu.matmul %171, %172, %cst_73 {dimension_numbers = #tpu.dot_dimension_numbers<[1], [0], [0], [1], [0, 0, 1, 1], [], []>} : vector<8x8xf32>, vector<8x32xf32>, vector<8x32xf32> -> vector<8x32xf32>
    %174 = arith.addf %154, %173 : vector<8x32xf32>
    %175 = vector.extract_strided_slice %122 {offsets = [0, 16], sizes = [8, 8], strides = [1, 1]} : vector<8x32xf32> to vector<8x8xf32>
    %176 = vector.extract_strided_slice %128 {offsets = [0, 16], sizes = [8, 8], strides = [1, 1]} : vector<8x32xf32> to vector<8x8xf32>
    %cst_74 = arith.constant dense<0.000000e+00> : vector<8x8xf32>
    %177 = tpu.matmul %175, %176, %cst_74 {dimension_numbers = #tpu.dot_dimension_numbers<[1], [1], [0], [0], [0, 0, 1, 0], [], []>} : vector<8x8xf32>, vector<8x8xf32>, vector<8x8xf32> -> vector<8x8xf32>
    %178 = vector.broadcast %131 : vector<1x8xf32> to vector<8x8xf32>
    %179 = arith.addf %177, %178 : vector<8x8xf32>
    %cst_75 = arith.constant dense<0xFF800000> : vector<8xf32>
    %180 = vector.multi_reduction <maximumf>, %179, %cst_75 [1] : vector<8x8xf32> to vector<8xf32>
    %181 = vector.shape_cast %180 : vector<8xf32> to vector<8x1xf32>
    %182 = vector.broadcast %181 : vector<8x1xf32> to vector<8x8xf32>
    %183 = arith.subf %179, %182 : vector<8x8xf32>
    %184 = math.exp %183 : vector<8x8xf32>
    %cst_76 = arith.constant dense<0.000000e+00> : vector<8xf32>
    %185 = vector.multi_reduction <add>, %184, %cst_76 [1] : vector<8x8xf32> to vector<8xf32>
    %186 = vector.shape_cast %185 : vector<8xf32> to vector<8x1xf32>
    %187 = tpu.reciprocal %186 {approx = true} : vector<8x1xf32> -> vector<8x1xf32>
    %188 = vector.broadcast %187 : vector<8x1xf32> to vector<8x8xf32>
    %189 = arith.mulf %184, %188 : vector<8x8xf32>
    %190 = vector.extract_strided_slice %129 {offsets = [0, 16], sizes = [8, 8], strides = [1, 1]} : vector<8x32xf32> to vector<8x8xf32>
    %cst_77 = arith.constant dense<0.000000e+00> : vector<8x8xf32>
    %191 = tpu.matmul %189, %190, %cst_77 {dimension_numbers = #tpu.dot_dimension_numbers<[1], [0], [0], [1], [0, 0, 1, 1], [], []>} : vector<8x8xf32>, vector<8x8xf32>, vector<8x8xf32> -> vector<8x8xf32>
    %192 = vector.extract_strided_slice %132 {offsets = [16, 0], sizes = [8, 32], strides = [1, 1]} : vector<32x32xf32> to vector<8x32xf32>
    %cst_78 = arith.constant dense<0.000000e+00> : vector<8x32xf32>
    %193 = tpu.matmul %191, %192, %cst_78 {dimension_numbers = #tpu.dot_dimension_numbers<[1], [0], [0], [1], [0, 0, 1, 1], [], []>} : vector<8x8xf32>, vector<8x32xf32>, vector<8x32xf32> -> vector<8x32xf32>
    %194 = arith.addf %174, %193 : vector<8x32xf32>
    %195 = vector.extract_strided_slice %122 {offsets = [0, 24], sizes = [8, 8], strides = [1, 1]} : vector<8x32xf32> to vector<8x8xf32>
    %196 = vector.extract_strided_slice %128 {offsets = [0, 24], sizes = [8, 8], strides = [1, 1]} : vector<8x32xf32> to vector<8x8xf32>
    %cst_79 = arith.constant dense<0.000000e+00> : vector<8x8xf32>
    %197 = tpu.matmul %195, %196, %cst_79 {dimension_numbers = #tpu.dot_dimension_numbers<[1], [1], [0], [0], [0, 0, 1, 0], [], []>} : vector<8x8xf32>, vector<8x8xf32>, vector<8x8xf32> -> vector<8x8xf32>
    %198 = vector.broadcast %131 : vector<1x8xf32> to vector<8x8xf32>
    %199 = arith.addf %197, %198 : vector<8x8xf32>
    %cst_80 = arith.constant dense<0xFF800000> : vector<8xf32>
    %200 = vector.multi_reduction <maximumf>, %199, %cst_80 [1] : vector<8x8xf32> to vector<8xf32>
    %201 = vector.shape_cast %200 : vector<8xf32> to vector<8x1xf32>
    %202 = vector.broadcast %201 : vector<8x1xf32> to vector<8x8xf32>
    %203 = arith.subf %199, %202 : vector<8x8xf32>
    %204 = math.exp %203 : vector<8x8xf32>
    %cst_81 = arith.constant dense<0.000000e+00> : vector<8xf32>
    %205 = vector.multi_reduction <add>, %204, %cst_81 [1] : vector<8x8xf32> to vector<8xf32>
    %206 = vector.shape_cast %205 : vector<8xf32> to vector<8x1xf32>
    %207 = tpu.reciprocal %206 {approx = true} : vector<8x1xf32> -> vector<8x1xf32>
    %208 = vector.broadcast %207 : vector<8x1xf32> to vector<8x8xf32>
    %209 = arith.mulf %204, %208 : vector<8x8xf32>
    %210 = vector.extract_strided_slice %129 {offsets = [0, 24], sizes = [8, 8], strides = [1, 1]} : vector<8x32xf32> to vector<8x8xf32>
    %cst_82 = arith.constant dense<0.000000e+00> : vector<8x8xf32>
    %211 = tpu.matmul %209, %210, %cst_82 {dimension_numbers = #tpu.dot_dimension_numbers<[1], [0], [0], [1], [0, 0, 1, 1], [], []>} : vector<8x8xf32>, vector<8x8xf32>, vector<8x8xf32> -> vector<8x8xf32>
    %212 = vector.extract_strided_slice %132 {offsets = [24, 0], sizes = [8, 32], strides = [1, 1]} : vector<32x32xf32> to vector<8x32xf32>
    %cst_83 = arith.constant dense<0.000000e+00> : vector<8x32xf32>
    %213 = tpu.matmul %211, %212, %cst_83 {dimension_numbers = #tpu.dot_dimension_numbers<[1], [0], [0], [1], [0, 0, 1, 1], [], []>} : vector<8x8xf32>, vector<8x32xf32>, vector<8x32xf32> -> vector<8x32xf32>
    %214 = arith.addf %194, %213 : vector<8x32xf32>
    %215 = vector.broadcast %133 : vector<1x32xf32> to vector<8x32xf32>
    %216 = arith.addf %214, %215 : vector<8x32xf32>
    %217 = arith.addf %117, %216 : vector<8x32xf32>
    %c0_84 = arith.constant 0 : index
    %c0_85 = arith.constant 0 : index
    %218 = vector.load %arg17[%c0_84, %c0_85] : memref<1x32xf32, #tpu.memory_space<vmem>>, vector<1x32xf32>
    %c0_86 = arith.constant 0 : index
    %c0_87 = arith.constant 0 : index
    %219 = vector.load %arg18[%c0_86, %c0_87] : memref<1x32xf32, #tpu.memory_space<vmem>>, vector<1x32xf32>
    %cst_88 = arith.constant dense<0.000000e+00> : vector<8xf32>
    %220 = vector.multi_reduction <add>, %217, %cst_88 [1] : vector<8x32xf32> to vector<8xf32>
    %221 = vector.shape_cast %220 : vector<8xf32> to vector<8x1xf32>
    %cst_89 = arith.constant 3.200000e+01 : f32
    %222 = vector.broadcast %cst_89 : f32 to vector<8x1xf32>
    %223 = arith.divf %221, %222 : vector<8x1xf32>
    %224 = vector.broadcast %223 : vector<8x1xf32> to vector<8x32xf32>
    %225 = arith.subf %217, %224 : vector<8x32xf32>
    %226 = arith.mulf %225, %225 : vector<8x32xf32>
    %cst_90 = arith.constant dense<0.000000e+00> : vector<8xf32>
    %227 = vector.multi_reduction <add>, %226, %cst_90 [1] : vector<8x32xf32> to vector<8xf32>
    %228 = vector.shape_cast %227 : vector<8xf32> to vector<8x1xf32>
    %cst_91 = arith.constant 3.200000e+01 : f32
    %229 = vector.broadcast %cst_91 : f32 to vector<8x1xf32>
    %230 = arith.divf %228, %229 : vector<8x1xf32>
    %cst_92 = arith.constant 9.99999974E-6 : f32
    %231 = vector.broadcast %cst_92 : f32 to vector<8x1xf32>
    %232 = arith.addf %230, %231 : vector<8x1xf32>
    %233 = math.rsqrt %232 : vector<8x1xf32>
    %234 = vector.broadcast %233 : vector<8x1xf32> to vector<8x32xf32>
    %235 = arith.mulf %225, %234 : vector<8x32xf32>
    %236 = vector.broadcast %218 : vector<1x32xf32> to vector<8x32xf32>
    %237 = arith.mulf %235, %236 : vector<8x32xf32>
    %238 = vector.broadcast %219 : vector<1x32xf32> to vector<8x32xf32>
    %239 = arith.addf %237, %238 : vector<8x32xf32>
    %c0_93 = arith.constant 0 : index
    %c0_94 = arith.constant 0 : index
    %240 = vector.load %arg19[%c0_93, %c0_94] : memref<32x64xf32, #tpu.memory_space<vmem>>, vector<32x64xf32>
    %cst_95 = arith.constant dense<0.000000e+00> : vector<8x64xf32>
    %241 = tpu.matmul %239, %240, %cst_95 {dimension_numbers = #tpu.dot_dimension_numbers<[1], [0], [0], [1], [0, 0, 1, 1], [], []>} : vector<8x32xf32>, vector<32x64xf32>, vector<8x64xf32> -> vector<8x64xf32>
    %c0_96 = arith.constant 0 : index
    %c0_97 = arith.constant 0 : index
    %242 = vector.load %arg20[%c0_96, %c0_97] : memref<1x64xf32, #tpu.memory_space<vmem>>, vector<1x64xf32>
    %243 = vector.broadcast %242 : vector<1x64xf32> to vector<8x64xf32>
    %244 = arith.addf %241, %243 : vector<8x64xf32>
    %cst_98 = arith.constant 0.000000e+00 : f32
    %245 = vector.broadcast %cst_98 : f32 to vector<8x64xf32>
    %246 = arith.maximumf %244, %245 : vector<8x64xf32>
    %c0_99 = arith.constant 0 : index
    %c0_100 = arith.constant 0 : index
    %247 = vector.load %arg21[%c0_99, %c0_100] : memref<64x32xf32, #tpu.memory_space<vmem>>, vector<64x32xf32>
    %cst_101 = arith.constant dense<0.000000e+00> : vector<8x32xf32>
    %248 = tpu.matmul %246, %247, %cst_101 {dimension_numbers = #tpu.dot_dimension_numbers<[1], [0], [0], [1], [0, 0, 1, 1], [], []>} : vector<8x64xf32>, vector<64x32xf32>, vector<8x32xf32> -> vector<8x32xf32>
    %c0_102 = arith.constant 0 : index
    %c0_103 = arith.constant 0 : index
    %249 = vector.load %arg22[%c0_102, %c0_103] : memref<1x32xf32, #tpu.memory_space<vmem>>, vector<1x32xf32>
    %250 = vector.broadcast %249 : vector<1x32xf32> to vector<8x32xf32>
    %251 = arith.addf %248, %250 : vector<8x32xf32>
    %252 = arith.addf %239, %251 : vector<8x32xf32>
    %c0_104 = arith.constant 0 : index
    %c0_105 = arith.constant 0 : index
    %253 = vector.load %arg23[%c0_104, %c0_105] : memref<1x32xf32, #tpu.memory_space<vmem>>, vector<1x32xf32>
    %c0_106 = arith.constant 0 : index
    %c0_107 = arith.constant 0 : index
    %254 = vector.load %arg24[%c0_106, %c0_107] : memref<1x32xf32, #tpu.memory_space<vmem>>, vector<1x32xf32>
    %cst_108 = arith.constant dense<0.000000e+00> : vector<8xf32>
    %255 = vector.multi_reduction <add>, %252, %cst_108 [1] : vector<8x32xf32> to vector<8xf32>
    %256 = vector.shape_cast %255 : vector<8xf32> to vector<8x1xf32>
    %cst_109 = arith.constant 3.200000e+01 : f32
    %257 = vector.broadcast %cst_109 : f32 to vector<8x1xf32>
    %258 = arith.divf %256, %257 : vector<8x1xf32>
    %259 = vector.broadcast %258 : vector<8x1xf32> to vector<8x32xf32>
    %260 = arith.subf %252, %259 : vector<8x32xf32>
    %261 = arith.mulf %260, %260 : vector<8x32xf32>
    %cst_110 = arith.constant dense<0.000000e+00> : vector<8xf32>
    %262 = vector.multi_reduction <add>, %261, %cst_110 [1] : vector<8x32xf32> to vector<8xf32>
    %263 = vector.shape_cast %262 : vector<8xf32> to vector<8x1xf32>
    %cst_111 = arith.constant 3.200000e+01 : f32
    %264 = vector.broadcast %cst_111 : f32 to vector<8x1xf32>
    %265 = arith.divf %263, %264 : vector<8x1xf32>
    %cst_112 = arith.constant 9.99999974E-6 : f32
    %266 = vector.broadcast %cst_112 : f32 to vector<8x1xf32>
    %267 = arith.addf %265, %266 : vector<8x1xf32>
    %268 = math.rsqrt %267 : vector<8x1xf32>
    %269 = vector.broadcast %268 : vector<8x1xf32> to vector<8x32xf32>
    %270 = arith.mulf %260, %269 : vector<8x32xf32>
    %271 = vector.broadcast %253 : vector<1x32xf32> to vector<8x32xf32>
    %272 = arith.mulf %270, %271 : vector<8x32xf32>
    %273 = vector.broadcast %254 : vector<1x32xf32> to vector<8x32xf32>
    %274 = arith.addf %272, %273 : vector<8x32xf32>
    %c0_113 = arith.constant 0 : index
    %c0_114 = arith.constant 0 : index
    %c0_115 = arith.constant 0 : index
    %275 = vector.load %arg25[%c0_113, %c0_114, %c0_115] : memref<1x8x32xf32, #tpu.memory_space<vmem>>, vector<1x8x32xf32>
    %276 = vector.shape_cast %275 : vector<1x8x32xf32> to vector<8x32xf32>
    %277 = vector.shape_cast %274 : vector<8x32xf32> to vector<1x8x32xf32>
    tpu.vector_store %arg25[%c0_113, %c0_114, %c0_115], %277 {strides = array<i32>} : memref<1x8x32xf32, #tpu.memory_space<vmem>>, vector<1x8x32xf32>,
    return
  }
  func.func @transform_0(%arg0: i32) -> (i32, i32, i32) {
    %c0_i32 = arith.constant 0 : i32
    %c0_i32_0 = arith.constant 0 : i32
    %c0_i32_1 = arith.constant 0 : i32
    return %arg0, %c0_i32, %c0_i32_0 : i32, i32, i32
  }
  func.func @transform_1(%arg0: i32) -> (i32, i32, i32) {
    %c0_i32 = arith.constant 0 : i32
    %c0_i32_0 = arith.constant 0 : i32
    %c0_i32_1 = arith.constant 0 : i32
    return %arg0, %c0_i32, %c0_i32_0 : i32, i32, i32
  }
  func.func @transform_2(%arg0: i32) -> (i32, i32, i32) {
    %c0_i32 = arith.constant 0 : i32
    %c0_i32_0 = arith.constant 0 : i32
    %c0_i32_1 = arith.constant 0 : i32
    %c0_i32_2 = arith.constant 0 : i32
    return %c0_i32, %c0_i32_0, %c0_i32_1 : i32, i32, i32
  }
  func.func @transform_3(%arg0: i32) -> (i32, i32, i32) {
    %c0_i32 = arith.constant 0 : i32
    %c0_i32_0 = arith.constant 0 : i32
    %c0_i32_1 = arith.constant 0 : i32
    return %arg0, %c0_i32, %c0_i32_0 : i32, i32, i32
  }
  func.func @transform_4(%arg0: i32) -> (i32, i32) {
    %c0_i32 = arith.constant 0 : i32
    %c0_i32_0 = arith.constant 0 : i32
    %c0_i32_1 = arith.constant 0 : i32
    return %c0_i32, %c0_i32_0 : i32, i32
  }
  func.func @transform_5(%arg0: i32) -> (i32, i32) {
    %c0_i32 = arith.constant 0 : i32
    %c0_i32_0 = arith.constant 0 : i32
    %c0_i32_1 = arith.constant 0 : i32
    return %c0_i32, %c0_i32_0 : i32, i32
  }
  func.func @transform_6(%arg0: i32) -> (i32, i32) {
    %c0_i32 = arith.constant 0 : i32
    %c0_i32_0 = arith.constant 0 : i32
    %c0_i32_1 = arith.constant 0 : i32
    return %c0_i32, %c0_i32_0 : i32, i32
  }
  func.func @transform_7(%arg0: i32) -> (i32, i32) {
    %c0_i32 = arith.constant 0 : i32
    %c0_i32_0 = arith.constant 0 : i32
    %c0_i32_1 = arith.constant 0 : i32
    return %c0_i32, %c0_i32_0 : i32, i32
  }
  func.func @transform_8(%arg0: i32) -> (i32, i32) {
    %c0_i32 = arith.constant 0 : i32
    %c0_i32_0 = arith.constant 0 : i32
    %c0_i32_1 = arith.constant 0 : i32
    return %c0_i32, %c0_i32_0 : i32, i32
  }
  func.func @transform_9(%arg0: i32) -> (i32, i32) {
    %c0_i32 = arith.constant 0 : i32
    %c0_i32_0 = arith.constant 0 : i32
    %c0_i32_1 = arith.constant 0 : i32
    return %c0_i32, %c0_i32_0 : i32, i32
  }
  func.func @transform_10(%arg0: i32) -> (i32, i32) {
    %c0_i32 = arith.constant 0 : i32
    %c0_i32_0 = arith.constant 0 : i32
    %c0_i32_1 = arith.constant 0 : i32
    return %c0_i32, %c0_i32_0 : i32, i32
  }
  func.func @transform_11(%arg0: i32) -> (i32, i32) {
    %c0_i32 = arith.constant 0 : i32
    %c0_i32_0 = arith.constant 0 : i32
    %c0_i32_1 = arith.constant 0 : i32
    return %c0_i32, %c0_i32_0 : i32, i32
  }
  func.func @transform_12(%arg0: i32) -> (i32, i32) {
    %c0_i32 = arith.constant 0 : i32
    %c0_i32_0 = arith.constant 0 : i32
    %c0_i32_1 = arith.constant 0 : i32
    return %c0_i32, %c0_i32_0 : i32, i32
  }
  func.func @transform_13(%arg0: i32) -> (i32, i32) {
    %c0_i32 = arith.constant 0 : i32
    %c0_i32_0 = arith.constant 0 : i32
    %c0_i32_1 = arith.constant 0 : i32
    return %c0_i32, %c0_i32_0 : i32, i32
  }
  func.func @transform_14(%arg0: i32) -> (i32, i32) {
    %c0_i32 = arith.constant 0 : i32
    %c0_i32_0 = arith.constant 0 : i32
    %c0_i32_1 = arith.constant 0 : i32
    return %c0_i32, %c0_i32_0 : i32, i32
  }
  func.func @transform_15(%arg0: i32) -> (i32, i32) {
    %c0_i32 = arith.constant 0 : i32
    %c0_i32_0 = arith.constant 0 : i32
    %c0_i32_1 = arith.constant 0 : i32
    return %c0_i32, %c0_i32_0 : i32, i32
  }
  func.func @transform_16(%arg0: i32) -> (i32, i32) {
    %c0_i32 = arith.constant 0 : i32
    %c0_i32_0 = arith.constant 0 : i32
    %c0_i32_1 = arith.constant 0 : i32
    return %c0_i32, %c0_i32_0 : i32, i32
  }
  func.func @transform_17(%arg0: i32) -> (i32, i32) {
    %c0_i32 = arith.constant 0 : i32
    %c0_i32_0 = arith.constant 0 : i32
    %c0_i32_1 = arith.constant 0 : i32
    return %c0_i32, %c0_i32_0 : i32, i32
  }
  func.func @transform_18(%arg0: i32) -> (i32, i32) {
    %c0_i32 = arith.constant 0 : i32
    %c0_i32_0 = arith.constant 0 : i32
    %c0_i32_1 = arith.constant 0 : i32
    return %c0_i32, %c0_i32_0 : i32, i32
  }
  func.func @transform_19(%arg0: i32) -> (i32, i32) {
    %c0_i32 = arith.constant 0 : i32
    %c0_i32_0 = arith.constant 0 : i32
    %c0_i32_1 = arith.constant 0 : i32
    return %c0_i32, %c0_i32_0 : i32, i32
  }
  func.func @transform_20(%arg0: i32) -> (i32, i32) {
    %c0_i32 = arith.constant 0 : i32
    %c0_i32_0 = arith.constant 0 : i32
    %c0_i32_1 = arith.constant 0 : i32
    return %c0_i32, %c0_i32_0 : i32, i32
  }
  func.func @transform_21(%arg0: i32) -> (i32, i32) {
    %c0_i32 = arith.constant 0 : i32
    %c0_i32_0 = arith.constant 0 : i32
    %c0_i32_1 = arith.constant 0 : i32
    return %c0_i32, %c0_i32_0 : i32, i32
  }
  func.func @transform_22(%arg0: i32) -> (i32, i32) {
    %c0_i32 = arith.constant 0 : i32
    %c0_i32_0 = arith.constant 0 : i32
    %c0_i32_1 = arith.constant 0 : i32
    return %c0_i32, %c0_i32_0 : i32, i32
  }
  func.func @transform_23(%arg0: i32) -> (i32, i32) {
    %c0_i32 = arith.constant 0 : i32
    %c0_i32_0 = arith.constant 0 : i32
    %c0_i32_1 = arith.constant 0 : i32
    return %c0_i32, %c0_i32_0 : i32, i32
  }
  func.func @transform_24(%arg0: i32) -> (i32, i32, i32) {
    %c0_i32 = arith.constant 0 : i32
    %c0_i32_0 = arith.constant 0 : i32
    %c0_i32_1 = arith.constant 0 : i32
    return %arg0, %c0_i32, %c0_i32_0 : i32, i32, i32
  }
}

</mosaic_0001>

<llo_original>
// kernel: sentence_transformer_forward.8
$region0: #{sentence_transformer_forward.8}
  #allocation0 [shape = 'u32[]', space=smem, size = 0x4, offset = 0x4, fixed_abs, tag = 'smem constant byte address 0x4 - core index']
  #allocation1 [shape = 'u32[72,128]{1,0:T(1,128)}', space=vmem, size = 0x9000, scoped, tag = 'internal scratch']
  %s0 = inlined_call_operand.vmem [shape: f32[2,16,32], index: 0, kind: input, shape index: {}]
  %s1 = inlined_call_operand.vmem [shape: f32[1,32], index: 1, kind: input, shape index: {}]
  %s2 = inlined_call_operand.vmem [shape: f32[1,32], index: 2, kind: input, shape index: {}]
  %s3 = inlined_call_operand.vmem [shape: f32[2,16,32], index: 3, kind: output, shape index: {}]
  %s4 = sld [smem:[#allocation0]]
  $region45: #{sentence_transformer_forward.8} parent=0
    _
  %s6 = ssub.s32 1, %s4
  %s7 = scalar_select 0, %s6, %s4
  loop: start=0, step=1, limit=4
  $region2: #{sentence_transformer_forward.8} parent=0 // loop_pre_header
    _
  $region3: #{sentence_transformer_forward.8} parent=0 // loop_header
    %s9 = sphi 0, %s13
    %p10 = scmp.ge.s32.totalorder %s9, 4
    %s19 = sphi 0, %s21
    %s22 = sphi 0, %s19
    %s23 = sphi 0, %s22
    %s39 = sphi 0, %s23
    %s43 = sphi 0, %s43
    %s45 = sphi 0, %s43
    %s46 = sphi 0, %s45
    %s60 = sphi 0, %s46
    %s64 = sphi 0, %s64
    %s66 = sphi 0, %s64
    %s67 = sphi 0, %s66
    %s81 = sphi 0, %s67
    %s87 = sphi 0, %s89
    %s90 = sphi 0, %s87
    %s91 = sphi 0, %s90
    %s107 = sphi 0, %s91
  $region4: #{sentence_transformer_forward.8} parent=0 // loop_header_branch
    %12 = sbr.rel (%p10) target = $region8
  $region5: #{sentence_transformer_forward.8} parent=0 // loop_body
    %s14 = ssub.s32 %s9, 1
    %s15 = ssub.s32 %s9, 2
    %s16 = sadd.s32 %s9, 1
    %s17 = ssub.s32 %s9, %s16
    %p18 = scmp.eq.s32.totalorder %s17, 0
    %s20 = sadd.s32 %s19, 1
    %s21 = scalar_select %p18, %s19, %s20
    %p24 = pneg %p18
    %p25 = scmp.eq.s32.totalorder %s9, 1
    %p26 = por %p24, %p25
    %p27 = scmp.ne.s32.totalorder %s19, %s22
    %p28 = scmp.eq.s32.totalorder %s9, 0
    %p29 = por %p27, %p28
    %p30 = scmp.ne.s32.totalorder %s19, %s22
    %p31 = scmp.eq.s32.totalorder %s14, 1
    %p32 = por %p30, %p31
    %p33 = scmp.ne.s32.totalorder %s22, %s23
    %p34 = scmp.eq.s32.totalorder %s14, 0
    %p35 = por %p33, %p34
    %p36 = scmp.ne.s32.totalorder %s22, %s23
    %p37 = scmp.eq.s32.totalorder %s15, 1
    %p38 = por %p36, %p37
    %p40 = scmp.ne.s32.totalorder %s23, %s39
    %p41 = scmp.eq.s32.totalorder %s15, 0
    %p42 = por %p40, %p41
    %s44 = sadd.s32 %s43, 1
    %p47 = scmp.eq.s32.totalorder %s9, 1
    %p48 = scmp.ne.s32.totalorder %s43, %s45
    %p49 = scmp.eq.s32.totalorder %s9, 0
    %p50 = por %p48, %p49
    %p51 = scmp.ne.s32.totalorder %s43, %s45
    %p52 = scmp.eq.s32.totalorder %s14, 1
    %p53 = por %p51, %p52
    %p54 = scmp.ne.s32.totalorder %s45, %s46
    %p55 = scmp.eq.s32.totalorder %s14, 0
    %p56 = por %p54, %p55
    %p57 = scmp.ne.s32.totalorder %s45, %s46
    %p58 = scmp.eq.s32.totalorder %s15, 1
    %p59 = por %p57, %p58
    %p61 = scmp.ne.s32.totalorder %s46, %s60
    %p62 = scmp.eq.s32.totalorder %s15, 0
    %p63 = por %p61, %p62
    %s65 = sadd.s32 %s64, 1
    %p68 = scmp.eq.s32.totalorder %s9, 1
    %p69 = scmp.ne.s32.totalorder %s64, %s66
    %p70 = scmp.eq.s32.totalorder %s9, 0
    %p71 = por %p69, %p70
    %p72 = scmp.ne.s32.totalorder %s64, %s66
    %p73 = scmp.eq.s32.totalorder %s14, 1
    %p74 = por %p72, %p73
    %p75 = scmp.ne.s32.totalorder %s66, %s67
    %p76 = scmp.eq.s32.totalorder %s14, 0
    %p77 = por %p75, %p76
    %p78 = scmp.ne.s32.totalorder %s66, %s67
    %p79 = scmp.eq.s32.totalorder %s15, 1
    %p80 = por %p78, %p79
    %p82 = scmp.ne.s32.totalorder %s67, %s81
    %p83 = scmp.eq.s32.totalorder %s15, 0
    %p84 = por %p82, %p83
    %s85 = ssub.s32 %s9, %s16
    %p86 = scmp.eq.s32.totalorder %s85, 0
    %s88 = sadd.s32 %s87, 1
    %s89 = scalar_select %p86, %s87, %s88
    %p92 = pneg %p86
    %p93 = scmp.eq.s32.totalorder %s9, 1
    %p94 = por %p92, %p93
    %p95 = scmp.ne.s32.totalorder %s87, %s90
    %p96 = scmp.eq.s32.totalorder %s9, 0
    %p97 = por %p95, %p96
    %p98 = scmp.ne.s32.totalorder %s87, %s90
    %p99 = scmp.eq.s32.totalorder %s14, 1
    %p100 = por %p98, %p99
    %p101 = scmp.ne.s32.totalorder %s90, %s91
    %p102 = scmp.eq.s32.totalorder %s14, 0
    %p103 = por %p101, %p102
    %p104 = scmp.ne.s32.totalorder %s90, %s91
    %p105 = scmp.eq.s32.totalorder %s15, 1
    %p106 = por %p104, %p105
    %p108 = scmp.ne.s32.totalorder %s91, %s107
    %p109 = scmp.eq.s32.totalorder %s15, 0
    %p110 = por %p108, %p109
    %p111 = scmp.le.s32.totalorder 1, %s9
    %p112 = scmp.lt.s32.totalorder %s9, 3
    %p113 = pnand %p111, %p112
    %p114 = pneg %p113
    // Predicated region
    $region9: #{sentence_transformer_forward.8} parent=5 // pred_check
      _
    $region10: #{sentence_transformer_forward.8} parent=5 // pred_check_branch
      %116 = sbr.rel (%p113) target = $region12
    $region11: #{sentence_transformer_forward.8} parent=5 // pred_region
      %s117 = ssub.s32 %s9, 1
      // Predicated region
      $region13: #{sentence_transformer_forward.8} parent=11 // pred_check
        %p118 = pneg %p56
      $region14: #{sentence_transformer_forward.8} parent=11 // pred_check_branch
        %120 = sbr.rel (%p118) target = $region16
      $region15: #{sentence_transformer_forward.8} parent=11 // pred_region
        _
      $region16: #{sentence_transformer_forward.8} parent=11 // pred_fallthru
        _
      // Predicated region
      $region17: #{sentence_transformer_forward.8} parent=11 // pred_check
        %p121 = pneg %p77
      $region18: #{sentence_transformer_forward.8} parent=11 // pred_check_branch
        %123 = sbr.rel (%p121) target = $region20
      $region19: #{sentence_transformer_forward.8} parent=11 // pred_region
        _
      $region20: #{sentence_transformer_forward.8} parent=11 // pred_fallthru
        _
    $region12: #{sentence_transformer_forward.8} parent=5 // pred_fallthru
      _
    %p124 = scmp.lt.s32.totalorder %s9, 2
    // Predicated region
    $region21: #{sentence_transformer_forward.8} parent=5 // pred_check
      %p125 = pneg %p124
    $region22: #{sentence_transformer_forward.8} parent=5 // pred_check_branch
      %127 = sbr.rel (%p125) target = $region24
    $region23: #{sentence_transformer_forward.8} parent=5 // pred_region
      // Predicated region
      $region25: #{sentence_transformer_forward.8} parent=23 // pred_check
        %p128 = pneg %p29
      $region26: #{sentence_transformer_forward.8} parent=23 // pred_check_branch
        %130 = sbr.rel (%p128) target = $region28
      $region27: #{sentence_transformer_forward.8} parent=23 // pred_region
        %p131 = scmp.lt.s32.totalorder %s9, 1
        %s132 = scalar_select %p131, %s9, 1
        %s133 = smul.addr %s132, 2
        %s134 = smul.addr %s133, 8
        %s135 = scalar_lea.vmem %s0, %s134
      $region28: #{sentence_transformer_forward.8} parent=23 // pred_fallthru
        _
    $region24: #{sentence_transformer_forward.8} parent=5 // pred_fallthru
      _
    %p136 = scmp.le.s32.totalorder 1, %s9
    %p137 = scmp.lt.s32.totalorder %s9, 3
    %p138 = pnand %p136, %p137
    %p139 = pneg %p138
    // Predicated region
    $region29: #{sentence_transformer_forward.8} parent=5 // pred_check
      _
    $region30: #{sentence_transformer_forward.8} parent=5 // pred_check_branch
      %141 = sbr.rel (%p138) target = $region32
    $region31: #{sentence_transformer_forward.8} parent=5 // pred_region
      %s142 = ssub.s32 %s9, 1
      %p143 = scmp.lt.s32.totalorder %s14, 1
      %s144 = scalar_select %p143, %s14, 1
      %s145 = smul.addr %s144, 2
      %s146 = smul.addr %s145, 8
      %s147 = scalar_lea.vmem %s0, %s146
      %p148 = pneg %p35
      %p149 = pneg %p32
      %p150 = pneg %p56
      %p151 = pneg %p53
      %p152 = pneg %p77
      %p153 = pneg %p74
      %p154 = pneg %p103
      %p155 = pneg %p100
      %p156 = scmp.lt.s32.totalorder %s14, 1
      %s157 = scalar_select %p156, %s14, 1
      %s158 = smul.addr %s157, 2
      %s159 = smul.addr %s158, 8
      %s160 = scalar_lea.vmem %s3, %s159
      %p161 = scmp.lt.s32.totalorder %s14, 1
      %s162 = scalar_select %p161, %s14, 1
      %s163 = smul.addr %s162, 2
      %s164 = smul.addr %s163, 8
      %s165 = scalar_lea.vmem %s0, %s164
      %p166 = scmp.lt.s32.totalorder %s14, 1
      %s167 = scalar_select %p166, %s14, 1
      %s168 = smul.addr %s167, 2
      %s169 = smul.addr %s168, 8
      %s170 = scalar_lea.vmem %s3, %s169
      %v171 = vld [vmem:[%s165] sm:$0xff]
      %v172 = vld [vmem:[%s165 + $0x8] sm:$0xff]
      %v173 = vld [vmem:[%s1] sm:$0x1]
      %v174 = vld [vmem:[%s2] sm:$0x1]
      %vm175 = vcmask 261120
      %v176 = vsel %vm175, %v171, 0.0
      %177 = vadd.xlane.f32.xlu0 %v176
      %v178 = vpop.xlane.xlu0 %177
      %v179 = vsel %vm175, %v172, 0.0
      %180 = vadd.xlane.f32.xlu0 %v179
      %v181 = vpop.xlane.xlu0 %180
      %v182 = vrcp.pop 32.0
      %v183 = vmul.f32 32.0, %v182
      %v184 = vsub.f32 1.0, %v183
      %v185 = vmul.f32 %v182, %v184
      %v186 = vadd.f32 %v182, %v185
      %vm187 = vweird.f32 %v182
      %v188 = vsel %vm187, %v182, %v186
      %v189 = vmul.f32 %v178, %v188
      %v190 = vmul.f32 %v181, %v188
      %v191 = vsub.f32 %v171, %v189
      %v192 = vsub.f32 %v172, %v190
      %v193 = vmul.f32 %v191, %v191
      %v194 = vmul.f32 %v192, %v192
      %v195 = vsel %vm175, %v193, 0.0
      %196 = vadd.xlane.f32.xlu0 %v195
      %v197 = vpop.xlane.xlu0 %196
      %v198 = vsel %vm175, %v194, 0.0
      %199 = vadd.xlane.f32.xlu0 %v198
      %v200 = vpop.xlane.xlu0 %199
      %v201 = vmul.f32 %v197, %v188
      %v202 = vmul.f32 %v200, %v188
      %v203 = vadd.f32 %v201, 1e-05
      %v204 = vadd.f32 %v202, 1e-05
      %v205 = vrsqrt.pop %v203
      %v206 = vmul.f32 %v205, %v203
      %v207 = vmul.f32 %v206, %v205
      %v208 = vmul.f32 0.5, %v207
      %v209 = vsub.f32 1.5, %v208
      %v210 = vmul.f32 %v205, %v209
      %vm211 = vweird.f32 %v203
      %vm212 = vweird.f32 %v205
      %vm213 = vmor %vm211, %vm212
      %v214 = vsel %vm213, %v205, %v210
      %v215 = vrsqrt.pop %v204
      %v216 = vmul.f32 %v215, %v204
      %v217 = vmul.f32 %v216, %v215
      %v218 = vmul.f32 0.5, %v217
      %v219 = vsub.f32 1.5, %v218
      %v220 = vmul.f32 %v215, %v219
      %vm221 = vweird.f32 %v204
      %vm222 = vweird.f32 %v215
      %vm223 = vmor %vm221, %vm222
      %v224 = vsel %vm223, %v215, %v220
      %v225 = vmul.f32 %v191, %v214
      %v226 = vmul.f32 %v192, %v224
      %v228 = vperm.slane %v173, 0
      %v230 = vmul.f32 %v225, %v228
      %v231 = vmul.f32 %v226, %v228
      %v233 = vperm.slane %v174, 0
      %v235 = vadd.f32 %v230, %v233
      %v236 = vadd.f32 %v231, %v233
      %237 = vst.msk [vmem:[%s170] sm:$0xff] %vm175, %v235
      %238 = vst.msk [vmem:[%s170 + $0x8] sm:$0xff] %vm175, %v236
      %p239 = scmp.lt.s32.totalorder %s14, 1
      %s240 = scalar_select %p239, %s14, 1
      %s241 = smul.addr %s240, 2
      %s242 = smul.addr %s241, 8
      %s243 = scalar_lea.vmem %s3, %s242
      // Predicated region
      $region33: #{sentence_transformer_forward.8} parent=31 // pred_check
        %p244 = pneg %p100
      $region34: #{sentence_transformer_forward.8} parent=31 // pred_check_branch
        %246 = sbr.rel (%p244) target = $region36
      $region35: #{sentence_transformer_forward.8} parent=31 // pred_region
        _
      $region36: #{sentence_transformer_forward.8} parent=31 // pred_fallthru
        _
    $region32: #{sentence_transformer_forward.8} parent=5 // pred_fallthru
      _
    %p247 = scmp.le.s32.totalorder 2, %s9
    // Predicated region
    $region37: #{sentence_transformer_forward.8} parent=5 // pred_check
      %p248 = pneg %p247
    $region38: #{sentence_transformer_forward.8} parent=5 // pred_check_branch
      %250 = sbr.rel (%p248) target = $region40
    $region39: #{sentence_transformer_forward.8} parent=5 // pred_region
      %s251 = ssub.s32 %s9, 2
      // Predicated region
      $region41: #{sentence_transformer_forward.8} parent=39 // pred_check
        %p252 = pneg %p106
      $region42: #{sentence_transformer_forward.8} parent=39 // pred_check_branch
        %254 = sbr.rel (%p252) target = $region44
      $region43: #{sentence_transformer_forward.8} parent=39 // pred_region
        %p255 = scmp.lt.s32.totalorder %s15, 1
        %s256 = scalar_select %p255, %s15, 1
        %s257 = smul.addr %s256, 2
        %s258 = smul.addr %s257, 8
        %s259 = scalar_lea.vmem %s3, %s258
      $region44: #{sentence_transformer_forward.8} parent=39 // pred_fallthru
        _
    $region40: #{sentence_transformer_forward.8} parent=5 // pred_fallthru
      _
  $region6: #{sentence_transformer_forward.8} parent=0 // loop_footer
    %s13 = sadd.s32 1, %s9
  $region7: #{sentence_transformer_forward.8} parent=0 // loop_footer_branch
    %8 = sbr.rel target = $region3
  $region8: #{sentence_transformer_forward.8} parent=0 // loop_exit
    _

// kernel: sentence_transformer_forward.11
$region0: #{sentence_transformer_forward.11}
  #allocation0 [shape = 'u32[]', space=smem, size = 0x4, offset = 0x4, fixed_abs, tag = 'smem constant byte address 0x4 - core index']
  #allocation1 [shape = 'u32[72,128]{1,0:T(1,128)}', space=vmem, size = 0x9000, scoped, tag = 'internal scratch']
  %s0 = inlined_call_operand.vmem [shape: f32[2,8,32], index: 0, kind: input, shape index: {}]
  %s1 = inlined_call_operand.vmem [shape: f32[2,1,8], index: 1, kind: input, shape index: {}]
  %s2 = inlined_call_operand.vmem [shape: f32[32,96], index: 2, kind: input, shape index: {}]
  %s3 = inlined_call_operand.vmem [shape: f32[1,96], index: 3, kind: input, shape index: {}]
  %s4 = inlined_call_operand.vmem [shape: f32[32,32], index: 4, kind: input, shape index: {}]
  %s5 = inlined_call_operand.vmem [shape: f32[1,32], index: 5, kind: input, shape index: {}]
  %s6 = inlined_call_operand.vmem [shape: f32[1,32], index: 6, kind: input, shape index: {}]
  %s7 = inlined_call_operand.vmem [shape: f32[1,32], index: 7, kind: input, shape index: {}]
  %s8 = inlined_call_operand.vmem [shape: f32[32,64], index: 8, kind: input, shape index: {}]
  %s9 = inlined_call_operand.vmem [shape: f32[1,64], index: 9, kind: input, shape index: {}]
  %s10 = inlined_call_operand.vmem [shape: f32[64,32], index: 10, kind: input, shape index: {}]
  %s11 = inlined_call_operand.vmem [shape: f32[1,32], index: 11, kind: input, shape index: {}]
  %s12 = inlined_call_operand.vmem [shape: f32[1,32], index: 12, kind: input, shape index: {}]
  %s13 = inlined_call_operand.vmem [shape: f32[1,32], index: 13, kind: input, shape index: {}]
  %s14 = inlined_call_operand.vmem [shape: f32[2,8,32], index: 14, kind: output, shape index: {}]
  %s15 = sld [smem:[#allocation0]]
  $region89: #{sentence_transformer_forward.11} parent=0
    _
  %s17 = ssub.s32 1, %s15
  %s18 = scalar_select 0, %s17, %s15
  loop: start=0, step=1, limit=4
  $region2: #{sentence_transformer_forward.11} parent=0 // loop_pre_header
    _
  $region3: #{sentence_transformer_forward.11} parent=0 // loop_header
    %s20 = sphi 0, %s24
    %p21 = scmp.ge.s32.totalorder %s20, 4
    %s30 = sphi 0, %s32
    %s33 = sphi 0, %s30
    %s34 = sphi 0, %s33
    %s50 = sphi 0, %s34
    %s56 = sphi 0, %s58
    %s59 = sphi 0, %s56
    %s60 = sphi 0, %s59
    %s76 = sphi 0, %s60
    %s80 = sphi 0, %s80
    %s82 = sphi 0, %s80
    %s83 = sphi 0, %s82
    %s97 = sphi 0, %s83
    %s101 = sphi 0, %s101
    %s103 = sphi 0, %s101
    %s104 = sphi 0, %s103
    %s118 = sphi 0, %s104
    %s122 = sphi 0, %s122
    %s124 = sphi 0, %s122
    %s125 = sphi 0, %s124
    %s139 = sphi 0, %s125
    %s143 = sphi 0, %s143
    %s145 = sphi 0, %s143
    %s146 = sphi 0, %s145
    %s160 = sphi 0, %s146
    %s164 = sphi 0, %s164
    %s166 = sphi 0, %s164
    %s167 = sphi 0, %s166
    %s181 = sphi 0, %s167
    %s185 = sphi 0, %s185
    %s187 = sphi 0, %s185
    %s188 = sphi 0, %s187
    %s202 = sphi 0, %s188
    %s206 = sphi 0, %s206
    %s208 = sphi 0, %s206
    %s209 = sphi 0, %s208
    %s223 = sphi 0, %s209
    %s227 = sphi 0, %s227
    %s229 = sphi 0, %s227
    %s230 = sphi 0, %s229
    %s244 = sphi 0, %s230
    %s248 = sphi 0, %s248
    %s250 = sphi 0, %s248
    %s251 = sphi 0, %s250
    %s265 = sphi 0, %s251
    %s269 = sphi 0, %s269
    %s271 = sphi 0, %s269
    %s272 = sphi 0, %s271
    %s286 = sphi 0, %s272
    %s290 = sphi 0, %s290
    %s292 = sphi 0, %s290
    %s293 = sphi 0, %s292
    %s307 = sphi 0, %s293
    %s311 = sphi 0, %s311
    %s313 = sphi 0, %s311
    %s314 = sphi 0, %s313
    %s328 = sphi 0, %s314
    %s334 = sphi 0, %s336
    %s337 = sphi 0, %s334
    %s338 = sphi 0, %s337
    %s354 = sphi 0, %s338
  $region4: #{sentence_transformer_forward.11} parent=0 // loop_header_branch
    %23 = sbr.rel (%p21) target = $region8
  $region5: #{sentence_transformer_forward.11} parent=0 // loop_body
    %s25 = ssub.s32 %s20, 1
    %s26 = ssub.s32 %s20, 2
    %s27 = sadd.s32 %s20, 1
    %s28 = ssub.s32 %s20, %s27
    %p29 = scmp.eq.s32.totalorder %s28, 0
    %s31 = sadd.s32 %s30, 1
    %s32 = scalar_select %p29, %s30, %s31
    %p35 = pneg %p29
    %p36 = scmp.eq.s32.totalorder %s20, 1
    %p37 = por %p35, %p36
    %p38 = scmp.ne.s32.totalorder %s30, %s33
    %p39 = scmp.eq.s32.totalorder %s20, 0
    %p40 = por %p38, %p39
    %p41 = scmp.ne.s32.totalorder %s30, %s33
    %p42 = scmp.eq.s32.totalorder %s25, 1
    %p43 = por %p41, %p42
    %p44 = scmp.ne.s32.totalorder %s33, %s34
    %p45 = scmp.eq.s32.totalorder %s25, 0
    %p46 = por %p44, %p45
    %p47 = scmp.ne.s32.totalorder %s33, %s34
    %p48 = scmp.eq.s32.totalorder %s26, 1
    %p49 = por %p47, %p48
    %p51 = scmp.ne.s32.totalorder %s34, %s50
    %p52 = scmp.eq.s32.totalorder %s26, 0
    %p53 = por %p51, %p52
    %s54 = ssub.s32 %s20, %s27
    %p55 = scmp.eq.s32.totalorder %s54, 0
    %s57 = sadd.s32 %s56, 1
    %s58 = scalar_select %p55, %s56, %s57
    %p61 = pneg %p55
    %p62 = scmp.eq.s32.totalorder %s20, 1
    %p63 = por %p61, %p62
    %p64 = scmp.ne.s32.totalorder %s56, %s59
    %p65 = scmp.eq.s32.totalorder %s20, 0
    %p66 = por %p64, %p65
    %p67 = scmp.ne.s32.totalorder %s56, %s59
    %p68 = scmp.eq.s32.totalorder %s25, 1
    %p69 = por %p67, %p68
    %p70 = scmp.ne.s32.totalorder %s59, %s60
    %p71 = scmp.eq.s32.totalorder %s25, 0
    %p72 = por %p70, %p71
    %p73 = scmp.ne.s32.totalorder %s59, %s60
    %p74 = scmp.eq.s32.totalorder %s26, 1
    %p75 = por %p73, %p74
    %p77 = scmp.ne.s32.totalorder %s60, %s76
    %p78 = scmp.eq.s32.totalorder %s26, 0
    %p79 = por %p77, %p78
    %s81 = sadd.s32 %s80, 1
    %p84 = scmp.eq.s32.totalorder %s20, 1
    %p85 = scmp.ne.s32.totalorder %s80, %s82
    %p86 = scmp.eq.s32.totalorder %s20, 0
    %p87 = por %p85, %p86
    %p88 = scmp.ne.s32.totalorder %s80, %s82
    %p89 = scmp.eq.s32.totalorder %s25, 1
    %p90 = por %p88, %p89
    %p91 = scmp.ne.s32.totalorder %s82, %s83
    %p92 = scmp.eq.s32.totalorder %s25, 0
    %p93 = por %p91, %p92
    %p94 = scmp.ne.s32.totalorder %s82, %s83
    %p95 = scmp.eq.s32.totalorder %s26, 1
    %p96 = por %p94, %p95
    %p98 = scmp.ne.s32.totalorder %s83, %s97
    %p99 = scmp.eq.s32.totalorder %s26, 0
    %p100 = por %p98, %p99
    %s102 = sadd.s32 %s101, 1
    %p105 = scmp.eq.s32.totalorder %s20, 1
    %p106 = scmp.ne.s32.totalorder %s101, %s103
    %p107 = scmp.eq.s32.totalorder %s20, 0
    %p108 = por %p106, %p107
    %p109 = scmp.ne.s32.totalorder %s101, %s103
    %p110 = scmp.eq.s32.totalorder %s25, 1
    %p111 = por %p109, %p110
    %p112 = scmp.ne.s32.totalorder %s103, %s104
    %p113 = scmp.eq.s32.totalorder %s25, 0
    %p114 = por %p112, %p113
    %p115 = scmp.ne.s32.totalorder %s103, %s104
    %p116 = scmp.eq.s32.totalorder %s26, 1
    %p117 = por %p115, %p116
    %p119 = scmp.ne.s32.totalorder %s104, %s118
    %p120 = scmp.eq.s32.totalorder %s26, 0
    %p121 = por %p119, %p120
    %s123 = sadd.s32 %s122, 1
    %p126 = scmp.eq.s32.totalorder %s20, 1
    %p127 = scmp.ne.s32.totalorder %s122, %s124
    %p128 = scmp.eq.s32.totalorder %s20, 0
    %p129 = por %p127, %p128
    %p130 = scmp.ne.s32.totalorder %s122, %s124
    %p131 = scmp.eq.s32.totalorder %s25, 1
    %p132 = por %p130, %p131
    %p133 = scmp.ne.s32.totalorder %s124, %s125
    %p134 = scmp.eq.s32.totalorder %s25, 0
    %p135 = por %p133, %p134
    %p136 = scmp.ne.s32.totalorder %s124, %s125
    %p137 = scmp.eq.s32.totalorder %s26, 1
    %p138 = por %p136, %p137
    %p140 = scmp.ne.s32.totalorder %s125, %s139
    %p141 = scmp.eq.s32.totalorder %s26, 0
    %p142 = por %p140, %p141
    %s144 = sadd.s32 %s143, 1
    %p147 = scmp.eq.s32.totalorder %s20, 1
    %p148 = scmp.ne.s32.totalorder %s143, %s145
    %p149 = scmp.eq.s32.totalorder %s20, 0
    %p150 = por %p148, %p149
    %p151 = scmp.ne.s32.totalorder %s143, %s145
    %p152 = scmp.eq.s32.totalorder %s25, 1
    %p153 = por %p151, %p152
    %p154 = scmp.ne.s32.totalorder %s145, %s146
    %p155 = scmp.eq.s32.totalorder %s25, 0
    %p156 = por %p154, %p155
    %p157 = scmp.ne.s32.totalorder %s145, %s146
    %p158 = scmp.eq.s32.totalorder %s26, 1
    %p159 = por %p157, %p158
    %p161 = scmp.ne.s32.totalorder %s146, %s160
    %p162 = scmp.eq.s32.totalorder %s26, 0
    %p163 = por %p161, %p162
    %s165 = sadd.s32 %s164, 1
    %p168 = scmp.eq.s32.totalorder %s20, 1
    %p169 = scmp.ne.s32.totalorder %s164, %s166
    %p170 = scmp.eq.s32.totalorder %s20, 0
    %p171 = por %p169, %p170
    %p172 = scmp.ne.s32.totalorder %s164, %s166
    %p173 = scmp.eq.s32.totalorder %s25, 1
    %p174 = por %p172, %p173
    %p175 = scmp.ne.s32.totalorder %s166, %s167
    %p176 = scmp.eq.s32.totalorder %s25, 0
    %p177 = por %p175, %p176
    %p178 = scmp.ne.s32.totalorder %s166, %s167
    %p179 = scmp.eq.s32.totalorder %s26, 1
    %p180 = por %p178, %p179
    %p182 = scmp.ne.s32.totalorder %s167, %s181
    %p183 = scmp.eq.s32.totalorder %s26, 0
    %p184 = por %p182, %p183
    %s186 = sadd.s32 %s185, 1
    %p189 = scmp.eq.s32.totalorder %s20, 1
    %p190 = scmp.ne.s32.totalorder %s185, %s187
    %p191 = scmp.eq.s32.totalorder %s20, 0
    %p192 = por %p190, %p191
    %p193 = scmp.ne.s32.totalorder %s185, %s187
    %p194 = scmp.eq.s32.totalorder %s25, 1
    %p195 = por %p193, %p194
    %p196 = scmp.ne.s32.totalorder %s187, %s188
    %p197 = scmp.eq.s32.totalorder %s25, 0
    %p198 = por %p196, %p197
    %p199 = scmp.ne.s32.totalorder %s187, %s188
    %p200 = scmp.eq.s32.totalorder %s26, 1
    %p201 = por %p199, %p200
    %p203 = scmp.ne.s32.totalorder %s188, %s202
    %p204 = scmp.eq.s32.totalorder %s26, 0
    %p205 = por %p203, %p204
    %s207 = sadd.s32 %s206, 1
    %p210 = scmp.eq.s32.totalorder %s20, 1
    %p211 = scmp.ne.s32.totalorder %s206, %s208
    %p212 = scmp.eq.s32.totalorder %s20, 0
    %p213 = por %p211, %p212
    %p214 = scmp.ne.s32.totalorder %s206, %s208
    %p215 = scmp.eq.s32.totalorder %s25, 1
    %p216 = por %p214, %p215
    %p217 = scmp.ne.s32.totalorder %s208, %s209
    %p218 = scmp.eq.s32.totalorder %s25, 0
    %p219 = por %p217, %p218
    %p220 = scmp.ne.s32.totalorder %s208, %s209
    %p221 = scmp.eq.s32.totalorder %s26, 1
    %p222 = por %p220, %p221
    %p224 = scmp.ne.s32.totalorder %s209, %s223
    %p225 = scmp.eq.s32.totalorder %s26, 0
    %p226 = por %p224, %p225
    %s228 = sadd.s32 %s227, 1
    %p231 = scmp.eq.s32.totalorder %s20, 1
    %p232 = scmp.ne.s32.totalorder %s227, %s229
    %p233 = scmp.eq.s32.totalorder %s20, 0
    %p234 = por %p232, %p233
    %p235 = scmp.ne.s32.totalorder %s227, %s229
    %p236 = scmp.eq.s32.totalorder %s25, 1
    %p237 = por %p235, %p236
    %p238 = scmp.ne.s32.totalorder %s229, %s230
    %p239 = scmp.eq.s32.totalorder %s25, 0
    %p240 = por %p238, %p239
    %p241 = scmp.ne.s32.totalorder %s229, %s230
    %p242 = scmp.eq.s32.totalorder %s26, 1
    %p243 = por %p241, %p242
    %p245 = scmp.ne.s32.totalorder %s230, %s244
    %p246 = scmp.eq.s32.totalorder %s26, 0
    %p247 = por %p245, %p246
    %s249 = sadd.s32 %s248, 1
    %p252 = scmp.eq.s32.totalorder %s20, 1
    %p253 = scmp.ne.s32.totalorder %s248, %s250
    %p254 = scmp.eq.s32.totalorder %s20, 0
    %p255 = por %p253, %p254
    %p256 = scmp.ne.s32.totalorder %s248, %s250
    %p257 = scmp.eq.s32.totalorder %s25, 1
    %p258 = por %p256, %p257
    %p259 = scmp.ne.s32.totalorder %s250, %s251
    %p260 = scmp.eq.s32.totalorder %s25, 0
    %p261 = por %p259, %p260
    %p262 = scmp.ne.s32.totalorder %s250, %s251
    %p263 = scmp.eq.s32.totalorder %s26, 1
    %p264 = por %p262, %p263
    %p266 = scmp.ne.s32.totalorder %s251, %s265
    %p267 = scmp.eq.s32.totalorder %s26, 0
    %p268 = por %p266, %p267
    %s270 = sadd.s32 %s269, 1
    %p273 = scmp.eq.s32.totalorder %s20, 1
    %p274 = scmp.ne.s32.totalorder %s269, %s271
    %p275 = scmp.eq.s32.totalorder %s20, 0
    %p276 = por %p274, %p275
    %p277 = scmp.ne.s32.totalorder %s269, %s271
    %p278 = scmp.eq.s32.totalorder %s25, 1
    %p279 = por %p277, %p278
    %p280 = scmp.ne.s32.totalorder %s271, %s272
    %p281 = scmp.eq.s32.totalorder %s25, 0
    %p282 = por %p280, %p281
    %p283 = scmp.ne.s32.totalorder %s271, %s272
    %p284 = scmp.eq.s32.totalorder %s26, 1
    %p285 = por %p283, %p284
    %p287 = scmp.ne.s32.totalorder %s272, %s286
    %p288 = scmp.eq.s32.totalorder %s26, 0
    %p289 = por %p287, %p288
    %s291 = sadd.s32 %s290, 1
    %p294 = scmp.eq.s32.totalorder %s20, 1
    %p295 = scmp.ne.s32.totalorder %s290, %s292
    %p296 = scmp.eq.s32.totalorder %s20, 0
    %p297 = por %p295, %p296
    %p298 = scmp.ne.s32.totalorder %s290, %s292
    %p299 = scmp.eq.s32.totalorder %s25, 1
    %p300 = por %p298, %p299
    %p301 = scmp.ne.s32.totalorder %s292, %s293
    %p302 = scmp.eq.s32.totalorder %s25, 0
    %p303 = por %p301, %p302
    %p304 = scmp.ne.s32.totalorder %s292, %s293
    %p305 = scmp.eq.s32.totalorder %s26, 1
    %p306 = por %p304, %p305
    %p308 = scmp.ne.s32.totalorder %s293, %s307
    %p309 = scmp.eq.s32.totalorder %s26, 0
    %p310 = por %p308, %p309
    %s312 = sadd.s32 %s311, 1
    %p315 = scmp.eq.s32.totalorder %s20, 1
    %p316 = scmp.ne.s32.totalorder %s311, %s313
    %p317 = scmp.eq.s32.totalorder %s20, 0
    %p318 = por %p316, %p317
    %p319 = scmp.ne.s32.totalorder %s311, %s313
    %p320 = scmp.eq.s32.totalorder %s25, 1
    %p321 = por %p319, %p320
    %p322 = scmp.ne.s32.totalorder %s313, %s314
    %p323 = scmp.eq.s32.totalorder %s25, 0
    %p324 = por %p322, %p323
    %p325 = scmp.ne.s32.totalorder %s313, %s314
    %p326 = scmp.eq.s32.totalorder %s26, 1
    %p327 = por %p325, %p326
    %p329 = scmp.ne.s32.totalorder %s314, %s328
    %p330 = scmp.eq.s32.totalorder %s26, 0
    %p331 = por %p329, %p330
    %s332 = ssub.s32 %s20, %s27
    %p333 = scmp.eq.s32.totalorder %s332, 0
    %s335 = sadd.s32 %s334, 1
    %s336 = scalar_select %p333, %s334, %s335
    %p339 = pneg %p333
    %p340 = scmp.eq.s32.totalorder %s20, 1
    %p341 = por %p339, %p340
    %p342 = scmp.ne.s32.totalorder %s334, %s337
    %p343 = scmp.eq.s32.totalorder %s20, 0
    %p344 = por %p342, %p343
    %p345 = scmp.ne.s32.totalorder %s334, %s337
    %p346 = scmp.eq.s32.totalorder %s25, 1
    %p347 = por %p345, %p346
    %p348 = scmp.ne.s32.totalorder %s337, %s338
    %p349 = scmp.eq.s32.totalorder %s25, 0
    %p350 = por %p348, %p349
    %p351 = scmp.ne.s32.totalorder %s337, %s338
    %p352 = scmp.eq.s32.totalorder %s26, 1
    %p353 = por %p351, %p352
    %p355 = scmp.ne.s32.totalorder %s338, %s354
    %p356 = scmp.eq.s32.totalorder %s26, 0
    %p357 = por %p355, %p356
    %p358 = scmp.le.s32.totalorder 1, %s20
    %p359 = scmp.lt.s32.totalorder %s20, 3
    %p360 = pnand %p358, %p359
    %p361 = pneg %p360
    // Predicated region
    $region9: #{sentence_transformer_forward.11} parent=5 // pred_check
      _
    $region10: #{sentence_transformer_forward.11} parent=5 // pred_check_branch
      %363 = sbr.rel (%p360) target = $region12
    $region11: #{sentence_transformer_forward.11} parent=5 // pred_region
      %s364 = ssub.s32 %s20, 1
      // Predicated region
      $region13: #{sentence_transformer_forward.11} parent=11 // pred_check
        %p365 = pneg %p93
      $region14: #{sentence_transformer_forward.11} parent=11 // pred_check_branch
        %367 = sbr.rel (%p365) target = $region16
      $region15: #{sentence_transformer_forward.11} parent=11 // pred_region
        _
      $region16: #{sentence_transformer_forward.11} parent=11 // pred_fallthru
        _
      // Predicated region
      $region17: #{sentence_transformer_forward.11} parent=11 // pred_check
        %p368 = pneg %p114
      $region18: #{sentence_transformer_forward.11} parent=11 // pred_check_branch
        %370 = sbr.rel (%p368) target = $region20
      $region19: #{sentence_transformer_forward.11} parent=11 // pred_region
        _
      $region20: #{sentence_transformer_forward.11} parent=11 // pred_fallthru
        _
      // Predicated region
      $region21: #{sentence_transformer_forward.11} parent=11 // pred_check
        %p371 = pneg %p135
      $region22: #{sentence_transformer_forward.11} parent=11 // pred_check_branch
        %373 = sbr.rel (%p371) target = $region24
      $region23: #{sentence_transformer_forward.11} parent=11 // pred_region
        _
      $region24: #{sentence_transformer_forward.11} parent=11 // pred_fallthru
        _
      // Predicated region
      $region25: #{sentence_transformer_forward.11} parent=11 // pred_check
        %p374 = pneg %p156
      $region26: #{sentence_transformer_forward.11} parent=11 // pred_check_branch
        %376 = sbr.rel (%p374) target = $region28
      $region27: #{sentence_transformer_forward.11} parent=11 // pred_region
        _
      $region28: #{sentence_transformer_forward.11} parent=11 // pred_fallthru
        _
      // Predicated region
      $region29: #{sentence_transformer_forward.11} parent=11 // pred_check
        %p377 = pneg %p177
      $region30: #{sentence_transformer_forward.11} parent=11 // pred_check_branch
        %379 = sbr.rel (%p377) target = $region32
      $region31: #{sentence_transformer_forward.11} parent=11 // pred_region
        _
      $region32: #{sentence_transformer_forward.11} parent=11 // pred_fallthru
        _
      // Predicated region
      $region33: #{sentence_transformer_forward.11} parent=11 // pred_check
        %p380 = pneg %p198
      $region34: #{sentence_transformer_forward.11} parent=11 // pred_check_branch
        %382 = sbr.rel (%p380) target = $region36
      $region35: #{sentence_transformer_forward.11} parent=11 // pred_region
        _
      $region36: #{sentence_transformer_forward.11} parent=11 // pred_fallthru
        _
      // Predicated region
      $region37: #{sentence_transformer_forward.11} parent=11 // pred_check
        %p383 = pneg %p219
      $region38: #{sentence_transformer_forward.11} parent=11 // pred_check_branch
        %385 = sbr.rel (%p383) target = $region40
      $region39: #{sentence_transformer_forward.11} parent=11 // pred_region
        _
      $region40: #{sentence_transformer_forward.11} parent=11 // pred_fallthru
        _
      // Predicated region
      $region41: #{sentence_transformer_forward.11} parent=11 // pred_check
        %p386 = pneg %p240
      $region42: #{sentence_transformer_forward.11} parent=11 // pred_check_branch
        %388 = sbr.rel (%p386) target = $region44
      $region43: #{sentence_transformer_forward.11} parent=11 // pred_region
        _
      $region44: #{sentence_transformer_forward.11} parent=11 // pred_fallthru
        _
      // Predicated region
      $region45: #{sentence_transformer_forward.11} parent=11 // pred_check
        %p389 = pneg %p261
      $region46: #{sentence_transformer_forward.11} parent=11 // pred_check_branch
        %391 = sbr.rel (%p389) target = $region48
      $region47: #{sentence_transformer_forward.11} parent=11 // pred_region
        _
      $region48: #{sentence_transformer_forward.11} parent=11 // pred_fallthru
        _
      // Predicated region
      $region49: #{sentence_transformer_forward.11} parent=11 // pred_check
        %p392 = pneg %p282
      $region50: #{sentence_transformer_forward.11} parent=11 // pred_check_branch
        %394 = sbr.rel (%p392) target = $region52
      $region51: #{sentence_transformer_forward.11} parent=11 // pred_region
        _
      $region52: #{sentence_transformer_forward.11} parent=11 // pred_fallthru
        _
      // Predicated region
      $region53: #{sentence_transformer_forward.11} parent=11 // pred_check
        %p395 = pneg %p303
      $region54: #{sentence_transformer_forward.11} parent=11 // pred_check_branch
        %397 = sbr.rel (%p395) target = $region56
      $region55: #{sentence_transformer_forward.11} parent=11 // pred_region
        _
      $region56: #{sentence_transformer_forward.11} parent=11 // pred_fallthru
        _
      // Predicated region
      $region57: #{sentence_transformer_forward.11} parent=11 // pred_check
        %p398 = pneg %p324
      $region58: #{sentence_transformer_forward.11} parent=11 // pred_check_branch
        %400 = sbr.rel (%p398) target = $region60
      $region59: #{sentence_transformer_forward.11} parent=11 // pred_region
        _
      $region60: #{sentence_transformer_forward.11} parent=11 // pred_fallthru
        _
    $region12: #{sentence_transformer_forward.11} parent=5 // pred_fallthru
      _
    %p401 = scmp.lt.s32.totalorder %s20, 2
    // Predicated region
    $region61: #{sentence_transformer_forward.11} parent=5 // pred_check
      %p402 = pneg %p401
    $region62: #{sentence_transformer_forward.11} parent=5 // pred_check_branch
      %404 = sbr.rel (%p402) target = $region64
    $region63: #{sentence_transformer_forward.11} parent=5 // pred_region
      // Predicated region
      $region65: #{sentence_transformer_forward.11} parent=63 // pred_check
        %p405 = pneg %p40
      $region66: #{sentence_transformer_forward.11} parent=63 // pred_check_branch
        %407 = sbr.rel (%p405) target = $region68
      $region67: #{sentence_transformer_forward.11} parent=63 // pred_region
        %p408 = scmp.lt.s32.totalorder %s20, 1
        %s409 = scalar_select %p408, %s20, 1
        %s410 = smul.addr %s409, 8
        %s411 = scalar_lea.vmem %s0, %s410
      $region68: #{sentence_transformer_forward.11} parent=63 // pred_fallthru
        _
      // Predicated region
      $region69: #{sentence_transformer_forward.11} parent=63 // pred_check
        %p412 = pneg %p66
      $region70: #{sentence_transformer_forward.11} parent=63 // pred_check_branch
        %414 = sbr.rel (%p412) target = $region72
      $region71: #{sentence_transformer_forward.11} parent=63 // pred_region
        %p415 = scmp.lt.s32.totalorder %s20, 1
        %s416 = scalar_select %p415, %s20, 1
        %s417 = scalar_lea.vmem %s1, %s416
      $region72: #{sentence_transformer_forward.11} parent=63 // pred_fallthru
        _
    $region64: #{sentence_transformer_forward.11} parent=5 // pred_fallthru
      _
    %p418 = scmp.le.s32.totalorder 1, %s20
    %p419 = scmp.lt.s32.totalorder %s20, 3
    %p420 = pnand %p418, %p419
    %p421 = pneg %p420
    // Predicated region
    $region73: #{sentence_transformer_forward.11} parent=5 // pred_check
      _
    $region74: #{sentence_transformer_forward.11} parent=5 // pred_check_branch
      %423 = sbr.rel (%p420) target = $region76
    $region75: #{sentence_transformer_forward.11} parent=5 // pred_region
      %s424 = ssub.s32 %s20, 1
      %p425 = scmp.lt.s32.totalorder %s25, 1
      %s426 = scalar_select %p425, %s25, 1
      %s427 = smul.addr %s426, 8
      %s428 = scalar_lea.vmem %s0, %s427
      %p429 = pneg %p46
      %p430 = pneg %p43
      %p431 = scmp.lt.s32.totalorder %s25, 1
      %s432 = scalar_select %p431, %s25, 1
      %s433 = scalar_lea.vmem %s1, %s432
      %p434 = pneg %p72
      %p435 = pneg %p69
      %p436 = pneg %p93
      %p437 = pneg %p90
      %p438 = pneg %p114
      %p439 = pneg %p111
      %p440 = pneg %p135
      %p441 = pneg %p132
      %p442 = pneg %p156
      %p443 = pneg %p153
      %p444 = pneg %p177
      %p445 = pneg %p174
      %p446 = pneg %p198
      %p447 = pneg %p195
      %p448 = pneg %p219
      %p449 = pneg %p216
      %p450 = pneg %p240
      %p451 = pneg %p237
      %p452 = pneg %p261
      %p453 = pneg %p258
      %p454 = pneg %p282
      %p455 = pneg %p279
      %p456 = pneg %p303
      %p457 = pneg %p300
      %p458 = pneg %p324
      %p459 = pneg %p321
      %p460 = pneg %p350
      %p461 = pneg %p347
      %p462 = scmp.lt.s32.totalorder %s25, 1
      %s463 = scalar_select %p462, %s25, 1
      %s464 = smul.addr %s463, 8
      %s465 = scalar_lea.vmem %s14, %s464
      %p466 = scmp.lt.s32.totalorder %s25, 1
      %s467 = scalar_select %p466, %s25, 1
      %s468 = smul.addr %s467, 8
      %s469 = scalar_lea.vmem %s0, %s468
      %p470 = scmp.lt.s32.totalorder %s25, 1
      %s471 = scalar_select %p470, %s25, 1
      %s472 = scalar_lea.vmem %s1, %s471
      %p473 = scmp.lt.s32.totalorder %s25, 1
      %s474 = scalar_select %p473, %s25, 1
      %s475 = smul.addr %s474, 8
      %s476 = scalar_lea.vmem %s14, %s475
      %v477 = vld [vmem:[%s469] sm:$0xff]
      %v478 = vld [vmem:[%s2] sm:$0xff]
      %v479 = vld [vmem:[%s2 + $0x8] sm:$0xff]
      %v480 = vld [vmem:[%s2 + $0x10] sm:$0xff]
      %v481 = vld [vmem:[%s2 + $0x18] sm:$0xff]
      %v482 = vld [vmem:[%s3] sm:$0x1]
      %v484 = vperm.slane %v482, 0
      %vm486 = vcmask 261120
      %v488 = vsel %vm486, %v477, 0
      %490 = vmatpush.msra.mxu0 0.0
      %491 = vmatpush.msra.mxu0 0.0
      %492 = vmatpush.msra.mxu0 0.0
      %493 = vmatpush.msra.mxu0 0.0
      %494 = vmatpush.msra.mxu0 0.0
      %495 = vmatpush.msra.mxu0 0.0
      %496 = vmatpush.msra.mxu0 0.0
      %497 = vmatpush.msra.mxu0 0.0
      %498 = vmatpush.msra.mxu0 0.0
      %499 = vmatpush.msra.mxu0 0.0
      %500 = vmatpush.msra.mxu0 0.0
      %501 = vmatpush.msra.mxu0 0.0
      %502 = vmatpush.msra.mxu0 %v481
      %503 = vmatpush.msra.mxu0 %v480
      %504 = vmatpush.msra.mxu0 %v479
      %505 = vmatpush.msra.mxu0 %v478
      %506 = vmatmul.f32.gmra.mxu0 %v488
      %v507 = vpop.f32.mrf.mxu0
      %v508 = vadd.f32 %v484, %v507
      %509 = vdwg.mxu0
      %v510 = vld [vmem:[%s472] sm:$0x1]
      %v511 = vld [vmem:[%s4] sm:$0xff]
      %v512 = vld [vmem:[%s4 + $0x8] sm:$0xff]
      %v513 = vld [vmem:[%s4 + $0x10] sm:$0xff]
      %v514 = vld [vmem:[%s4 + $0x18] sm:$0xff]
      %v515 = vld [vmem:[%s5] sm:$0x1]
      %v517 = vperm.slane %v510, 0
      %520 = vrot.lane.b32.xlu0 %v508, 96
      %v521 = vpop.permute.xlu0 %520
      %vm522 = vcmask 64512
      %v523 = vsel %vm522, %v508, 0
      %v525 = vsel %vm522, %v521, 0
      %527 = vmatpush.xpose.msra.mxu0 0.0
      %528 = vmatpush.xpose.msra.mxu0 0.0
      %529 = vmatpush.xpose.msra.mxu0 0.0
      %530 = vmatpush.xpose.msra.mxu0 0.0
      %531 = vmatpush.xpose.msra.mxu0 0.0
      %532 = vmatpush.xpose.msra.mxu0 0.0
      %533 = vmatpush.xpose.msra.mxu0 0.0
      %534 = vmatpush.xpose.msra.mxu0 0.0
      %535 = vmatpush.xpose.msra.mxu0 0.0
      %536 = vmatpush.xpose.msra.mxu0 0.0
      %537 = vmatpush.xpose.msra.mxu0 0.0
      %538 = vmatpush.xpose.msra.mxu0 0.0
      %539 = vmatpush.xpose.msra.mxu0 0.0
      %540 = vmatpush.xpose.msra.mxu0 0.0
      %541 = vmatpush.xpose.msra.mxu0 0.0
      %542 = vmatpush.xpose.msra.mxu0 %v525
      %543 = vmatmul.f32.gmra.mxu0 %v523
      %v544 = vpop.f32.mrf.mxu0
      %v545 = vadd.f32 %v517, %v544
      %546 = vdwg.mxu0
      %v547 = vsel %vm522, %v545, -inf
      %548 = vmax.xlane.f32.xlu0 %v547
      %v549 = vpop.xlane.xlu0 %548
      %v550 = vsub.f32 %v545, %v549
      %v551 = vmul.f32 %v550, 1.442695
      %v552 = vpow.pop %v551
      %v553 = vsel %vm522, %v552, 0.0
      %554 = vadd.xlane.f32.xlu0 %v553
      %v555 = vpop.xlane.xlu0 %554
      %v556 = vrcp.pop %v555
      %v557 = vmul.f32 %v552, %v556
      %558 = vrot.lane.b32.xlu0 %v508, 64
      %v559 = vpop.permute.xlu0 %558
      %v562 = vsel %vm522, %v557, 0
      %564 = vmatpush.msra.mxu0 0.0
      %565 = vmatpush.msra.mxu0 0.0
      %566 = vmatpush.msra.mxu0 0.0
      %567 = vmatpush.msra.mxu0 0.0
      %568 = vmatpush.msra.mxu0 0.0
      %569 = vmatpush.msra.mxu0 0.0
      %570 = vmatpush.msra.mxu0 0.0
      %571 = vmatpush.msra.mxu0 0.0
      %572 = vmatpush.msra.mxu0 0.0
      %573 = vmatpush.msra.mxu0 0.0
      %574 = vmatpush.msra.mxu0 0.0
      %575 = vmatpush.msra.mxu0 0.0
      %576 = vmatpush.msra.mxu0 0.0
      %577 = vmatpush.msra.mxu0 0.0
      %578 = vmatpush.msra.mxu0 0.0
      %579 = vmatpush.msra.mxu0 %v559
      %580 = vmatmul.f32.gmra.mxu0 %v562
      %v581 = vpop.f32.mrf.mxu0
      %v582 = vadd.f32 0.0, %v581
      %583 = vdwg.mxu0
      %584 = vrot.lane.b32.xlu0 %v508, 120
      %v585 = vpop.permute.xlu0 %584
      %586 = vrot.lane.b32.xlu0 %v508, 88
      %v587 = vpop.permute.xlu0 %586
      %v588 = vsel %vm522, %v585, 0
      %v590 = vsel %vm522, %v587, 0
      %592 = vmatpush.xpose.msra.mxu0 0.0
      %593 = vmatpush.xpose.msra.mxu0 0.0
      %594 = vmatpush.xpose.msra.mxu0 0.0
      %595 = vmatpush.xpose.msra.mxu0 0.0
      %596 = vmatpush.xpose.msra.mxu0 0.0
      %597 = vmatpush.xpose.msra.mxu0 0.0
      %598 = vmatpush.xpose.msra.mxu0 0.0
      %599 = vmatpush.xpose.msra.mxu0 0.0
      %600 = vmatpush.xpose.msra.mxu0 0.0
      %601 = vmatpush.xpose.msra.mxu0 0.0
      %602 = vmatpush.xpose.msra.mxu0 0.0
      %603 = vmatpush.xpose.msra.mxu0 0.0
      %604 = vmatpush.xpose.msra.mxu0 0.0
      %605 = vmatpush.xpose.msra.mxu0 0.0
      %606 = vmatpush.xpose.msra.mxu0 0.0
      %607 = vmatpush.xpose.msra.mxu0 %v590
      %608 = vmatmul.f32.gmra.mxu0 %v588
      %v609 = vpop.f32.mrf.mxu0
      %v610 = vadd.f32 %v517, %v609
      %611 = vdwg.mxu0
      %v612 = vsel %vm522, %v610, -inf
      %613 = vmax.xlane.f32.xlu0 %v612
      %v614 = vpop.xlane.xlu0 %613
      %v615 = vsub.f32 %v610, %v614
      %v616 = vmul.f32 %v615, 1.442695
      %v617 = vpow.pop %v616
      %v618 = vsel %vm522, %v617, 0.0
      %619 = vadd.xlane.f32.xlu0 %v618
      %v620 = vpop.xlane.xlu0 %619
      %v621 = vrcp.pop %v620
      %v622 = vmul.f32 %v617, %v621
      %623 = vrot.lane.b32.xlu0 %v508, 56
      %v624 = vpop.permute.xlu0 %623
      %v627 = vsel %vm522, %v622, 0
      %629 = vmatpush.msra.mxu0 0.0
      %630 = vmatpush.msra.mxu0 0.0
      %631 = vmatpush.msra.mxu0 0.0
      %632 = vmatpush.msra.mxu0 0.0
      %633 = vmatpush.msra.mxu0 0.0
      %634 = vmatpush.msra.mxu0 0.0
      %635 = vmatpush.msra.mxu0 0.0
      %636 = vmatpush.msra.mxu0 0.0
      %637 = vmatpush.msra.mxu0 0.0
      %638 = vmatpush.msra.mxu0 0.0
      %639 = vmatpush.msra.mxu0 0.0
      %640 = vmatpush.msra.mxu0 0.0
      %641 = vmatpush.msra.mxu0 0.0
      %642 = vmatpush.msra.mxu0 0.0
      %643 = vmatpush.msra.mxu0 0.0
      %644 = vmatpush.msra.mxu0 %v624
      %645 = vmatmul.f32.gmra.mxu0 %v627
      %v646 = vpop.f32.mrf.mxu0
      %v647 = vadd.f32 0.0, %v646
      %648 = vdwg.mxu0
      %v650 = vsel %vm522, %v647, 0
      %652 = vmatpush.msra.mxu0 0.0
      %653 = vmatpush.msra.mxu0 0.0
      %654 = vmatpush.msra.mxu0 0.0
      %655 = vmatpush.msra.mxu0 0.0
      %656 = vmatpush.msra.mxu0 0.0
      %657 = vmatpush.msra.mxu0 0.0
      %658 = vmatpush.msra.mxu0 0.0
      %659 = vmatpush.msra.mxu0 0.0
      %660 = vmatpush.msra.mxu0 0.0
      %661 = vmatpush.msra.mxu0 0.0
      %662 = vmatpush.msra.mxu0 0.0
      %663 = vmatpush.msra.mxu0 0.0
      %664 = vmatpush.msra.mxu0 0.0
      %665 = vmatpush.msra.mxu0 0.0
      %666 = vmatpush.msra.mxu0 0.0
      %667 = vmatpush.msra.mxu0 %v512
      %668 = vmatmul.f32.gmra.mxu0 %v650
      %v669 = vpop.f32.mrf.mxu0
      %v670 = vadd.f32 0.0, %v669
      %671 = vdwg.mxu0
      %v673 = vsel %vm522, %v582, 0
      %675 = vmatpush.msra.mxu0 0.0
      %676 = vmatpush.msra.mxu0 0.0
      %677 = vmatpush.msra.mxu0 0.0
      %678 = vmatpush.msra.mxu0 0.0
      %679 = vmatpush.msra.mxu0 0.0
      %680 = vmatpush.msra.mxu0 0.0
      %681 = vmatpush.msra.mxu0 0.0
      %682 = vmatpush.msra.mxu0 0.0
      %683 = vmatpush.msra.mxu0 0.0
      %684 = vmatpush.msra.mxu0 0.0
      %685 = vmatpush.msra.mxu0 0.0
      %686 = vmatpush.msra.mxu0 0.0
      %687 = vmatpush.msra.mxu0 0.0
      %688 = vmatpush.msra.mxu0 0.0
      %689 = vmatpush.msra.mxu0 0.0
      %690 = vmatpush.msra.mxu0 %v511
      %691 = vmatmul.f32.gmra.mxu0 %v673
      %v692 = vpop.f32.mrf.mxu0
      %v693 = vadd.f32 %v670, %v692
      %694 = vdwg.mxu0
      %695 = vrot.lane.b32.xlu0 %v508, 112
      %v696 = vpop.permute.xlu0 %695
      %697 = vrot.lane.b32.xlu0 %v508, 80
      %v698 = vpop.permute.xlu0 %697
      %v699 = vsel %vm522, %v696, 0
      %v701 = vsel %vm522, %v698, 0
      %703 = vmatpush.xpose.msra.mxu0 0.0
      %704 = vmatpush.xpose.msra.mxu0 0.0
      %705 = vmatpush.xpose.msra.mxu0 0.0
      %706 = vmatpush.xpose.msra.mxu0 0.0
      %707 = vmatpush.xpose.msra.mxu0 0.0
      %708 = vmatpush.xpose.msra.mxu0 0.0
      %709 = vmatpush.xpose.msra.mxu0 0.0
      %710 = vmatpush.xpose.msra.mxu0 0.0
      %711 = vmatpush.xpose.msra.mxu0 0.0
      %712 = vmatpush.xpose.msra.mxu0 0.0
      %713 = vmatpush.xpose.msra.mxu0 0.0
      %714 = vmatpush.xpose.msra.mxu0 0.0
      %715 = vmatpush.xpose.msra.mxu0 0.0
      %716 = vmatpush.xpose.msra.mxu0 0.0
      %717 = vmatpush.xpose.msra.mxu0 0.0
      %718 = vmatpush.xpose.msra.mxu0 %v701
      %719 = vmatmul.f32.gmra.mxu0 %v699
      %v720 = vpop.f32.mrf.mxu0
      %v721 = vadd.f32 %v517, %v720
      %722 = vdwg.mxu0
      %v723 = vsel %vm522, %v721, -inf
      %724 = vmax.xlane.f32.xlu0 %v723
      %v725 = vpop.xlane.xlu0 %724
      %v726 = vsub.f32 %v721, %v725
      %v727 = vmul.f32 %v726, 1.442695
      %v728 = vpow.pop %v727
      %v729 = vsel %vm522, %v728, 0.0
      %730 = vadd.xlane.f32.xlu0 %v729
      %v731 = vpop.xlane.xlu0 %730
      %v732 = vrcp.pop %v731
      %v733 = vmul.f32 %v728, %v732
      %734 = vrot.lane.b32.xlu0 %v508, 48
      %v735 = vpop.permute.xlu0 %734
      %v738 = vsel %vm522, %v733, 0
      %740 = vmatpush.msra.mxu0 0.0
      %741 = vmatpush.msra.mxu0 0.0
      %742 = vmatpush.msra.mxu0 0.0
      %743 = vmatpush.msra.mxu0 0.0
      %744 = vmatpush.msra.mxu0 0.0
      %745 = vmatpush.msra.mxu0 0.0
      %746 = vmatpush.msra.mxu0 0.0
      %747 = vmatpush.msra.mxu0 0.0
      %748 = vmatpush.msra.mxu0 0.0
      %749 = vmatpush.msra.mxu0 0.0
      %750 = vmatpush.msra.mxu0 0.0
      %751 = vmatpush.msra.mxu0 0.0
      %752 = vmatpush.msra.mxu0 0.0
      %753 = vmatpush.msra.mxu0 0.0
      %754 = vmatpush.msra.mxu0 0.0
      %755 = vmatpush.msra.mxu0 %v735
      %756 = vmatmul.f32.gmra.mxu0 %v738
      %v757 = vpop.f32.mrf.mxu0
      %v758 = vadd.f32 0.0, %v757
      %759 = vdwg.mxu0
      %v761 = vsel %vm522, %v758, 0
      %763 = vmatpush.msra.mxu0 0.0
      %764 = vmatpush.msra.mxu0 0.0
      %765 = vmatpush.msra.mxu0 0.0
      %766 = vmatpush.msra.mxu0 0.0
      %767 = vmatpush.msra.mxu0 0.0
      %768 = vmatpush.msra.mxu0 0.0
      %769 = vmatpush.msra.mxu0 0.0
      %770 = vmatpush.msra.mxu0 0.0
      %771 = vmatpush.msra.mxu0 0.0
      %772 = vmatpush.msra.mxu0 0.0
      %773 = vmatpush.msra.mxu0 0.0
      %774 = vmatpush.msra.mxu0 0.0
      %775 = vmatpush.msra.mxu0 0.0
      %776 = vmatpush.msra.mxu0 0.0
      %777 = vmatpush.msra.mxu0 0.0
      %778 = vmatpush.msra.mxu0 %v513
      %779 = vmatmul.f32.gmra.mxu0 %v761
      %v780 = vpop.f32.mrf.mxu0
      %v781 = vadd.f32 0.0, %v780
      %782 = vdwg.mxu0
      %v783 = vadd.f32 %v693, %v781
      %784 = vrot.lane.b32.xlu0 %v508, 104
      %v785 = vpop.permute.xlu0 %784
      %786 = vrot.lane.b32.xlu0 %v508, 72
      %v787 = vpop.permute.xlu0 %786
      %v788 = vsel %vm522, %v785, 0
      %v790 = vsel %vm522, %v787, 0
      %792 = vmatpush.xpose.msra.mxu0 0.0
      %793 = vmatpush.xpose.msra.mxu0 0.0
      %794 = vmatpush.xpose.msra.mxu0 0.0
      %795 = vmatpush.xpose.msra.mxu0 0.0
      %796 = vmatpush.xpose.msra.mxu0 0.0
      %797 = vmatpush.xpose.msra.mxu0 0.0
      %798 = vmatpush.xpose.msra.mxu0 0.0
      %799 = vmatpush.xpose.msra.mxu0 0.0
      %800 = vmatpush.xpose.msra.mxu0 0.0
      %801 = vmatpush.xpose.msra.mxu0 0.0
      %802 = vmatpush.xpose.msra.mxu0 0.0
      %803 = vmatpush.xpose.msra.mxu0 0.0
      %804 = vmatpush.xpose.msra.mxu0 0.0
      %805 = vmatpush.xpose.msra.mxu0 0.0
      %806 = vmatpush.xpose.msra.mxu0 0.0
      %807 = vmatpush.xpose.msra.mxu0 %v790
      %808 = vmatmul.f32.gmra.mxu0 %v788
      %v809 = vpop.f32.mrf.mxu0
      %v810 = vadd.f32 %v517, %v809
      %811 = vdwg.mxu0
      %v812 = vsel %vm522, %v810, -inf
      %813 = vmax.xlane.f32.xlu0 %v812
      %v814 = vpop.xlane.xlu0 %813
      %v815 = vsub.f32 %v810, %v814
      %v816 = vmul.f32 %v815, 1.442695
      %v817 = vpow.pop %v816
      %v818 = vsel %vm522, %v817, 0.0
      %819 = vadd.xlane.f32.xlu0 %v818
      %v820 = vpop.xlane.xlu0 %819
      %v821 = vrcp.pop %v820
      %v822 = vmul.f32 %v817, %v821
      %823 = vrot.lane.b32.xlu0 %v508, 40
      %v824 = vpop.permute.xlu0 %823
      %v827 = vsel %vm522, %v822, 0
      %829 = vmatpush.msra.mxu0 0.0
      %830 = vmatpush.msra.mxu0 0.0
      %831 = vmatpush.msra.mxu0 0.0
      %832 = vmatpush.msra.mxu0 0.0
      %833 = vmatpush.msra.mxu0 0.0
      %834 = vmatpush.msra.mxu0 0.0
      %835 = vmatpush.msra.mxu0 0.0
      %836 = vmatpush.msra.mxu0 0.0
      %837 = vmatpush.msra.mxu0 0.0
      %838 = vmatpush.msra.mxu0 0.0
      %839 = vmatpush.msra.mxu0 0.0
      %840 = vmatpush.msra.mxu0 0.0
      %841 = vmatpush.msra.mxu0 0.0
      %842 = vmatpush.msra.mxu0 0.0
      %843 = vmatpush.msra.mxu0 0.0
      %844 = vmatpush.msra.mxu0 %v824
      %845 = vmatmul.f32.gmra.mxu0 %v827
      %v846 = vpop.f32.mrf.mxu0
      %v847 = vadd.f32 0.0, %v846
      %848 = vdwg.mxu0
      %v850 = vsel %vm522, %v847, 0
      %852 = vmatpush.msra.mxu0 0.0
      %853 = vmatpush.msra.mxu0 0.0
      %854 = vmatpush.msra.mxu0 0.0
      %855 = vmatpush.msra.mxu0 0.0
      %856 = vmatpush.msra.mxu0 0.0
      %857 = vmatpush.msra.mxu0 0.0
      %858 = vmatpush.msra.mxu0 0.0
      %859 = vmatpush.msra.mxu0 0.0
      %860 = vmatpush.msra.mxu0 0.0
      %861 = vmatpush.msra.mxu0 0.0
      %862 = vmatpush.msra.mxu0 0.0
      %863 = vmatpush.msra.mxu0 0.0
      %864 = vmatpush.msra.mxu0 0.0
      %865 = vmatpush.msra.mxu0 0.0
      %866 = vmatpush.msra.mxu0 0.0
      %867 = vmatpush.msra.mxu0 %v514
      %868 = vmatmul.f32.gmra.mxu0 %v850
      %v869 = vpop.f32.mrf.mxu0
      %v870 = vadd.f32 0.0, %v869
      %871 = vdwg.mxu0
      %v872 = vadd.f32 %v783, %v870
      %v874 = vperm.slane %v515, 0
      %v876 = vadd.f32 %v872, %v874
      %v877 = vadd.f32 %v477, %v876
      %v878 = vld [vmem:[%s6] sm:$0x1]
      %v879 = vld [vmem:[%s7] sm:$0x1]
      %v880 = vsel %vm486, %v877, 0.0
      %881 = vadd.xlane.f32.xlu0 %v880
      %v882 = vpop.xlane.xlu0 %881
      %v883 = vrcp.pop 32.0
      %v884 = vmul.f32 32.0, %v883
      %v885 = vsub.f32 1.0, %v884
      %v886 = vmul.f32 %v883, %v885
      %v887 = vadd.f32 %v883, %v886
      %vm888 = vweird.f32 %v883
      %v889 = vsel %vm888, %v883, %v887
      %v890 = vmul.f32 %v882, %v889
      %v891 = vsub.f32 %v877, %v890
      %v892 = vmul.f32 %v891, %v891
      %v893 = vsel %vm486, %v892, 0.0
      %894 = vadd.xlane.f32.xlu0 %v893
      %v895 = vpop.xlane.xlu0 %894
      %v896 = vmul.f32 %v895, %v889
      %v897 = vadd.f32 %v896, 1e-05
      %v898 = vrsqrt.pop %v897
      %v899 = vmul.f32 %v898, %v897
      %v900 = vmul.f32 %v899, %v898
      %v901 = vmul.f32 0.5, %v900
      %v902 = vsub.f32 1.5, %v901
      %v903 = vmul.f32 %v898, %v902
      %vm904 = vweird.f32 %v897
      %vm905 = vweird.f32 %v898
      %vm906 = vmor %vm904, %vm905
      %v907 = vsel %vm906, %v898, %v903
      %v908 = vmul.f32 %v891, %v907
      %v910 = vperm.slane %v878, 0
      %v912 = vmul.f32 %v908, %v910
      %v914 = vperm.slane %v879, 0
      %v916 = vadd.f32 %v912, %v914
      %v917 = vld [vmem:[%s8] sm:$0xff]
      %v918 = vld [vmem:[%s8 + $0x8] sm:$0xff]
      %v919 = vld [vmem:[%s8 + $0x10] sm:$0xff]
      %v920 = vld [vmem:[%s8 + $0x18] sm:$0xff]
      %v921 = vld [vmem:[%s9] sm:$0x1]
      %v923 = vperm.slane %v921, 0
      %v926 = vsel %vm486, %v916, 0
      %928 = vmatpush.msra.mxu0 0.0
      %929 = vmatpush.msra.mxu0 0.0
      %930 = vmatpush.msra.mxu0 0.0
      %931 = vmatpush.msra.mxu0 0.0
      %932 = vmatpush.msra.mxu0 0.0
      %933 = vmatpush.msra.mxu0 0.0
      %934 = vmatpush.msra.mxu0 0.0
      %935 = vmatpush.msra.mxu0 0.0
      %936 = vmatpush.msra.mxu0 0.0
      %937 = vmatpush.msra.mxu0 0.0
      %938 = vmatpush.msra.mxu0 0.0
      %939 = vmatpush.msra.mxu0 0.0
      %940 = vmatpush.msra.mxu0 %v920
      %941 = vmatpush.msra.mxu0 %v919
      %942 = vmatpush.msra.mxu0 %v918
      %943 = vmatpush.msra.mxu0 %v917
      %944 = vmatmul.f32.gmra.mxu0 %v926
      %v945 = vpop.f32.mrf.mxu0
      %v946 = vadd.f32 %v923, %v945
      %947 = vdwg.mxu0
      %v948 = vmax.f32 %v946, 0.0
      %v949 = vld [vmem:[%s10] sm:$0xff]
      %v950 = vld [vmem:[%s10 + $0x8] sm:$0xff]
      %v951 = vld [vmem:[%s10 + $0x10] sm:$0xff]
      %v952 = vld [vmem:[%s10 + $0x18] sm:$0xff]
      %v953 = vld [vmem:[%s10 + $0x20] sm:$0xff]
      %v954 = vld [vmem:[%s10 + $0x28] sm:$0xff]
      %v955 = vld [vmem:[%s10 + $0x30] sm:$0xff]
      %v956 = vld [vmem:[%s10 + $0x38] sm:$0xff]
      %v957 = vld [vmem:[%s11] sm:$0x1]
      %v959 = vperm.slane %v957, 0
      %vm961 = vcmask 523264
      %v963 = vsel %vm961, %v948, 0
      %965 = vmatpush.msra.mxu0 0.0
      %966 = vmatpush.msra.mxu0 0.0
      %967 = vmatpush.msra.mxu0 0.0
      %968 = vmatpush.msra.mxu0 0.0
      %969 = vmatpush.msra.mxu0 0.0
      %970 = vmatpush.msra.mxu0 0.0
      %971 = vmatpush.msra.mxu0 0.0
      %972 = vmatpush.msra.mxu0 0.0
      %973 = vmatpush.msra.mxu0 %v956
      %974 = vmatpush.msra.mxu0 %v955
      %975 = vmatpush.msra.mxu0 %v954
      %976 = vmatpush.msra.mxu0 %v953
      %977 = vmatpush.msra.mxu0 %v952
      %978 = vmatpush.msra.mxu0 %v951
      %979 = vmatpush.msra.mxu0 %v950
      %980 = vmatpush.msra.mxu0 %v949
      %981 = vmatmul.f32.gmra.mxu0 %v963
      %v982 = vpop.f32.mrf.mxu0
      %v983 = vadd.f32 %v959, %v982
      %984 = vdwg.mxu0
      %v985 = vadd.f32 %v916, %v983
      %v986 = vld [vmem:[%s12] sm:$0x1]
      %v987 = vld [vmem:[%s13] sm:$0x1]
      %v988 = vsel %vm486, %v985, 0.0
      %989 = vadd.xlane.f32.xlu0 %v988
      %v990 = vpop.xlane.xlu0 %989
      %v991 = vmul.f32 %v990, %v889
      %v992 = vsub.f32 %v985, %v991
      %v993 = vmul.f32 %v992, %v992
      %v994 = vsel %vm486, %v993, 0.0
      %995 = vadd.xlane.f32.xlu0 %v994
      %v996 = vpop.xlane.xlu0 %995
      %v997 = vmul.f32 %v996, %v889
      %v998 = vadd.f32 %v997, 1e-05
      %v999 = vrsqrt.pop %v998
      %v1000 = vmul.f32 %v999, %v998
      %v1001 = vmul.f32 %v1000, %v999
      %v1002 = vmul.f32 0.5, %v1001
      %v1003 = vsub.f32 1.5, %v1002
      %v1004 = vmul.f32 %v999, %v1003
      %vm1005 = vweird.f32 %v998
      %vm1006 = vweird.f32 %v999
      %vm1007 = vmor %vm1005, %vm1006
      %v1008 = vsel %vm1007, %v999, %v1004
      %v1009 = vmul.f32 %v992, %v1008
      %v1011 = vperm.slane %v986, 0
      %v1013 = vmul.f32 %v1009, %v1011
      %v1015 = vperm.slane %v987, 0
      %v1017 = vadd.f32 %v1013, %v1015
      %1018 = vst.msk [vmem:[%s476] sm:$0xff] %vm486, %v1017
      %p1019 = scmp.lt.s32.totalorder %s25, 1
      %s1020 = scalar_select %p1019, %s25, 1
      %s1021 = smul.addr %s1020, 8
      %s1022 = scalar_lea.vmem %s14, %s1021
      // Predicated region
      $region77: #{sentence_transformer_forward.11} parent=75 // pred_check
        %p1023 = pneg %p347
      $region78: #{sentence_transformer_forward.11} parent=75 // pred_check_branch
        %1025 = sbr.rel (%p1023) target = $region80
      $region79: #{sentence_transformer_forward.11} parent=75 // pred_region
        _
      $region80: #{sentence_transformer_forward.11} parent=75 // pred_fallthru
        _
    $region76: #{sentence_transformer_forward.11} parent=5 // pred_fallthru
      _
    %p1026 = scmp.le.s32.totalorder 2, %s20
    // Predicated region
    $region81: #{sentence_transformer_forward.11} parent=5 // pred_check
      %p1027 = pneg %p1026
    $region82: #{sentence_transformer_forward.11} parent=5 // pred_check_branch
      %1029 = sbr.rel (%p1027) target = $region84
    $region83: #{sentence_transformer_forward.11} parent=5 // pred_region
      %s1030 = ssub.s32 %s20, 2
      // Predicated region
      $region85: #{sentence_transformer_forward.11} parent=83 // pred_check
        %p1031 = pneg %p353
      $region86: #{sentence_transformer_forward.11} parent=83 // pred_check_branch
        %1033 = sbr.rel (%p1031) target = $region88
      $region87: #{sentence_transformer_forward.11} parent=83 // pred_region
        %p1034 = scmp.lt.s32.totalorder %s26, 1
        %s1035 = scalar_select %p1034, %s26, 1
        %s1036 = smul.addr %s1035, 8
        %s1037 = scalar_lea.vmem %s14, %s1036
      $region88: #{sentence_transformer_forward.11} parent=83 // pred_fallthru
        _
    $region84: #{sentence_transformer_forward.11} parent=5 // pred_fallthru
      _
  $region6: #{sentence_transformer_forward.11} parent=0 // loop_footer
    %s24 = sadd.s32 1, %s20
  $region7: #{sentence_transformer_forward.11} parent=0 // loop_footer_branch
    %19 = sbr.rel target = $region3
  $region8: #{sentence_transformer_forward.11} parent=0 // loop_exit
    _

// kernel: sentence_transformer_forward.9
$region0: #{sentence_transformer_forward.9}
  #allocation0 [shape = 'u32[]', space=smem, size = 0x4, offset = 0x4, fixed_abs, tag = 'smem constant byte address 0x4 - core index']
  #allocation1 [shape = 'u32[72,128]{1,0:T(1,128)}', space=vmem, size = 0x9000, scoped, tag = 'internal scratch']
  %s0 = inlined_call_operand.vmem [shape: f32[2,16,32], index: 0, kind: input, shape index: {}]
  %s1 = inlined_call_operand.vmem [shape: f32[2,1,16], index: 1, kind: input, shape index: {}]
  %s2 = inlined_call_operand.vmem [shape: f32[32,96], index: 2, kind: input, shape index: {}]
  %s3 = inlined_call_operand.vmem [shape: f32[1,96], index: 3, kind: input, shape index: {}]
  %s4 = inlined_call_operand.vmem [shape: f32[32,32], index: 4, kind: input, shape index: {}]
  %s5 = inlined_call_operand.vmem [shape: f32[1,32], index: 5, kind: input, shape index: {}]
  %s6 = inlined_call_operand.vmem [shape: f32[1,32], index: 6, kind: input, shape index: {}]
  %s7 = inlined_call_operand.vmem [shape: f32[1,32], index: 7, kind: input, shape index: {}]
  %s8 = inlined_call_operand.vmem [shape: f32[32,64], index: 8, kind: input, shape index: {}]
  %s9 = inlined_call_operand.vmem [shape: f32[1,64], index: 9, kind: input, shape index: {}]
  %s10 = inlined_call_operand.vmem [shape: f32[64,32], index: 10, kind: input, shape index: {}]
  %s11 = inlined_call_operand.vmem [shape: f32[1,32], index: 11, kind: input, shape index: {}]
  %s12 = inlined_call_operand.vmem [shape: f32[1,32], index: 12, kind: input, shape index: {}]
  %s13 = inlined_call_operand.vmem [shape: f32[1,32], index: 13, kind: input, shape index: {}]
  %s14 = inlined_call_operand.vmem [shape: f32[2,16,32], index: 14, kind: output, shape index: {}]
  %s15 = sld [smem:[#allocation0]]
  $region89: #{sentence_transformer_forward.9} parent=0
    _
  %s17 = ssub.s32 1, %s15
  %s18 = scalar_select 0, %s17, %s15
  loop: start=0, step=1, limit=4
  $region2: #{sentence_transformer_forward.9} parent=0 // loop_pre_header
    _
  $region3: #{sentence_transformer_forward.9} parent=0 // loop_header
    %s20 = sphi 0, %s24
    %p21 = scmp.ge.s32.totalorder %s20, 4
    %s30 = sphi 0, %s32
    %s33 = sphi 0, %s30
    %s34 = sphi 0, %s33
    %s50 = sphi 0, %s34
    %s56 = sphi 0, %s58
    %s59 = sphi 0, %s56
    %s60 = sphi 0, %s59
    %s76 = sphi 0, %s60
    %s80 = sphi 0, %s80
    %s82 = sphi 0, %s80
    %s83 = sphi 0, %s82
    %s97 = sphi 0, %s83
    %s101 = sphi 0, %s101
    %s103 = sphi 0, %s101
    %s104 = sphi 0, %s103
    %s118 = sphi 0, %s104
    %s122 = sphi 0, %s122
    %s124 = sphi 0, %s122
    %s125 = sphi 0, %s124
    %s139 = sphi 0, %s125
    %s143 = sphi 0, %s143
    %s145 = sphi 0, %s143
    %s146 = sphi 0, %s145
    %s160 = sphi 0, %s146
    %s164 = sphi 0, %s164
    %s166 = sphi 0, %s164
    %s167 = sphi 0, %s166
    %s181 = sphi 0, %s167
    %s185 = sphi 0, %s185
    %s187 = sphi 0, %s185
    %s188 = sphi 0, %s187
    %s202 = sphi 0, %s188
    %s206 = sphi 0, %s206
    %s208 = sphi 0, %s206
    %s209 = sphi 0, %s208
    %s223 = sphi 0, %s209
    %s227 = sphi 0, %s227
    %s229 = sphi 0, %s227
    %s230 = sphi 0, %s229
    %s244 = sphi 0, %s230
    %s248 = sphi 0, %s248
    %s250 = sphi 0, %s248
    %s251 = sphi 0, %s250
    %s265 = sphi 0, %s251
    %s269 = sphi 0, %s269
    %s271 = sphi 0, %s269
    %s272 = sphi 0, %s271
    %s286 = sphi 0, %s272
    %s290 = sphi 0, %s290
    %s292 = sphi 0, %s290
    %s293 = sphi 0, %s292
    %s307 = sphi 0, %s293
    %s311 = sphi 0, %s311
    %s313 = sphi 0, %s311
    %s314 = sphi 0, %s313
    %s328 = sphi 0, %s314
    %s334 = sphi 0, %s336
    %s337 = sphi 0, %s334
    %s338 = sphi 0, %s337
    %s354 = sphi 0, %s338
  $region4: #{sentence_transformer_forward.9} parent=0 // loop_header_branch
    %23 = sbr.rel (%p21) target = $region8
  $region5: #{sentence_transformer_forward.9} parent=0 // loop_body
    %s25 = ssub.s32 %s20, 1
    %s26 = ssub.s32 %s20, 2
    %s27 = sadd.s32 %s20, 1
    %s28 = ssub.s32 %s20, %s27
    %p29 = scmp.eq.s32.totalorder %s28, 0
    %s31 = sadd.s32 %s30, 1
    %s32 = scalar_select %p29, %s30, %s31
    %p35 = pneg %p29
    %p36 = scmp.eq.s32.totalorder %s20, 1
    %p37 = por %p35, %p36
    %p38 = scmp.ne.s32.totalorder %s30, %s33
    %p39 = scmp.eq.s32.totalorder %s20, 0
    %p40 = por %p38, %p39
    %p41 = scmp.ne.s32.totalorder %s30, %s33
    %p42 = scmp.eq.s32.totalorder %s25, 1
    %p43 = por %p41, %p42
    %p44 = scmp.ne.s32.totalorder %s33, %s34
    %p45 = scmp.eq.s32.totalorder %s25, 0
    %p46 = por %p44, %p45
    %p47 = scmp.ne.s32.totalorder %s33, %s34
    %p48 = scmp.eq.s32.totalorder %s26, 1
    %p49 = por %p47, %p48
    %p51 = scmp.ne.s32.totalorder %s34, %s50
    %p52 = scmp.eq.s32.totalorder %s26, 0
    %p53 = por %p51, %p52
    %s54 = ssub.s32 %s20, %s27
    %p55 = scmp.eq.s32.totalorder %s54, 0
    %s57 = sadd.s32 %s56, 1
    %s58 = scalar_select %p55, %s56, %s57
    %p61 = pneg %p55
    %p62 = scmp.eq.s32.totalorder %s20, 1
    %p63 = por %p61, %p62
    %p64 = scmp.ne.s32.totalorder %s56, %s59
    %p65 = scmp.eq.s32.totalorder %s20, 0
    %p66 = por %p64, %p65
    %p67 = scmp.ne.s32.totalorder %s56, %s59
    %p68 = scmp.eq.s32.totalorder %s25, 1
    %p69 = por %p67, %p68
    %p70 = scmp.ne.s32.totalorder %s59, %s60
    %p71 = scmp.eq.s32.totalorder %s25, 0
    %p72 = por %p70, %p71
    %p73 = scmp.ne.s32.totalorder %s59, %s60
    %p74 = scmp.eq.s32.totalorder %s26, 1
    %p75 = por %p73, %p74
    %p77 = scmp.ne.s32.totalorder %s60, %s76
    %p78 = scmp.eq.s32.totalorder %s26, 0
    %p79 = por %p77, %p78
    %s81 = sadd.s32 %s80, 1
    %p84 = scmp.eq.s32.totalorder %s20, 1
    %p85 = scmp.ne.s32.totalorder %s80, %s82
    %p86 = scmp.eq.s32.totalorder %s20, 0
    %p87 = por %p85, %p86
    %p88 = scmp.ne.s32.totalorder %s80, %s82
    %p89 = scmp.eq.s32.totalorder %s25, 1
    %p90 = por %p88, %p89
    %p91 = scmp.ne.s32.totalorder %s82, %s83
    %p92 = scmp.eq.s32.totalorder %s25, 0
    %p93 = por %p91, %p92
    %p94 = scmp.ne.s32.totalorder %s82, %s83
    %p95 = scmp.eq.s32.totalorder %s26, 1
    %p96 = por %p94, %p95
    %p98 = scmp.ne.s32.totalorder %s83, %s97
    %p99 = scmp.eq.s32.totalorder %s26, 0
    %p100 = por %p98, %p99
    %s102 = sadd.s32 %s101, 1
    %p105 = scmp.eq.s32.totalorder %s20, 1
    %p106 = scmp.ne.s32.totalorder %s101, %s103
    %p107 = scmp.eq.s32.totalorder %s20, 0
    %p108 = por %p106, %p107
    %p109 = scmp.ne.s32.totalorder %s101, %s103
    %p110 = scmp.eq.s32.totalorder %s25, 1
    %p111 = por %p109, %p110
    %p112 = scmp.ne.s32.totalorder %s103, %s104
    %p113 = scmp.eq.s32.totalorder %s25, 0
    %p114 = por %p112, %p113
    %p115 = scmp.ne.s32.totalorder %s103, %s104
    %p116 = scmp.eq.s32.totalorder %s26, 1
    %p117 = por %p115, %p116
    %p119 = scmp.ne.s32.totalorder %s104, %s118
    %p120 = scmp.eq.s32.totalorder %s26, 0
    %p121 = por %p119, %p120
    %s123 = sadd.s32 %s122, 1
    %p126 = scmp.eq.s32.totalorder %s20, 1
    %p127 = scmp.ne.s32.totalorder %s122, %s124
    %p128 = scmp.eq.s32.totalorder %s20, 0
    %p129 = por %p127, %p128
    %p130 = scmp.ne.s32.totalorder %s122, %s124
    %p131 = scmp.eq.s32.totalorder %s25, 1
    %p132 = por %p130, %p131
    %p133 = scmp.ne.s32.totalorder %s124, %s125
    %p134 = scmp.eq.s32.totalorder %s25, 0
    %p135 = por %p133, %p134
    %p136 = scmp.ne.s32.totalorder %s124, %s125
    %p137 = scmp.eq.s32.totalorder %s26, 1
    %p138 = por %p136, %p137
    %p140 = scmp.ne.s32.totalorder %s125, %s139
    %p141 = scmp.eq.s32.totalorder %s26, 0
    %p142 = por %p140, %p141
    %s144 = sadd.s32 %s143, 1
    %p147 = scmp.eq.s32.totalorder %s20, 1
    %p148 = scmp.ne.s32.totalorder %s143, %s145
    %p149 = scmp.eq.s32.totalorder %s20, 0
    %p150 = por %p148, %p149
    %p151 = scmp.ne.s32.totalorder %s143, %s145
    %p152 = scmp.eq.s32.totalorder %s25, 1
    %p153 = por %p151, %p152
    %p154 = scmp.ne.s32.totalorder %s145, %s146
    %p155 = scmp.eq.s32.totalorder %s25, 0
    %p156 = por %p154, %p155
    %p157 = scmp.ne.s32.totalorder %s145, %s146
    %p158 = scmp.eq.s32.totalorder %s26, 1
    %p159 = por %p157, %p158
    %p161 = scmp.ne.s32.totalorder %s146, %s160
    %p162 = scmp.eq.s32.totalorder %s26, 0
    %p163 = por %p161, %p162
    %s165 = sadd.s32 %s164, 1
    %p168 = scmp.eq.s32.totalorder %s20, 1
    %p169 = scmp.ne.s32.totalorder %s164, %s166
    %p170 = scmp.eq.s32.totalorder %s20, 0
    %p171 = por %p169, %p170
    %p172 = scmp.ne.s32.totalorder %s164, %s166
    %p173 = scmp.eq.s32.totalorder %s25, 1
    %p174 = por %p172, %p173
    %p175 = scmp.ne.s32.totalorder %s166, %s167
    %p176 = scmp.eq.s32.totalorder %s25, 0
    %p177 = por %p175, %p176
    %p178 = scmp.ne.s32.totalorder %s166, %s167
    %p179 = scmp.eq.s32.totalorder %s26, 1
    %p180 = por %p178, %p179
    %p182 = scmp.ne.s32.totalorder %s167, %s181
    %p183 = scmp.eq.s32.totalorder %s26, 0
    %p184 = por %p182, %p183
    %s186 = sadd.s32 %s185, 1
    %p189 = scmp.eq.s32.totalorder %s20, 1
    %p190 = scmp.ne.s32.totalorder %s185, %s187
    %p191 = scmp.eq.s32.totalorder %s20, 0
    %p192 = por %p190, %p191
    %p193 = scmp.ne.s32.totalorder %s185, %s187
    %p194 = scmp.eq.s32.totalorder %s25, 1
    %p195 = por %p193, %p194
    %p196 = scmp.ne.s32.totalorder %s187, %s188
    %p197 = scmp.eq.s32.totalorder %s25, 0
    %p198 = por %p196, %p197
    %p199 = scmp.ne.s32.totalorder %s187, %s188
    %p200 = scmp.eq.s32.totalorder %s26, 1
    %p201 = por %p199, %p200
    %p203 = scmp.ne.s32.totalorder %s188, %s202
    %p204 = scmp.eq.s32.totalorder %s26, 0
    %p205 = por %p203, %p204
    %s207 = sadd.s32 %s206, 1
    %p210 = scmp.eq.s32.totalorder %s20, 1
    %p211 = scmp.ne.s32.totalorder %s206, %s208
    %p212 = scmp.eq.s32.totalorder %s20, 0
    %p213 = por %p211, %p212
    %p214 = scmp.ne.s32.totalorder %s206, %s208
    %p215 = scmp.eq.s32.totalorder %s25, 1
    %p216 = por %p214, %p215
    %p217 = scmp.ne.s32.totalorder %s208, %s209
    %p218 = scmp.eq.s32.totalorder %s25, 0
    %p219 = por %p217, %p218
    %p220 = scmp.ne.s32.totalorder %s208, %s209
    %p221 = scmp.eq.s32.totalorder %s26, 1
    %p222 = por %p220, %p221
    %p224 = scmp.ne.s32.totalorder %s209, %s223
    %p225 = scmp.eq.s32.totalorder %s26, 0
    %p226 = por %p224, %p225
    %s228 = sadd.s32 %s227, 1
    %p231 = scmp.eq.s32.totalorder %s20, 1
    %p232 = scmp.ne.s32.totalorder %s227, %s229
    %p233 = scmp.eq.s32.totalorder %s20, 0
    %p234 = por %p232, %p233
    %p235 = scmp.ne.s32.totalorder %s227, %s229
    %p236 = scmp.eq.s32.totalorder %s25, 1
    %p237 = por %p235, %p236
    %p238 = scmp.ne.s32.totalorder %s229, %s230
    %p239 = scmp.eq.s32.totalorder %s25, 0
    %p240 = por %p238, %p239
    %p241 = scmp.ne.s32.totalorder %s229, %s230
    %p242 = scmp.eq.s32.totalorder %s26, 1
    %p243 = por %p241, %p242
    %p245 = scmp.ne.s32.totalorder %s230, %s244
    %p246 = scmp.eq.s32.totalorder %s26, 0
    %p247 = por %p245, %p246
    %s249 = sadd.s32 %s248, 1
    %p252 = scmp.eq.s32.totalorder %s20, 1
    %p253 = scmp.ne.s32.totalorder %s248, %s250
    %p254 = scmp.eq.s32.totalorder %s20, 0
    %p255 = por %p253, %p254
    %p256 = scmp.ne.s32.totalorder %s248, %s250
    %p257 = scmp.eq.s32.totalorder %s25, 1
    %p258 = por %p256, %p257
    %p259 = scmp.ne.s32.totalorder %s250, %s251
    %p260 = scmp.eq.s32.totalorder %s25, 0
    %p261 = por %p259, %p260
    %p262 = scmp.ne.s32.totalorder %s250, %s251
    %p263 = scmp.eq.s32.totalorder %s26, 1
    %p264 = por %p262, %p263
    %p266 = scmp.ne.s32.totalorder %s251, %s265
    %p267 = scmp.eq.s32.totalorder %s26, 0
    %p268 = por %p266, %p267
    %s270 = sadd.s32 %s269, 1
    %p273 = scmp.eq.s32.totalorder %s20, 1
    %p274 = scmp.ne.s32.totalorder %s269, %s271
    %p275 = scmp.eq.s32.totalorder %s20, 0
    %p276 = por %p274, %p275
    %p277 = scmp.ne.s32.totalorder %s269, %s271
    %p278 = scmp.eq.s32.totalorder %s25, 1
    %p279 = por %p277, %p278
    %p280 = scmp.ne.s32.totalorder %s271, %s272
    %p281 = scmp.eq.s32.totalorder %s25, 0
    %p282 = por %p280, %p281
    %p283 = scmp.ne.s32.totalorder %s271, %s272
    %p284 = scmp.eq.s32.totalorder %s26, 1
    %p285 = por %p283, %p284
    %p287 = scmp.ne.s32.totalorder %s272, %s286
    %p288 = scmp.eq.s32.totalorder %s26, 0
    %p289 = por %p287, %p288
    %s291 = sadd.s32 %s290, 1
    %p294 = scmp.eq.s32.totalorder %s20, 1
    %p295 = scmp.ne.s32.totalorder %s290, %s292
    %p296 = scmp.eq.s32.totalorder %s20, 0
    %p297 = por %p295, %p296
    %p298 = scmp.ne.s32.totalorder %s290, %s292
    %p299 = scmp.eq.s32.totalorder %s25, 1
    %p300 = por %p298, %p299
    %p301 = scmp.ne.s32.totalorder %s292, %s293
    %p302 = scmp.eq.s32.totalorder %s25, 0
    %p303 = por %p301, %p302
    %p304 = scmp.ne.s32.totalorder %s292, %s293
    %p305 = scmp.eq.s32.totalorder %s26, 1
    %p306 = por %p304, %p305
    %p308 = scmp.ne.s32.totalorder %s293, %s307
    %p309 = scmp.eq.s32.totalorder %s26, 0
    %p310 = por %p308, %p309
    %s312 = sadd.s32 %s311, 1
    %p315 = scmp.eq.s32.totalorder %s20, 1
    %p316 = scmp.ne.s32.totalorder %s311, %s313
    %p317 = scmp.eq.s32.totalorder %s20, 0
    %p318 = por %p316, %p317
    %p319 = scmp.ne.s32.totalorder %s311, %s313
    %p320 = scmp.eq.s32.totalorder %s25, 1
    %p321 = por %p319, %p320
    %p322 = scmp.ne.s32.totalorder %s313, %s314
    %p323 = scmp.eq.s32.totalorder %s25, 0
    %p324 = por %p322, %p323
    %p325 = scmp.ne.s32.totalorder %s313, %s314
    %p326 = scmp.eq.s32.totalorder %s26, 1
    %p327 = por %p325, %p326
    %p329 = scmp.ne.s32.totalorder %s314, %s328
    %p330 = scmp.eq.s32.totalorder %s26, 0
    %p331 = por %p329, %p330
    %s332 = ssub.s32 %s20, %s27
    %p333 = scmp.eq.s32.totalorder %s332, 0
    %s335 = sadd.s32 %s334, 1
    %s336 = scalar_select %p333, %s334, %s335
    %p339 = pneg %p333
    %p340 = scmp.eq.s32.totalorder %s20, 1
    %p341 = por %p339, %p340
    %p342 = scmp.ne.s32.totalorder %s334, %s337
    %p343 = scmp.eq.s32.totalorder %s20, 0
    %p344 = por %p342, %p343
    %p345 = scmp.ne.s32.totalorder %s334, %s337
    %p346 = scmp.eq.s32.totalorder %s25, 1
    %p347 = por %p345, %p346
    %p348 = scmp.ne.s32.totalorder %s337, %s338
    %p349 = scmp.eq.s32.totalorder %s25, 0
    %p350 = por %p348, %p349
    %p351 = scmp.ne.s32.totalorder %s337, %s338
    %p352 = scmp.eq.s32.totalorder %s26, 1
    %p353 = por %p351, %p352
    %p355 = scmp.ne.s32.totalorder %s338, %s354
    %p356 = scmp.eq.s32.totalorder %s26, 0
    %p357 = por %p355, %p356
    %p358 = scmp.le.s32.totalorder 1, %s20
    %p359 = scmp.lt.s32.totalorder %s20, 3
    %p360 = pnand %p358, %p359
    %p361 = pneg %p360
    // Predicated region
    $region9: #{sentence_transformer_forward.9} parent=5 // pred_check
      _
    $region10: #{sentence_transformer_forward.9} parent=5 // pred_check_branch
      %363 = sbr.rel (%p360) target = $region12
    $region11: #{sentence_transformer_forward.9} parent=5 // pred_region
      %s364 = ssub.s32 %s20, 1
      // Predicated region
      $region13: #{sentence_transformer_forward.9} parent=11 // pred_check
        %p365 = pneg %p93
      $region14: #{sentence_transformer_forward.9} parent=11 // pred_check_branch
        %367 = sbr.rel (%p365) target = $region16
      $region15: #{sentence_transformer_forward.9} parent=11 // pred_region
        _
      $region16: #{sentence_transformer_forward.9} parent=11 // pred_fallthru
        _
      // Predicated region
      $region17: #{sentence_transformer_forward.9} parent=11 // pred_check
        %p368 = pneg %p114
      $region18: #{sentence_transformer_forward.9} parent=11 // pred_check_branch
        %370 = sbr.rel (%p368) target = $region20
      $region19: #{sentence_transformer_forward.9} parent=11 // pred_region
        _
      $region20: #{sentence_transformer_forward.9} parent=11 // pred_fallthru
        _
      // Predicated region
      $region21: #{sentence_transformer_forward.9} parent=11 // pred_check
        %p371 = pneg %p135
      $region22: #{sentence_transformer_forward.9} parent=11 // pred_check_branch
        %373 = sbr.rel (%p371) target = $region24
      $region23: #{sentence_transformer_forward.9} parent=11 // pred_region
        _
      $region24: #{sentence_transformer_forward.9} parent=11 // pred_fallthru
        _
      // Predicated region
      $region25: #{sentence_transformer_forward.9} parent=11 // pred_check
        %p374 = pneg %p156
      $region26: #{sentence_transformer_forward.9} parent=11 // pred_check_branch
        %376 = sbr.rel (%p374) target = $region28
      $region27: #{sentence_transformer_forward.9} parent=11 // pred_region
        _
      $region28: #{sentence_transformer_forward.9} parent=11 // pred_fallthru
        _
      // Predicated region
      $region29: #{sentence_transformer_forward.9} parent=11 // pred_check
        %p377 = pneg %p177
      $region30: #{sentence_transformer_forward.9} parent=11 // pred_check_branch
        %379 = sbr.rel (%p377) target = $region32
      $region31: #{sentence_transformer_forward.9} parent=11 // pred_region
        _
      $region32: #{sentence_transformer_forward.9} parent=11 // pred_fallthru
        _
      // Predicated region
      $region33: #{sentence_transformer_forward.9} parent=11 // pred_check
        %p380 = pneg %p198
      $region34: #{sentence_transformer_forward.9} parent=11 // pred_check_branch
        %382 = sbr.rel (%p380) target = $region36
      $region35: #{sentence_transformer_forward.9} parent=11 // pred_region
        _
      $region36: #{sentence_transformer_forward.9} parent=11 // pred_fallthru
        _
      // Predicated region
      $region37: #{sentence_transformer_forward.9} parent=11 // pred_check
        %p383 = pneg %p219
      $region38: #{sentence_transformer_forward.9} parent=11 // pred_check_branch
        %385 = sbr.rel (%p383) target = $region40
      $region39: #{sentence_transformer_forward.9} parent=11 // pred_region
        _
      $region40: #{sentence_transformer_forward.9} parent=11 // pred_fallthru
        _
      // Predicated region
      $region41: #{sentence_transformer_forward.9} parent=11 // pred_check
        %p386 = pneg %p240
      $region42: #{sentence_transformer_forward.9} parent=11 // pred_check_branch
        %388 = sbr.rel (%p386) target = $region44
      $region43: #{sentence_transformer_forward.9} parent=11 // pred_region
        _
      $region44: #{sentence_transformer_forward.9} parent=11 // pred_fallthru
        _
      // Predicated region
      $region45: #{sentence_transformer_forward.9} parent=11 // pred_check
        %p389 = pneg %p261
      $region46: #{sentence_transformer_forward.9} parent=11 // pred_check_branch
        %391 = sbr.rel (%p389) target = $region48
      $region47: #{sentence_transformer_forward.9} parent=11 // pred_region
        _
      $region48: #{sentence_transformer_forward.9} parent=11 // pred_fallthru
        _
      // Predicated region
      $region49: #{sentence_transformer_forward.9} parent=11 // pred_check
        %p392 = pneg %p282
      $region50: #{sentence_transformer_forward.9} parent=11 // pred_check_branch
        %394 = sbr.rel (%p392) target = $region52
      $region51: #{sentence_transformer_forward.9} parent=11 // pred_region
        _
      $region52: #{sentence_transformer_forward.9} parent=11 // pred_fallthru
        _
      // Predicated region
      $region53: #{sentence_transformer_forward.9} parent=11 // pred_check
        %p395 = pneg %p303
      $region54: #{sentence_transformer_forward.9} parent=11 // pred_check_branch
        %397 = sbr.rel (%p395) target = $region56
      $region55: #{sentence_transformer_forward.9} parent=11 // pred_region
        _
      $region56: #{sentence_transformer_forward.9} parent=11 // pred_fallthru
        _
      // Predicated region
      $region57: #{sentence_transformer_forward.9} parent=11 // pred_check
        %p398 = pneg %p324
      $region58: #{sentence_transformer_forward.9} parent=11 // pred_check_branch
        %400 = sbr.rel (%p398) target = $region60
      $region59: #{sentence_transformer_forward.9} parent=11 // pred_region
        _
      $region60: #{sentence_transformer_forward.9} parent=11 // pred_fallthru
        _
    $region12: #{sentence_transformer_forward.9} parent=5 // pred_fallthru
      _
    %p401 = scmp.lt.s32.totalorder %s20, 2
    // Predicated region
    $region61: #{sentence_transformer_forward.9} parent=5 // pred_check
      %p402 = pneg %p401
    $region62: #{sentence_transformer_forward.9} parent=5 // pred_check_branch
      %404 = sbr.rel (%p402) target = $region64
    $region63: #{sentence_transformer_forward.9} parent=5 // pred_region
      // Predicated region
      $region65: #{sentence_transformer_forward.9} parent=63 // pred_check
        %p405 = pneg %p40
      $region66: #{sentence_transformer_forward.9} parent=63 // pred_check_branch
        %407 = sbr.rel (%p405) target = $region68
      $region67: #{sentence_transformer_forward.9} parent=63 // pred_region
        %p408 = scmp.lt.s32.totalorder %s20, 1
        %s409 = scalar_select %p408, %s20, 1
        %s410 = smul.addr %s409, 2
        %s411 = smul.addr %s410, 8
        %s412 = scalar_lea.vmem %s0, %s411
      $region68: #{sentence_transformer_forward.9} parent=63 // pred_fallthru
        _
      // Predicated region
      $region69: #{sentence_transformer_forward.9} parent=63 // pred_check
        %p413 = pneg %p66
      $region70: #{sentence_transformer_forward.9} parent=63 // pred_check_branch
        %415 = sbr.rel (%p413) target = $region72
      $region71: #{sentence_transformer_forward.9} parent=63 // pred_region
        %p416 = scmp.lt.s32.totalorder %s20, 1
        %s417 = scalar_select %p416, %s20, 1
        %s418 = scalar_lea.vmem %s1, %s417
      $region72: #{sentence_transformer_forward.9} parent=63 // pred_fallthru
        _
    $region64: #{sentence_transformer_forward.9} parent=5 // pred_fallthru
      _
    %p419 = scmp.le.s32.totalorder 1, %s20
    %p420 = scmp.lt.s32.totalorder %s20, 3
    %p421 = pnand %p419, %p420
    %p422 = pneg %p421
    // Predicated region
    $region73: #{sentence_transformer_forward.9} parent=5 // pred_check
      _
    $region74: #{sentence_transformer_forward.9} parent=5 // pred_check_branch
      %424 = sbr.rel (%p421) target = $region76
    $region75: #{sentence_transformer_forward.9} parent=5 // pred_region
      %s425 = ssub.s32 %s20, 1
      %p426 = scmp.lt.s32.totalorder %s25, 1
      %s427 = scalar_select %p426, %s25, 1
      %s428 = smul.addr %s427, 2
      %s429 = smul.addr %s428, 8
      %s430 = scalar_lea.vmem %s0, %s429
      %p431 = pneg %p46
      %p432 = pneg %p43
      %p433 = scmp.lt.s32.totalorder %s25, 1
      %s434 = scalar_select %p433, %s25, 1
      %s435 = scalar_lea.vmem %s1, %s434
      %p436 = pneg %p72
      %p437 = pneg %p69
      %p438 = pneg %p93
      %p439 = pneg %p90
      %p440 = pneg %p114
      %p441 = pneg %p111
      %p442 = pneg %p135
      %p443 = pneg %p132
      %p444 = pneg %p156
      %p445 = pneg %p153
      %p446 = pneg %p177
      %p447 = pneg %p174
      %p448 = pneg %p198
      %p449 = pneg %p195
      %p450 = pneg %p219
      %p451 = pneg %p216
      %p452 = pneg %p240
      %p453 = pneg %p237
      %p454 = pneg %p261
      %p455 = pneg %p258
      %p456 = pneg %p282
      %p457 = pneg %p279
      %p458 = pneg %p303
      %p459 = pneg %p300
      %p460 = pneg %p324
      %p461 = pneg %p321
      %p462 = pneg %p350
      %p463 = pneg %p347
      %p464 = scmp.lt.s32.totalorder %s25, 1
      %s465 = scalar_select %p464, %s25, 1
      %s466 = smul.addr %s465, 2
      %s467 = smul.addr %s466, 8
      %s468 = scalar_lea.vmem %s14, %s467
      %p469 = scmp.lt.s32.totalorder %s25, 1
      %s470 = scalar_select %p469, %s25, 1
      %s471 = smul.addr %s470, 2
      %s472 = smul.addr %s471, 8
      %s473 = scalar_lea.vmem %s0, %s472
      %p474 = scmp.lt.s32.totalorder %s25, 1
      %s475 = scalar_select %p474, %s25, 1
      %s476 = scalar_lea.vmem %s1, %s475
      %p477 = scmp.lt.s32.totalorder %s25, 1
      %s478 = scalar_select %p477, %s25, 1
      %s479 = smul.addr %s478, 2
      %s480 = smul.addr %s479, 8
      %s481 = scalar_lea.vmem %s14, %s480
      %v482 = vld [vmem:[%s473] sm:$0xff]
      %v483 = vld [vmem:[%s473 + $0x8] sm:$0xff]
      %v484 = vld [vmem:[%s2] sm:$0xff]
      %v485 = vld [vmem:[%s2 + $0x8] sm:$0xff]
      %v486 = vld [vmem:[%s2 + $0x10] sm:$0xff]
      %v487 = vld [vmem:[%s2 + $0x18] sm:$0xff]
      %v488 = vld [vmem:[%s3] sm:$0x1]
      %v490 = vperm.slane %v488, 0
      %vm492 = vcmask 261120
      %v494 = vsel %vm492, %v482, 0
      %v497 = vsel %vm492, %v483, 0
      %499 = vmatpush.msra.mxu0 0.0
      %500 = vmatpush.msra.mxu0 0.0
      %501 = vmatpush.msra.mxu0 0.0
      %502 = vmatpush.msra.mxu0 0.0
      %503 = vmatpush.msra.mxu0 0.0
      %504 = vmatpush.msra.mxu0 0.0
      %505 = vmatpush.msra.mxu0 0.0
      %506 = vmatpush.msra.mxu0 0.0
      %507 = vmatpush.msra.mxu0 0.0
      %508 = vmatpush.msra.mxu0 0.0
      %509 = vmatpush.msra.mxu0 0.0
      %510 = vmatpush.msra.mxu0 0.0
      %511 = vmatpush.msra.mxu0 %v487
      %512 = vmatpush.msra.mxu0 %v486
      %513 = vmatpush.msra.mxu0 %v485
      %514 = vmatpush.msra.mxu0 %v484
      %515 = vmatmul.f32.gmra.mxu0 %v494
      %v516 = vpop.f32.mrf.mxu0
      %v517 = vadd.f32 %v490, %v516
      %518 = vmatmul.f32.gmra.mxu0 %v497
      %v519 = vpop.f32.mrf.mxu0
      %v520 = vadd.f32 %v490, %v519
      %521 = vdwg.mxu0
      %v522 = vld [vmem:[%s476] sm:$0x1]
      %v523 = vld [vmem:[%s4] sm:$0xff]
      %v524 = vld [vmem:[%s4 + $0x8] sm:$0xff]
      %v525 = vld [vmem:[%s4 + $0x10] sm:$0xff]
      %v526 = vld [vmem:[%s4 + $0x18] sm:$0xff]
      %v527 = vld [vmem:[%s5] sm:$0x1]
      %v529 = vperm.slane %v522, 0
      %533 = vrot.lane.b32.xlu0 %v517, 96
      %v534 = vpop.permute.xlu0 %533
      %535 = vrot.lane.b32.xlu0 %v520, 96
      %v536 = vpop.permute.xlu0 %535
      %vm537 = vcmask 64512
      %v538 = vsel %vm537, %v517, 0
      %v540 = vsel %vm537, %v520, 0
      %v542 = vsel %vm537, %v534, 0
      %v544 = vsel %vm537, %v536, 0
      %546 = vmatpush.xpose.msra.mxu0 0.0
      %547 = vmatpush.xpose.msra.mxu0 0.0
      %548 = vmatpush.xpose.msra.mxu0 0.0
      %549 = vmatpush.xpose.msra.mxu0 0.0
      %550 = vmatpush.xpose.msra.mxu0 0.0
      %551 = vmatpush.xpose.msra.mxu0 0.0
      %552 = vmatpush.xpose.msra.mxu0 0.0
      %553 = vmatpush.xpose.msra.mxu0 0.0
      %554 = vmatpush.xpose.msra.mxu0 0.0
      %555 = vmatpush.xpose.msra.mxu0 0.0
      %556 = vmatpush.xpose.msra.mxu0 0.0
      %557 = vmatpush.xpose.msra.mxu0 0.0
      %558 = vmatpush.xpose.msra.mxu0 0.0
      %559 = vmatpush.xpose.msra.mxu0 0.0
      %560 = vmatpush.xpose.msra.mxu0 %v544
      %561 = vmatpush.xpose.msra.mxu0 %v542
      %562 = vmatmul.f32.gmra.mxu0 %v538
      %v563 = vpop.f32.mrf.mxu0
      %v564 = vadd.f32 %v529, %v563
      %565 = vmatmul.f32.gmra.mxu0 %v540
      %v566 = vpop.f32.mrf.mxu0
      %v567 = vadd.f32 %v529, %v566
      %568 = vdwg.mxu0
      %vm569 = vcmask 130048
      %v570 = vsel %vm569, %v564, -inf
      %571 = vmax.xlane.f32.xlu0 %v570
      %v572 = vpop.xlane.xlu0 %571
      %v573 = vsel %vm569, %v567, -inf
      %574 = vmax.xlane.f32.xlu0 %v573
      %v575 = vpop.xlane.xlu0 %574
      %v576 = vsub.f32 %v564, %v572
      %v577 = vsub.f32 %v567, %v575
      %v578 = vmul.f32 %v576, 1.442695
      %v579 = vpow.pop %v578
      %v580 = vmul.f32 %v577, 1.442695
      %v581 = vpow.pop %v580
      %v582 = vsel %vm569, %v579, 0.0
      %583 = vadd.xlane.f32.xlu0 %v582
      %v584 = vpop.xlane.xlu0 %583
      %v585 = vsel %vm569, %v581, 0.0
      %586 = vadd.xlane.f32.xlu0 %v585
      %v587 = vpop.xlane.xlu0 %586
      %v588 = vrcp.pop %v584
      %v589 = vrcp.pop %v587
      %v590 = vmul.f32 %v579, %v588
      %v591 = vmul.f32 %v581, %v589
      %592 = vrot.lane.b32.xlu0 %v517, 64
      %v593 = vpop.permute.xlu0 %592
      %594 = vrot.lane.b32.xlu0 %v520, 64
      %v595 = vpop.permute.xlu0 %594
      %v599 = vsel %vm569, %v590, 0
      %v602 = vsel %vm569, %v591, 0
      %604 = vmatpush.msra.mxu0 0.0
      %605 = vmatpush.msra.mxu0 0.0
      %606 = vmatpush.msra.mxu0 0.0
      %607 = vmatpush.msra.mxu0 0.0
      %608 = vmatpush.msra.mxu0 0.0
      %609 = vmatpush.msra.mxu0 0.0
      %610 = vmatpush.msra.mxu0 0.0
      %611 = vmatpush.msra.mxu0 0.0
      %612 = vmatpush.msra.mxu0 0.0
      %613 = vmatpush.msra.mxu0 0.0
      %614 = vmatpush.msra.mxu0 0.0
      %615 = vmatpush.msra.mxu0 0.0
      %616 = vmatpush.msra.mxu0 0.0
      %617 = vmatpush.msra.mxu0 0.0
      %618 = vmatpush.msra.mxu0 %v595
      %619 = vmatpush.msra.mxu0 %v593
      %620 = vmatmul.f32.gmra.mxu0 %v599
      %v621 = vpop.f32.mrf.mxu0
      %v622 = vadd.f32 0.0, %v621
      %623 = vmatmul.f32.gmra.mxu0 %v602
      %v624 = vpop.f32.mrf.mxu0
      %v625 = vadd.f32 0.0, %v624
      %626 = vdwg.mxu0
      %627 = vrot.lane.b32.xlu0 %v517, 120
      %v628 = vpop.permute.xlu0 %627
      %629 = vrot.lane.b32.xlu0 %v520, 120
      %v630 = vpop.permute.xlu0 %629
      %631 = vrot.lane.b32.xlu0 %v517, 88
      %v632 = vpop.permute.xlu0 %631
      %633 = vrot.lane.b32.xlu0 %v520, 88
      %v634 = vpop.permute.xlu0 %633
      %v635 = vsel %vm537, %v628, 0
      %v637 = vsel %vm537, %v630, 0
      %v639 = vsel %vm537, %v632, 0
      %v641 = vsel %vm537, %v634, 0
      %643 = vmatpush.xpose.msra.mxu0 0.0
      %644 = vmatpush.xpose.msra.mxu0 0.0
      %645 = vmatpush.xpose.msra.mxu0 0.0
      %646 = vmatpush.xpose.msra.mxu0 0.0
      %647 = vmatpush.xpose.msra.mxu0 0.0
      %648 = vmatpush.xpose.msra.mxu0 0.0
      %649 = vmatpush.xpose.msra.mxu0 0.0
      %650 = vmatpush.xpose.msra.mxu0 0.0
      %651 = vmatpush.xpose.msra.mxu0 0.0
      %652 = vmatpush.xpose.msra.mxu0 0.0
      %653 = vmatpush.xpose.msra.mxu0 0.0
      %654 = vmatpush.xpose.msra.mxu0 0.0
      %655 = vmatpush.xpose.msra.mxu0 0.0
      %656 = vmatpush.xpose.msra.mxu0 0.0
      %657 = vmatpush.xpose.msra.mxu0 %v641
      %658 = vmatpush.xpose.msra.mxu0 %v639
      %659 = vmatmul.f32.gmra.mxu0 %v635
      %v660 = vpop.f32.mrf.mxu0
      %v661 = vadd.f32 %v529, %v660
      %662 = vmatmul.f32.gmra.mxu0 %v637
      %v663 = vpop.f32.mrf.mxu0
      %v664 = vadd.f32 %v529, %v663
      %665 = vdwg.mxu0
      %v666 = vsel %vm569, %v661, -inf
      %667 = vmax.xlane.f32.xlu0 %v666
      %v668 = vpop.xlane.xlu0 %667
      %v669 = vsel %vm569, %v664, -inf
      %670 = vmax.xlane.f32.xlu0 %v669
      %v671 = vpop.xlane.xlu0 %670
      %v672 = vsub.f32 %v661, %v668
      %v673 = vsub.f32 %v664, %v671
      %v674 = vmul.f32 %v672, 1.442695
      %v675 = vpow.pop %v674
      %v676 = vmul.f32 %v673, 1.442695
      %v677 = vpow.pop %v676
      %v678 = vsel %vm569, %v675, 0.0
      %679 = vadd.xlane.f32.xlu0 %v678
      %v680 = vpop.xlane.xlu0 %679
      %v681 = vsel %vm569, %v677, 0.0
      %682 = vadd.xlane.f32.xlu0 %v681
      %v683 = vpop.xlane.xlu0 %682
      %v684 = vrcp.pop %v680
      %v685 = vrcp.pop %v683
      %v686 = vmul.f32 %v675, %v684
      %v687 = vmul.f32 %v677, %v685
      %688 = vrot.lane.b32.xlu0 %v517, 56
      %v689 = vpop.permute.xlu0 %688
      %690 = vrot.lane.b32.xlu0 %v520, 56
      %v691 = vpop.permute.xlu0 %690
      %v695 = vsel %vm569, %v686, 0
      %v698 = vsel %vm569, %v687, 0
      %700 = vmatpush.msra.mxu0 0.0
      %701 = vmatpush.msra.mxu0 0.0
      %702 = vmatpush.msra.mxu0 0.0
      %703 = vmatpush.msra.mxu0 0.0
      %704 = vmatpush.msra.mxu0 0.0
      %705 = vmatpush.msra.mxu0 0.0
      %706 = vmatpush.msra.mxu0 0.0
      %707 = vmatpush.msra.mxu0 0.0
      %708 = vmatpush.msra.mxu0 0.0
      %709 = vmatpush.msra.mxu0 0.0
      %710 = vmatpush.msra.mxu0 0.0
      %711 = vmatpush.msra.mxu0 0.0
      %712 = vmatpush.msra.mxu0 0.0
      %713 = vmatpush.msra.mxu0 0.0
      %714 = vmatpush.msra.mxu0 %v691
      %715 = vmatpush.msra.mxu0 %v689
      %716 = vmatmul.f32.gmra.mxu0 %v695
      %v717 = vpop.f32.mrf.mxu0
      %v718 = vadd.f32 0.0, %v717
      %719 = vmatmul.f32.gmra.mxu0 %v698
      %v720 = vpop.f32.mrf.mxu0
      %v721 = vadd.f32 0.0, %v720
      %722 = vdwg.mxu0
      %v724 = vsel %vm537, %v718, 0
      %v727 = vsel %vm537, %v721, 0
      %729 = vmatpush.msra.mxu0 0.0
      %730 = vmatpush.msra.mxu0 0.0
      %731 = vmatpush.msra.mxu0 0.0
      %732 = vmatpush.msra.mxu0 0.0
      %733 = vmatpush.msra.mxu0 0.0
      %734 = vmatpush.msra.mxu0 0.0
      %735 = vmatpush.msra.mxu0 0.0
      %736 = vmatpush.msra.mxu0 0.0
      %737 = vmatpush.msra.mxu0 0.0
      %738 = vmatpush.msra.mxu0 0.0
      %739 = vmatpush.msra.mxu0 0.0
      %740 = vmatpush.msra.mxu0 0.0
      %741 = vmatpush.msra.mxu0 0.0
      %742 = vmatpush.msra.mxu0 0.0
      %743 = vmatpush.msra.mxu0 0.0
      %744 = vmatpush.msra.mxu0 %v524
      %745 = vmatmul.f32.gmra.mxu0 %v724
      %v746 = vpop.f32.mrf.mxu0
      %v747 = vadd.f32 0.0, %v746
      %748 = vmatmul.f32.gmra.mxu0 %v727
      %v749 = vpop.f32.mrf.mxu0
      %v750 = vadd.f32 0.0, %v749
      %751 = vdwg.mxu0
      %v753 = vsel %vm537, %v622, 0
      %v756 = vsel %vm537, %v625, 0
      %758 = vmatpush.msra.mxu0 0.0
      %759 = vmatpush.msra.mxu0 0.0
      %760 = vmatpush.msra.mxu0 0.0
      %761 = vmatpush.msra.mxu0 0.0
      %762 = vmatpush.msra.mxu0 0.0
      %763 = vmatpush.msra.mxu0 0.0
      %764 = vmatpush.msra.mxu0 0.0
      %765 = vmatpush.msra.mxu0 0.0
      %766 = vmatpush.msra.mxu0 0.0
      %767 = vmatpush.msra.mxu0 0.0
      %768 = vmatpush.msra.mxu0 0.0
      %769 = vmatpush.msra.mxu0 0.0
      %770 = vmatpush.msra.mxu0 0.0
      %771 = vmatpush.msra.mxu0 0.0
      %772 = vmatpush.msra.mxu0 0.0
      %773 = vmatpush.msra.mxu0 %v523
      %774 = vmatmul.f32.gmra.mxu0 %v753
      %v775 = vpop.f32.mrf.mxu0
      %v776 = vadd.f32 %v747, %v775
      %777 = vmatmul.f32.gmra.mxu0 %v756
      %v778 = vpop.f32.mrf.mxu0
      %v779 = vadd.f32 %v750, %v778
      %780 = vdwg.mxu0
      %781 = vrot.lane.b32.xlu0 %v517, 112
      %v782 = vpop.permute.xlu0 %781
      %783 = vrot.lane.b32.xlu0 %v520, 112
      %v784 = vpop.permute.xlu0 %783
      %785 = vrot.lane.b32.xlu0 %v517, 80
      %v786 = vpop.permute.xlu0 %785
      %787 = vrot.lane.b32.xlu0 %v520, 80
      %v788 = vpop.permute.xlu0 %787
      %v789 = vsel %vm537, %v782, 0
      %v791 = vsel %vm537, %v784, 0
      %v793 = vsel %vm537, %v786, 0
      %v795 = vsel %vm537, %v788, 0
      %797 = vmatpush.xpose.msra.mxu0 0.0
      %798 = vmatpush.xpose.msra.mxu0 0.0
      %799 = vmatpush.xpose.msra.mxu0 0.0
      %800 = vmatpush.xpose.msra.mxu0 0.0
      %801 = vmatpush.xpose.msra.mxu0 0.0
      %802 = vmatpush.xpose.msra.mxu0 0.0
      %803 = vmatpush.xpose.msra.mxu0 0.0
      %804 = vmatpush.xpose.msra.mxu0 0.0
      %805 = vmatpush.xpose.msra.mxu0 0.0
      %806 = vmatpush.xpose.msra.mxu0 0.0
      %807 = vmatpush.xpose.msra.mxu0 0.0
      %808 = vmatpush.xpose.msra.mxu0 0.0
      %809 = vmatpush.xpose.msra.mxu0 0.0
      %810 = vmatpush.xpose.msra.mxu0 0.0
      %811 = vmatpush.xpose.msra.mxu0 %v795
      %812 = vmatpush.xpose.msra.mxu0 %v793
      %813 = vmatmul.f32.gmra.mxu0 %v789
      %v814 = vpop.f32.mrf.mxu0
      %v815 = vadd.f32 %v529, %v814
      %816 = vmatmul.f32.gmra.mxu0 %v791
      %v817 = vpop.f32.mrf.mxu0
      %v818 = vadd.f32 %v529, %v817
      %819 = vdwg.mxu0
      %v820 = vsel %vm569, %v815, -inf
      %821 = vmax.xlane.f32.xlu0 %v820
      %v822 = vpop.xlane.xlu0 %821
      %v823 = vsel %vm569, %v818, -inf
      %824 = vmax.xlane.f32.xlu0 %v823
      %v825 = vpop.xlane.xlu0 %824
      %v826 = vsub.f32 %v815, %v822
      %v827 = vsub.f32 %v818, %v825
      %v828 = vmul.f32 %v826, 1.442695
      %v829 = vpow.pop %v828
      %v830 = vmul.f32 %v827, 1.442695
      %v831 = vpow.pop %v830
      %v832 = vsel %vm569, %v829, 0.0
      %833 = vadd.xlane.f32.xlu0 %v832
      %v834 = vpop.xlane.xlu0 %833
      %v835 = vsel %vm569, %v831, 0.0
      %836 = vadd.xlane.f32.xlu0 %v835
      %v837 = vpop.xlane.xlu0 %836
      %v838 = vrcp.pop %v834
      %v839 = vrcp.pop %v837
      %v840 = vmul.f32 %v829, %v838
      %v841 = vmul.f32 %v831, %v839
      %842 = vrot.lane.b32.xlu0 %v517, 48
      %v843 = vpop.permute.xlu0 %842
      %844 = vrot.lane.b32.xlu0 %v520, 48
      %v845 = vpop.permute.xlu0 %844
      %v849 = vsel %vm569, %v840, 0
      %v852 = vsel %vm569, %v841, 0
      %854 = vmatpush.msra.mxu0 0.0
      %855 = vmatpush.msra.mxu0 0.0
      %856 = vmatpush.msra.mxu0 0.0
      %857 = vmatpush.msra.mxu0 0.0
      %858 = vmatpush.msra.mxu0 0.0
      %859 = vmatpush.msra.mxu0 0.0
      %860 = vmatpush.msra.mxu0 0.0
      %861 = vmatpush.msra.mxu0 0.0
      %862 = vmatpush.msra.mxu0 0.0
      %863 = vmatpush.msra.mxu0 0.0
      %864 = vmatpush.msra.mxu0 0.0
      %865 = vmatpush.msra.mxu0 0.0
      %866 = vmatpush.msra.mxu0 0.0
      %867 = vmatpush.msra.mxu0 0.0
      %868 = vmatpush.msra.mxu0 %v845
      %869 = vmatpush.msra.mxu0 %v843
      %870 = vmatmul.f32.gmra.mxu0 %v849
      %v871 = vpop.f32.mrf.mxu0
      %v872 = vadd.f32 0.0, %v871
      %873 = vmatmul.f32.gmra.mxu0 %v852
      %v874 = vpop.f32.mrf.mxu0
      %v875 = vadd.f32 0.0, %v874
      %876 = vdwg.mxu0
      %v878 = vsel %vm537, %v872, 0
      %v881 = vsel %vm537, %v875, 0
      %883 = vmatpush.msra.mxu0 0.0
      %884 = vmatpush.msra.mxu0 0.0
      %885 = vmatpush.msra.mxu0 0.0
      %886 = vmatpush.msra.mxu0 0.0
      %887 = vmatpush.msra.mxu0 0.0
      %888 = vmatpush.msra.mxu0 0.0
      %889 = vmatpush.msra.mxu0 0.0
      %890 = vmatpush.msra.mxu0 0.0
      %891 = vmatpush.msra.mxu0 0.0
      %892 = vmatpush.msra.mxu0 0.0
      %893 = vmatpush.msra.mxu0 0.0
      %894 = vmatpush.msra.mxu0 0.0
      %895 = vmatpush.msra.mxu0 0.0
      %896 = vmatpush.msra.mxu0 0.0
      %897 = vmatpush.msra.mxu0 0.0
      %898 = vmatpush.msra.mxu0 %v525
      %899 = vmatmul.f32.gmra.mxu0 %v878
      %v900 = vpop.f32.mrf.mxu0
      %v901 = vadd.f32 0.0, %v900
      %902 = vmatmul.f32.gmra.mxu0 %v881
      %v903 = vpop.f32.mrf.mxu0
      %v904 = vadd.f32 0.0, %v903
      %905 = vdwg.mxu0
      %v906 = vadd.f32 %v776, %v901
      %v907 = vadd.f32 %v779, %v904
      %908 = vrot.lane.b32.xlu0 %v517, 104
      %v909 = vpop.permute.xlu0 %908
      %910 = vrot.lane.b32.xlu0 %v520, 104
      %v911 = vpop.permute.xlu0 %910
      %912 = vrot.lane.b32.xlu0 %v517, 72
      %v913 = vpop.permute.xlu0 %912
      %914 = vrot.lane.b32.xlu0 %v520, 72
      %v915 = vpop.permute.xlu0 %914
      %v916 = vsel %vm537, %v909, 0
      %v918 = vsel %vm537, %v911, 0
      %v920 = vsel %vm537, %v913, 0
      %v922 = vsel %vm537, %v915, 0
      %924 = vmatpush.xpose.msra.mxu0 0.0
      %925 = vmatpush.xpose.msra.mxu0 0.0
      %926 = vmatpush.xpose.msra.mxu0 0.0
      %927 = vmatpush.xpose.msra.mxu0 0.0
      %928 = vmatpush.xpose.msra.mxu0 0.0
      %929 = vmatpush.xpose.msra.mxu0 0.0
      %930 = vmatpush.xpose.msra.mxu0 0.0
      %931 = vmatpush.xpose.msra.mxu0 0.0
      %932 = vmatpush.xpose.msra.mxu0 0.0
      %933 = vmatpush.xpose.msra.mxu0 0.0
      %934 = vmatpush.xpose.msra.mxu0 0.0
      %935 = vmatpush.xpose.msra.mxu0 0.0
      %936 = vmatpush.xpose.msra.mxu0 0.0
      %937 = vmatpush.xpose.msra.mxu0 0.0
      %938 = vmatpush.xpose.msra.mxu0 %v922
      %939 = vmatpush.xpose.msra.mxu0 %v920
      %940 = vmatmul.f32.gmra.mxu0 %v916
      %v941 = vpop.f32.mrf.mxu0
      %v942 = vadd.f32 %v529, %v941
      %943 = vmatmul.f32.gmra.mxu0 %v918
      %v944 = vpop.f32.mrf.mxu0
      %v945 = vadd.f32 %v529, %v944
      %946 = vdwg.mxu0
      %v947 = vsel %vm569, %v942, -inf
      %948 = vmax.xlane.f32.xlu0 %v947
      %v949 = vpop.xlane.xlu0 %948
      %v950 = vsel %vm569, %v945, -inf
      %951 = vmax.xlane.f32.xlu0 %v950
      %v952 = vpop.xlane.xlu0 %951
      %v953 = vsub.f32 %v942, %v949
      %v954 = vsub.f32 %v945, %v952
      %v955 = vmul.f32 %v953, 1.442695
      %v956 = vpow.pop %v955
      %v957 = vmul.f32 %v954, 1.442695
      %v958 = vpow.pop %v957
      %v959 = vsel %vm569, %v956, 0.0
      %960 = vadd.xlane.f32.xlu0 %v959
      %v961 = vpop.xlane.xlu0 %960
      %v962 = vsel %vm569, %v958, 0.0
      %963 = vadd.xlane.f32.xlu0 %v962
      %v964 = vpop.xlane.xlu0 %963
      %v965 = vrcp.pop %v961
      %v966 = vrcp.pop %v964
      %v967 = vmul.f32 %v956, %v965
      %v968 = vmul.f32 %v958, %v966
      %969 = vrot.lane.b32.xlu0 %v517, 40
      %v970 = vpop.permute.xlu0 %969
      %971 = vrot.lane.b32.xlu0 %v520, 40
      %v972 = vpop.permute.xlu0 %971
      %v976 = vsel %vm569, %v967, 0
      %v979 = vsel %vm569, %v968, 0
      %981 = vmatpush.msra.mxu0 0.0
      %982 = vmatpush.msra.mxu0 0.0
      %983 = vmatpush.msra.mxu0 0.0
      %984 = vmatpush.msra.mxu0 0.0
      %985 = vmatpush.msra.mxu0 0.0
      %986 = vmatpush.msra.mxu0 0.0
      %987 = vmatpush.msra.mxu0 0.0
      %988 = vmatpush.msra.mxu0 0.0
      %989 = vmatpush.msra.mxu0 0.0
      %990 = vmatpush.msra.mxu0 0.0
      %991 = vmatpush.msra.mxu0 0.0
      %992 = vmatpush.msra.mxu0 0.0
      %993 = vmatpush.msra.mxu0 0.0
      %994 = vmatpush.msra.mxu0 0.0
      %995 = vmatpush.msra.mxu0 %v972
      %996 = vmatpush.msra.mxu0 %v970
      %997 = vmatmul.f32.gmra.mxu0 %v976
      %v998 = vpop.f32.mrf.mxu0
      %v999 = vadd.f32 0.0, %v998
      %1000 = vmatmul.f32.gmra.mxu0 %v979
      %v1001 = vpop.f32.mrf.mxu0
      %v1002 = vadd.f32 0.0, %v1001
      %1003 = vdwg.mxu0
      %v1005 = vsel %vm537, %v999, 0
      %v1008 = vsel %vm537, %v1002, 0
      %1010 = vmatpush.msra.mxu0 0.0
      %1011 = vmatpush.msra.mxu0 0.0
      %1012 = vmatpush.msra.mxu0 0.0
      %1013 = vmatpush.msra.mxu0 0.0
      %1014 = vmatpush.msra.mxu0 0.0
      %1015 = vmatpush.msra.mxu0 0.0
      %1016 = vmatpush.msra.mxu0 0.0
      %1017 = vmatpush.msra.mxu0 0.0
      %1018 = vmatpush.msra.mxu0 0.0
      %1019 = vmatpush.msra.mxu0 0.0
      %1020 = vmatpush.msra.mxu0 0.0
      %1021 = vmatpush.msra.mxu0 0.0
      %1022 = vmatpush.msra.mxu0 0.0
      %1023 = vmatpush.msra.mxu0 0.0
      %1024 = vmatpush.msra.mxu0 0.0
      %1025 = vmatpush.msra.mxu0 %v526
      %1026 = vmatmul.f32.gmra.mxu0 %v1005
      %v1027 = vpop.f32.mrf.mxu0
      %v1028 = vadd.f32 0.0, %v1027
      %1029 = vmatmul.f32.gmra.mxu0 %v1008
      %v1030 = vpop.f32.mrf.mxu0
      %v1031 = vadd.f32 0.0, %v1030
      %1032 = vdwg.mxu0
      %v1033 = vadd.f32 %v906, %v1028
      %v1034 = vadd.f32 %v907, %v1031
      %v1036 = vperm.slane %v527, 0
      %v1038 = vadd.f32 %v1033, %v1036
      %v1039 = vadd.f32 %v1034, %v1036
      %v1040 = vadd.f32 %v482, %v1038
      %v1041 = vadd.f32 %v483, %v1039
      %v1042 = vld [vmem:[%s6] sm:$0x1]
      %v1043 = vld [vmem:[%s7] sm:$0x1]
      %v1044 = vsel %vm492, %v1040, 0.0
      %1045 = vadd.xlane.f32.xlu0 %v1044
      %v1046 = vpop.xlane.xlu0 %1045
      %v1047 = vsel %vm492, %v1041, 0.0
      %1048 = vadd.xlane.f32.xlu0 %v1047
      %v1049 = vpop.xlane.xlu0 %1048
      %v1050 = vrcp.pop 32.0
      %v1051 = vmul.f32 32.0, %v1050
      %v1052 = vsub.f32 1.0, %v1051
      %v1053 = vmul.f32 %v1050, %v1052
      %v1054 = vadd.f32 %v1050, %v1053
      %vm1055 = vweird.f32 %v1050
      %v1056 = vsel %vm1055, %v1050, %v1054
      %v1057 = vmul.f32 %v1046, %v1056
      %v1058 = vmul.f32 %v1049, %v1056
      %v1059 = vsub.f32 %v1040, %v1057
      %v1060 = vsub.f32 %v1041, %v1058
      %v1061 = vmul.f32 %v1059, %v1059
      %v1062 = vmul.f32 %v1060, %v1060
      %v1063 = vsel %vm492, %v1061, 0.0
      %1064 = vadd.xlane.f32.xlu0 %v1063
      %v1065 = vpop.xlane.xlu0 %1064
      %v1066 = vsel %vm492, %v1062, 0.0
      %1067 = vadd.xlane.f32.xlu0 %v1066
      %v1068 = vpop.xlane.xlu0 %1067
      %v1069 = vmul.f32 %v1065, %v1056
      %v1070 = vmul.f32 %v1068, %v1056
      %v1071 = vadd.f32 %v1069, 1e-05
      %v1072 = vadd.f32 %v1070, 1e-05
      %v1073 = vrsqrt.pop %v1071
      %v1074 = vmul.f32 %v1073, %v1071
      %v1075 = vmul.f32 %v1074, %v1073
      %v1076 = vmul.f32 0.5, %v1075
      %v1077 = vsub.f32 1.5, %v1076
      %v1078 = vmul.f32 %v1073, %v1077
      %vm1079 = vweird.f32 %v1071
      %vm1080 = vweird.f32 %v1073
      %vm1081 = vmor %vm1079, %vm1080
      %v1082 = vsel %vm1081, %v1073, %v1078
      %v1083 = vrsqrt.pop %v1072
      %v1084 = vmul.f32 %v1083, %v1072
      %v1085 = vmul.f32 %v1084, %v1083
      %v1086 = vmul.f32 0.5, %v1085
      %v1087 = vsub.f32 1.5, %v1086
      %v1088 = vmul.f32 %v1083, %v1087
      %vm1089 = vweird.f32 %v1072
      %vm1090 = vweird.f32 %v1083
      %vm1091 = vmor %vm1089, %vm1090
      %v1092 = vsel %vm1091, %v1083, %v1088
      %v1093 = vmul.f32 %v1059, %v1082
      %v1094 = vmul.f32 %v1060, %v1092
      %v1096 = vperm.slane %v1042, 0
      %v1098 = vmul.f32 %v1093, %v1096
      %v1099 = vmul.f32 %v1094, %v1096
      %v1101 = vperm.slane %v1043, 0
      %v1103 = vadd.f32 %v1098, %v1101
      %v1104 = vadd.f32 %v1099, %v1101
      %v1105 = vld [vmem:[%s8] sm:$0xff]
      %v1106 = vld [vmem:[%s8 + $0x8] sm:$0xff]
      %v1107 = vld [vmem:[%s8 + $0x10] sm:$0xff]
      %v1108 = vld [vmem:[%s8 + $0x18] sm:$0xff]
      %v1109 = vld [vmem:[%s9] sm:$0x1]
      %v1111 = vperm.slane %v1109, 0
      %v1114 = vsel %vm492, %v1103, 0
      %v1117 = vsel %vm492, %v1104, 0
      %1119 = vmatpush.msra.mxu0 0.0
      %1120 = vmatpush.msra.mxu0 0.0
      %1121 = vmatpush.msra.mxu0 0.0
      %1122 = vmatpush.msra.mxu0 0.0
      %1123 = vmatpush.msra.mxu0 0.0
      %1124 = vmatpush.msra.mxu0 0.0
      %1125 = vmatpush.msra.mxu0 0.0
      %1126 = vmatpush.msra.mxu0 0.0
      %1127 = vmatpush.msra.mxu0 0.0
      %1128 = vmatpush.msra.mxu0 0.0
      %1129 = vmatpush.msra.mxu0 0.0
      %1130 = vmatpush.msra.mxu0 0.0
      %1131 = vmatpush.msra.mxu0 %v1108
      %1132 = vmatpush.msra.mxu0 %v1107
      %1133 = vmatpush.msra.mxu0 %v1106
      %1134 = vmatpush.msra.mxu0 %v1105
      %1135 = vmatmul.f32.gmra.mxu0 %v1114
      %v1136 = vpop.f32.mrf.mxu0
      %v1137 = vadd.f32 %v1111, %v1136
      %1138 = vmatmul.f32.gmra.mxu0 %v1117
      %v1139 = vpop.f32.mrf.mxu0
      %v1140 = vadd.f32 %v1111, %v1139
      %1141 = vdwg.mxu0
      %v1142 = vmax.f32 %v1137, 0.0
      %v1143 = vmax.f32 %v1140, 0.0
      %v1144 = vld [vmem:[%s10] sm:$0xff]
      %v1145 = vld [vmem:[%s10 + $0x8] sm:$0xff]
      %v1146 = vld [vmem:[%s10 + $0x10] sm:$0xff]
      %v1147 = vld [vmem:[%s10 + $0x18] sm:$0xff]
      %v1148 = vld [vmem:[%s10 + $0x20] sm:$0xff]
      %v1149 = vld [vmem:[%s10 + $0x28] sm:$0xff]
      %v1150 = vld [vmem:[%s10 + $0x30] sm:$0xff]
      %v1151 = vld [vmem:[%s10 + $0x38] sm:$0xff]
      %v1152 = vld [vmem:[%s11] sm:$0x1]
      %v1154 = vperm.slane %v1152, 0
      %vm1156 = vcmask 523264
      %v1158 = vsel %vm1156, %v1142, 0
      %v1161 = vsel %vm1156, %v1143, 0
      %1163 = vmatpush.msra.mxu0 0.0
      %1164 = vmatpush.msra.mxu0 0.0
      %1165 = vmatpush.msra.mxu0 0.0
      %1166 = vmatpush.msra.mxu0 0.0
      %1167 = vmatpush.msra.mxu0 0.0
      %1168 = vmatpush.msra.mxu0 0.0
      %1169 = vmatpush.msra.mxu0 0.0
      %1170 = vmatpush.msra.mxu0 0.0
      %1171 = vmatpush.msra.mxu0 %v1151
      %1172 = vmatpush.msra.mxu0 %v1150
      %1173 = vmatpush.msra.mxu0 %v1149
      %1174 = vmatpush.msra.mxu0 %v1148
      %1175 = vmatpush.msra.mxu0 %v1147
      %1176 = vmatpush.msra.mxu0 %v1146
      %1177 = vmatpush.msra.mxu0 %v1145
      %1178 = vmatpush.msra.mxu0 %v1144
      %1179 = vmatmul.f32.gmra.mxu0 %v1158
      %v1180 = vpop.f32.mrf.mxu0
      %v1181 = vadd.f32 %v1154, %v1180
      %1182 = vmatmul.f32.gmra.mxu0 %v1161
      %v1183 = vpop.f32.mrf.mxu0
      %v1184 = vadd.f32 %v1154, %v1183
      %1185 = vdwg.mxu0
      %v1186 = vadd.f32 %v1103, %v1181
      %v1187 = vadd.f32 %v1104, %v1184
      %v1188 = vld [vmem:[%s12] sm:$0x1]
      %v1189 = vld [vmem:[%s13] sm:$0x1]
      %v1190 = vsel %vm492, %v1186, 0.0
      %1191 = vadd.xlane.f32.xlu0 %v1190
      %v1192 = vpop.xlane.xlu0 %1191
      %v1193 = vsel %vm492, %v1187, 0.0
      %1194 = vadd.xlane.f32.xlu0 %v1193
      %v1195 = vpop.xlane.xlu0 %1194
      %v1196 = vmul.f32 %v1192, %v1056
      %v1197 = vmul.f32 %v1195, %v1056
      %v1198 = vsub.f32 %v1186, %v1196
      %v1199 = vsub.f32 %v1187, %v1197
      %v1200 = vmul.f32 %v1198, %v1198
      %v1201 = vmul.f32 %v1199, %v1199
      %v1202 = vsel %vm492, %v1200, 0.0
      %1203 = vadd.xlane.f32.xlu0 %v1202
      %v1204 = vpop.xlane.xlu0 %1203
      %v1205 = vsel %vm492, %v1201, 0.0
      %1206 = vadd.xlane.f32.xlu0 %v1205
      %v1207 = vpop.xlane.xlu0 %1206
      %v1208 = vmul.f32 %v1204, %v1056
      %v1209 = vmul.f32 %v1207, %v1056
      %v1210 = vadd.f32 %v1208, 1e-05
      %v1211 = vadd.f32 %v1209, 1e-05
      %v1212 = vrsqrt.pop %v1210
      %v1213 = vmul.f32 %v1212, %v1210
      %v1214 = vmul.f32 %v1213, %v1212
      %v1215 = vmul.f32 0.5, %v1214
      %v1216 = vsub.f32 1.5, %v1215
      %v1217 = vmul.f32 %v1212, %v1216
      %vm1218 = vweird.f32 %v1210
      %vm1219 = vweird.f32 %v1212
      %vm1220 = vmor %vm1218, %vm1219
      %v1221 = vsel %vm1220, %v1212, %v1217
      %v1222 = vrsqrt.pop %v1211
      %v1223 = vmul.f32 %v1222, %v1211
      %v1224 = vmul.f32 %v1223, %v1222
      %v1225 = vmul.f32 0.5, %v1224
      %v1226 = vsub.f32 1.5, %v1225
      %v1227 = vmul.f32 %v1222, %v1226
      %vm1228 = vweird.f32 %v1211
      %vm1229 = vweird.f32 %v1222
      %vm1230 = vmor %vm1228, %vm1229
      %v1231 = vsel %vm1230, %v1222, %v1227
      %v1232 = vmul.f32 %v1198, %v1221
      %v1233 = vmul.f32 %v1199, %v1231
      %v1235 = vperm.slane %v1188, 0
      %v1237 = vmul.f32 %v1232, %v1235
      %v1238 = vmul.f32 %v1233, %v1235
      %v1240 = vperm.slane %v1189, 0
      %v1242 = vadd.f32 %v1237, %v1240
      %v1243 = vadd.f32 %v1238, %v1240
      %1244 = vst.msk [vmem:[%s481] sm:$0xff] %vm492, %v1242
      %1245 = vst.msk [vmem:[%s481 + $0x8] sm:$0xff] %vm492, %v1243
      %p1246 = scmp.lt.s32.totalorder %s25, 1
      %s1247 = scalar_select %p1246, %s25, 1
      %s1248 = smul.addr %s1247, 2
      %s1249 = smul.addr %s1248, 8
      %s1250 = scalar_lea.vmem %s14, %s1249
      // Predicated region
      $region77: #{sentence_transformer_forward.9} parent=75 // pred_check
        %p1251 = pneg %p347
      $region78: #{sentence_transformer_forward.9} parent=75 // pred_check_branch
        %1253 = sbr.rel (%p1251) target = $region80
      $region79: #{sentence_transformer_forward.9} parent=75 // pred_region
        _
      $region80: #{sentence_transformer_forward.9} parent=75 // pred_fallthru
        _
    $region76: #{sentence_transformer_forward.9} parent=5 // pred_fallthru
      _
    %p1254 = scmp.le.s32.totalorder 2, %s20
    // Predicated region
    $region81: #{sentence_transformer_forward.9} parent=5 // pred_check
      %p1255 = pneg %p1254
    $region82: #{sentence_transformer_forward.9} parent=5 // pred_check_branch
      %1257 = sbr.rel (%p1255) target = $region84
    $region83: #{sentence_transformer_forward.9} parent=5 // pred_region
      %s1258 = ssub.s32 %s20, 2
      // Predicated region
      $region85: #{sentence_transformer_forward.9} parent=83 // pred_check
        %p1259 = pneg %p353
      $region86: #{sentence_transformer_forward.9} parent=83 // pred_check_branch
        %1261 = sbr.rel (%p1259) target = $region88
      $region87: #{sentence_transformer_forward.9} parent=83 // pred_region
        %p1262 = scmp.lt.s32.totalorder %s26, 1
        %s1263 = scalar_select %p1262, %s26, 1
        %s1264 = smul.addr %s1263, 2
        %s1265 = smul.addr %s1264, 8
        %s1266 = scalar_lea.vmem %s14, %s1265
      $region88: #{sentence_transformer_forward.9} parent=83 // pred_fallthru
        _
    $region84: #{sentence_transformer_forward.9} parent=5 // pred_fallthru
      _
  $region6: #{sentence_transformer_forward.9} parent=0 // loop_footer
    %s24 = sadd.s32 1, %s20
  $region7: #{sentence_transformer_forward.9} parent=0 // loop_footer_branch
    %19 = sbr.rel target = $region3
  $region8: #{sentence_transformer_forward.9} parent=0 // loop_exit
    _

// kernel: sentence_transformer_forward.15
$region0: #{sentence_transformer_forward.15}
  #allocation0 [shape = 'u32[]', space=smem, size = 0x4, offset = 0x4, fixed_abs, tag = 'smem constant byte address 0x4 - core index']
  #allocation1 [shape = 'u32[72,128]{1,0:T(1,128)}', space=vmem, size = 0x9000, scoped, tag = 'internal scratch']
  %s0 = inlined_call_operand.vmem [shape: f32[2,8,32], index: 0, kind: input, shape index: {}]
  %s1 = inlined_call_operand.vmem [shape: f32[32,32], index: 1, kind: input, shape index: {}]
  %s2 = inlined_call_operand.vmem [shape: f32[1,32], index: 2, kind: input, shape index: {}]
  %s3 = inlined_call_operand.vmem [shape: f32[2,8,32], index: 3, kind: input, shape index: {}]
  %s4 = inlined_call_operand.vmem [shape: f32[2,8,8], index: 4, kind: output, shape index: {}]
  %s5 = sld [smem:[#allocation0]]
  $region49: #{sentence_transformer_forward.15} parent=0
    _
  %s7 = ssub.s32 1, %s5
  %s8 = scalar_select 0, %s7, %s5
  loop: start=0, step=1, limit=4
  $region2: #{sentence_transformer_forward.15} parent=0 // loop_pre_header
    _
  $region3: #{sentence_transformer_forward.15} parent=0 // loop_header
    %s10 = sphi 0, %s14
    %p11 = scmp.ge.s32.totalorder %s10, 4
    %s20 = sphi 0, %s22
    %s23 = sphi 0, %s20
    %s24 = sphi 0, %s23
    %s40 = sphi 0, %s24
    %s44 = sphi 0, %s44
    %s46 = sphi 0, %s44
    %s47 = sphi 0, %s46
    %s61 = sphi 0, %s47
    %s65 = sphi 0, %s65
    %s67 = sphi 0, %s65
    %s68 = sphi 0, %s67
    %s82 = sphi 0, %s68
    %s88 = sphi 0, %s90
    %s91 = sphi 0, %s88
    %s92 = sphi 0, %s91
    %s108 = sphi 0, %s92
    %s114 = sphi 0, %s116
    %s117 = sphi 0, %s114
    %s118 = sphi 0, %s117
    %s134 = sphi 0, %s118
  $region4: #{sentence_transformer_forward.15} parent=0 // loop_header_branch
    %13 = sbr.rel (%p11) target = $region8
  $region5: #{sentence_transformer_forward.15} parent=0 // loop_body
    %s15 = ssub.s32 %s10, 1
    %s16 = ssub.s32 %s10, 2
    %s17 = sadd.s32 %s10, 1
    %s18 = ssub.s32 %s10, %s17
    %p19 = scmp.eq.s32.totalorder %s18, 0
    %s21 = sadd.s32 %s20, 1
    %s22 = scalar_select %p19, %s20, %s21
    %p25 = pneg %p19
    %p26 = scmp.eq.s32.totalorder %s10, 1
    %p27 = por %p25, %p26
    %p28 = scmp.ne.s32.totalorder %s20, %s23
    %p29 = scmp.eq.s32.totalorder %s10, 0
    %p30 = por %p28, %p29
    %p31 = scmp.ne.s32.totalorder %s20, %s23
    %p32 = scmp.eq.s32.totalorder %s15, 1
    %p33 = por %p31, %p32
    %p34 = scmp.ne.s32.totalorder %s23, %s24
    %p35 = scmp.eq.s32.totalorder %s15, 0
    %p36 = por %p34, %p35
    %p37 = scmp.ne.s32.totalorder %s23, %s24
    %p38 = scmp.eq.s32.totalorder %s16, 1
    %p39 = por %p37, %p38
    %p41 = scmp.ne.s32.totalorder %s24, %s40
    %p42 = scmp.eq.s32.totalorder %s16, 0
    %p43 = por %p41, %p42
    %s45 = sadd.s32 %s44, 1
    %p48 = scmp.eq.s32.totalorder %s10, 1
    %p49 = scmp.ne.s32.totalorder %s44, %s46
    %p50 = scmp.eq.s32.totalorder %s10, 0
    %p51 = por %p49, %p50
    %p52 = scmp.ne.s32.totalorder %s44, %s46
    %p53 = scmp.eq.s32.totalorder %s15, 1
    %p54 = por %p52, %p53
    %p55 = scmp.ne.s32.totalorder %s46, %s47
    %p56 = scmp.eq.s32.totalorder %s15, 0
    %p57 = por %p55, %p56
    %p58 = scmp.ne.s32.totalorder %s46, %s47
    %p59 = scmp.eq.s32.totalorder %s16, 1
    %p60 = por %p58, %p59
    %p62 = scmp.ne.s32.totalorder %s47, %s61
    %p63 = scmp.eq.s32.totalorder %s16, 0
    %p64 = por %p62, %p63
    %s66 = sadd.s32 %s65, 1
    %p69 = scmp.eq.s32.totalorder %s10, 1
    %p70 = scmp.ne.s32.totalorder %s65, %s67
    %p71 = scmp.eq.s32.totalorder %s10, 0
    %p72 = por %p70, %p71
    %p73 = scmp.ne.s32.totalorder %s65, %s67
    %p74 = scmp.eq.s32.totalorder %s15, 1
    %p75 = por %p73, %p74
    %p76 = scmp.ne.s32.totalorder %s67, %s68
    %p77 = scmp.eq.s32.totalorder %s15, 0
    %p78 = por %p76, %p77
    %p79 = scmp.ne.s32.totalorder %s67, %s68
    %p80 = scmp.eq.s32.totalorder %s16, 1
    %p81 = por %p79, %p80
    %p83 = scmp.ne.s32.totalorder %s68, %s82
    %p84 = scmp.eq.s32.totalorder %s16, 0
    %p85 = por %p83, %p84
    %s86 = ssub.s32 %s10, %s17
    %p87 = scmp.eq.s32.totalorder %s86, 0
    %s89 = sadd.s32 %s88, 1
    %s90 = scalar_select %p87, %s88, %s89
    %p93 = pneg %p87
    %p94 = scmp.eq.s32.totalorder %s10, 1
    %p95 = por %p93, %p94
    %p96 = scmp.ne.s32.totalorder %s88, %s91
    %p97 = scmp.eq.s32.totalorder %s10, 0
    %p98 = por %p96, %p97
    %p99 = scmp.ne.s32.totalorder %s88, %s91
    %p100 = scmp.eq.s32.totalorder %s15, 1
    %p101 = por %p99, %p100
    %p102 = scmp.ne.s32.totalorder %s91, %s92
    %p103 = scmp.eq.s32.totalorder %s15, 0
    %p104 = por %p102, %p103
    %p105 = scmp.ne.s32.totalorder %s91, %s92
    %p106 = scmp.eq.s32.totalorder %s16, 1
    %p107 = por %p105, %p106
    %p109 = scmp.ne.s32.totalorder %s92, %s108
    %p110 = scmp.eq.s32.totalorder %s16, 0
    %p111 = por %p109, %p110
    %s112 = ssub.s32 %s10, %s17
    %p113 = scmp.eq.s32.totalorder %s112, 0
    %s115 = sadd.s32 %s114, 1
    %s116 = scalar_select %p113, %s114, %s115
    %p119 = pneg %p113
    %p120 = scmp.eq.s32.totalorder %s10, 1
    %p121 = por %p119, %p120
    %p122 = scmp.ne.s32.totalorder %s114, %s117
    %p123 = scmp.eq.s32.totalorder %s10, 0
    %p124 = por %p122, %p123
    %p125 = scmp.ne.s32.totalorder %s114, %s117
    %p126 = scmp.eq.s32.totalorder %s15, 1
    %p127 = por %p125, %p126
    %p128 = scmp.ne.s32.totalorder %s117, %s118
    %p129 = scmp.eq.s32.totalorder %s15, 0
    %p130 = por %p128, %p129
    %p131 = scmp.ne.s32.totalorder %s117, %s118
    %p132 = scmp.eq.s32.totalorder %s16, 1
    %p133 = por %p131, %p132
    %p135 = scmp.ne.s32.totalorder %s118, %s134
    %p136 = scmp.eq.s32.totalorder %s16, 0
    %p137 = por %p135, %p136
    %p138 = scmp.le.s32.totalorder 1, %s10
    %p139 = scmp.lt.s32.totalorder %s10, 3
    %p140 = pnand %p138, %p139
    %p141 = pneg %p140
    // Predicated region
    $region9: #{sentence_transformer_forward.15} parent=5 // pred_check
      _
    $region10: #{sentence_transformer_forward.15} parent=5 // pred_check_branch
      %143 = sbr.rel (%p140) target = $region12
    $region11: #{sentence_transformer_forward.15} parent=5 // pred_region
      %s144 = ssub.s32 %s10, 1
      // Predicated region
      $region13: #{sentence_transformer_forward.15} parent=11 // pred_check
        %p145 = pneg %p57
      $region14: #{sentence_transformer_forward.15} parent=11 // pred_check_branch
        %147 = sbr.rel (%p145) target = $region16
      $region15: #{sentence_transformer_forward.15} parent=11 // pred_region
        _
      $region16: #{sentence_transformer_forward.15} parent=11 // pred_fallthru
        _
      // Predicated region
      $region17: #{sentence_transformer_forward.15} parent=11 // pred_check
        %p148 = pneg %p78
      $region18: #{sentence_transformer_forward.15} parent=11 // pred_check_branch
        %150 = sbr.rel (%p148) target = $region20
      $region19: #{sentence_transformer_forward.15} parent=11 // pred_region
        _
      $region20: #{sentence_transformer_forward.15} parent=11 // pred_fallthru
        _
    $region12: #{sentence_transformer_forward.15} parent=5 // pred_fallthru
      _
    %p151 = scmp.lt.s32.totalorder %s10, 2
    // Predicated region
    $region21: #{sentence_transformer_forward.15} parent=5 // pred_check
      %p152 = pneg %p151
    $region22: #{sentence_transformer_forward.15} parent=5 // pred_check_branch
      %154 = sbr.rel (%p152) target = $region24
    $region23: #{sentence_transformer_forward.15} parent=5 // pred_region
      // Predicated region
      $region25: #{sentence_transformer_forward.15} parent=23 // pred_check
        %p155 = pneg %p30
      $region26: #{sentence_transformer_forward.15} parent=23 // pred_check_branch
        %157 = sbr.rel (%p155) target = $region28
      $region27: #{sentence_transformer_forward.15} parent=23 // pred_region
        %p158 = scmp.lt.s32.totalorder %s10, 1
        %s159 = scalar_select %p158, %s10, 1
        %s160 = smul.addr %s159, 8
        %s161 = scalar_lea.vmem %s0, %s160
      $region28: #{sentence_transformer_forward.15} parent=23 // pred_fallthru
        _
      // Predicated region
      $region29: #{sentence_transformer_forward.15} parent=23 // pred_check
        %p162 = pneg %p98
      $region30: #{sentence_transformer_forward.15} parent=23 // pred_check_branch
        %164 = sbr.rel (%p162) target = $region32
      $region31: #{sentence_transformer_forward.15} parent=23 // pred_region
        %p165 = scmp.lt.s32.totalorder %s10, 1
        %s166 = scalar_select %p165, %s10, 1
        %s167 = smul.addr %s166, 8
        %s168 = scalar_lea.vmem %s3, %s167
      $region32: #{sentence_transformer_forward.15} parent=23 // pred_fallthru
        _
    $region24: #{sentence_transformer_forward.15} parent=5 // pred_fallthru
      _
    %p169 = scmp.le.s32.totalorder 1, %s10
    %p170 = scmp.lt.s32.totalorder %s10, 3
    %p171 = pnand %p169, %p170
    %p172 = pneg %p171
    // Predicated region
    $region33: #{sentence_transformer_forward.15} parent=5 // pred_check
      _
    $region34: #{sentence_transformer_forward.15} parent=5 // pred_check_branch
      %174 = sbr.rel (%p171) target = $region36
    $region35: #{sentence_transformer_forward.15} parent=5 // pred_region
      %s175 = ssub.s32 %s10, 1
      %p176 = scmp.lt.s32.totalorder %s15, 1
      %s177 = scalar_select %p176, %s15, 1
      %s178 = smul.addr %s177, 8
      %s179 = scalar_lea.vmem %s0, %s178
      %p180 = pneg %p36
      %p181 = pneg %p33
      %p182 = pneg %p57
      %p183 = pneg %p54
      %p184 = pneg %p78
      %p185 = pneg %p75
      %p186 = scmp.lt.s32.totalorder %s15, 1
      %s187 = scalar_select %p186, %s15, 1
      %s188 = smul.addr %s187, 8
      %s189 = scalar_lea.vmem %s3, %s188
      %p190 = pneg %p104
      %p191 = pneg %p101
      %p192 = pneg %p130
      %p193 = pneg %p127
      %p194 = scmp.lt.s32.totalorder %s15, 1
      %s195 = scalar_select %p194, %s15, 1
      %s196 = smul.addr %s195, 8
      %s197 = scalar_lea.vmem %s4, %s196
      %p198 = scmp.lt.s32.totalorder %s15, 1
      %s199 = scalar_select %p198, %s15, 1
      %s200 = smul.addr %s199, 8
      %s201 = scalar_lea.vmem %s0, %s200
      %p202 = scmp.lt.s32.totalorder %s15, 1
      %s203 = scalar_select %p202, %s15, 1
      %s204 = smul.addr %s203, 8
      %s205 = scalar_lea.vmem %s3, %s204
      %p206 = scmp.lt.s32.totalorder %s15, 1
      %s207 = scalar_select %p206, %s15, 1
      %s208 = smul.addr %s207, 8
      %s209 = scalar_lea.vmem %s4, %s208
      %v210 = vld [vmem:[%s201] sm:$0xff]
      %v211 = vld [vmem:[%s1] sm:$0xff]
      %v212 = vld [vmem:[%s1 + $0x8] sm:$0xff]
      %v213 = vld [vmem:[%s1 + $0x10] sm:$0xff]
      %v214 = vld [vmem:[%s1 + $0x18] sm:$0xff]
      %v215 = vld [vmem:[%s2] sm:$0x1]
      %v217 = vperm.slane %v215, 0
      %vm219 = vcmask 261120
      %v221 = vsel %vm219, %v210, 0
      %223 = vmatpush.msra.mxu0 0.0
      %224 = vmatpush.msra.mxu0 0.0
      %225 = vmatpush.msra.mxu0 0.0
      %226 = vmatpush.msra.mxu0 0.0
      %227 = vmatpush.msra.mxu0 0.0
      %228 = vmatpush.msra.mxu0 0.0
      %229 = vmatpush.msra.mxu0 0.0
      %230 = vmatpush.msra.mxu0 0.0
      %231 = vmatpush.msra.mxu0 0.0
      %232 = vmatpush.msra.mxu0 0.0
      %233 = vmatpush.msra.mxu0 0.0
      %234 = vmatpush.msra.mxu0 0.0
      %235 = vmatpush.msra.mxu0 %v214
      %236 = vmatpush.msra.mxu0 %v213
      %237 = vmatpush.msra.mxu0 %v212
      %238 = vmatpush.msra.mxu0 %v211
      %239 = vmatmul.f32.gmra.mxu0 %v221
      %v240 = vpop.f32.mrf.mxu0
      %v241 = vadd.f32 %v217, %v240
      %242 = vdwg.mxu0
      %v243 = vld [vmem:[%s205] sm:$0xff]
      %v245 = vsel %vm219, %v241, 0
      %v248 = vsel %vm219, %v243, 0
      %250 = vmatpush.xpose.msra.mxu0 0.0
      %251 = vmatpush.xpose.msra.mxu0 0.0
      %252 = vmatpush.xpose.msra.mxu0 0.0
      %253 = vmatpush.xpose.msra.mxu0 0.0
      %254 = vmatpush.xpose.msra.mxu0 0.0
      %255 = vmatpush.xpose.msra.mxu0 0.0
      %256 = vmatpush.xpose.msra.mxu0 0.0
      %257 = vmatpush.xpose.msra.mxu0 0.0
      %258 = vmatpush.xpose.msra.mxu0 0.0
      %259 = vmatpush.xpose.msra.mxu0 0.0
      %260 = vmatpush.xpose.msra.mxu0 0.0
      %261 = vmatpush.xpose.msra.mxu0 0.0
      %262 = vmatpush.xpose.msra.mxu0 0.0
      %263 = vmatpush.xpose.msra.mxu0 0.0
      %264 = vmatpush.xpose.msra.mxu0 0.0
      %265 = vmatpush.xpose.msra.mxu0 %v248
      %266 = vmatmul.f32.gmra.mxu0 %v245
      %v267 = vpop.f32.mrf.mxu0
      %v268 = vadd.f32 0.0, %v267
      %269 = vdwg.mxu0
      %vm270 = vcmask 64512
      %v271 = vsel %vm270, %v268, -inf
      %272 = vmax.xlane.f32.xlu0 %v271
      %v273 = vpop.xlane.xlu0 %272
      %v274 = vsub.f32 %v268, %v273
      %v275 = vmul.f32 %v274, 1.442695
      %v276 = vpow.pop %v275
      %v277 = vsel %vm270, %v276, 0.0
      %278 = vadd.xlane.f32.xlu0 %v277
      %v279 = vpop.xlane.xlu0 %278
      %v280 = vrcp.pop %v279
      %v281 = vmul.f32 %v279, %v280
      %v282 = vsub.f32 1.0, %v281
      %v283 = vmul.f32 %v280, %v282
      %v284 = vadd.f32 %v280, %v283
      %vm285 = vweird.f32 %v279
      %vm286 = vweird.f32 %v280
      %vm287 = vmor %vm285, %vm286
      %v288 = vsel %vm287, %v280, %v284
      %v289 = vand.u32 2147483647, %v279
      %vm290 = vcmp.eq.f32.partialorder %v289, 8.507059e+37
      %v291 = vand.u32 %v279, 2147483648
      %v292 = vor.u32 1.1754944e-38, %v291
      %v293 = vsel %vm290, %v292, %v288
      %v294 = vmul.f32 %v276, %v293
      %295 = vst.msk [vmem:[%s209] sm:$0xff] %vm270, %v294
      %p296 = scmp.lt.s32.totalorder %s15, 1
      %s297 = scalar_select %p296, %s15, 1
      %s298 = smul.addr %s297, 8
      %s299 = scalar_lea.vmem %s4, %s298
      // Predicated region
      $region37: #{sentence_transformer_forward.15} parent=35 // pred_check
        %p300 = pneg %p127
      $region38: #{sentence_transformer_forward.15} parent=35 // pred_check_branch
        %302 = sbr.rel (%p300) target = $region40
      $region39: #{sentence_transformer_forward.15} parent=35 // pred_region
        _
      $region40: #{sentence_transformer_forward.15} parent=35 // pred_fallthru
        _
    $region36: #{sentence_transformer_forward.15} parent=5 // pred_fallthru
      _
    %p303 = scmp.le.s32.totalorder 2, %s10
    // Predicated region
    $region41: #{sentence_transformer_forward.15} parent=5 // pred_check
      %p304 = pneg %p303
    $region42: #{sentence_transformer_forward.15} parent=5 // pred_check_branch
      %306 = sbr.rel (%p304) target = $region44
    $region43: #{sentence_transformer_forward.15} parent=5 // pred_region
      %s307 = ssub.s32 %s10, 2
      // Predicated region
      $region45: #{sentence_transformer_forward.15} parent=43 // pred_check
        %p308 = pneg %p133
      $region46: #{sentence_transformer_forward.15} parent=43 // pred_check_branch
        %310 = sbr.rel (%p308) target = $region48
      $region47: #{sentence_transformer_forward.15} parent=43 // pred_region
        %p311 = scmp.lt.s32.totalorder %s16, 1
        %s312 = scalar_select %p311, %s16, 1
        %s313 = smul.addr %s312, 8
        %s314 = scalar_lea.vmem %s4, %s313
      $region48: #{sentence_transformer_forward.15} parent=43 // pred_fallthru
        _
    $region44: #{sentence_transformer_forward.15} parent=5 // pred_fallthru
      _
  $region6: #{sentence_transformer_forward.15} parent=0 // loop_footer
    %s14 = sadd.s32 1, %s10
  $region7: #{sentence_transformer_forward.15} parent=0 // loop_footer_branch
    %9 = sbr.rel target = $region3
  $region8: #{sentence_transformer_forward.15} parent=0 // loop_exit
    _

// kernel: sentence_transformer_forward.14
$region0: #{sentence_transformer_forward.14}
  #allocation0 [shape = 'u32[]', space=smem, size = 0x4, offset = 0x4, fixed_abs, tag = 'smem constant byte address 0x4 - core index']
  #allocation1 [shape = 'u32[72,128]{1,0:T(1,128)}', space=vmem, size = 0x9000, scoped, tag = 'internal scratch']
  %s0 = inlined_call_operand.vmem [shape: f32[2,8,32], index: 0, kind: input, shape index: {}]
  %s1 = inlined_call_operand.vmem [shape: f32[2,8,32], index: 1, kind: input, shape index: {}]
  %s2 = inlined_call_operand.vmem [shape: f32[1,8,8], index: 2, kind: input, shape index: {}]
  %s3 = inlined_call_operand.vmem [shape: f32[2,1,8], index: 3, kind: input, shape index: {}]
  %s4 = inlined_call_operand.vmem [shape: f32[32,96], index: 4, kind: input, shape index: {}]
  %s5 = inlined_call_operand.vmem [shape: f32[1,96], index: 5, kind: input, shape index: {}]
  %s6 = inlined_call_operand.vmem [shape: f32[32,32], index: 6, kind: input, shape index: {}]
  %s7 = inlined_call_operand.vmem [shape: f32[1,32], index: 7, kind: input, shape index: {}]
  %s8 = inlined_call_operand.vmem [shape: f32[1,32], index: 8, kind: input, shape index: {}]
  %s9 = inlined_call_operand.vmem [shape: f32[1,32], index: 9, kind: input, shape index: {}]
  %s10 = inlined_call_operand.vmem [shape: f32[32,32], index: 10, kind: input, shape index: {}]
  %s11 = inlined_call_operand.vmem [shape: f32[1,32], index: 11, kind: input, shape index: {}]
  %s12 = inlined_call_operand.vmem [shape: f32[32,64], index: 12, kind: input, shape index: {}]
  %s13 = inlined_call_operand.vmem [shape: f32[1,64], index: 13, kind: input, shape index: {}]
  %s14 = inlined_call_operand.vmem [shape: f32[32,32], index: 14, kind: input, shape index: {}]
  %s15 = inlined_call_operand.vmem [shape: f32[1,32], index: 15, kind: input, shape index: {}]
  %s16 = inlined_call_operand.vmem [shape: f32[1,32], index: 16, kind: input, shape index: {}]
  %s17 = inlined_call_operand.vmem [shape: f32[1,32], index: 17, kind: input, shape index: {}]
  %s18 = inlined_call_operand.vmem [shape: f32[32,64], index: 18, kind: input, shape index: {}]
  %s19 = inlined_call_operand.vmem [shape: f32[1,64], index: 19, kind: input, shape index: {}]
  %s20 = inlined_call_operand.vmem [shape: f32[64,32], index: 20, kind: input, shape index: {}]
  %s21 = inlined_call_operand.vmem [shape: f32[1,32], index: 21, kind: input, shape index: {}]
  %s22 = inlined_call_operand.vmem [shape: f32[1,32], index: 22, kind: input, shape index: {}]
  %s23 = inlined_call_operand.hbm [shape: f32[1,32], index: 23, kind: input, shape index: {}]
  %s24 = inlined_call_operand.vmem [shape: f32[2,8,32], index: 24, kind: output, shape index: {}]
  %s25 = sld [smem:[#allocation0]]
  $region133: #{sentence_transformer_forward.14} parent=0
    _
  %s27 = ssub.s32 1, %s25
  %s28 = scalar_select 0, %s27, %s25
  $region1: #{sentence_transformer_forward.14} parent=0
    #allocation2 [shape = 'u8[512]{0}', space=vmem, size = 0x400, scoped, tag = 'input window, operand 23, single buffered']
    #allocation3 [shape = 's32[2]{0}', space=sflag, size = 0x8, scoped, tag = 'scoped memory for sentence_transformer_forward.14']
    %29 = vsyncpa [#allocation3], 0
    loop: start=0, step=1, limit=4
    $region2: #{sentence_transformer_forward.14} parent=1 // loop_pre_header
      _
    $region3: #{sentence_transformer_forward.14} parent=1 // loop_header
      %s31 = sphi 0, %s35
      %p32 = scmp.ge.s32.totalorder %s31, 4
      %s41 = sphi 0, %s43
      %s44 = sphi 0, %s41
      %s45 = sphi 0, %s44
      %s61 = sphi 0, %s45
      %s67 = sphi 0, %s69
      %s70 = sphi 0, %s67
      %s71 = sphi 0, %s70
      %s87 = sphi 0, %s71
      %s91 = sphi 0, %s91
      %s93 = sphi 0, %s91
      %s94 = sphi 0, %s93
      %s108 = sphi 0, %s94
      %s114 = sphi 0, %s116
      %s117 = sphi 0, %s114
      %s118 = sphi 0, %s117
      %s134 = sphi 0, %s118
      %s138 = sphi 0, %s138
      %s140 = sphi 0, %s138
      %s141 = sphi 0, %s140
      %s155 = sphi 0, %s141
      %s159 = sphi 0, %s159
      %s161 = sphi 0, %s159
      %s162 = sphi 0, %s161
      %s176 = sphi 0, %s162
      %s180 = sphi 0, %s180
      %s182 = sphi 0, %s180
      %s183 = sphi 0, %s182
      %s197 = sphi 0, %s183
      %s201 = sphi 0, %s201
      %s203 = sphi 0, %s201
      %s204 = sphi 0, %s203
      %s218 = sphi 0, %s204
      %s222 = sphi 0, %s222
      %s224 = sphi 0, %s222
      %s225 = sphi 0, %s224
      %s239 = sphi 0, %s225
      %s243 = sphi 0, %s243
      %s245 = sphi 0, %s243
      %s246 = sphi 0, %s245
      %s260 = sphi 0, %s246
      %s264 = sphi 0, %s264
      %s266 = sphi 0, %s264
      %s267 = sphi 0, %s266
      %s281 = sphi 0, %s267
      %s285 = sphi 0, %s285
      %s287 = sphi 0, %s285
      %s288 = sphi 0, %s287
      %s302 = sphi 0, %s288
      %s306 = sphi 0, %s306
      %s308 = sphi 0, %s306
      %s309 = sphi 0, %s308
      %s323 = sphi 0, %s309
      %s327 = sphi 0, %s327
      %s329 = sphi 0, %s327
      %s330 = sphi 0, %s329
      %s344 = sphi 0, %s330
      %s348 = sphi 0, %s348
      %s350 = sphi 0, %s348
      %s351 = sphi 0, %s350
      %s365 = sphi 0, %s351
      %s369 = sphi 0, %s369
      %s371 = sphi 0, %s369
      %s372 = sphi 0, %s371
      %s386 = sphi 0, %s372
      %s390 = sphi 0, %s390
      %s392 = sphi 0, %s390
      %s393 = sphi 0, %s392
      %s407 = sphi 0, %s393
      %s411 = sphi 0, %s411
      %s413 = sphi 0, %s411
      %s414 = sphi 0, %s413
      %s428 = sphi 0, %s414
      %s432 = sphi 0, %s432
      %s434 = sphi 0, %s432
      %s435 = sphi 0, %s434
      %s449 = sphi 0, %s435
      %s453 = sphi 0, %s453
      %s455 = sphi 0, %s453
      %s456 = sphi 0, %s455
      %s470 = sphi 0, %s456
      %s474 = sphi 0, %s474
      %s476 = sphi 0, %s474
      %s477 = sphi 0, %s476
      %s491 = sphi 0, %s477
      %s495 = sphi 0, %s495
      %s497 = sphi 0, %s495
      %s498 = sphi 0, %s497
      %s512 = sphi 0, %s498
      %s516 = sphi 0, %s516
      %s518 = sphi 0, %s516
      %s519 = sphi 0, %s518
      %s533 = sphi 0, %s519
      %s537 = sphi 0, %s537
      %s539 = sphi 0, %s537
      %s540 = sphi 0, %s539
      %s554 = sphi 0, %s540
      %s560 = sphi 0, %s562
      %s563 = sphi 0, %s560
      %s564 = sphi 0, %s563
      %s580 = sphi 0, %s564
    $region4: #{sentence_transformer_forward.14} parent=1 // loop_header_branch
      %34 = sbr.rel (%p32) target = $region8
    $region5: #{sentence_transformer_forward.14} parent=1 // loop_body
      %s36 = ssub.s32 %s31, 1
      %s37 = ssub.s32 %s31, 2
      %s38 = sadd.s32 %s31, 1
      %s39 = ssub.s32 %s31, %s38
      %p40 = scmp.eq.s32.totalorder %s39, 0
      %s42 = sadd.s32 %s41, 1
      %s43 = scalar_select %p40, %s41, %s42
      %p46 = pneg %p40
      %p47 = scmp.eq.s32.totalorder %s31, 1
      %p48 = por %p46, %p47
      %p49 = scmp.ne.s32.totalorder %s41, %s44
      %p50 = scmp.eq.s32.totalorder %s31, 0
      %p51 = por %p49, %p50
      %p52 = scmp.ne.s32.totalorder %s41, %s44
      %p53 = scmp.eq.s32.totalorder %s36, 1
      %p54 = por %p52, %p53
      %p55 = scmp.ne.s32.totalorder %s44, %s45
      %p56 = scmp.eq.s32.totalorder %s36, 0
      %p57 = por %p55, %p56
      %p58 = scmp.ne.s32.totalorder %s44, %s45
      %p59 = scmp.eq.s32.totalorder %s37, 1
      %p60 = por %p58, %p59
      %p62 = scmp.ne.s32.totalorder %s45, %s61
      %p63 = scmp.eq.s32.totalorder %s37, 0
      %p64 = por %p62, %p63
      %s65 = ssub.s32 %s31, %s38
      %p66 = scmp.eq.s32.totalorder %s65, 0
      %s68 = sadd.s32 %s67, 1
      %s69 = scalar_select %p66, %s67, %s68
      %p72 = pneg %p66
      %p73 = scmp.eq.s32.totalorder %s31, 1
      %p74 = por %p72, %p73
      %p75 = scmp.ne.s32.totalorder %s67, %s70
      %p76 = scmp.eq.s32.totalorder %s31, 0
      %p77 = por %p75, %p76
      %p78 = scmp.ne.s32.totalorder %s67, %s70
      %p79 = scmp.eq.s32.totalorder %s36, 1
      %p80 = por %p78, %p79
      %p81 = scmp.ne.s32.totalorder %s70, %s71
      %p82 = scmp.eq.s32.totalorder %s36, 0
      %p83 = por %p81, %p82
      %p84 = scmp.ne.s32.totalorder %s70, %s71
      %p85 = scmp.eq.s32.totalorder %s37, 1
      %p86 = por %p84, %p85
      %p88 = scmp.ne.s32.totalorder %s71, %s87
      %p89 = scmp.eq.s32.totalorder %s37, 0
      %p90 = por %p88, %p89
      %s92 = sadd.s32 %s91, 1
      %p95 = scmp.eq.s32.totalorder %s31, 1
      %p96 = scmp.ne.s32.totalorder %s91, %s93
      %p97 = scmp.eq.s32.totalorder %s31, 0
      %p98 = por %p96, %p97
      %p99 = scmp.ne.s32.totalorder %s91, %s93
      %p100 = scmp.eq.s32.totalorder %s36, 1
      %p101 = por %p99, %p100
      %p102 = scmp.ne.s32.totalorder %s93, %s94
      %p103 = scmp.eq.s32.totalorder %s36, 0
      %p104 = por %p102, %p103
      %p105 = scmp.ne.s32.totalorder %s93, %s94
      %p106 = scmp.eq.s32.totalorder %s37, 1
      %p107 = por %p105, %p106
      %p109 = scmp.ne.s32.totalorder %s94, %s108
      %p110 = scmp.eq.s32.totalorder %s37, 0
      %p111 = por %p109, %p110
      %s112 = ssub.s32 %s31, %s38
      %p113 = scmp.eq.s32.totalorder %s112, 0
      %s115 = sadd.s32 %s114, 1
      %s116 = scalar_select %p113, %s114, %s115
      %p119 = pneg %p113
      %p120 = scmp.eq.s32.totalorder %s31, 1
      %p121 = por %p119, %p120
      %p122 = scmp.ne.s32.totalorder %s114, %s117
      %p123 = scmp.eq.s32.totalorder %s31, 0
      %p124 = por %p122, %p123
      %p125 = scmp.ne.s32.totalorder %s114, %s117
      %p126 = scmp.eq.s32.totalorder %s36, 1
      %p127 = por %p125, %p126
      %p128 = scmp.ne.s32.totalorder %s117, %s118
      %p129 = scmp.eq.s32.totalorder %s36, 0
      %p130 = por %p128, %p129
      %p131 = scmp.ne.s32.totalorder %s117, %s118
      %p132 = scmp.eq.s32.totalorder %s37, 1
      %p133 = por %p131, %p132
      %p135 = scmp.ne.s32.totalorder %s118, %s134
      %p136 = scmp.eq.s32.totalorder %s37, 0
      %p137 = por %p135, %p136
      %s139 = sadd.s32 %s138, 1
      %p142 = scmp.eq.s32.totalorder %s31, 1
      %p143 = scmp.ne.s32.totalorder %s138, %s140
      %p144 = scmp.eq.s32.totalorder %s31, 0
      %p145 = por %p143, %p144
      %p146 = scmp.ne.s32.totalorder %s138, %s140
      %p147 = scmp.eq.s32.totalorder %s36, 1
      %p148 = por %p146, %p147
      %p149 = scmp.ne.s32.totalorder %s140, %s141
      %p150 = scmp.eq.s32.totalorder %s36, 0
      %p151 = por %p149, %p150
      %p152 = scmp.ne.s32.totalorder %s140, %s141
      %p153 = scmp.eq.s32.totalorder %s37, 1
      %p154 = por %p152, %p153
      %p156 = scmp.ne.s32.totalorder %s141, %s155
      %p157 = scmp.eq.s32.totalorder %s37, 0
      %p158 = por %p156, %p157
      %s160 = sadd.s32 %s159, 1
      %p163 = scmp.eq.s32.totalorder %s31, 1
      %p164 = scmp.ne.s32.totalorder %s159, %s161
      %p165 = scmp.eq.s32.totalorder %s31, 0
      %p166 = por %p164, %p165
      %p167 = scmp.ne.s32.totalorder %s159, %s161
      %p168 = scmp.eq.s32.totalorder %s36, 1
      %p169 = por %p167, %p168
      %p170 = scmp.ne.s32.totalorder %s161, %s162
      %p171 = scmp.eq.s32.totalorder %s36, 0
      %p172 = por %p170, %p171
      %p173 = scmp.ne.s32.totalorder %s161, %s162
      %p174 = scmp.eq.s32.totalorder %s37, 1
      %p175 = por %p173, %p174
      %p177 = scmp.ne.s32.totalorder %s162, %s176
      %p178 = scmp.eq.s32.totalorder %s37, 0
      %p179 = por %p177, %p178
      %s181 = sadd.s32 %s180, 1
      %p184 = scmp.eq.s32.totalorder %s31, 1
      %p185 = scmp.ne.s32.totalorder %s180, %s182
      %p186 = scmp.eq.s32.totalorder %s31, 0
      %p187 = por %p185, %p186
      %p188 = scmp.ne.s32.totalorder %s180, %s182
      %p189 = scmp.eq.s32.totalorder %s36, 1
      %p190 = por %p188, %p189
      %p191 = scmp.ne.s32.totalorder %s182, %s183
      %p192 = scmp.eq.s32.totalorder %s36, 0
      %p193 = por %p191, %p192
      %p194 = scmp.ne.s32.totalorder %s182, %s183
      %p195 = scmp.eq.s32.totalorder %s37, 1
      %p196 = por %p194, %p195
      %p198 = scmp.ne.s32.totalorder %s183, %s197
      %p199 = scmp.eq.s32.totalorder %s37, 0
      %p200 = por %p198, %p199
      %s202 = sadd.s32 %s201, 1
      %p205 = scmp.eq.s32.totalorder %s31, 1
      %p206 = scmp.ne.s32.totalorder %s201, %s203
      %p207 = scmp.eq.s32.totalorder %s31, 0
      %p208 = por %p206, %p207
      %p209 = scmp.ne.s32.totalorder %s201, %s203
      %p210 = scmp.eq.s32.totalorder %s36, 1
      %p211 = por %p209, %p210
      %p212 = scmp.ne.s32.totalorder %s203, %s204
      %p213 = scmp.eq.s32.totalorder %s36, 0
      %p214 = por %p212, %p213
      %p215 = scmp.ne.s32.totalorder %s203, %s204
      %p216 = scmp.eq.s32.totalorder %s37, 1
      %p217 = por %p215, %p216
      %p219 = scmp.ne.s32.totalorder %s204, %s218
      %p220 = scmp.eq.s32.totalorder %s37, 0
      %p221 = por %p219, %p220
      %s223 = sadd.s32 %s222, 1
      %p226 = scmp.eq.s32.totalorder %s31, 1
      %p227 = scmp.ne.s32.totalorder %s222, %s224
      %p228 = scmp.eq.s32.totalorder %s31, 0
      %p229 = por %p227, %p228
      %p230 = scmp.ne.s32.totalorder %s222, %s224
      %p231 = scmp.eq.s32.totalorder %s36, 1
      %p232 = por %p230, %p231
      %p233 = scmp.ne.s32.totalorder %s224, %s225
      %p234 = scmp.eq.s32.totalorder %s36, 0
      %p235 = por %p233, %p234
      %p236 = scmp.ne.s32.totalorder %s224, %s225
      %p237 = scmp.eq.s32.totalorder %s37, 1
      %p238 = por %p236, %p237
      %p240 = scmp.ne.s32.totalorder %s225, %s239
      %p241 = scmp.eq.s32.totalorder %s37, 0
      %p242 = por %p240, %p241
      %s244 = sadd.s32 %s243, 1
      %p247 = scmp.eq.s32.totalorder %s31, 1
      %p248 = scmp.ne.s32.totalorder %s243, %s245
      %p249 = scmp.eq.s32.totalorder %s31, 0
      %p250 = por %p248, %p249
      %p251 = scmp.ne.s32.totalorder %s243, %s245
      %p252 = scmp.eq.s32.totalorder %s36, 1
      %p253 = por %p251, %p252
      %p254 = scmp.ne.s32.totalorder %s245, %s246
      %p255 = scmp.eq.s32.totalorder %s36, 0
      %p256 = por %p254, %p255
      %p257 = scmp.ne.s32.totalorder %s245, %s246
      %p258 = scmp.eq.s32.totalorder %s37, 1
      %p259 = por %p257, %p258
      %p261 = scmp.ne.s32.totalorder %s246, %s260
      %p262 = scmp.eq.s32.totalorder %s37, 0
      %p263 = por %p261, %p262
      %s265 = sadd.s32 %s264, 1
      %p268 = scmp.eq.s32.totalorder %s31, 1
      %p269 = scmp.ne.s32.totalorder %s264, %s266
      %p270 = scmp.eq.s32.totalorder %s31, 0
      %p271 = por %p269, %p270
      %p272 = scmp.ne.s32.totalorder %s264, %s266
      %p273 = scmp.eq.s32.totalorder %s36, 1
      %p274 = por %p272, %p273
      %p275 = scmp.ne.s32.totalorder %s266, %s267
      %p276 = scmp.eq.s32.totalorder %s36, 0
      %p277 = por %p275, %p276
      %p278 = scmp.ne.s32.totalorder %s266, %s267
      %p279 = scmp.eq.s32.totalorder %s37, 1
      %p280 = por %p278, %p279
      %p282 = scmp.ne.s32.totalorder %s267, %s281
      %p283 = scmp.eq.s32.totalorder %s37, 0
      %p284 = por %p282, %p283
      %s286 = sadd.s32 %s285, 1
      %p289 = scmp.eq.s32.totalorder %s31, 1
      %p290 = scmp.ne.s32.totalorder %s285, %s287
      %p291 = scmp.eq.s32.totalorder %s31, 0
      %p292 = por %p290, %p291
      %p293 = scmp.ne.s32.totalorder %s285, %s287
      %p294 = scmp.eq.s32.totalorder %s36, 1
      %p295 = por %p293, %p294
      %p296 = scmp.ne.s32.totalorder %s287, %s288
      %p297 = scmp.eq.s32.totalorder %s36, 0
      %p298 = por %p296, %p297
      %p299 = scmp.ne.s32.totalorder %s287, %s288
      %p300 = scmp.eq.s32.totalorder %s37, 1
      %p301 = por %p299, %p300
      %p303 = scmp.ne.s32.totalorder %s288, %s302
      %p304 = scmp.eq.s32.totalorder %s37, 0
      %p305 = por %p303, %p304
      %s307 = sadd.s32 %s306, 1
      %p310 = scmp.eq.s32.totalorder %s31, 1
      %p311 = scmp.ne.s32.totalorder %s306, %s308
      %p312 = scmp.eq.s32.totalorder %s31, 0
      %p313 = por %p311, %p312
      %p314 = scmp.ne.s32.totalorder %s306, %s308
      %p315 = scmp.eq.s32.totalorder %s36, 1
      %p316 = por %p314, %p315
      %p317 = scmp.ne.s32.totalorder %s308, %s309
      %p318 = scmp.eq.s32.totalorder %s36, 0
      %p319 = por %p317, %p318
      %p320 = scmp.ne.s32.totalorder %s308, %s309
      %p321 = scmp.eq.s32.totalorder %s37, 1
      %p322 = por %p320, %p321
      %p324 = scmp.ne.s32.totalorder %s309, %s323
      %p325 = scmp.eq.s32.totalorder %s37, 0
      %p326 = por %p324, %p325
      %s328 = sadd.s32 %s327, 1
      %p331 = scmp.eq.s32.totalorder %s31, 1
      %p332 = scmp.ne.s32.totalorder %s327, %s329
      %p333 = scmp.eq.s32.totalorder %s31, 0
      %p334 = por %p332, %p333
      %p335 = scmp.ne.s32.totalorder %s327, %s329
      %p336 = scmp.eq.s32.totalorder %s36, 1
      %p337 = por %p335, %p336
      %p338 = scmp.ne.s32.totalorder %s329, %s330
      %p339 = scmp.eq.s32.totalorder %s36, 0
      %p340 = por %p338, %p339
      %p341 = scmp.ne.s32.totalorder %s329, %s330
      %p342 = scmp.eq.s32.totalorder %s37, 1
      %p343 = por %p341, %p342
      %p345 = scmp.ne.s32.totalorder %s330, %s344
      %p346 = scmp.eq.s32.totalorder %s37, 0
      %p347 = por %p345, %p346
      %s349 = sadd.s32 %s348, 1
      %p352 = scmp.eq.s32.totalorder %s31, 1
      %p353 = scmp.ne.s32.totalorder %s348, %s350
      %p354 = scmp.eq.s32.totalorder %s31, 0
      %p355 = por %p353, %p354
      %p356 = scmp.ne.s32.totalorder %s348, %s350
      %p357 = scmp.eq.s32.totalorder %s36, 1
      %p358 = por %p356, %p357
      %p359 = scmp.ne.s32.totalorder %s350, %s351
      %p360 = scmp.eq.s32.totalorder %s36, 0
      %p361 = por %p359, %p360
      %p362 = scmp.ne.s32.totalorder %s350, %s351
      %p363 = scmp.eq.s32.totalorder %s37, 1
      %p364 = por %p362, %p363
      %p366 = scmp.ne.s32.totalorder %s351, %s365
      %p367 = scmp.eq.s32.totalorder %s37, 0
      %p368 = por %p366, %p367
      %s370 = sadd.s32 %s369, 1
      %p373 = scmp.eq.s32.totalorder %s31, 1
      %p374 = scmp.ne.s32.totalorder %s369, %s371
      %p375 = scmp.eq.s32.totalorder %s31, 0
      %p376 = por %p374, %p375
      %p377 = scmp.ne.s32.totalorder %s369, %s371
      %p378 = scmp.eq.s32.totalorder %s36, 1
      %p379 = por %p377, %p378
      %p380 = scmp.ne.s32.totalorder %s371, %s372
      %p381 = scmp.eq.s32.totalorder %s36, 0
      %p382 = por %p380, %p381
      %p383 = scmp.ne.s32.totalorder %s371, %s372
      %p384 = scmp.eq.s32.totalorder %s37, 1
      %p385 = por %p383, %p384
      %p387 = scmp.ne.s32.totalorder %s372, %s386
      %p388 = scmp.eq.s32.totalorder %s37, 0
      %p389 = por %p387, %p388
      %s391 = sadd.s32 %s390, 1
      %p394 = scmp.eq.s32.totalorder %s31, 1
      %p395 = scmp.ne.s32.totalorder %s390, %s392
      %p396 = scmp.eq.s32.totalorder %s31, 0
      %p397 = por %p395, %p396
      %p398 = scmp.ne.s32.totalorder %s390, %s392
      %p399 = scmp.eq.s32.totalorder %s36, 1
      %p400 = por %p398, %p399
      %p401 = scmp.ne.s32.totalorder %s392, %s393
      %p402 = scmp.eq.s32.totalorder %s36, 0
      %p403 = por %p401, %p402
      %p404 = scmp.ne.s32.totalorder %s392, %s393
      %p405 = scmp.eq.s32.totalorder %s37, 1
      %p406 = por %p404, %p405
      %p408 = scmp.ne.s32.totalorder %s393, %s407
      %p409 = scmp.eq.s32.totalorder %s37, 0
      %p410 = por %p408, %p409
      %s412 = sadd.s32 %s411, 1
      %p415 = scmp.eq.s32.totalorder %s31, 1
      %p416 = scmp.ne.s32.totalorder %s411, %s413
      %p417 = scmp.eq.s32.totalorder %s31, 0
      %p418 = por %p416, %p417
      %p419 = scmp.ne.s32.totalorder %s411, %s413
      %p420 = scmp.eq.s32.totalorder %s36, 1
      %p421 = por %p419, %p420
      %p422 = scmp.ne.s32.totalorder %s413, %s414
      %p423 = scmp.eq.s32.totalorder %s36, 0
      %p424 = por %p422, %p423
      %p425 = scmp.ne.s32.totalorder %s413, %s414
      %p426 = scmp.eq.s32.totalorder %s37, 1
      %p427 = por %p425, %p426
      %p429 = scmp.ne.s32.totalorder %s414, %s428
      %p430 = scmp.eq.s32.totalorder %s37, 0
      %p431 = por %p429, %p430
      %s433 = sadd.s32 %s432, 1
      %p436 = scmp.eq.s32.totalorder %s31, 1
      %p437 = scmp.ne.s32.totalorder %s432, %s434
      %p438 = scmp.eq.s32.totalorder %s31, 0
      %p439 = por %p437, %p438
      %p440 = scmp.ne.s32.totalorder %s432, %s434
      %p441 = scmp.eq.s32.totalorder %s36, 1
      %p442 = por %p440, %p441
      %p443 = scmp.ne.s32.totalorder %s434, %s435
      %p444 = scmp.eq.s32.totalorder %s36, 0
      %p445 = por %p443, %p444
      %p446 = scmp.ne.s32.totalorder %s434, %s435
      %p447 = scmp.eq.s32.totalorder %s37, 1
      %p448 = por %p446, %p447
      %p450 = scmp.ne.s32.totalorder %s435, %s449
      %p451 = scmp.eq.s32.totalorder %s37, 0
      %p452 = por %p450, %p451
      %s454 = sadd.s32 %s453, 1
      %p457 = scmp.eq.s32.totalorder %s31, 1
      %p458 = scmp.ne.s32.totalorder %s453, %s455
      %p459 = scmp.eq.s32.totalorder %s31, 0
      %p460 = por %p458, %p459
      %p461 = scmp.ne.s32.totalorder %s453, %s455
      %p462 = scmp.eq.s32.totalorder %s36, 1
      %p463 = por %p461, %p462
      %p464 = scmp.ne.s32.totalorder %s455, %s456
      %p465 = scmp.eq.s32.totalorder %s36, 0
      %p466 = por %p464, %p465
      %p467 = scmp.ne.s32.totalorder %s455, %s456
      %p468 = scmp.eq.s32.totalorder %s37, 1
      %p469 = por %p467, %p468
      %p471 = scmp.ne.s32.totalorder %s456, %s470
      %p472 = scmp.eq.s32.totalorder %s37, 0
      %p473 = por %p471, %p472
      %s475 = sadd.s32 %s474, 1
      %p478 = scmp.eq.s32.totalorder %s31, 1
      %p479 = scmp.ne.s32.totalorder %s474, %s476
      %p480 = scmp.eq.s32.totalorder %s31, 0
      %p481 = por %p479, %p480
      %p482 = scmp.ne.s32.totalorder %s474, %s476
      %p483 = scmp.eq.s32.totalorder %s36, 1
      %p484 = por %p482, %p483
      %p485 = scmp.ne.s32.totalorder %s476, %s477
      %p486 = scmp.eq.s32.totalorder %s36, 0
      %p487 = por %p485, %p486
      %p488 = scmp.ne.s32.totalorder %s476, %s477
      %p489 = scmp.eq.s32.totalorder %s37, 1
      %p490 = por %p488, %p489
      %p492 = scmp.ne.s32.totalorder %s477, %s491
      %p493 = scmp.eq.s32.totalorder %s37, 0
      %p494 = por %p492, %p493
      %s496 = sadd.s32 %s495, 1
      %p499 = scmp.eq.s32.totalorder %s31, 1
      %p500 = scmp.ne.s32.totalorder %s495, %s497
      %p501 = scmp.eq.s32.totalorder %s31, 0
      %p502 = por %p500, %p501
      %p503 = scmp.ne.s32.totalorder %s495, %s497
      %p504 = scmp.eq.s32.totalorder %s36, 1
      %p505 = por %p503, %p504
      %p506 = scmp.ne.s32.totalorder %s497, %s498
      %p507 = scmp.eq.s32.totalorder %s36, 0
      %p508 = por %p506, %p507
      %p509 = scmp.ne.s32.totalorder %s497, %s498
      %p510 = scmp.eq.s32.totalorder %s37, 1
      %p511 = por %p509, %p510
      %p513 = scmp.ne.s32.totalorder %s498, %s512
      %p514 = scmp.eq.s32.totalorder %s37, 0
      %p515 = por %p513, %p514
      %s517 = sadd.s32 %s516, 1
      %p520 = scmp.eq.s32.totalorder %s31, 1
      %p521 = scmp.ne.s32.totalorder %s516, %s518
      %p522 = scmp.eq.s32.totalorder %s31, 0
      %p523 = por %p521, %p522
      %p524 = scmp.ne.s32.totalorder %s516, %s518
      %p525 = scmp.eq.s32.totalorder %s36, 1
      %p526 = por %p524, %p525
      %p527 = scmp.ne.s32.totalorder %s518, %s519
      %p528 = scmp.eq.s32.totalorder %s36, 0
      %p529 = por %p527, %p528
      %p530 = scmp.ne.s32.totalorder %s518, %s519
      %p531 = scmp.eq.s32.totalorder %s37, 1
      %p532 = por %p530, %p531
      %p534 = scmp.ne.s32.totalorder %s519, %s533
      %p535 = scmp.eq.s32.totalorder %s37, 0
      %p536 = por %p534, %p535
      %s538 = sadd.s32 %s537, 1
      %p541 = scmp.eq.s32.totalorder %s31, 1
      %p542 = scmp.ne.s32.totalorder %s537, %s539
      %p543 = scmp.eq.s32.totalorder %s31, 0
      %p544 = por %p542, %p543
      %p545 = scmp.ne.s32.totalorder %s537, %s539
      %p546 = scmp.eq.s32.totalorder %s36, 1
      %p547 = por %p545, %p546
      %p548 = scmp.ne.s32.totalorder %s539, %s540
      %p549 = scmp.eq.s32.totalorder %s36, 0
      %p550 = por %p548, %p549
      %p551 = scmp.ne.s32.totalorder %s539, %s540
      %p552 = scmp.eq.s32.totalorder %s37, 1
      %p553 = por %p551, %p552
      %p555 = scmp.ne.s32.totalorder %s540, %s554
      %p556 = scmp.eq.s32.totalorder %s37, 0
      %p557 = por %p555, %p556
      %s558 = ssub.s32 %s31, %s38
      %p559 = scmp.eq.s32.totalorder %s558, 0
      %s561 = sadd.s32 %s560, 1
      %s562 = scalar_select %p559, %s560, %s561
      %p565 = pneg %p559
      %p566 = scmp.eq.s32.totalorder %s31, 1
      %p567 = por %p565, %p566
      %p568 = scmp.ne.s32.totalorder %s560, %s563
      %p569 = scmp.eq.s32.totalorder %s31, 0
      %p570 = por %p568, %p569
      %p571 = scmp.ne.s32.totalorder %s560, %s563
      %p572 = scmp.eq.s32.totalorder %s36, 1
      %p573 = por %p571, %p572
      %p574 = scmp.ne.s32.totalorder %s563, %s564
      %p575 = scmp.eq.s32.totalorder %s36, 0
      %p576 = por %p574, %p575
      %p577 = scmp.ne.s32.totalorder %s563, %s564
      %p578 = scmp.eq.s32.totalorder %s37, 1
      %p579 = por %p577, %p578
      %p581 = scmp.ne.s32.totalorder %s564, %s580
      %p582 = scmp.eq.s32.totalorder %s37, 0
      %p583 = por %p581, %p582
      %p584 = scmp.le.s32.totalorder 1, %s31
      %p585 = scmp.lt.s32.totalorder %s31, 3
      %p586 = pnand %p584, %p585
      %p587 = pneg %p586
      // Predicated region
      $region9: #{sentence_transformer_forward.14} parent=5 // pred_check
        _
      $region10: #{sentence_transformer_forward.14} parent=5 // pred_check_branch
        %589 = sbr.rel (%p586) target = $region12
      $region11: #{sentence_transformer_forward.14} parent=5 // pred_region
        %s590 = ssub.s32 %s31, 1
        // Predicated region
        $region13: #{sentence_transformer_forward.14} parent=11 // pred_check
          %p591 = pneg %p104
        $region14: #{sentence_transformer_forward.14} parent=11 // pred_check_branch
          %593 = sbr.rel (%p591) target = $region16
        $region15: #{sentence_transformer_forward.14} parent=11 // pred_region
          _
        $region16: #{sentence_transformer_forward.14} parent=11 // pred_fallthru
          _
        // Predicated region
        $region17: #{sentence_transformer_forward.14} parent=11 // pred_check
          %p594 = pneg %p151
        $region18: #{sentence_transformer_forward.14} parent=11 // pred_check_branch
          %596 = sbr.rel (%p594) target = $region20
        $region19: #{sentence_transformer_forward.14} parent=11 // pred_region
          _
        $region20: #{sentence_transformer_forward.14} parent=11 // pred_fallthru
          _
        // Predicated region
        $region21: #{sentence_transformer_forward.14} parent=11 // pred_check
          %p597 = pneg %p172
        $region22: #{sentence_transformer_forward.14} parent=11 // pred_check_branch
          %599 = sbr.rel (%p597) target = $region24
        $region23: #{sentence_transformer_forward.14} parent=11 // pred_region
          _
        $region24: #{sentence_transformer_forward.14} parent=11 // pred_fallthru
          _
        // Predicated region
        $region25: #{sentence_transformer_forward.14} parent=11 // pred_check
          %p600 = pneg %p193
        $region26: #{sentence_transformer_forward.14} parent=11 // pred_check_branch
          %602 = sbr.rel (%p600) target = $region28
        $region27: #{sentence_transformer_forward.14} parent=11 // pred_region
          _
        $region28: #{sentence_transformer_forward.14} parent=11 // pred_fallthru
          _
        // Predicated region
        $region29: #{sentence_transformer_forward.14} parent=11 // pred_check
          %p603 = pneg %p214
        $region30: #{sentence_transformer_forward.14} parent=11 // pred_check_branch
          %605 = sbr.rel (%p603) target = $region32
        $region31: #{sentence_transformer_forward.14} parent=11 // pred_region
          _
        $region32: #{sentence_transformer_forward.14} parent=11 // pred_fallthru
          _
        // Predicated region
        $region33: #{sentence_transformer_forward.14} parent=11 // pred_check
          %p606 = pneg %p235
        $region34: #{sentence_transformer_forward.14} parent=11 // pred_check_branch
          %608 = sbr.rel (%p606) target = $region36
        $region35: #{sentence_transformer_forward.14} parent=11 // pred_region
          _
        $region36: #{sentence_transformer_forward.14} parent=11 // pred_fallthru
          _
        // Predicated region
        $region37: #{sentence_transformer_forward.14} parent=11 // pred_check
          %p609 = pneg %p256
        $region38: #{sentence_transformer_forward.14} parent=11 // pred_check_branch
          %611 = sbr.rel (%p609) target = $region40
        $region39: #{sentence_transformer_forward.14} parent=11 // pred_region
          _
        $region40: #{sentence_transformer_forward.14} parent=11 // pred_fallthru
          _
        // Predicated region
        $region41: #{sentence_transformer_forward.14} parent=11 // pred_check
          %p612 = pneg %p277
        $region42: #{sentence_transformer_forward.14} parent=11 // pred_check_branch
          %614 = sbr.rel (%p612) target = $region44
        $region43: #{sentence_transformer_forward.14} parent=11 // pred_region
          _
        $region44: #{sentence_transformer_forward.14} parent=11 // pred_fallthru
          _
        // Predicated region
        $region45: #{sentence_transformer_forward.14} parent=11 // pred_check
          %p615 = pneg %p298
        $region46: #{sentence_transformer_forward.14} parent=11 // pred_check_branch
          %617 = sbr.rel (%p615) target = $region48
        $region47: #{sentence_transformer_forward.14} parent=11 // pred_region
          _
        $region48: #{sentence_transformer_forward.14} parent=11 // pred_fallthru
          _
        // Predicated region
        $region49: #{sentence_transformer_forward.14} parent=11 // pred_check
          %p618 = pneg %p319
        $region50: #{sentence_transformer_forward.14} parent=11 // pred_check_branch
          %620 = sbr.rel (%p618) target = $region52
        $region51: #{sentence_transformer_forward.14} parent=11 // pred_region
          _
        $region52: #{sentence_transformer_forward.14} parent=11 // pred_fallthru
          _
        // Predicated region
        $region53: #{sentence_transformer_forward.14} parent=11 // pred_check
          %p621 = pneg %p340
        $region54: #{sentence_transformer_forward.14} parent=11 // pred_check_branch
          %623 = sbr.rel (%p621) target = $region56
        $region55: #{sentence_transformer_forward.14} parent=11 // pred_region
          _
        $region56: #{sentence_transformer_forward.14} parent=11 // pred_fallthru
          _
        // Predicated region
        $region57: #{sentence_transformer_forward.14} parent=11 // pred_check
          %p624 = pneg %p361
        $region58: #{sentence_transformer_forward.14} parent=11 // pred_check_branch
          %626 = sbr.rel (%p624) target = $region60
        $region59: #{sentence_transformer_forward.14} parent=11 // pred_region
          _
        $region60: #{sentence_transformer_forward.14} parent=11 // pred_fallthru
          _
        // Predicated region
        $region61: #{sentence_transformer_forward.14} parent=11 // pred_check
          %p627 = pneg %p382
        $region62: #{sentence_transformer_forward.14} parent=11 // pred_check_branch
          %629 = sbr.rel (%p627) target = $region64
        $region63: #{sentence_transformer_forward.14} parent=11 // pred_region
          _
        $region64: #{sentence_transformer_forward.14} parent=11 // pred_fallthru
          _
        // Predicated region
        $region65: #{sentence_transformer_forward.14} parent=11 // pred_check
          %p630 = pneg %p403
        $region66: #{sentence_transformer_forward.14} parent=11 // pred_check_branch
          %632 = sbr.rel (%p630) target = $region68
        $region67: #{sentence_transformer_forward.14} parent=11 // pred_region
          _
        $region68: #{sentence_transformer_forward.14} parent=11 // pred_fallthru
          _
        // Predicated region
        $region69: #{sentence_transformer_forward.14} parent=11 // pred_check
          %p633 = pneg %p424
        $region70: #{sentence_transformer_forward.14} parent=11 // pred_check_branch
          %635 = sbr.rel (%p633) target = $region72
        $region71: #{sentence_transformer_forward.14} parent=11 // pred_region
          _
        $region72: #{sentence_transformer_forward.14} parent=11 // pred_fallthru
          _
        // Predicated region
        $region73: #{sentence_transformer_forward.14} parent=11 // pred_check
          %p636 = pneg %p445
        $region74: #{sentence_transformer_forward.14} parent=11 // pred_check_branch
          %638 = sbr.rel (%p636) target = $region76
        $region75: #{sentence_transformer_forward.14} parent=11 // pred_region
          _
        $region76: #{sentence_transformer_forward.14} parent=11 // pred_fallthru
          _
        // Predicated region
        $region77: #{sentence_transformer_forward.14} parent=11 // pred_check
          %p639 = pneg %p466
        $region78: #{sentence_transformer_forward.14} parent=11 // pred_check_branch
          %641 = sbr.rel (%p639) target = $region80
        $region79: #{sentence_transformer_forward.14} parent=11 // pred_region
          _
        $region80: #{sentence_transformer_forward.14} parent=11 // pred_fallthru
          _
        // Predicated region
        $region81: #{sentence_transformer_forward.14} parent=11 // pred_check
          %p642 = pneg %p487
        $region82: #{sentence_transformer_forward.14} parent=11 // pred_check_branch
          %644 = sbr.rel (%p642) target = $region84
        $region83: #{sentence_transformer_forward.14} parent=11 // pred_region
          _
        $region84: #{sentence_transformer_forward.14} parent=11 // pred_fallthru
          _
        // Predicated region
        $region85: #{sentence_transformer_forward.14} parent=11 // pred_check
          %p645 = pneg %p508
        $region86: #{sentence_transformer_forward.14} parent=11 // pred_check_branch
          %647 = sbr.rel (%p645) target = $region88
        $region87: #{sentence_transformer_forward.14} parent=11 // pred_region
          _
        $region88: #{sentence_transformer_forward.14} parent=11 // pred_fallthru
          _
        // Predicated region
        $region89: #{sentence_transformer_forward.14} parent=11 // pred_check
          %p648 = pneg %p529
        $region90: #{sentence_transformer_forward.14} parent=11 // pred_check_branch
          %650 = sbr.rel (%p648) target = $region92
        $region91: #{sentence_transformer_forward.14} parent=11 // pred_region
          _
        $region92: #{sentence_transformer_forward.14} parent=11 // pred_fallthru
          _
        // Predicated region
        $region93: #{sentence_transformer_forward.14} parent=11 // pred_check
          %p651 = pneg %p550
        $region94: #{sentence_transformer_forward.14} parent=11 // pred_check_branch
          %653 = sbr.rel (%p651) target = $region96
        $region95: #{sentence_transformer_forward.14} parent=11 // pred_region
          %655 = vsyncadd [#allocation3], 0
          %s657 = sshll.u32 %s23, 4
          %s658 = int_to_ptr.hbm [resolvable:$true] %s657
          %s659 = sshll.u32 [#allocation2], 4
          %s660 = int_to_ptr.vmem [resolvable:$true] %s659
          %662 = dma.hbm_to_vmem [thread:$0]  %s658, 16, %s660, [#allocation3]
        $region96: #{sentence_transformer_forward.14} parent=11 // pred_fallthru
          _
      $region12: #{sentence_transformer_forward.14} parent=5 // pred_fallthru
        _
      %p663 = scmp.lt.s32.totalorder %s31, 2
      // Predicated region
      $region97: #{sentence_transformer_forward.14} parent=5 // pred_check
        %p664 = pneg %p663
      $region98: #{sentence_transformer_forward.14} parent=5 // pred_check_branch
        %666 = sbr.rel (%p664) target = $region100
      $region99: #{sentence_transformer_forward.14} parent=5 // pred_region
        // Predicated region
        $region101: #{sentence_transformer_forward.14} parent=99 // pred_check
          %p667 = pneg %p51
        $region102: #{sentence_transformer_forward.14} parent=99 // pred_check_branch
          %669 = sbr.rel (%p667) target = $region104
        $region103: #{sentence_transformer_forward.14} parent=99 // pred_region
          %p670 = scmp.lt.s32.totalorder %s31, 1
          %s671 = scalar_select %p670, %s31, 1
          %s672 = smul.addr %s671, 8
          %s673 = scalar_lea.vmem %s0, %s672
        $region104: #{sentence_transformer_forward.14} parent=99 // pred_fallthru
          _
        // Predicated region
        $region105: #{sentence_transformer_forward.14} parent=99 // pred_check
          %p674 = pneg %p77
        $region106: #{sentence_transformer_forward.14} parent=99 // pred_check_branch
          %676 = sbr.rel (%p674) target = $region108
        $region107: #{sentence_transformer_forward.14} parent=99 // pred_region
          %p677 = scmp.lt.s32.totalorder %s31, 1
          %s678 = scalar_select %p677, %s31, 1
          %s679 = smul.addr %s678, 8
          %s680 = scalar_lea.vmem %s1, %s679
        $region108: #{sentence_transformer_forward.14} parent=99 // pred_fallthru
          _
        // Predicated region
        $region109: #{sentence_transformer_forward.14} parent=99 // pred_check
          %p681 = pneg %p124
        $region110: #{sentence_transformer_forward.14} parent=99 // pred_check_branch
          %683 = sbr.rel (%p681) target = $region112
        $region111: #{sentence_transformer_forward.14} parent=99 // pred_region
          %p684 = scmp.lt.s32.totalorder %s31, 1
          %s685 = scalar_select %p684, %s31, 1
          %s686 = scalar_lea.vmem %s3, %s685
        $region112: #{sentence_transformer_forward.14} parent=99 // pred_fallthru
          _
      $region100: #{sentence_transformer_forward.14} parent=5 // pred_fallthru
        _
      %p687 = scmp.le.s32.totalorder 1, %s31
      %p688 = scmp.lt.s32.totalorder %s31, 3
      %p689 = pnand %p687, %p688
      %p690 = pneg %p689
      // Predicated region
      $region113: #{sentence_transformer_forward.14} parent=5 // pred_check
        _
      $region114: #{sentence_transformer_forward.14} parent=5 // pred_check_branch
        %692 = sbr.rel (%p689) target = $region116
      $region115: #{sentence_transformer_forward.14} parent=5 // pred_region
        %s693 = ssub.s32 %s31, 1
        // Predicated region
        $region117: #{sentence_transformer_forward.14} parent=115 // pred_check
          %p694 = pneg %p550
        $region118: #{sentence_transformer_forward.14} parent=115 // pred_check_branch
          %696 = sbr.rel (%p694) target = $region120
        $region119: #{sentence_transformer_forward.14} parent=115 // pred_region
          %698 = dma.done [#allocation3], 16
        $region120: #{sentence_transformer_forward.14} parent=115 // pred_fallthru
          _
        %p699 = scmp.lt.s32.totalorder %s36, 1
        %s700 = scalar_select %p699, %s36, 1
        %s701 = smul.addr %s700, 8
        %s702 = scalar_lea.vmem %s0, %s701
        %p703 = pneg %p57
        %p704 = pneg %p54
        %p705 = scmp.lt.s32.totalorder %s36, 1
        %s706 = scalar_select %p705, %s36, 1
        %s707 = smul.addr %s706, 8
        %s708 = scalar_lea.vmem %s1, %s707
        %p709 = pneg %p83
        %p710 = pneg %p80
        %p711 = pneg %p104
        %p712 = pneg %p101
        %p713 = scmp.lt.s32.totalorder %s36, 1
        %s714 = scalar_select %p713, %s36, 1
        %s715 = scalar_lea.vmem %s3, %s714
        %p716 = pneg %p130
        %p717 = pneg %p127
        %p718 = pneg %p151
        %p719 = pneg %p148
        %p720 = pneg %p172
        %p721 = pneg %p169
        %p722 = pneg %p193
        %p723 = pneg %p190
        %p724 = pneg %p214
        %p725 = pneg %p211
        %p726 = pneg %p235
        %p727 = pneg %p232
        %p728 = pneg %p256
        %p729 = pneg %p253
        %p730 = pneg %p277
        %p731 = pneg %p274
        %p732 = pneg %p298
        %p733 = pneg %p295
        %p734 = pneg %p319
        %p735 = pneg %p316
        %p736 = pneg %p340
        %p737 = pneg %p337
        %p738 = pneg %p361
        %p739 = pneg %p358
        %p740 = pneg %p382
        %p741 = pneg %p379
        %p742 = pneg %p403
        %p743 = pneg %p400
        %p744 = pneg %p424
        %p745 = pneg %p421
        %p746 = pneg %p445
        %p747 = pneg %p442
        %p748 = pneg %p466
        %p749 = pneg %p463
        %p750 = pneg %p487
        %p751 = pneg %p484
        %p752 = pneg %p508
        %p753 = pneg %p505
        %p754 = pneg %p529
        %p755 = pneg %p526
        %p756 = pneg %p550
        %p757 = pneg %p547
        %p758 = pneg %p576
        %p759 = pneg %p573
        %p760 = scmp.lt.s32.totalorder %s36, 1
        %s761 = scalar_select %p760, %s36, 1
        %s762 = smul.addr %s761, 8
        %s763 = scalar_lea.vmem %s24, %s762
        %p764 = scmp.lt.s32.totalorder %s36, 1
        %s765 = scalar_select %p764, %s36, 1
        %s766 = smul.addr %s765, 8
        %s767 = scalar_lea.vmem %s0, %s766
        %p768 = scmp.lt.s32.totalorder %s36, 1
        %s769 = scalar_select %p768, %s36, 1
        %s770 = smul.addr %s769, 8
        %s771 = scalar_lea.vmem %s1, %s770
        %p772 = scmp.lt.s32.totalorder %s36, 1
        %s773 = scalar_select %p772, %s36, 1
        %s774 = scalar_lea.vmem %s3, %s773
        %p775 = scmp.lt.s32.totalorder %s36, 1
        %s776 = scalar_select %p775, %s36, 1
        %s777 = smul.addr %s776, 8
        %s778 = scalar_lea.vmem %s24, %s777
        %v779 = vld [vmem:[%s767] sm:$0xff]
        %v780 = vld [vmem:[%s771] sm:$0xff]
        %v781 = vld [vmem:[%s4] sm:$0xff]
        %v782 = vld [vmem:[%s4 + $0x8] sm:$0xff]
        %v783 = vld [vmem:[%s4 + $0x10] sm:$0xff]
        %v784 = vld [vmem:[%s4 + $0x18] sm:$0xff]
        %v785 = vld [vmem:[%s5] sm:$0x1]
        %v787 = vperm.slane %v785, 0
        %vm789 = vcmask 261120
        %v791 = vsel %vm789, %v779, 0
        %793 = vmatpush.msra.mxu0 0.0
        %794 = vmatpush.msra.mxu0 0.0
        %795 = vmatpush.msra.mxu0 0.0
        %796 = vmatpush.msra.mxu0 0.0
        %797 = vmatpush.msra.mxu0 0.0
        %798 = vmatpush.msra.mxu0 0.0
        %799 = vmatpush.msra.mxu0 0.0
        %800 = vmatpush.msra.mxu0 0.0
        %801 = vmatpush.msra.mxu0 0.0
        %802 = vmatpush.msra.mxu0 0.0
        %803 = vmatpush.msra.mxu0 0.0
        %804 = vmatpush.msra.mxu0 0.0
        %805 = vmatpush.msra.mxu0 %v784
        %806 = vmatpush.msra.mxu0 %v783
        %807 = vmatpush.msra.mxu0 %v782
        %808 = vmatpush.msra.mxu0 %v781
        %809 = vmatmul.f32.gmra.mxu0 %v791
        %v810 = vpop.f32.mrf.mxu0
        %v811 = vadd.f32 %v787, %v810
        %812 = vdwg.mxu0
        %v813 = vld [vmem:[%s2] sm:$0xff]
        %v814 = vld [vmem:[%s6] sm:$0xff]
        %v815 = vld [vmem:[%s6 + $0x8] sm:$0xff]
        %v816 = vld [vmem:[%s6 + $0x10] sm:$0xff]
        %v817 = vld [vmem:[%s6 + $0x18] sm:$0xff]
        %v818 = vld [vmem:[%s7] sm:$0x1]
        %820 = vrot.lane.b32.xlu0 %v811, 96
        %v821 = vpop.permute.xlu0 %820
        %vm822 = vcmask 64512
        %v823 = vsel %vm822, %v811, 0
        %v825 = vsel %vm822, %v821, 0
        %827 = vmatpush.xpose.msra.mxu0 0.0
        %828 = vmatpush.xpose.msra.mxu0 0.0
        %829 = vmatpush.xpose.msra.mxu0 0.0
        %830 = vmatpush.xpose.msra.mxu0 0.0
        %831 = vmatpush.xpose.msra.mxu0 0.0
        %832 = vmatpush.xpose.msra.mxu0 0.0
        %833 = vmatpush.xpose.msra.mxu0 0.0
        %834 = vmatpush.xpose.msra.mxu0 0.0
        %835 = vmatpush.xpose.msra.mxu0 0.0
        %836 = vmatpush.xpose.msra.mxu0 0.0
        %837 = vmatpush.xpose.msra.mxu0 0.0
        %838 = vmatpush.xpose.msra.mxu0 0.0
        %839 = vmatpush.xpose.msra.mxu0 0.0
        %840 = vmatpush.xpose.msra.mxu0 0.0
        %841 = vmatpush.xpose.msra.mxu0 0.0
        %842 = vmatpush.xpose.msra.mxu0 %v825
        %843 = vmatmul.f32.gmra.mxu0 %v823
        %v844 = vpop.f32.mrf.mxu0
        %v845 = vadd.f32 %v813, %v844
        %846 = vdwg.mxu0
        %v847 = vsel %vm822, %v845, -inf
        %848 = vmax.xlane.f32.xlu0 %v847
        %v849 = vpop.xlane.xlu0 %848
        %v850 = vsub.f32 %v845, %v849
        %v851 = vmul.f32 %v850, 1.442695
        %v852 = vpow.pop %v851
        %v853 = vsel %vm822, %v852, 0.0
        %854 = vadd.xlane.f32.xlu0 %v853
        %v855 = vpop.xlane.xlu0 %854
        %v856 = vrcp.pop %v855
        %v857 = vmul.f32 %v852, %v856
        %858 = vrot.lane.b32.xlu0 %v811, 64
        %v859 = vpop.permute.xlu0 %858
        %v862 = vsel %vm822, %v857, 0
        %864 = vmatpush.msra.mxu0 0.0
        %865 = vmatpush.msra.mxu0 0.0
        %866 = vmatpush.msra.mxu0 0.0
        %867 = vmatpush.msra.mxu0 0.0
        %868 = vmatpush.msra.mxu0 0.0
        %869 = vmatpush.msra.mxu0 0.0
        %870 = vmatpush.msra.mxu0 0.0
        %871 = vmatpush.msra.mxu0 0.0
        %872 = vmatpush.msra.mxu0 0.0
        %873 = vmatpush.msra.mxu0 0.0
        %874 = vmatpush.msra.mxu0 0.0
        %875 = vmatpush.msra.mxu0 0.0
        %876 = vmatpush.msra.mxu0 0.0
        %877 = vmatpush.msra.mxu0 0.0
        %878 = vmatpush.msra.mxu0 0.0
        %879 = vmatpush.msra.mxu0 %v859
        %880 = vmatmul.f32.gmra.mxu0 %v862
        %v881 = vpop.f32.mrf.mxu0
        %v882 = vadd.f32 0.0, %v881
        %883 = vdwg.mxu0
        %884 = vrot.lane.b32.xlu0 %v811, 120
        %v885 = vpop.permute.xlu0 %884
        %886 = vrot.lane.b32.xlu0 %v811, 88
        %v887 = vpop.permute.xlu0 %886
        %v888 = vsel %vm822, %v885, 0
        %v890 = vsel %vm822, %v887, 0
        %892 = vmatpush.xpose.msra.mxu0 0.0
        %893 = vmatpush.xpose.msra.mxu0 0.0
        %894 = vmatpush.xpose.msra.mxu0 0.0
        %895 = vmatpush.xpose.msra.mxu0 0.0
        %896 = vmatpush.xpose.msra.mxu0 0.0
        %897 = vmatpush.xpose.msra.mxu0 0.0
        %898 = vmatpush.xpose.msra.mxu0 0.0
        %899 = vmatpush.xpose.msra.mxu0 0.0
        %900 = vmatpush.xpose.msra.mxu0 0.0
        %901 = vmatpush.xpose.msra.mxu0 0.0
        %902 = vmatpush.xpose.msra.mxu0 0.0
        %903 = vmatpush.xpose.msra.mxu0 0.0
        %904 = vmatpush.xpose.msra.mxu0 0.0
        %905 = vmatpush.xpose.msra.mxu0 0.0
        %906 = vmatpush.xpose.msra.mxu0 0.0
        %907 = vmatpush.xpose.msra.mxu0 %v890
        %908 = vmatmul.f32.gmra.mxu0 %v888
        %v909 = vpop.f32.mrf.mxu0
        %v910 = vadd.f32 %v813, %v909
        %911 = vdwg.mxu0
        %v912 = vsel %vm822, %v910, -inf
        %913 = vmax.xlane.f32.xlu0 %v912
        %v914 = vpop.xlane.xlu0 %913
        %v915 = vsub.f32 %v910, %v914
        %v916 = vmul.f32 %v915, 1.442695
        %v917 = vpow.pop %v916
        %v918 = vsel %vm822, %v917, 0.0
        %919 = vadd.xlane.f32.xlu0 %v918
        %v920 = vpop.xlane.xlu0 %919
        %v921 = vrcp.pop %v920
        %v922 = vmul.f32 %v917, %v921
        %923 = vrot.lane.b32.xlu0 %v811, 56
        %v924 = vpop.permute.xlu0 %923
        %v927 = vsel %vm822, %v922, 0
        %929 = vmatpush.msra.mxu0 0.0
        %930 = vmatpush.msra.mxu0 0.0
        %931 = vmatpush.msra.mxu0 0.0
        %932 = vmatpush.msra.mxu0 0.0
        %933 = vmatpush.msra.mxu0 0.0
        %934 = vmatpush.msra.mxu0 0.0
        %935 = vmatpush.msra.mxu0 0.0
        %936 = vmatpush.msra.mxu0 0.0
        %937 = vmatpush.msra.mxu0 0.0
        %938 = vmatpush.msra.mxu0 0.0
        %939 = vmatpush.msra.mxu0 0.0
        %940 = vmatpush.msra.mxu0 0.0
        %941 = vmatpush.msra.mxu0 0.0
        %942 = vmatpush.msra.mxu0 0.0
        %943 = vmatpush.msra.mxu0 0.0
        %944 = vmatpush.msra.mxu0 %v924
        %945 = vmatmul.f32.gmra.mxu0 %v927
        %v946 = vpop.f32.mrf.mxu0
        %v947 = vadd.f32 0.0, %v946
        %948 = vdwg.mxu0
        %v950 = vsel %vm822, %v947, 0
        %952 = vmatpush.msra.mxu0 0.0
        %953 = vmatpush.msra.mxu0 0.0
        %954 = vmatpush.msra.mxu0 0.0
        %955 = vmatpush.msra.mxu0 0.0
        %956 = vmatpush.msra.mxu0 0.0
        %957 = vmatpush.msra.mxu0 0.0
        %958 = vmatpush.msra.mxu0 0.0
        %959 = vmatpush.msra.mxu0 0.0
        %960 = vmatpush.msra.mxu0 0.0
        %961 = vmatpush.msra.mxu0 0.0
        %962 = vmatpush.msra.mxu0 0.0
        %963 = vmatpush.msra.mxu0 0.0
        %964 = vmatpush.msra.mxu0 0.0
        %965 = vmatpush.msra.mxu0 0.0
        %966 = vmatpush.msra.mxu0 0.0
        %967 = vmatpush.msra.mxu0 %v815
        %968 = vmatmul.f32.gmra.mxu0 %v950
        %v969 = vpop.f32.mrf.mxu0
        %v970 = vadd.f32 0.0, %v969
        %971 = vdwg.mxu0
        %v973 = vsel %vm822, %v882, 0
        %975 = vmatpush.msra.mxu0 0.0
        %976 = vmatpush.msra.mxu0 0.0
        %977 = vmatpush.msra.mxu0 0.0
        %978 = vmatpush.msra.mxu0 0.0
        %979 = vmatpush.msra.mxu0 0.0
        %980 = vmatpush.msra.mxu0 0.0
        %981 = vmatpush.msra.mxu0 0.0
        %982 = vmatpush.msra.mxu0 0.0
        %983 = vmatpush.msra.mxu0 0.0
        %984 = vmatpush.msra.mxu0 0.0
        %985 = vmatpush.msra.mxu0 0.0
        %986 = vmatpush.msra.mxu0 0.0
        %987 = vmatpush.msra.mxu0 0.0
        %988 = vmatpush.msra.mxu0 0.0
        %989 = vmatpush.msra.mxu0 0.0
        %990 = vmatpush.msra.mxu0 %v814
        %991 = vmatmul.f32.gmra.mxu0 %v973
        %v992 = vpop.f32.mrf.mxu0
        %v993 = vadd.f32 %v970, %v992
        %994 = vdwg.mxu0
        %995 = vrot.lane.b32.xlu0 %v811, 112
        %v996 = vpop.permute.xlu0 %995
        %997 = vrot.lane.b32.xlu0 %v811, 80
        %v998 = vpop.permute.xlu0 %997
        %v999 = vsel %vm822, %v996, 0
        %v1001 = vsel %vm822, %v998, 0
        %1003 = vmatpush.xpose.msra.mxu0 0.0
        %1004 = vmatpush.xpose.msra.mxu0 0.0
        %1005 = vmatpush.xpose.msra.mxu0 0.0
        %1006 = vmatpush.xpose.msra.mxu0 0.0
        %1007 = vmatpush.xpose.msra.mxu0 0.0
        %1008 = vmatpush.xpose.msra.mxu0 0.0
        %1009 = vmatpush.xpose.msra.mxu0 0.0
        %1010 = vmatpush.xpose.msra.mxu0 0.0
        %1011 = vmatpush.xpose.msra.mxu0 0.0
        %1012 = vmatpush.xpose.msra.mxu0 0.0
        %1013 = vmatpush.xpose.msra.mxu0 0.0
        %1014 = vmatpush.xpose.msra.mxu0 0.0
        %1015 = vmatpush.xpose.msra.mxu0 0.0
        %1016 = vmatpush.xpose.msra.mxu0 0.0
        %1017 = vmatpush.xpose.msra.mxu0 0.0
        %1018 = vmatpush.xpose.msra.mxu0 %v1001
        %1019 = vmatmul.f32.gmra.mxu0 %v999
        %v1020 = vpop.f32.mrf.mxu0
        %v1021 = vadd.f32 %v813, %v1020
        %1022 = vdwg.mxu0
        %v1023 = vsel %vm822, %v1021, -inf
        %1024 = vmax.xlane.f32.xlu0 %v1023
        %v1025 = vpop.xlane.xlu0 %1024
        %v1026 = vsub.f32 %v1021, %v1025
        %v1027 = vmul.f32 %v1026, 1.442695
        %v1028 = vpow.pop %v1027
        %v1029 = vsel %vm822, %v1028, 0.0
        %1030 = vadd.xlane.f32.xlu0 %v1029
        %v1031 = vpop.xlane.xlu0 %1030
        %v1032 = vrcp.pop %v1031
        %v1033 = vmul.f32 %v1028, %v1032
        %1034 = vrot.lane.b32.xlu0 %v811, 48
        %v1035 = vpop.permute.xlu0 %1034
        %v1038 = vsel %vm822, %v1033, 0
        %1040 = vmatpush.msra.mxu0 0.0
        %1041 = vmatpush.msra.mxu0 0.0
        %1042 = vmatpush.msra.mxu0 0.0
        %1043 = vmatpush.msra.mxu0 0.0
        %1044 = vmatpush.msra.mxu0 0.0
        %1045 = vmatpush.msra.mxu0 0.0
        %1046 = vmatpush.msra.mxu0 0.0
        %1047 = vmatpush.msra.mxu0 0.0
        %1048 = vmatpush.msra.mxu0 0.0
        %1049 = vmatpush.msra.mxu0 0.0
        %1050 = vmatpush.msra.mxu0 0.0
        %1051 = vmatpush.msra.mxu0 0.0
        %1052 = vmatpush.msra.mxu0 0.0
        %1053 = vmatpush.msra.mxu0 0.0
        %1054 = vmatpush.msra.mxu0 0.0
        %1055 = vmatpush.msra.mxu0 %v1035
        %1056 = vmatmul.f32.gmra.mxu0 %v1038
        %v1057 = vpop.f32.mrf.mxu0
        %v1058 = vadd.f32 0.0, %v1057
        %1059 = vdwg.mxu0
        %v1061 = vsel %vm822, %v1058, 0
        %1063 = vmatpush.msra.mxu0 0.0
        %1064 = vmatpush.msra.mxu0 0.0
        %1065 = vmatpush.msra.mxu0 0.0
        %1066 = vmatpush.msra.mxu0 0.0
        %1067 = vmatpush.msra.mxu0 0.0
        %1068 = vmatpush.msra.mxu0 0.0
        %1069 = vmatpush.msra.mxu0 0.0
        %1070 = vmatpush.msra.mxu0 0.0
        %1071 = vmatpush.msra.mxu0 0.0
        %1072 = vmatpush.msra.mxu0 0.0
        %1073 = vmatpush.msra.mxu0 0.0
        %1074 = vmatpush.msra.mxu0 0.0
        %1075 = vmatpush.msra.mxu0 0.0
        %1076 = vmatpush.msra.mxu0 0.0
        %1077 = vmatpush.msra.mxu0 0.0
        %1078 = vmatpush.msra.mxu0 %v816
        %1079 = vmatmul.f32.gmra.mxu0 %v1061
        %v1080 = vpop.f32.mrf.mxu0
        %v1081 = vadd.f32 0.0, %v1080
        %1082 = vdwg.mxu0
        %v1083 = vadd.f32 %v993, %v1081
        %1084 = vrot.lane.b32.xlu0 %v811, 104
        %v1085 = vpop.permute.xlu0 %1084
        %1086 = vrot.lane.b32.xlu0 %v811, 72
        %v1087 = vpop.permute.xlu0 %1086
        %v1088 = vsel %vm822, %v1085, 0
        %v1090 = vsel %vm822, %v1087, 0
        %1092 = vmatpush.xpose.msra.mxu0 0.0
        %1093 = vmatpush.xpose.msra.mxu0 0.0
        %1094 = vmatpush.xpose.msra.mxu0 0.0
        %1095 = vmatpush.xpose.msra.mxu0 0.0
        %1096 = vmatpush.xpose.msra.mxu0 0.0
        %1097 = vmatpush.xpose.msra.mxu0 0.0
        %1098 = vmatpush.xpose.msra.mxu0 0.0
        %1099 = vmatpush.xpose.msra.mxu0 0.0
        %1100 = vmatpush.xpose.msra.mxu0 0.0
        %1101 = vmatpush.xpose.msra.mxu0 0.0
        %1102 = vmatpush.xpose.msra.mxu0 0.0
        %1103 = vmatpush.xpose.msra.mxu0 0.0
        %1104 = vmatpush.xpose.msra.mxu0 0.0
        %1105 = vmatpush.xpose.msra.mxu0 0.0
        %1106 = vmatpush.xpose.msra.mxu0 0.0
        %1107 = vmatpush.xpose.msra.mxu0 %v1090
        %1108 = vmatmul.f32.gmra.mxu0 %v1088
        %v1109 = vpop.f32.mrf.mxu0
        %v1110 = vadd.f32 %v813, %v1109
        %1111 = vdwg.mxu0
        %v1112 = vsel %vm822, %v1110, -inf
        %1113 = vmax.xlane.f32.xlu0 %v1112
        %v1114 = vpop.xlane.xlu0 %1113
        %v1115 = vsub.f32 %v1110, %v1114
        %v1116 = vmul.f32 %v1115, 1.442695
        %v1117 = vpow.pop %v1116
        %v1118 = vsel %vm822, %v1117, 0.0
        %1119 = vadd.xlane.f32.xlu0 %v1118
        %v1120 = vpop.xlane.xlu0 %1119
        %v1121 = vrcp.pop %v1120
        %v1122 = vmul.f32 %v1117, %v1121
        %1123 = vrot.lane.b32.xlu0 %v811, 40
        %v1124 = vpop.permute.xlu0 %1123
        %v1127 = vsel %vm822, %v1122, 0
        %1129 = vmatpush.msra.mxu0 0.0
        %1130 = vmatpush.msra.mxu0 0.0
        %1131 = vmatpush.msra.mxu0 0.0
        %1132 = vmatpush.msra.mxu0 0.0
        %1133 = vmatpush.msra.mxu0 0.0
        %1134 = vmatpush.msra.mxu0 0.0
        %1135 = vmatpush.msra.mxu0 0.0
        %1136 = vmatpush.msra.mxu0 0.0
        %1137 = vmatpush.msra.mxu0 0.0
        %1138 = vmatpush.msra.mxu0 0.0
        %1139 = vmatpush.msra.mxu0 0.0
        %1140 = vmatpush.msra.mxu0 0.0
        %1141 = vmatpush.msra.mxu0 0.0
        %1142 = vmatpush.msra.mxu0 0.0
        %1143 = vmatpush.msra.mxu0 0.0
        %1144 = vmatpush.msra.mxu0 %v1124
        %1145 = vmatmul.f32.gmra.mxu0 %v1127
        %v1146 = vpop.f32.mrf.mxu0
        %v1147 = vadd.f32 0.0, %v1146
        %1148 = vdwg.mxu0
        %v1150 = vsel %vm822, %v1147, 0
        %1152 = vmatpush.msra.mxu0 0.0
        %1153 = vmatpush.msra.mxu0 0.0
        %1154 = vmatpush.msra.mxu0 0.0
        %1155 = vmatpush.msra.mxu0 0.0
        %1156 = vmatpush.msra.mxu0 0.0
        %1157 = vmatpush.msra.mxu0 0.0
        %1158 = vmatpush.msra.mxu0 0.0
        %1159 = vmatpush.msra.mxu0 0.0
        %1160 = vmatpush.msra.mxu0 0.0
        %1161 = vmatpush.msra.mxu0 0.0
        %1162 = vmatpush.msra.mxu0 0.0
        %1163 = vmatpush.msra.mxu0 0.0
        %1164 = vmatpush.msra.mxu0 0.0
        %1165 = vmatpush.msra.mxu0 0.0
        %1166 = vmatpush.msra.mxu0 0.0
        %1167 = vmatpush.msra.mxu0 %v817
        %1168 = vmatmul.f32.gmra.mxu0 %v1150
        %v1169 = vpop.f32.mrf.mxu0
        %v1170 = vadd.f32 0.0, %v1169
        %1171 = vdwg.mxu0
        %v1172 = vadd.f32 %v1083, %v1170
        %v1174 = vperm.slane %v818, 0
        %v1176 = vadd.f32 %v1172, %v1174
        %v1177 = vadd.f32 %v779, %v1176
        %v1178 = vld [vmem:[%s8] sm:$0x1]
        %v1179 = vld [vmem:[%s9] sm:$0x1]
        %v1180 = vsel %vm789, %v1177, 0.0
        %1181 = vadd.xlane.f32.xlu0 %v1180
        %v1182 = vpop.xlane.xlu0 %1181
        %v1183 = vrcp.pop 32.0
        %v1184 = vmul.f32 32.0, %v1183
        %v1185 = vsub.f32 1.0, %v1184
        %v1186 = vmul.f32 %v1183, %v1185
        %v1187 = vadd.f32 %v1183, %v1186
        %vm1188 = vweird.f32 %v1183
        %v1189 = vsel %vm1188, %v1183, %v1187
        %v1190 = vmul.f32 %v1182, %v1189
        %v1191 = vsub.f32 %v1177, %v1190
        %v1192 = vmul.f32 %v1191, %v1191
        %v1193 = vsel %vm789, %v1192, 0.0
        %1194 = vadd.xlane.f32.xlu0 %v1193
        %v1195 = vpop.xlane.xlu0 %1194
        %v1196 = vmul.f32 %v1195, %v1189
        %v1197 = vadd.f32 %v1196, 1e-05
        %v1198 = vrsqrt.pop %v1197
        %v1199 = vmul.f32 %v1198, %v1197
        %v1200 = vmul.f32 %v1199, %v1198
        %v1201 = vmul.f32 0.5, %v1200
        %v1202 = vsub.f32 1.5, %v1201
        %v1203 = vmul.f32 %v1198, %v1202
        %vm1204 = vweird.f32 %v1197
        %vm1205 = vweird.f32 %v1198
        %vm1206 = vmor %vm1204, %vm1205
        %v1207 = vsel %vm1206, %v1198, %v1203
        %v1208 = vmul.f32 %v1191, %v1207
        %v1210 = vperm.slane %v1178, 0
        %v1212 = vmul.f32 %v1208, %v1210
        %v1214 = vperm.slane %v1179, 0
        %v1216 = vadd.f32 %v1212, %v1214
        %v1217 = vld [vmem:[%s10] sm:$0xff]
        %v1218 = vld [vmem:[%s10 + $0x8] sm:$0xff]
        %v1219 = vld [vmem:[%s10 + $0x10] sm:$0xff]
        %v1220 = vld [vmem:[%s10 + $0x18] sm:$0xff]
        %v1221 = vld [vmem:[%s11] sm:$0x1]
        %v1223 = vperm.slane %v1221, 0
        %v1226 = vsel %vm789, %v1216, 0
        %1228 = vmatpush.msra.mxu0 0.0
        %1229 = vmatpush.msra.mxu0 0.0
        %1230 = vmatpush.msra.mxu0 0.0
        %1231 = vmatpush.msra.mxu0 0.0
        %1232 = vmatpush.msra.mxu0 0.0
        %1233 = vmatpush.msra.mxu0 0.0
        %1234 = vmatpush.msra.mxu0 0.0
        %1235 = vmatpush.msra.mxu0 0.0
        %1236 = vmatpush.msra.mxu0 0.0
        %1237 = vmatpush.msra.mxu0 0.0
        %1238 = vmatpush.msra.mxu0 0.0
        %1239 = vmatpush.msra.mxu0 0.0
        %1240 = vmatpush.msra.mxu0 %v1220
        %1241 = vmatpush.msra.mxu0 %v1219
        %1242 = vmatpush.msra.mxu0 %v1218
        %1243 = vmatpush.msra.mxu0 %v1217
        %1244 = vmatmul.f32.gmra.mxu0 %v1226
        %v1245 = vpop.f32.mrf.mxu0
        %v1246 = vadd.f32 %v1223, %v1245
        %1247 = vdwg.mxu0
        %v1248 = vld [vmem:[%s12] sm:$0xff]
        %v1249 = vld [vmem:[%s12 + $0x8] sm:$0xff]
        %v1250 = vld [vmem:[%s12 + $0x10] sm:$0xff]
        %v1251 = vld [vmem:[%s12 + $0x18] sm:$0xff]
        %v1252 = vld [vmem:[%s13] sm:$0x1]
        %v1254 = vperm.slane %v1252, 0
        %v1257 = vsel %vm789, %v780, 0
        %1259 = vmatpush.msra.mxu0 0.0
        %1260 = vmatpush.msra.mxu0 0.0
        %1261 = vmatpush.msra.mxu0 0.0
        %1262 = vmatpush.msra.mxu0 0.0
        %1263 = vmatpush.msra.mxu0 0.0
        %1264 = vmatpush.msra.mxu0 0.0
        %1265 = vmatpush.msra.mxu0 0.0
        %1266 = vmatpush.msra.mxu0 0.0
        %1267 = vmatpush.msra.mxu0 0.0
        %1268 = vmatpush.msra.mxu0 0.0
        %1269 = vmatpush.msra.mxu0 0.0
        %1270 = vmatpush.msra.mxu0 0.0
        %1271 = vmatpush.msra.mxu0 %v1251
        %1272 = vmatpush.msra.mxu0 %v1250
        %1273 = vmatpush.msra.mxu0 %v1249
        %1274 = vmatpush.msra.mxu0 %v1248
        %1275 = vmatmul.f32.gmra.mxu0 %v1257
        %v1276 = vpop.f32.mrf.mxu0
        %v1277 = vadd.f32 %v1254, %v1276
        %1278 = vdwg.mxu0
        %v1279 = vld [vmem:[%s774] sm:$0x1]
        %v1280 = vld [vmem:[%s14] sm:$0xff]
        %v1281 = vld [vmem:[%s14 + $0x8] sm:$0xff]
        %v1282 = vld [vmem:[%s14 + $0x10] sm:$0xff]
        %v1283 = vld [vmem:[%s14 + $0x18] sm:$0xff]
        %v1284 = vld [vmem:[%s15] sm:$0x1]
        %v1286 = vperm.slane %v1279, 0
        %v1289 = vsel %vm822, %v1246, 0
        %v1292 = vsel %vm822, %v1277, 0
        %1294 = vmatpush.xpose.msra.mxu0 0.0
        %1295 = vmatpush.xpose.msra.mxu0 0.0
        %1296 = vmatpush.xpose.msra.mxu0 0.0
        %1297 = vmatpush.xpose.msra.mxu0 0.0
        %1298 = vmatpush.xpose.msra.mxu0 0.0
        %1299 = vmatpush.xpose.msra.mxu0 0.0
        %1300 = vmatpush.xpose.msra.mxu0 0.0
        %1301 = vmatpush.xpose.msra.mxu0 0.0
        %1302 = vmatpush.xpose.msra.mxu0 0.0
        %1303 = vmatpush.xpose.msra.mxu0 0.0
        %1304 = vmatpush.xpose.msra.mxu0 0.0
        %1305 = vmatpush.xpose.msra.mxu0 0.0
        %1306 = vmatpush.xpose.msra.mxu0 0.0
        %1307 = vmatpush.xpose.msra.mxu0 0.0
        %1308 = vmatpush.xpose.msra.mxu0 0.0
        %1309 = vmatpush.xpose.msra.mxu0 %v1292
        %1310 = vmatmul.f32.gmra.mxu0 %v1289
        %v1311 = vpop.f32.mrf.mxu0
        %v1312 = vadd.f32 %v1286, %v1311
        %1313 = vdwg.mxu0
        %v1314 = vsel %vm822, %v1312, -inf
        %1315 = vmax.xlane.f32.xlu0 %v1314
        %v1316 = vpop.xlane.xlu0 %1315
        %v1317 = vsub.f32 %v1312, %v1316
        %v1318 = vmul.f32 %v1317, 1.442695
        %v1319 = vpow.pop %v1318
        %v1320 = vsel %vm822, %v1319, 0.0
        %1321 = vadd.xlane.f32.xlu0 %v1320
        %v1322 = vpop.xlane.xlu0 %1321
        %v1323 = vrcp.pop %v1322
        %v1324 = vmul.f32 %v1319, %v1323
        %1325 = vrot.lane.b32.xlu0 %v1277, 96
        %v1326 = vpop.permute.xlu0 %1325
        %v1329 = vsel %vm822, %v1324, 0
        %1331 = vmatpush.msra.mxu0 0.0
        %1332 = vmatpush.msra.mxu0 0.0
        %1333 = vmatpush.msra.mxu0 0.0
        %1334 = vmatpush.msra.mxu0 0.0
        %1335 = vmatpush.msra.mxu0 0.0
        %1336 = vmatpush.msra.mxu0 0.0
        %1337 = vmatpush.msra.mxu0 0.0
        %1338 = vmatpush.msra.mxu0 0.0
        %1339 = vmatpush.msra.mxu0 0.0
        %1340 = vmatpush.msra.mxu0 0.0
        %1341 = vmatpush.msra.mxu0 0.0
        %1342 = vmatpush.msra.mxu0 0.0
        %1343 = vmatpush.msra.mxu0 0.0
        %1344 = vmatpush.msra.mxu0 0.0
        %1345 = vmatpush.msra.mxu0 0.0
        %1346 = vmatpush.msra.mxu0 %v1326
        %1347 = vmatmul.f32.gmra.mxu0 %v1329
        %v1348 = vpop.f32.mrf.mxu0
        %v1349 = vadd.f32 0.0, %v1348
        %1350 = vdwg.mxu0
        %1351 = vrot.lane.b32.xlu0 %v1246, 120
        %v1352 = vpop.permute.xlu0 %1351
        %1353 = vrot.lane.b32.xlu0 %v1277, 120
        %v1354 = vpop.permute.xlu0 %1353
        %v1355 = vsel %vm822, %v1352, 0
        %v1357 = vsel %vm822, %v1354, 0
        %1359 = vmatpush.xpose.msra.mxu0 0.0
        %1360 = vmatpush.xpose.msra.mxu0 0.0
        %1361 = vmatpush.xpose.msra.mxu0 0.0
        %1362 = vmatpush.xpose.msra.mxu0 0.0
        %1363 = vmatpush.xpose.msra.mxu0 0.0
        %1364 = vmatpush.xpose.msra.mxu0 0.0
        %1365 = vmatpush.xpose.msra.mxu0 0.0
        %1366 = vmatpush.xpose.msra.mxu0 0.0
        %1367 = vmatpush.xpose.msra.mxu0 0.0
        %1368 = vmatpush.xpose.msra.mxu0 0.0
        %1369 = vmatpush.xpose.msra.mxu0 0.0
        %1370 = vmatpush.xpose.msra.mxu0 0.0
        %1371 = vmatpush.xpose.msra.mxu0 0.0
        %1372 = vmatpush.xpose.msra.mxu0 0.0
        %1373 = vmatpush.xpose.msra.mxu0 0.0
        %1374 = vmatpush.xpose.msra.mxu0 %v1357
        %1375 = vmatmul.f32.gmra.mxu0 %v1355
        %v1376 = vpop.f32.mrf.mxu0
        %v1377 = vadd.f32 %v1286, %v1376
        %1378 = vdwg.mxu0
        %v1379 = vsel %vm822, %v1377, -inf
        %1380 = vmax.xlane.f32.xlu0 %v1379
        %v1381 = vpop.xlane.xlu0 %1380
        %v1382 = vsub.f32 %v1377, %v1381
        %v1383 = vmul.f32 %v1382, 1.442695
        %v1384 = vpow.pop %v1383
        %v1385 = vsel %vm822, %v1384, 0.0
        %1386 = vadd.xlane.f32.xlu0 %v1385
        %v1387 = vpop.xlane.xlu0 %1386
        %v1388 = vrcp.pop %v1387
        %v1389 = vmul.f32 %v1384, %v1388
        %1390 = vrot.lane.b32.xlu0 %v1277, 88
        %v1391 = vpop.permute.xlu0 %1390
        %v1394 = vsel %vm822, %v1389, 0
        %1396 = vmatpush.msra.mxu0 0.0
        %1397 = vmatpush.msra.mxu0 0.0
        %1398 = vmatpush.msra.mxu0 0.0
        %1399 = vmatpush.msra.mxu0 0.0
        %1400 = vmatpush.msra.mxu0 0.0
        %1401 = vmatpush.msra.mxu0 0.0
        %1402 = vmatpush.msra.mxu0 0.0
        %1403 = vmatpush.msra.mxu0 0.0
        %1404 = vmatpush.msra.mxu0 0.0
        %1405 = vmatpush.msra.mxu0 0.0
        %1406 = vmatpush.msra.mxu0 0.0
        %1407 = vmatpush.msra.mxu0 0.0
        %1408 = vmatpush.msra.mxu0 0.0
        %1409 = vmatpush.msra.mxu0 0.0
        %1410 = vmatpush.msra.mxu0 0.0
        %1411 = vmatpush.msra.mxu0 %v1391
        %1412 = vmatmul.f32.gmra.mxu0 %v1394
        %v1413 = vpop.f32.mrf.mxu0
        %v1414 = vadd.f32 0.0, %v1413
        %1415 = vdwg.mxu0
        %v1417 = vsel %vm822, %v1414, 0
        %1419 = vmatpush.msra.mxu0 0.0
        %1420 = vmatpush.msra.mxu0 0.0
        %1421 = vmatpush.msra.mxu0 0.0
        %1422 = vmatpush.msra.mxu0 0.0
        %1423 = vmatpush.msra.mxu0 0.0
        %1424 = vmatpush.msra.mxu0 0.0
        %1425 = vmatpush.msra.mxu0 0.0
        %1426 = vmatpush.msra.mxu0 0.0
        %1427 = vmatpush.msra.mxu0 0.0
        %1428 = vmatpush.msra.mxu0 0.0
        %1429 = vmatpush.msra.mxu0 0.0
        %1430 = vmatpush.msra.mxu0 0.0
        %1431 = vmatpush.msra.mxu0 0.0
        %1432 = vmatpush.msra.mxu0 0.0
        %1433 = vmatpush.msra.mxu0 0.0
        %1434 = vmatpush.msra.mxu0 %v1281
        %1435 = vmatmul.f32.gmra.mxu0 %v1417
        %v1436 = vpop.f32.mrf.mxu0
        %v1437 = vadd.f32 0.0, %v1436
        %1438 = vdwg.mxu0
        %v1440 = vsel %vm822, %v1349, 0
        %1442 = vmatpush.msra.mxu0 0.0
        %1443 = vmatpush.msra.mxu0 0.0
        %1444 = vmatpush.msra.mxu0 0.0
        %1445 = vmatpush.msra.mxu0 0.0
        %1446 = vmatpush.msra.mxu0 0.0
        %1447 = vmatpush.msra.mxu0 0.0
        %1448 = vmatpush.msra.mxu0 0.0
        %1449 = vmatpush.msra.mxu0 0.0
        %1450 = vmatpush.msra.mxu0 0.0
        %1451 = vmatpush.msra.mxu0 0.0
        %1452 = vmatpush.msra.mxu0 0.0
        %1453 = vmatpush.msra.mxu0 0.0
        %1454 = vmatpush.msra.mxu0 0.0
        %1455 = vmatpush.msra.mxu0 0.0
        %1456 = vmatpush.msra.mxu0 0.0
        %1457 = vmatpush.msra.mxu0 %v1280
        %1458 = vmatmul.f32.gmra.mxu0 %v1440
        %v1459 = vpop.f32.mrf.mxu0
        %v1460 = vadd.f32 %v1437, %v1459
        %1461 = vdwg.mxu0
        %1462 = vrot.lane.b32.xlu0 %v1246, 112
        %v1463 = vpop.permute.xlu0 %1462
        %1464 = vrot.lane.b32.xlu0 %v1277, 112
        %v1465 = vpop.permute.xlu0 %1464
        %v1466 = vsel %vm822, %v1463, 0
        %v1468 = vsel %vm822, %v1465, 0
        %1470 = vmatpush.xpose.msra.mxu0 0.0
        %1471 = vmatpush.xpose.msra.mxu0 0.0
        %1472 = vmatpush.xpose.msra.mxu0 0.0
        %1473 = vmatpush.xpose.msra.mxu0 0.0
        %1474 = vmatpush.xpose.msra.mxu0 0.0
        %1475 = vmatpush.xpose.msra.mxu0 0.0
        %1476 = vmatpush.xpose.msra.mxu0 0.0
        %1477 = vmatpush.xpose.msra.mxu0 0.0
        %1478 = vmatpush.xpose.msra.mxu0 0.0
        %1479 = vmatpush.xpose.msra.mxu0 0.0
        %1480 = vmatpush.xpose.msra.mxu0 0.0
        %1481 = vmatpush.xpose.msra.mxu0 0.0
        %1482 = vmatpush.xpose.msra.mxu0 0.0
        %1483 = vmatpush.xpose.msra.mxu0 0.0
        %1484 = vmatpush.xpose.msra.mxu0 0.0
        %1485 = vmatpush.xpose.msra.mxu0 %v1468
        %1486 = vmatmul.f32.gmra.mxu0 %v1466
        %v1487 = vpop.f32.mrf.mxu0
        %v1488 = vadd.f32 %v1286, %v1487
        %1489 = vdwg.mxu0
        %v1490 = vsel %vm822, %v1488, -inf
        %1491 = vmax.xlane.f32.xlu0 %v1490
        %v1492 = vpop.xlane.xlu0 %1491
        %v1493 = vsub.f32 %v1488, %v1492
        %v1494 = vmul.f32 %v1493, 1.442695
        %v1495 = vpow.pop %v1494
        %v1496 = vsel %vm822, %v1495, 0.0
        %1497 = vadd.xlane.f32.xlu0 %v1496
        %v1498 = vpop.xlane.xlu0 %1497
        %v1499 = vrcp.pop %v1498
        %v1500 = vmul.f32 %v1495, %v1499
        %1501 = vrot.lane.b32.xlu0 %v1277, 80
        %v1502 = vpop.permute.xlu0 %1501
        %v1505 = vsel %vm822, %v1500, 0
        %1507 = vmatpush.msra.mxu0 0.0
        %1508 = vmatpush.msra.mxu0 0.0
        %1509 = vmatpush.msra.mxu0 0.0
        %1510 = vmatpush.msra.mxu0 0.0
        %1511 = vmatpush.msra.mxu0 0.0
        %1512 = vmatpush.msra.mxu0 0.0
        %1513 = vmatpush.msra.mxu0 0.0
        %1514 = vmatpush.msra.mxu0 0.0
        %1515 = vmatpush.msra.mxu0 0.0
        %1516 = vmatpush.msra.mxu0 0.0
        %1517 = vmatpush.msra.mxu0 0.0
        %1518 = vmatpush.msra.mxu0 0.0
        %1519 = vmatpush.msra.mxu0 0.0
        %1520 = vmatpush.msra.mxu0 0.0
        %1521 = vmatpush.msra.mxu0 0.0
        %1522 = vmatpush.msra.mxu0 %v1502
        %1523 = vmatmul.f32.gmra.mxu0 %v1505
        %v1524 = vpop.f32.mrf.mxu0
        %v1525 = vadd.f32 0.0, %v1524
        %1526 = vdwg.mxu0
        %v1528 = vsel %vm822, %v1525, 0
        %1530 = vmatpush.msra.mxu0 0.0
        %1531 = vmatpush.msra.mxu0 0.0
        %1532 = vmatpush.msra.mxu0 0.0
        %1533 = vmatpush.msra.mxu0 0.0
        %1534 = vmatpush.msra.mxu0 0.0
        %1535 = vmatpush.msra.mxu0 0.0
        %1536 = vmatpush.msra.mxu0 0.0
        %1537 = vmatpush.msra.mxu0 0.0
        %1538 = vmatpush.msra.mxu0 0.0
        %1539 = vmatpush.msra.mxu0 0.0
        %1540 = vmatpush.msra.mxu0 0.0
        %1541 = vmatpush.msra.mxu0 0.0
        %1542 = vmatpush.msra.mxu0 0.0
        %1543 = vmatpush.msra.mxu0 0.0
        %1544 = vmatpush.msra.mxu0 0.0
        %1545 = vmatpush.msra.mxu0 %v1282
        %1546 = vmatmul.f32.gmra.mxu0 %v1528
        %v1547 = vpop.f32.mrf.mxu0
        %v1548 = vadd.f32 0.0, %v1547
        %1549 = vdwg.mxu0
        %v1550 = vadd.f32 %v1460, %v1548
        %1551 = vrot.lane.b32.xlu0 %v1246, 104
        %v1552 = vpop.permute.xlu0 %1551
        %1553 = vrot.lane.b32.xlu0 %v1277, 104
        %v1554 = vpop.permute.xlu0 %1553
        %v1555 = vsel %vm822, %v1552, 0
        %v1557 = vsel %vm822, %v1554, 0
        %1559 = vmatpush.xpose.msra.mxu0 0.0
        %1560 = vmatpush.xpose.msra.mxu0 0.0
        %1561 = vmatpush.xpose.msra.mxu0 0.0
        %1562 = vmatpush.xpose.msra.mxu0 0.0
        %1563 = vmatpush.xpose.msra.mxu0 0.0
        %1564 = vmatpush.xpose.msra.mxu0 0.0
        %1565 = vmatpush.xpose.msra.mxu0 0.0
        %1566 = vmatpush.xpose.msra.mxu0 0.0
        %1567 = vmatpush.xpose.msra.mxu0 0.0
        %1568 = vmatpush.xpose.msra.mxu0 0.0
        %1569 = vmatpush.xpose.msra.mxu0 0.0
        %1570 = vmatpush.xpose.msra.mxu0 0.0
        %1571 = vmatpush.xpose.msra.mxu0 0.0
        %1572 = vmatpush.xpose.msra.mxu0 0.0
        %1573 = vmatpush.xpose.msra.mxu0 0.0
        %1574 = vmatpush.xpose.msra.mxu0 %v1557
        %1575 = vmatmul.f32.gmra.mxu0 %v1555
        %v1576 = vpop.f32.mrf.mxu0
        %v1577 = vadd.f32 %v1286, %v1576
        %1578 = vdwg.mxu0
        %v1579 = vsel %vm822, %v1577, -inf
        %1580 = vmax.xlane.f32.xlu0 %v1579
        %v1581 = vpop.xlane.xlu0 %1580
        %v1582 = vsub.f32 %v1577, %v1581
        %v1583 = vmul.f32 %v1582, 1.442695
        %v1584 = vpow.pop %v1583
        %v1585 = vsel %vm822, %v1584, 0.0
        %1586 = vadd.xlane.f32.xlu0 %v1585
        %v1587 = vpop.xlane.xlu0 %1586
        %v1588 = vrcp.pop %v1587
        %v1589 = vmul.f32 %v1584, %v1588
        %1590 = vrot.lane.b32.xlu0 %v1277, 72
        %v1591 = vpop.permute.xlu0 %1590
        %v1594 = vsel %vm822, %v1589, 0
        %1596 = vmatpush.msra.mxu0 0.0
        %1597 = vmatpush.msra.mxu0 0.0
        %1598 = vmatpush.msra.mxu0 0.0
        %1599 = vmatpush.msra.mxu0 0.0
        %1600 = vmatpush.msra.mxu0 0.0
        %1601 = vmatpush.msra.mxu0 0.0
        %1602 = vmatpush.msra.mxu0 0.0
        %1603 = vmatpush.msra.mxu0 0.0
        %1604 = vmatpush.msra.mxu0 0.0
        %1605 = vmatpush.msra.mxu0 0.0
        %1606 = vmatpush.msra.mxu0 0.0
        %1607 = vmatpush.msra.mxu0 0.0
        %1608 = vmatpush.msra.mxu0 0.0
        %1609 = vmatpush.msra.mxu0 0.0
        %1610 = vmatpush.msra.mxu0 0.0
        %1611 = vmatpush.msra.mxu0 %v1591
        %1612 = vmatmul.f32.gmra.mxu0 %v1594
        %v1613 = vpop.f32.mrf.mxu0
        %v1614 = vadd.f32 0.0, %v1613
        %1615 = vdwg.mxu0
        %v1617 = vsel %vm822, %v1614, 0
        %1619 = vmatpush.msra.mxu0 0.0
        %1620 = vmatpush.msra.mxu0 0.0
        %1621 = vmatpush.msra.mxu0 0.0
        %1622 = vmatpush.msra.mxu0 0.0
        %1623 = vmatpush.msra.mxu0 0.0
        %1624 = vmatpush.msra.mxu0 0.0
        %1625 = vmatpush.msra.mxu0 0.0
        %1626 = vmatpush.msra.mxu0 0.0
        %1627 = vmatpush.msra.mxu0 0.0
        %1628 = vmatpush.msra.mxu0 0.0
        %1629 = vmatpush.msra.mxu0 0.0
        %1630 = vmatpush.msra.mxu0 0.0
        %1631 = vmatpush.msra.mxu0 0.0
        %1632 = vmatpush.msra.mxu0 0.0
        %1633 = vmatpush.msra.mxu0 0.0
        %1634 = vmatpush.msra.mxu0 %v1283
        %1635 = vmatmul.f32.gmra.mxu0 %v1617
        %v1636 = vpop.f32.mrf.mxu0
        %v1637 = vadd.f32 0.0, %v1636
        %1638 = vdwg.mxu0
        %v1639 = vadd.f32 %v1550, %v1637
        %v1641 = vperm.slane %v1284, 0
        %v1643 = vadd.f32 %v1639, %v1641
        %v1644 = vadd.f32 %v1216, %v1643
        %v1645 = vld [vmem:[%s16] sm:$0x1]
        %v1646 = vld [vmem:[%s17] sm:$0x1]
        %v1647 = vsel %vm789, %v1644, 0.0
        %1648 = vadd.xlane.f32.xlu0 %v1647
        %v1649 = vpop.xlane.xlu0 %1648
        %v1650 = vmul.f32 %v1649, %v1189
        %v1651 = vsub.f32 %v1644, %v1650
        %v1652 = vmul.f32 %v1651, %v1651
        %v1653 = vsel %vm789, %v1652, 0.0
        %1654 = vadd.xlane.f32.xlu0 %v1653
        %v1655 = vpop.xlane.xlu0 %1654
        %v1656 = vmul.f32 %v1655, %v1189
        %v1657 = vadd.f32 %v1656, 1e-05
        %v1658 = vrsqrt.pop %v1657
        %v1659 = vmul.f32 %v1658, %v1657
        %v1660 = vmul.f32 %v1659, %v1658
        %v1661 = vmul.f32 0.5, %v1660
        %v1662 = vsub.f32 1.5, %v1661
        %v1663 = vmul.f32 %v1658, %v1662
        %vm1664 = vweird.f32 %v1657
        %vm1665 = vweird.f32 %v1658
        %vm1666 = vmor %vm1664, %vm1665
        %v1667 = vsel %vm1666, %v1658, %v1663
        %v1668 = vmul.f32 %v1651, %v1667
        %v1670 = vperm.slane %v1645, 0
        %v1672 = vmul.f32 %v1668, %v1670
        %v1674 = vperm.slane %v1646, 0
        %v1676 = vadd.f32 %v1672, %v1674
        %v1677 = vld [vmem:[%s18] sm:$0xff]
        %v1678 = vld [vmem:[%s18 + $0x8] sm:$0xff]
        %v1679 = vld [vmem:[%s18 + $0x10] sm:$0xff]
        %v1680 = vld [vmem:[%s18 + $0x18] sm:$0xff]
        %v1681 = vld [vmem:[%s19] sm:$0x1]
        %v1683 = vperm.slane %v1681, 0
        %v1686 = vsel %vm789, %v1676, 0
        %1688 = vmatpush.msra.mxu0 0.0
        %1689 = vmatpush.msra.mxu0 0.0
        %1690 = vmatpush.msra.mxu0 0.0
        %1691 = vmatpush.msra.mxu0 0.0
        %1692 = vmatpush.msra.mxu0 0.0
        %1693 = vmatpush.msra.mxu0 0.0
        %1694 = vmatpush.msra.mxu0 0.0
        %1695 = vmatpush.msra.mxu0 0.0
        %1696 = vmatpush.msra.mxu0 0.0
        %1697 = vmatpush.msra.mxu0 0.0
        %1698 = vmatpush.msra.mxu0 0.0
        %1699 = vmatpush.msra.mxu0 0.0
        %1700 = vmatpush.msra.mxu0 %v1680
        %1701 = vmatpush.msra.mxu0 %v1679
        %1702 = vmatpush.msra.mxu0 %v1678
        %1703 = vmatpush.msra.mxu0 %v1677
        %1704 = vmatmul.f32.gmra.mxu0 %v1686
        %v1705 = vpop.f32.mrf.mxu0
        %v1706 = vadd.f32 %v1683, %v1705
        %1707 = vdwg.mxu0
        %v1708 = vmax.f32 %v1706, 0.0
        %v1709 = vld [vmem:[%s20] sm:$0xff]
        %v1710 = vld [vmem:[%s20 + $0x8] sm:$0xff]
        %v1711 = vld [vmem:[%s20 + $0x10] sm:$0xff]
        %v1712 = vld [vmem:[%s20 + $0x18] sm:$0xff]
        %v1713 = vld [vmem:[%s20 + $0x20] sm:$0xff]
        %v1714 = vld [vmem:[%s20 + $0x28] sm:$0xff]
        %v1715 = vld [vmem:[%s20 + $0x30] sm:$0xff]
        %v1716 = vld [vmem:[%s20 + $0x38] sm:$0xff]
        %v1717 = vld [vmem:[%s21] sm:$0x1]
        %v1719 = vperm.slane %v1717, 0
        %vm1721 = vcmask 523264
        %v1723 = vsel %vm1721, %v1708, 0
        %1725 = vmatpush.msra.mxu0 0.0
        %1726 = vmatpush.msra.mxu0 0.0
        %1727 = vmatpush.msra.mxu0 0.0
        %1728 = vmatpush.msra.mxu0 0.0
        %1729 = vmatpush.msra.mxu0 0.0
        %1730 = vmatpush.msra.mxu0 0.0
        %1731 = vmatpush.msra.mxu0 0.0
        %1732 = vmatpush.msra.mxu0 0.0
        %1733 = vmatpush.msra.mxu0 %v1716
        %1734 = vmatpush.msra.mxu0 %v1715
        %1735 = vmatpush.msra.mxu0 %v1714
        %1736 = vmatpush.msra.mxu0 %v1713
        %1737 = vmatpush.msra.mxu0 %v1712
        %1738 = vmatpush.msra.mxu0 %v1711
        %1739 = vmatpush.msra.mxu0 %v1710
        %1740 = vmatpush.msra.mxu0 %v1709
        %1741 = vmatmul.f32.gmra.mxu0 %v1723
        %v1742 = vpop.f32.mrf.mxu0
        %v1743 = vadd.f32 %v1719, %v1742
        %1744 = vdwg.mxu0
        %v1745 = vadd.f32 %v1676, %v1743
        %v1746 = vld [vmem:[%s22] sm:$0x1]
        %v1747 = vld [vmem:[#allocation2] sm:$0x1]
        %v1748 = vsel %vm789, %v1745, 0.0
        %1749 = vadd.xlane.f32.xlu0 %v1748
        %v1750 = vpop.xlane.xlu0 %1749
        %v1751 = vmul.f32 %v1750, %v1189
        %v1752 = vsub.f32 %v1745, %v1751
        %v1753 = vmul.f32 %v1752, %v1752
        %v1754 = vsel %vm789, %v1753, 0.0
        %1755 = vadd.xlane.f32.xlu0 %v1754
        %v1756 = vpop.xlane.xlu0 %1755
        %v1757 = vmul.f32 %v1756, %v1189
        %v1758 = vadd.f32 %v1757, 1e-05
        %v1759 = vrsqrt.pop %v1758
        %v1760 = vmul.f32 %v1759, %v1758
        %v1761 = vmul.f32 %v1760, %v1759
        %v1762 = vmul.f32 0.5, %v1761
        %v1763 = vsub.f32 1.5, %v1762
        %v1764 = vmul.f32 %v1759, %v1763
        %vm1765 = vweird.f32 %v1758
        %vm1766 = vweird.f32 %v1759
        %vm1767 = vmor %vm1765, %vm1766
        %v1768 = vsel %vm1767, %v1759, %v1764
        %v1769 = vmul.f32 %v1752, %v1768
        %v1771 = vperm.slane %v1746, 0
        %v1773 = vmul.f32 %v1769, %v1771
        %v1775 = vperm.slane %v1747, 0
        %v1777 = vadd.f32 %v1773, %v1775
        %1778 = vst.msk [vmem:[%s778] sm:$0xff] %vm789, %v1777
        %p1779 = scmp.lt.s32.totalorder %s36, 1
        %s1780 = scalar_select %p1779, %s36, 1
        %s1781 = smul.addr %s1780, 8
        %s1782 = scalar_lea.vmem %s24, %s1781
        // Predicated region
        $region121: #{sentence_transformer_forward.14} parent=115 // pred_check
          %p1783 = pneg %p573
        $region122: #{sentence_transformer_forward.14} parent=115 // pred_check_branch
          %1785 = sbr.rel (%p1783) target = $region124
        $region123: #{sentence_transformer_forward.14} parent=115 // pred_region
          _
        $region124: #{sentence_transformer_forward.14} parent=115 // pred_fallthru
          _
      $region116: #{sentence_transformer_forward.14} parent=5 // pred_fallthru
        _
      %p1786 = scmp.le.s32.totalorder 2, %s31
      // Predicated region
      $region125: #{sentence_transformer_forward.14} parent=5 // pred_check
        %p1787 = pneg %p1786
      $region126: #{sentence_transformer_forward.14} parent=5 // pred_check_branch
        %1789 = sbr.rel (%p1787) target = $region128
      $region127: #{sentence_transformer_forward.14} parent=5 // pred_region
        %s1790 = ssub.s32 %s31, 2
        // Predicated region
        $region129: #{sentence_transformer_forward.14} parent=127 // pred_check
          %p1791 = pneg %p579
        $region130: #{sentence_transformer_forward.14} parent=127 // pred_check_branch
          %1793 = sbr.rel (%p1791) target = $region132
        $region131: #{sentence_transformer_forward.14} parent=127 // pred_region
          %p1794 = scmp.lt.s32.totalorder %s37, 1
          %s1795 = scalar_select %p1794, %s37, 1
          %s1796 = smul.addr %s1795, 8
          %s1797 = scalar_lea.vmem %s24, %s1796
        $region132: #{sentence_transformer_forward.14} parent=127 // pred_fallthru
          _
      $region128: #{sentence_transformer_forward.14} parent=5 // pred_fallthru
        _
    $region6: #{sentence_transformer_forward.14} parent=1 // loop_footer
      %s35 = sadd.s32 1, %s31
    $region7: #{sentence_transformer_forward.14} parent=1 // loop_footer_branch
      %30 = sbr.rel target = $region3
    $region8: #{sentence_transformer_forward.14} parent=1 // loop_exit
      _
    %1798 = vsyncpa [#allocation3], 1
    %s1799 = scalar_lea.sflag [#allocation3], 1
    %1800 = vsyncpa %s1799, 1

// kernel: sentence_transformer_forward.13
$region0: #{sentence_transformer_forward.13}
  #allocation0 [shape = 'u32[]', space=smem, size = 0x4, offset = 0x4, fixed_abs, tag = 'smem constant byte address 0x4 - core index']
  #allocation1 [shape = 'u32[72,128]{1,0:T(1,128)}', space=vmem, size = 0x9000, scoped, tag = 'internal scratch']
  %s0 = inlined_call_operand.vmem [shape: f32[2,8,32], index: 0, kind: input, shape index: {}]
  %s1 = inlined_call_operand.vmem [shape: f32[2,8,32], index: 1, kind: input, shape index: {}]
  %s2 = inlined_call_operand.vmem [shape: f32[1,8,8], index: 2, kind: input, shape index: {}]
  %s3 = inlined_call_operand.vmem [shape: f32[2,1,8], index: 3, kind: input, shape index: {}]
  %s4 = inlined_call_operand.vmem [shape: f32[32,96], index: 4, kind: input, shape index: {}]
  %s5 = inlined_call_operand.vmem [shape: f32[1,96], index: 5, kind: input, shape index: {}]
  %s6 = inlined_call_operand.vmem [shape: f32[32,32], index: 6, kind: input, shape index: {}]
  %s7 = inlined_call_operand.vmem [shape: f32[1,32], index: 7, kind: input, shape index: {}]
  %s8 = inlined_call_operand.vmem [shape: f32[1,32], index: 8, kind: input, shape index: {}]
  %s9 = inlined_call_operand.vmem [shape: f32[1,32], index: 9, kind: input, shape index: {}]
  %s10 = inlined_call_operand.vmem [shape: f32[32,32], index: 10, kind: input, shape index: {}]
  %s11 = inlined_call_operand.vmem [shape: f32[1,32], index: 11, kind: input, shape index: {}]
  %s12 = inlined_call_operand.vmem [shape: f32[32,64], index: 12, kind: input, shape index: {}]
  %s13 = inlined_call_operand.vmem [shape: f32[1,64], index: 13, kind: input, shape index: {}]
  %s14 = inlined_call_operand.vmem [shape: f32[32,32], index: 14, kind: input, shape index: {}]
  %s15 = inlined_call_operand.vmem [shape: f32[1,32], index: 15, kind: input, shape index: {}]
  %s16 = inlined_call_operand.vmem [shape: f32[1,32], index: 16, kind: input, shape index: {}]
  %s17 = inlined_call_operand.vmem [shape: f32[1,32], index: 17, kind: input, shape index: {}]
  %s18 = inlined_call_operand.vmem [shape: f32[32,64], index: 18, kind: input, shape index: {}]
  %s19 = inlined_call_operand.vmem [shape: f32[1,64], index: 19, kind: input, shape index: {}]
  %s20 = inlined_call_operand.vmem [shape: f32[64,32], index: 20, kind: input, shape index: {}]
  %s21 = inlined_call_operand.vmem [shape: f32[1,32], index: 21, kind: input, shape index: {}]
  %s22 = inlined_call_operand.vmem [shape: f32[1,32], index: 22, kind: input, shape index: {}]
  %s23 = inlined_call_operand.vmem [shape: f32[1,32], index: 23, kind: input, shape index: {}]
  %s24 = inlined_call_operand.vmem [shape: f32[2,8,32], index: 24, kind: output, shape index: {}]
  %s25 = sld [smem:[#allocation0]]
  $region129: #{sentence_transformer_forward.13} parent=0
    _
  %s27 = ssub.s32 1, %s25
  %s28 = scalar_select 0, %s27, %s25
  loop: start=0, step=1, limit=4
  $region2: #{sentence_transformer_forward.13} parent=0 // loop_pre_header
    _
  $region3: #{sentence_transformer_forward.13} parent=0 // loop_header
    %s30 = sphi 0, %s34
    %p31 = scmp.ge.s32.totalorder %s30, 4
    %s40 = sphi 0, %s42
    %s43 = sphi 0, %s40
    %s44 = sphi 0, %s43
    %s60 = sphi 0, %s44
    %s66 = sphi 0, %s68
    %s69 = sphi 0, %s66
    %s70 = sphi 0, %s69
    %s86 = sphi 0, %s70
    %s90 = sphi 0, %s90
    %s92 = sphi 0, %s90
    %s93 = sphi 0, %s92
    %s107 = sphi 0, %s93
    %s113 = sphi 0, %s115
    %s116 = sphi 0, %s113
    %s117 = sphi 0, %s116
    %s133 = sphi 0, %s117
    %s137 = sphi 0, %s137
    %s139 = sphi 0, %s137
    %s140 = sphi 0, %s139
    %s154 = sphi 0, %s140
    %s158 = sphi 0, %s158
    %s160 = sphi 0, %s158
    %s161 = sphi 0, %s160
    %s175 = sphi 0, %s161
    %s179 = sphi 0, %s179
    %s181 = sphi 0, %s179
    %s182 = sphi 0, %s181
    %s196 = sphi 0, %s182
    %s200 = sphi 0, %s200
    %s202 = sphi 0, %s200
    %s203 = sphi 0, %s202
    %s217 = sphi 0, %s203
    %s221 = sphi 0, %s221
    %s223 = sphi 0, %s221
    %s224 = sphi 0, %s223
    %s238 = sphi 0, %s224
    %s242 = sphi 0, %s242
    %s244 = sphi 0, %s242
    %s245 = sphi 0, %s244
    %s259 = sphi 0, %s245
    %s263 = sphi 0, %s263
    %s265 = sphi 0, %s263
    %s266 = sphi 0, %s265
    %s280 = sphi 0, %s266
    %s284 = sphi 0, %s284
    %s286 = sphi 0, %s284
    %s287 = sphi 0, %s286
    %s301 = sphi 0, %s287
    %s305 = sphi 0, %s305
    %s307 = sphi 0, %s305
    %s308 = sphi 0, %s307
    %s322 = sphi 0, %s308
    %s326 = sphi 0, %s326
    %s328 = sphi 0, %s326
    %s329 = sphi 0, %s328
    %s343 = sphi 0, %s329
    %s347 = sphi 0, %s347
    %s349 = sphi 0, %s347
    %s350 = sphi 0, %s349
    %s364 = sphi 0, %s350
    %s368 = sphi 0, %s368
    %s370 = sphi 0, %s368
    %s371 = sphi 0, %s370
    %s385 = sphi 0, %s371
    %s389 = sphi 0, %s389
    %s391 = sphi 0, %s389
    %s392 = sphi 0, %s391
    %s406 = sphi 0, %s392
    %s410 = sphi 0, %s410
    %s412 = sphi 0, %s410
    %s413 = sphi 0, %s412
    %s427 = sphi 0, %s413
    %s431 = sphi 0, %s431
    %s433 = sphi 0, %s431
    %s434 = sphi 0, %s433
    %s448 = sphi 0, %s434
    %s452 = sphi 0, %s452
    %s454 = sphi 0, %s452
    %s455 = sphi 0, %s454
    %s469 = sphi 0, %s455
    %s473 = sphi 0, %s473
    %s475 = sphi 0, %s473
    %s476 = sphi 0, %s475
    %s490 = sphi 0, %s476
    %s494 = sphi 0, %s494
    %s496 = sphi 0, %s494
    %s497 = sphi 0, %s496
    %s511 = sphi 0, %s497
    %s515 = sphi 0, %s515
    %s517 = sphi 0, %s515
    %s518 = sphi 0, %s517
    %s532 = sphi 0, %s518
    %s536 = sphi 0, %s536
    %s538 = sphi 0, %s536
    %s539 = sphi 0, %s538
    %s553 = sphi 0, %s539
    %s559 = sphi 0, %s561
    %s562 = sphi 0, %s559
    %s563 = sphi 0, %s562
    %s579 = sphi 0, %s563
  $region4: #{sentence_transformer_forward.13} parent=0 // loop_header_branch
    %33 = sbr.rel (%p31) target = $region8
  $region5: #{sentence_transformer_forward.13} parent=0 // loop_body
    %s35 = ssub.s32 %s30, 1
    %s36 = ssub.s32 %s30, 2
    %s37 = sadd.s32 %s30, 1
    %s38 = ssub.s32 %s30, %s37
    %p39 = scmp.eq.s32.totalorder %s38, 0
    %s41 = sadd.s32 %s40, 1
    %s42 = scalar_select %p39, %s40, %s41
    %p45 = pneg %p39
    %p46 = scmp.eq.s32.totalorder %s30, 1
    %p47 = por %p45, %p46
    %p48 = scmp.ne.s32.totalorder %s40, %s43
    %p49 = scmp.eq.s32.totalorder %s30, 0
    %p50 = por %p48, %p49
    %p51 = scmp.ne.s32.totalorder %s40, %s43
    %p52 = scmp.eq.s32.totalorder %s35, 1
    %p53 = por %p51, %p52
    %p54 = scmp.ne.s32.totalorder %s43, %s44
    %p55 = scmp.eq.s32.totalorder %s35, 0
    %p56 = por %p54, %p55
    %p57 = scmp.ne.s32.totalorder %s43, %s44
    %p58 = scmp.eq.s32.totalorder %s36, 1
    %p59 = por %p57, %p58
    %p61 = scmp.ne.s32.totalorder %s44, %s60
    %p62 = scmp.eq.s32.totalorder %s36, 0
    %p63 = por %p61, %p62
    %s64 = ssub.s32 %s30, %s37
    %p65 = scmp.eq.s32.totalorder %s64, 0
    %s67 = sadd.s32 %s66, 1
    %s68 = scalar_select %p65, %s66, %s67
    %p71 = pneg %p65
    %p72 = scmp.eq.s32.totalorder %s30, 1
    %p73 = por %p71, %p72
    %p74 = scmp.ne.s32.totalorder %s66, %s69
    %p75 = scmp.eq.s32.totalorder %s30, 0
    %p76 = por %p74, %p75
    %p77 = scmp.ne.s32.totalorder %s66, %s69
    %p78 = scmp.eq.s32.totalorder %s35, 1
    %p79 = por %p77, %p78
    %p80 = scmp.ne.s32.totalorder %s69, %s70
    %p81 = scmp.eq.s32.totalorder %s35, 0
    %p82 = por %p80, %p81
    %p83 = scmp.ne.s32.totalorder %s69, %s70
    %p84 = scmp.eq.s32.totalorder %s36, 1
    %p85 = por %p83, %p84
    %p87 = scmp.ne.s32.totalorder %s70, %s86
    %p88 = scmp.eq.s32.totalorder %s36, 0
    %p89 = por %p87, %p88
    %s91 = sadd.s32 %s90, 1
    %p94 = scmp.eq.s32.totalorder %s30, 1
    %p95 = scmp.ne.s32.totalorder %s90, %s92
    %p96 = scmp.eq.s32.totalorder %s30, 0
    %p97 = por %p95, %p96
    %p98 = scmp.ne.s32.totalorder %s90, %s92
    %p99 = scmp.eq.s32.totalorder %s35, 1
    %p100 = por %p98, %p99
    %p101 = scmp.ne.s32.totalorder %s92, %s93
    %p102 = scmp.eq.s32.totalorder %s35, 0
    %p103 = por %p101, %p102
    %p104 = scmp.ne.s32.totalorder %s92, %s93
    %p105 = scmp.eq.s32.totalorder %s36, 1
    %p106 = por %p104, %p105
    %p108 = scmp.ne.s32.totalorder %s93, %s107
    %p109 = scmp.eq.s32.totalorder %s36, 0
    %p110 = por %p108, %p109
    %s111 = ssub.s32 %s30, %s37
    %p112 = scmp.eq.s32.totalorder %s111, 0
    %s114 = sadd.s32 %s113, 1
    %s115 = scalar_select %p112, %s113, %s114
    %p118 = pneg %p112
    %p119 = scmp.eq.s32.totalorder %s30, 1
    %p120 = por %p118, %p119
    %p121 = scmp.ne.s32.totalorder %s113, %s116
    %p122 = scmp.eq.s32.totalorder %s30, 0
    %p123 = por %p121, %p122
    %p124 = scmp.ne.s32.totalorder %s113, %s116
    %p125 = scmp.eq.s32.totalorder %s35, 1
    %p126 = por %p124, %p125
    %p127 = scmp.ne.s32.totalorder %s116, %s117
    %p128 = scmp.eq.s32.totalorder %s35, 0
    %p129 = por %p127, %p128
    %p130 = scmp.ne.s32.totalorder %s116, %s117
    %p131 = scmp.eq.s32.totalorder %s36, 1
    %p132 = por %p130, %p131
    %p134 = scmp.ne.s32.totalorder %s117, %s133
    %p135 = scmp.eq.s32.totalorder %s36, 0
    %p136 = por %p134, %p135
    %s138 = sadd.s32 %s137, 1
    %p141 = scmp.eq.s32.totalorder %s30, 1
    %p142 = scmp.ne.s32.totalorder %s137, %s139
    %p143 = scmp.eq.s32.totalorder %s30, 0
    %p144 = por %p142, %p143
    %p145 = scmp.ne.s32.totalorder %s137, %s139
    %p146 = scmp.eq.s32.totalorder %s35, 1
    %p147 = por %p145, %p146
    %p148 = scmp.ne.s32.totalorder %s139, %s140
    %p149 = scmp.eq.s32.totalorder %s35, 0
    %p150 = por %p148, %p149
    %p151 = scmp.ne.s32.totalorder %s139, %s140
    %p152 = scmp.eq.s32.totalorder %s36, 1
    %p153 = por %p151, %p152
    %p155 = scmp.ne.s32.totalorder %s140, %s154
    %p156 = scmp.eq.s32.totalorder %s36, 0
    %p157 = por %p155, %p156
    %s159 = sadd.s32 %s158, 1
    %p162 = scmp.eq.s32.totalorder %s30, 1
    %p163 = scmp.ne.s32.totalorder %s158, %s160
    %p164 = scmp.eq.s32.totalorder %s30, 0
    %p165 = por %p163, %p164
    %p166 = scmp.ne.s32.totalorder %s158, %s160
    %p167 = scmp.eq.s32.totalorder %s35, 1
    %p168 = por %p166, %p167
    %p169 = scmp.ne.s32.totalorder %s160, %s161
    %p170 = scmp.eq.s32.totalorder %s35, 0
    %p171 = por %p169, %p170
    %p172 = scmp.ne.s32.totalorder %s160, %s161
    %p173 = scmp.eq.s32.totalorder %s36, 1
    %p174 = por %p172, %p173
    %p176 = scmp.ne.s32.totalorder %s161, %s175
    %p177 = scmp.eq.s32.totalorder %s36, 0
    %p178 = por %p176, %p177
    %s180 = sadd.s32 %s179, 1
    %p183 = scmp.eq.s32.totalorder %s30, 1
    %p184 = scmp.ne.s32.totalorder %s179, %s181
    %p185 = scmp.eq.s32.totalorder %s30, 0
    %p186 = por %p184, %p185
    %p187 = scmp.ne.s32.totalorder %s179, %s181
    %p188 = scmp.eq.s32.totalorder %s35, 1
    %p189 = por %p187, %p188
    %p190 = scmp.ne.s32.totalorder %s181, %s182
    %p191 = scmp.eq.s32.totalorder %s35, 0
    %p192 = por %p190, %p191
    %p193 = scmp.ne.s32.totalorder %s181, %s182
    %p194 = scmp.eq.s32.totalorder %s36, 1
    %p195 = por %p193, %p194
    %p197 = scmp.ne.s32.totalorder %s182, %s196
    %p198 = scmp.eq.s32.totalorder %s36, 0
    %p199 = por %p197, %p198
    %s201 = sadd.s32 %s200, 1
    %p204 = scmp.eq.s32.totalorder %s30, 1
    %p205 = scmp.ne.s32.totalorder %s200, %s202
    %p206 = scmp.eq.s32.totalorder %s30, 0
    %p207 = por %p205, %p206
    %p208 = scmp.ne.s32.totalorder %s200, %s202
    %p209 = scmp.eq.s32.totalorder %s35, 1
    %p210 = por %p208, %p209
    %p211 = scmp.ne.s32.totalorder %s202, %s203
    %p212 = scmp.eq.s32.totalorder %s35, 0
    %p213 = por %p211, %p212
    %p214 = scmp.ne.s32.totalorder %s202, %s203
    %p215 = scmp.eq.s32.totalorder %s36, 1
    %p216 = por %p214, %p215
    %p218 = scmp.ne.s32.totalorder %s203, %s217
    %p219 = scmp.eq.s32.totalorder %s36, 0
    %p220 = por %p218, %p219
    %s222 = sadd.s32 %s221, 1
    %p225 = scmp.eq.s32.totalorder %s30, 1
    %p226 = scmp.ne.s32.totalorder %s221, %s223
    %p227 = scmp.eq.s32.totalorder %s30, 0
    %p228 = por %p226, %p227
    %p229 = scmp.ne.s32.totalorder %s221, %s223
    %p230 = scmp.eq.s32.totalorder %s35, 1
    %p231 = por %p229, %p230
    %p232 = scmp.ne.s32.totalorder %s223, %s224
    %p233 = scmp.eq.s32.totalorder %s35, 0
    %p234 = por %p232, %p233
    %p235 = scmp.ne.s32.totalorder %s223, %s224
    %p236 = scmp.eq.s32.totalorder %s36, 1
    %p237 = por %p235, %p236
    %p239 = scmp.ne.s32.totalorder %s224, %s238
    %p240 = scmp.eq.s32.totalorder %s36, 0
    %p241 = por %p239, %p240
    %s243 = sadd.s32 %s242, 1
    %p246 = scmp.eq.s32.totalorder %s30, 1
    %p247 = scmp.ne.s32.totalorder %s242, %s244
    %p248 = scmp.eq.s32.totalorder %s30, 0
    %p249 = por %p247, %p248
    %p250 = scmp.ne.s32.totalorder %s242, %s244
    %p251 = scmp.eq.s32.totalorder %s35, 1
    %p252 = por %p250, %p251
    %p253 = scmp.ne.s32.totalorder %s244, %s245
    %p254 = scmp.eq.s32.totalorder %s35, 0
    %p255 = por %p253, %p254
    %p256 = scmp.ne.s32.totalorder %s244, %s245
    %p257 = scmp.eq.s32.totalorder %s36, 1
    %p258 = por %p256, %p257
    %p260 = scmp.ne.s32.totalorder %s245, %s259
    %p261 = scmp.eq.s32.totalorder %s36, 0
    %p262 = por %p260, %p261
    %s264 = sadd.s32 %s263, 1
    %p267 = scmp.eq.s32.totalorder %s30, 1
    %p268 = scmp.ne.s32.totalorder %s263, %s265
    %p269 = scmp.eq.s32.totalorder %s30, 0
    %p270 = por %p268, %p269
    %p271 = scmp.ne.s32.totalorder %s263, %s265
    %p272 = scmp.eq.s32.totalorder %s35, 1
    %p273 = por %p271, %p272
    %p274 = scmp.ne.s32.totalorder %s265, %s266
    %p275 = scmp.eq.s32.totalorder %s35, 0
    %p276 = por %p274, %p275
    %p277 = scmp.ne.s32.totalorder %s265, %s266
    %p278 = scmp.eq.s32.totalorder %s36, 1
    %p279 = por %p277, %p278
    %p281 = scmp.ne.s32.totalorder %s266, %s280
    %p282 = scmp.eq.s32.totalorder %s36, 0
    %p283 = por %p281, %p282
    %s285 = sadd.s32 %s284, 1
    %p288 = scmp.eq.s32.totalorder %s30, 1
    %p289 = scmp.ne.s32.totalorder %s284, %s286
    %p290 = scmp.eq.s32.totalorder %s30, 0
    %p291 = por %p289, %p290
    %p292 = scmp.ne.s32.totalorder %s284, %s286
    %p293 = scmp.eq.s32.totalorder %s35, 1
    %p294 = por %p292, %p293
    %p295 = scmp.ne.s32.totalorder %s286, %s287
    %p296 = scmp.eq.s32.totalorder %s35, 0
    %p297 = por %p295, %p296
    %p298 = scmp.ne.s32.totalorder %s286, %s287
    %p299 = scmp.eq.s32.totalorder %s36, 1
    %p300 = por %p298, %p299
    %p302 = scmp.ne.s32.totalorder %s287, %s301
    %p303 = scmp.eq.s32.totalorder %s36, 0
    %p304 = por %p302, %p303
    %s306 = sadd.s32 %s305, 1
    %p309 = scmp.eq.s32.totalorder %s30, 1
    %p310 = scmp.ne.s32.totalorder %s305, %s307
    %p311 = scmp.eq.s32.totalorder %s30, 0
    %p312 = por %p310, %p311
    %p313 = scmp.ne.s32.totalorder %s305, %s307
    %p314 = scmp.eq.s32.totalorder %s35, 1
    %p315 = por %p313, %p314
    %p316 = scmp.ne.s32.totalorder %s307, %s308
    %p317 = scmp.eq.s32.totalorder %s35, 0
    %p318 = por %p316, %p317
    %p319 = scmp.ne.s32.totalorder %s307, %s308
    %p320 = scmp.eq.s32.totalorder %s36, 1
    %p321 = por %p319, %p320
    %p323 = scmp.ne.s32.totalorder %s308, %s322
    %p324 = scmp.eq.s32.totalorder %s36, 0
    %p325 = por %p323, %p324
    %s327 = sadd.s32 %s326, 1
    %p330 = scmp.eq.s32.totalorder %s30, 1
    %p331 = scmp.ne.s32.totalorder %s326, %s328
    %p332 = scmp.eq.s32.totalorder %s30, 0
    %p333 = por %p331, %p332
    %p334 = scmp.ne.s32.totalorder %s326, %s328
    %p335 = scmp.eq.s32.totalorder %s35, 1
    %p336 = por %p334, %p335
    %p337 = scmp.ne.s32.totalorder %s328, %s329
    %p338 = scmp.eq.s32.totalorder %s35, 0
    %p339 = por %p337, %p338
    %p340 = scmp.ne.s32.totalorder %s328, %s329
    %p341 = scmp.eq.s32.totalorder %s36, 1
    %p342 = por %p340, %p341
    %p344 = scmp.ne.s32.totalorder %s329, %s343
    %p345 = scmp.eq.s32.totalorder %s36, 0
    %p346 = por %p344, %p345
    %s348 = sadd.s32 %s347, 1
    %p351 = scmp.eq.s32.totalorder %s30, 1
    %p352 = scmp.ne.s32.totalorder %s347, %s349
    %p353 = scmp.eq.s32.totalorder %s30, 0
    %p354 = por %p352, %p353
    %p355 = scmp.ne.s32.totalorder %s347, %s349
    %p356 = scmp.eq.s32.totalorder %s35, 1
    %p357 = por %p355, %p356
    %p358 = scmp.ne.s32.totalorder %s349, %s350
    %p359 = scmp.eq.s32.totalorder %s35, 0
    %p360 = por %p358, %p359
    %p361 = scmp.ne.s32.totalorder %s349, %s350
    %p362 = scmp.eq.s32.totalorder %s36, 1
    %p363 = por %p361, %p362
    %p365 = scmp.ne.s32.totalorder %s350, %s364
    %p366 = scmp.eq.s32.totalorder %s36, 0
    %p367 = por %p365, %p366
    %s369 = sadd.s32 %s368, 1
    %p372 = scmp.eq.s32.totalorder %s30, 1
    %p373 = scmp.ne.s32.totalorder %s368, %s370
    %p374 = scmp.eq.s32.totalorder %s30, 0
    %p375 = por %p373, %p374
    %p376 = scmp.ne.s32.totalorder %s368, %s370
    %p377 = scmp.eq.s32.totalorder %s35, 1
    %p378 = por %p376, %p377
    %p379 = scmp.ne.s32.totalorder %s370, %s371
    %p380 = scmp.eq.s32.totalorder %s35, 0
    %p381 = por %p379, %p380
    %p382 = scmp.ne.s32.totalorder %s370, %s371
    %p383 = scmp.eq.s32.totalorder %s36, 1
    %p384 = por %p382, %p383
    %p386 = scmp.ne.s32.totalorder %s371, %s385
    %p387 = scmp.eq.s32.totalorder %s36, 0
    %p388 = por %p386, %p387
    %s390 = sadd.s32 %s389, 1
    %p393 = scmp.eq.s32.totalorder %s30, 1
    %p394 = scmp.ne.s32.totalorder %s389, %s391
    %p395 = scmp.eq.s32.totalorder %s30, 0
    %p396 = por %p394, %p395
    %p397 = scmp.ne.s32.totalorder %s389, %s391
    %p398 = scmp.eq.s32.totalorder %s35, 1
    %p399 = por %p397, %p398
    %p400 = scmp.ne.s32.totalorder %s391, %s392
    %p401 = scmp.eq.s32.totalorder %s35, 0
    %p402 = por %p400, %p401
    %p403 = scmp.ne.s32.totalorder %s391, %s392
    %p404 = scmp.eq.s32.totalorder %s36, 1
    %p405 = por %p403, %p404
    %p407 = scmp.ne.s32.totalorder %s392, %s406
    %p408 = scmp.eq.s32.totalorder %s36, 0
    %p409 = por %p407, %p408
    %s411 = sadd.s32 %s410, 1
    %p414 = scmp.eq.s32.totalorder %s30, 1
    %p415 = scmp.ne.s32.totalorder %s410, %s412
    %p416 = scmp.eq.s32.totalorder %s30, 0
    %p417 = por %p415, %p416
    %p418 = scmp.ne.s32.totalorder %s410, %s412
    %p419 = scmp.eq.s32.totalorder %s35, 1
    %p420 = por %p418, %p419
    %p421 = scmp.ne.s32.totalorder %s412, %s413
    %p422 = scmp.eq.s32.totalorder %s35, 0
    %p423 = por %p421, %p422
    %p424 = scmp.ne.s32.totalorder %s412, %s413
    %p425 = scmp.eq.s32.totalorder %s36, 1
    %p426 = por %p424, %p425
    %p428 = scmp.ne.s32.totalorder %s413, %s427
    %p429 = scmp.eq.s32.totalorder %s36, 0
    %p430 = por %p428, %p429
    %s432 = sadd.s32 %s431, 1
    %p435 = scmp.eq.s32.totalorder %s30, 1
    %p436 = scmp.ne.s32.totalorder %s431, %s433
    %p437 = scmp.eq.s32.totalorder %s30, 0
    %p438 = por %p436, %p437
    %p439 = scmp.ne.s32.totalorder %s431, %s433
    %p440 = scmp.eq.s32.totalorder %s35, 1
    %p441 = por %p439, %p440
    %p442 = scmp.ne.s32.totalorder %s433, %s434
    %p443 = scmp.eq.s32.totalorder %s35, 0
    %p444 = por %p442, %p443
    %p445 = scmp.ne.s32.totalorder %s433, %s434
    %p446 = scmp.eq.s32.totalorder %s36, 1
    %p447 = por %p445, %p446
    %p449 = scmp.ne.s32.totalorder %s434, %s448
    %p450 = scmp.eq.s32.totalorder %s36, 0
    %p451 = por %p449, %p450
    %s453 = sadd.s32 %s452, 1
    %p456 = scmp.eq.s32.totalorder %s30, 1
    %p457 = scmp.ne.s32.totalorder %s452, %s454
    %p458 = scmp.eq.s32.totalorder %s30, 0
    %p459 = por %p457, %p458
    %p460 = scmp.ne.s32.totalorder %s452, %s454
    %p461 = scmp.eq.s32.totalorder %s35, 1
    %p462 = por %p460, %p461
    %p463 = scmp.ne.s32.totalorder %s454, %s455
    %p464 = scmp.eq.s32.totalorder %s35, 0
    %p465 = por %p463, %p464
    %p466 = scmp.ne.s32.totalorder %s454, %s455
    %p467 = scmp.eq.s32.totalorder %s36, 1
    %p468 = por %p466, %p467
    %p470 = scmp.ne.s32.totalorder %s455, %s469
    %p471 = scmp.eq.s32.totalorder %s36, 0
    %p472 = por %p470, %p471
    %s474 = sadd.s32 %s473, 1
    %p477 = scmp.eq.s32.totalorder %s30, 1
    %p478 = scmp.ne.s32.totalorder %s473, %s475
    %p479 = scmp.eq.s32.totalorder %s30, 0
    %p480 = por %p478, %p479
    %p481 = scmp.ne.s32.totalorder %s473, %s475
    %p482 = scmp.eq.s32.totalorder %s35, 1
    %p483 = por %p481, %p482
    %p484 = scmp.ne.s32.totalorder %s475, %s476
    %p485 = scmp.eq.s32.totalorder %s35, 0
    %p486 = por %p484, %p485
    %p487 = scmp.ne.s32.totalorder %s475, %s476
    %p488 = scmp.eq.s32.totalorder %s36, 1
    %p489 = por %p487, %p488
    %p491 = scmp.ne.s32.totalorder %s476, %s490
    %p492 = scmp.eq.s32.totalorder %s36, 0
    %p493 = por %p491, %p492
    %s495 = sadd.s32 %s494, 1
    %p498 = scmp.eq.s32.totalorder %s30, 1
    %p499 = scmp.ne.s32.totalorder %s494, %s496
    %p500 = scmp.eq.s32.totalorder %s30, 0
    %p501 = por %p499, %p500
    %p502 = scmp.ne.s32.totalorder %s494, %s496
    %p503 = scmp.eq.s32.totalorder %s35, 1
    %p504 = por %p502, %p503
    %p505 = scmp.ne.s32.totalorder %s496, %s497
    %p506 = scmp.eq.s32.totalorder %s35, 0
    %p507 = por %p505, %p506
    %p508 = scmp.ne.s32.totalorder %s496, %s497
    %p509 = scmp.eq.s32.totalorder %s36, 1
    %p510 = por %p508, %p509
    %p512 = scmp.ne.s32.totalorder %s497, %s511
    %p513 = scmp.eq.s32.totalorder %s36, 0
    %p514 = por %p512, %p513
    %s516 = sadd.s32 %s515, 1
    %p519 = scmp.eq.s32.totalorder %s30, 1
    %p520 = scmp.ne.s32.totalorder %s515, %s517
    %p521 = scmp.eq.s32.totalorder %s30, 0
    %p522 = por %p520, %p521
    %p523 = scmp.ne.s32.totalorder %s515, %s517
    %p524 = scmp.eq.s32.totalorder %s35, 1
    %p525 = por %p523, %p524
    %p526 = scmp.ne.s32.totalorder %s517, %s518
    %p527 = scmp.eq.s32.totalorder %s35, 0
    %p528 = por %p526, %p527
    %p529 = scmp.ne.s32.totalorder %s517, %s518
    %p530 = scmp.eq.s32.totalorder %s36, 1
    %p531 = por %p529, %p530
    %p533 = scmp.ne.s32.totalorder %s518, %s532
    %p534 = scmp.eq.s32.totalorder %s36, 0
    %p535 = por %p533, %p534
    %s537 = sadd.s32 %s536, 1
    %p540 = scmp.eq.s32.totalorder %s30, 1
    %p541 = scmp.ne.s32.totalorder %s536, %s538
    %p542 = scmp.eq.s32.totalorder %s30, 0
    %p543 = por %p541, %p542
    %p544 = scmp.ne.s32.totalorder %s536, %s538
    %p545 = scmp.eq.s32.totalorder %s35, 1
    %p546 = por %p544, %p545
    %p547 = scmp.ne.s32.totalorder %s538, %s539
    %p548 = scmp.eq.s32.totalorder %s35, 0
    %p549 = por %p547, %p548
    %p550 = scmp.ne.s32.totalorder %s538, %s539
    %p551 = scmp.eq.s32.totalorder %s36, 1
    %p552 = por %p550, %p551
    %p554 = scmp.ne.s32.totalorder %s539, %s553
    %p555 = scmp.eq.s32.totalorder %s36, 0
    %p556 = por %p554, %p555
    %s557 = ssub.s32 %s30, %s37
    %p558 = scmp.eq.s32.totalorder %s557, 0
    %s560 = sadd.s32 %s559, 1
    %s561 = scalar_select %p558, %s559, %s560
    %p564 = pneg %p558
    %p565 = scmp.eq.s32.totalorder %s30, 1
    %p566 = por %p564, %p565
    %p567 = scmp.ne.s32.totalorder %s559, %s562
    %p568 = scmp.eq.s32.totalorder %s30, 0
    %p569 = por %p567, %p568
    %p570 = scmp.ne.s32.totalorder %s559, %s562
    %p571 = scmp.eq.s32.totalorder %s35, 1
    %p572 = por %p570, %p571
    %p573 = scmp.ne.s32.totalorder %s562, %s563
    %p574 = scmp.eq.s32.totalorder %s35, 0
    %p575 = por %p573, %p574
    %p576 = scmp.ne.s32.totalorder %s562, %s563
    %p577 = scmp.eq.s32.totalorder %s36, 1
    %p578 = por %p576, %p577
    %p580 = scmp.ne.s32.totalorder %s563, %s579
    %p581 = scmp.eq.s32.totalorder %s36, 0
    %p582 = por %p580, %p581
    %p583 = scmp.le.s32.totalorder 1, %s30
    %p584 = scmp.lt.s32.totalorder %s30, 3
    %p585 = pnand %p583, %p584
    %p586 = pneg %p585
    // Predicated region
    $region9: #{sentence_transformer_forward.13} parent=5 // pred_check
      _
    $region10: #{sentence_transformer_forward.13} parent=5 // pred_check_branch
      %588 = sbr.rel (%p585) target = $region12
    $region11: #{sentence_transformer_forward.13} parent=5 // pred_region
      %s589 = ssub.s32 %s30, 1
      // Predicated region
      $region13: #{sentence_transformer_forward.13} parent=11 // pred_check
        %p590 = pneg %p103
      $region14: #{sentence_transformer_forward.13} parent=11 // pred_check_branch
        %592 = sbr.rel (%p590) target = $region16
      $region15: #{sentence_transformer_forward.13} parent=11 // pred_region
        _
      $region16: #{sentence_transformer_forward.13} parent=11 // pred_fallthru
        _
      // Predicated region
      $region17: #{sentence_transformer_forward.13} parent=11 // pred_check
        %p593 = pneg %p150
      $region18: #{sentence_transformer_forward.13} parent=11 // pred_check_branch
        %595 = sbr.rel (%p593) target = $region20
      $region19: #{sentence_transformer_forward.13} parent=11 // pred_region
        _
      $region20: #{sentence_transformer_forward.13} parent=11 // pred_fallthru
        _
      // Predicated region
      $region21: #{sentence_transformer_forward.13} parent=11 // pred_check
        %p596 = pneg %p171
      $region22: #{sentence_transformer_forward.13} parent=11 // pred_check_branch
        %598 = sbr.rel (%p596) target = $region24
      $region23: #{sentence_transformer_forward.13} parent=11 // pred_region
        _
      $region24: #{sentence_transformer_forward.13} parent=11 // pred_fallthru
        _
      // Predicated region
      $region25: #{sentence_transformer_forward.13} parent=11 // pred_check
        %p599 = pneg %p192
      $region26: #{sentence_transformer_forward.13} parent=11 // pred_check_branch
        %601 = sbr.rel (%p599) target = $region28
      $region27: #{sentence_transformer_forward.13} parent=11 // pred_region
        _
      $region28: #{sentence_transformer_forward.13} parent=11 // pred_fallthru
        _
      // Predicated region
      $region29: #{sentence_transformer_forward.13} parent=11 // pred_check
        %p602 = pneg %p213
      $region30: #{sentence_transformer_forward.13} parent=11 // pred_check_branch
        %604 = sbr.rel (%p602) target = $region32
      $region31: #{sentence_transformer_forward.13} parent=11 // pred_region
        _
      $region32: #{sentence_transformer_forward.13} parent=11 // pred_fallthru
        _
      // Predicated region
      $region33: #{sentence_transformer_forward.13} parent=11 // pred_check
        %p605 = pneg %p234
      $region34: #{sentence_transformer_forward.13} parent=11 // pred_check_branch
        %607 = sbr.rel (%p605) target = $region36
      $region35: #{sentence_transformer_forward.13} parent=11 // pred_region
        _
      $region36: #{sentence_transformer_forward.13} parent=11 // pred_fallthru
        _
      // Predicated region
      $region37: #{sentence_transformer_forward.13} parent=11 // pred_check
        %p608 = pneg %p255
      $region38: #{sentence_transformer_forward.13} parent=11 // pred_check_branch
        %610 = sbr.rel (%p608) target = $region40
      $region39: #{sentence_transformer_forward.13} parent=11 // pred_region
        _
      $region40: #{sentence_transformer_forward.13} parent=11 // pred_fallthru
        _
      // Predicated region
      $region41: #{sentence_transformer_forward.13} parent=11 // pred_check
        %p611 = pneg %p276
      $region42: #{sentence_transformer_forward.13} parent=11 // pred_check_branch
        %613 = sbr.rel (%p611) target = $region44
      $region43: #{sentence_transformer_forward.13} parent=11 // pred_region
        _
      $region44: #{sentence_transformer_forward.13} parent=11 // pred_fallthru
        _
      // Predicated region
      $region45: #{sentence_transformer_forward.13} parent=11 // pred_check
        %p614 = pneg %p297
      $region46: #{sentence_transformer_forward.13} parent=11 // pred_check_branch
        %616 = sbr.rel (%p614) target = $region48
      $region47: #{sentence_transformer_forward.13} parent=11 // pred_region
        _
      $region48: #{sentence_transformer_forward.13} parent=11 // pred_fallthru
        _
      // Predicated region
      $region49: #{sentence_transformer_forward.13} parent=11 // pred_check
        %p617 = pneg %p318
      $region50: #{sentence_transformer_forward.13} parent=11 // pred_check_branch
        %619 = sbr.rel (%p617) target = $region52
      $region51: #{sentence_transformer_forward.13} parent=11 // pred_region
        _
      $region52: #{sentence_transformer_forward.13} parent=11 // pred_fallthru
        _
      // Predicated region
      $region53: #{sentence_transformer_forward.13} parent=11 // pred_check
        %p620 = pneg %p339
      $region54: #{sentence_transformer_forward.13} parent=11 // pred_check_branch
        %622 = sbr.rel (%p620) target = $region56
      $region55: #{sentence_transformer_forward.13} parent=11 // pred_region
        _
      $region56: #{sentence_transformer_forward.13} parent=11 // pred_fallthru
        _
      // Predicated region
      $region57: #{sentence_transformer_forward.13} parent=11 // pred_check
        %p623 = pneg %p360
      $region58: #{sentence_transformer_forward.13} parent=11 // pred_check_branch
        %625 = sbr.rel (%p623) target = $region60
      $region59: #{sentence_transformer_forward.13} parent=11 // pred_region
        _
      $region60: #{sentence_transformer_forward.13} parent=11 // pred_fallthru
        _
      // Predicated region
      $region61: #{sentence_transformer_forward.13} parent=11 // pred_check
        %p626 = pneg %p381
      $region62: #{sentence_transformer_forward.13} parent=11 // pred_check_branch
        %628 = sbr.rel (%p626) target = $region64
      $region63: #{sentence_transformer_forward.13} parent=11 // pred_region
        _
      $region64: #{sentence_transformer_forward.13} parent=11 // pred_fallthru
        _
      // Predicated region
      $region65: #{sentence_transformer_forward.13} parent=11 // pred_check
        %p629 = pneg %p402
      $region66: #{sentence_transformer_forward.13} parent=11 // pred_check_branch
        %631 = sbr.rel (%p629) target = $region68
      $region67: #{sentence_transformer_forward.13} parent=11 // pred_region
        _
      $region68: #{sentence_transformer_forward.13} parent=11 // pred_fallthru
        _
      // Predicated region
      $region69: #{sentence_transformer_forward.13} parent=11 // pred_check
        %p632 = pneg %p423
      $region70: #{sentence_transformer_forward.13} parent=11 // pred_check_branch
        %634 = sbr.rel (%p632) target = $region72
      $region71: #{sentence_transformer_forward.13} parent=11 // pred_region
        _
      $region72: #{sentence_transformer_forward.13} parent=11 // pred_fallthru
        _
      // Predicated region
      $region73: #{sentence_transformer_forward.13} parent=11 // pred_check
        %p635 = pneg %p444
      $region74: #{sentence_transformer_forward.13} parent=11 // pred_check_branch
        %637 = sbr.rel (%p635) target = $region76
      $region75: #{sentence_transformer_forward.13} parent=11 // pred_region
        _
      $region76: #{sentence_transformer_forward.13} parent=11 // pred_fallthru
        _
      // Predicated region
      $region77: #{sentence_transformer_forward.13} parent=11 // pred_check
        %p638 = pneg %p465
      $region78: #{sentence_transformer_forward.13} parent=11 // pred_check_branch
        %640 = sbr.rel (%p638) target = $region80
      $region79: #{sentence_transformer_forward.13} parent=11 // pred_region
        _
      $region80: #{sentence_transformer_forward.13} parent=11 // pred_fallthru
        _
      // Predicated region
      $region81: #{sentence_transformer_forward.13} parent=11 // pred_check
        %p641 = pneg %p486
      $region82: #{sentence_transformer_forward.13} parent=11 // pred_check_branch
        %643 = sbr.rel (%p641) target = $region84
      $region83: #{sentence_transformer_forward.13} parent=11 // pred_region
        _
      $region84: #{sentence_transformer_forward.13} parent=11 // pred_fallthru
        _
      // Predicated region
      $region85: #{sentence_transformer_forward.13} parent=11 // pred_check
        %p644 = pneg %p507
      $region86: #{sentence_transformer_forward.13} parent=11 // pred_check_branch
        %646 = sbr.rel (%p644) target = $region88
      $region87: #{sentence_transformer_forward.13} parent=11 // pred_region
        _
      $region88: #{sentence_transformer_forward.13} parent=11 // pred_fallthru
        _
      // Predicated region
      $region89: #{sentence_transformer_forward.13} parent=11 // pred_check
        %p647 = pneg %p528
      $region90: #{sentence_transformer_forward.13} parent=11 // pred_check_branch
        %649 = sbr.rel (%p647) target = $region92
      $region91: #{sentence_transformer_forward.13} parent=11 // pred_region
        _
      $region92: #{sentence_transformer_forward.13} parent=11 // pred_fallthru
        _
      // Predicated region
      $region93: #{sentence_transformer_forward.13} parent=11 // pred_check
        %p650 = pneg %p549
      $region94: #{sentence_transformer_forward.13} parent=11 // pred_check_branch
        %652 = sbr.rel (%p650) target = $region96
      $region95: #{sentence_transformer_forward.13} parent=11 // pred_region
        _
      $region96: #{sentence_transformer_forward.13} parent=11 // pred_fallthru
        _
    $region12: #{sentence_transformer_forward.13} parent=5 // pred_fallthru
      _
    %p653 = scmp.lt.s32.totalorder %s30, 2
    // Predicated region
    $region97: #{sentence_transformer_forward.13} parent=5 // pred_check
      %p654 = pneg %p653
    $region98: #{sentence_transformer_forward.13} parent=5 // pred_check_branch
      %656 = sbr.rel (%p654) target = $region100
    $region99: #{sentence_transformer_forward.13} parent=5 // pred_region
      // Predicated region
      $region101: #{sentence_transformer_forward.13} parent=99 // pred_check
        %p657 = pneg %p50
      $region102: #{sentence_transformer_forward.13} parent=99 // pred_check_branch
        %659 = sbr.rel (%p657) target = $region104
      $region103: #{sentence_transformer_forward.13} parent=99 // pred_region
        %p660 = scmp.lt.s32.totalorder %s30, 1
        %s661 = scalar_select %p660, %s30, 1
        %s662 = smul.addr %s661, 8
        %s663 = scalar_lea.vmem %s0, %s662
      $region104: #{sentence_transformer_forward.13} parent=99 // pred_fallthru
        _
      // Predicated region
      $region105: #{sentence_transformer_forward.13} parent=99 // pred_check
        %p664 = pneg %p76
      $region106: #{sentence_transformer_forward.13} parent=99 // pred_check_branch
        %666 = sbr.rel (%p664) target = $region108
      $region107: #{sentence_transformer_forward.13} parent=99 // pred_region
        %p667 = scmp.lt.s32.totalorder %s30, 1
        %s668 = scalar_select %p667, %s30, 1
        %s669 = smul.addr %s668, 8
        %s670 = scalar_lea.vmem %s1, %s669
      $region108: #{sentence_transformer_forward.13} parent=99 // pred_fallthru
        _
      // Predicated region
      $region109: #{sentence_transformer_forward.13} parent=99 // pred_check
        %p671 = pneg %p123
      $region110: #{sentence_transformer_forward.13} parent=99 // pred_check_branch
        %673 = sbr.rel (%p671) target = $region112
      $region111: #{sentence_transformer_forward.13} parent=99 // pred_region
        %p674 = scmp.lt.s32.totalorder %s30, 1
        %s675 = scalar_select %p674, %s30, 1
        %s676 = scalar_lea.vmem %s3, %s675
      $region112: #{sentence_transformer_forward.13} parent=99 // pred_fallthru
        _
    $region100: #{sentence_transformer_forward.13} parent=5 // pred_fallthru
      _
    %p677 = scmp.le.s32.totalorder 1, %s30
    %p678 = scmp.lt.s32.totalorder %s30, 3
    %p679 = pnand %p677, %p678
    %p680 = pneg %p679
    // Predicated region
    $region113: #{sentence_transformer_forward.13} parent=5 // pred_check
      _
    $region114: #{sentence_transformer_forward.13} parent=5 // pred_check_branch
      %682 = sbr.rel (%p679) target = $region116
    $region115: #{sentence_transformer_forward.13} parent=5 // pred_region
      %s683 = ssub.s32 %s30, 1
      %p684 = scmp.lt.s32.totalorder %s35, 1
      %s685 = scalar_select %p684, %s35, 1
      %s686 = smul.addr %s685, 8
      %s687 = scalar_lea.vmem %s0, %s686
      %p688 = pneg %p56
      %p689 = pneg %p53
      %p690 = scmp.lt.s32.totalorder %s35, 1
      %s691 = scalar_select %p690, %s35, 1
      %s692 = smul.addr %s691, 8
      %s693 = scalar_lea.vmem %s1, %s692
      %p694 = pneg %p82
      %p695 = pneg %p79
      %p696 = pneg %p103
      %p697 = pneg %p100
      %p698 = scmp.lt.s32.totalorder %s35, 1
      %s699 = scalar_select %p698, %s35, 1
      %s700 = scalar_lea.vmem %s3, %s699
      %p701 = pneg %p129
      %p702 = pneg %p126
      %p703 = pneg %p150
      %p704 = pneg %p147
      %p705 = pneg %p171
      %p706 = pneg %p168
      %p707 = pneg %p192
      %p708 = pneg %p189
      %p709 = pneg %p213
      %p710 = pneg %p210
      %p711 = pneg %p234
      %p712 = pneg %p231
      %p713 = pneg %p255
      %p714 = pneg %p252
      %p715 = pneg %p276
      %p716 = pneg %p273
      %p717 = pneg %p297
      %p718 = pneg %p294
      %p719 = pneg %p318
      %p720 = pneg %p315
      %p721 = pneg %p339
      %p722 = pneg %p336
      %p723 = pneg %p360
      %p724 = pneg %p357
      %p725 = pneg %p381
      %p726 = pneg %p378
      %p727 = pneg %p402
      %p728 = pneg %p399
      %p729 = pneg %p423
      %p730 = pneg %p420
      %p731 = pneg %p444
      %p732 = pneg %p441
      %p733 = pneg %p465
      %p734 = pneg %p462
      %p735 = pneg %p486
      %p736 = pneg %p483
      %p737 = pneg %p507
      %p738 = pneg %p504
      %p739 = pneg %p528
      %p740 = pneg %p525
      %p741 = pneg %p549
      %p742 = pneg %p546
      %p743 = pneg %p575
      %p744 = pneg %p572
      %p745 = scmp.lt.s32.totalorder %s35, 1
      %s746 = scalar_select %p745, %s35, 1
      %s747 = smul.addr %s746, 8
      %s748 = scalar_lea.vmem %s24, %s747
      %p749 = scmp.lt.s32.totalorder %s35, 1
      %s750 = scalar_select %p749, %s35, 1
      %s751 = smul.addr %s750, 8
      %s752 = scalar_lea.vmem %s0, %s751
      %p753 = scmp.lt.s32.totalorder %s35, 1
      %s754 = scalar_select %p753, %s35, 1
      %s755 = smul.addr %s754, 8
      %s756 = scalar_lea.vmem %s1, %s755
      %p757 = scmp.lt.s32.totalorder %s35, 1
      %s758 = scalar_select %p757, %s35, 1
      %s759 = scalar_lea.vmem %s3, %s758
      %p760 = scmp.lt.s32.totalorder %s35, 1
      %s761 = scalar_select %p760, %s35, 1
      %s762 = smul.addr %s761, 8
      %s763 = scalar_lea.vmem %s24, %s762
      %v764 = vld [vmem:[%s752] sm:$0xff]
      %v765 = vld [vmem:[%s756] sm:$0xff]
      %v766 = vld [vmem:[%s4] sm:$0xff]
      %v767 = vld [vmem:[%s4 + $0x8] sm:$0xff]
      %v768 = vld [vmem:[%s4 + $0x10] sm:$0xff]
      %v769 = vld [vmem:[%s4 + $0x18] sm:$0xff]
      %v770 = vld [vmem:[%s5] sm:$0x1]
      %v772 = vperm.slane %v770, 0
      %vm774 = vcmask 261120
      %v776 = vsel %vm774, %v764, 0
      %778 = vmatpush.msra.mxu0 0.0
      %779 = vmatpush.msra.mxu0 0.0
      %780 = vmatpush.msra.mxu0 0.0
      %781 = vmatpush.msra.mxu0 0.0
      %782 = vmatpush.msra.mxu0 0.0
      %783 = vmatpush.msra.mxu0 0.0
      %784 = vmatpush.msra.mxu0 0.0
      %785 = vmatpush.msra.mxu0 0.0
      %786 = vmatpush.msra.mxu0 0.0
      %787 = vmatpush.msra.mxu0 0.0
      %788 = vmatpush.msra.mxu0 0.0
      %789 = vmatpush.msra.mxu0 0.0
      %790 = vmatpush.msra.mxu0 %v769
      %791 = vmatpush.msra.mxu0 %v768
      %792 = vmatpush.msra.mxu0 %v767
      %793 = vmatpush.msra.mxu0 %v766
      %794 = vmatmul.f32.gmra.mxu0 %v776
      %v795 = vpop.f32.mrf.mxu0
      %v796 = vadd.f32 %v772, %v795
      %797 = vdwg.mxu0
      %v798 = vld [vmem:[%s2] sm:$0xff]
      %v799 = vld [vmem:[%s6] sm:$0xff]
      %v800 = vld [vmem:[%s6 + $0x8] sm:$0xff]
      %v801 = vld [vmem:[%s6 + $0x10] sm:$0xff]
      %v802 = vld [vmem:[%s6 + $0x18] sm:$0xff]
      %v803 = vld [vmem:[%s7] sm:$0x1]
      %805 = vrot.lane.b32.xlu0 %v796, 96
      %v806 = vpop.permute.xlu0 %805
      %vm807 = vcmask 64512
      %v808 = vsel %vm807, %v796, 0
      %v810 = vsel %vm807, %v806, 0
      %812 = vmatpush.xpose.msra.mxu0 0.0
      %813 = vmatpush.xpose.msra.mxu0 0.0
      %814 = vmatpush.xpose.msra.mxu0 0.0
      %815 = vmatpush.xpose.msra.mxu0 0.0
      %816 = vmatpush.xpose.msra.mxu0 0.0
      %817 = vmatpush.xpose.msra.mxu0 0.0
      %818 = vmatpush.xpose.msra.mxu0 0.0
      %819 = vmatpush.xpose.msra.mxu0 0.0
      %820 = vmatpush.xpose.msra.mxu0 0.0
      %821 = vmatpush.xpose.msra.mxu0 0.0
      %822 = vmatpush.xpose.msra.mxu0 0.0
      %823 = vmatpush.xpose.msra.mxu0 0.0
      %824 = vmatpush.xpose.msra.mxu0 0.0
      %825 = vmatpush.xpose.msra.mxu0 0.0
      %826 = vmatpush.xpose.msra.mxu0 0.0
      %827 = vmatpush.xpose.msra.mxu0 %v810
      %828 = vmatmul.f32.gmra.mxu0 %v808
      %v829 = vpop.f32.mrf.mxu0
      %v830 = vadd.f32 %v798, %v829
      %831 = vdwg.mxu0
      %v832 = vsel %vm807, %v830, -inf
      %833 = vmax.xlane.f32.xlu0 %v832
      %v834 = vpop.xlane.xlu0 %833
      %v835 = vsub.f32 %v830, %v834
      %v836 = vmul.f32 %v835, 1.442695
      %v837 = vpow.pop %v836
      %v838 = vsel %vm807, %v837, 0.0
      %839 = vadd.xlane.f32.xlu0 %v838
      %v840 = vpop.xlane.xlu0 %839
      %v841 = vrcp.pop %v840
      %v842 = vmul.f32 %v837, %v841
      %843 = vrot.lane.b32.xlu0 %v796, 64
      %v844 = vpop.permute.xlu0 %843
      %v847 = vsel %vm807, %v842, 0
      %849 = vmatpush.msra.mxu0 0.0
      %850 = vmatpush.msra.mxu0 0.0
      %851 = vmatpush.msra.mxu0 0.0
      %852 = vmatpush.msra.mxu0 0.0
      %853 = vmatpush.msra.mxu0 0.0
      %854 = vmatpush.msra.mxu0 0.0
      %855 = vmatpush.msra.mxu0 0.0
      %856 = vmatpush.msra.mxu0 0.0
      %857 = vmatpush.msra.mxu0 0.0
      %858 = vmatpush.msra.mxu0 0.0
      %859 = vmatpush.msra.mxu0 0.0
      %860 = vmatpush.msra.mxu0 0.0
      %861 = vmatpush.msra.mxu0 0.0
      %862 = vmatpush.msra.mxu0 0.0
      %863 = vmatpush.msra.mxu0 0.0
      %864 = vmatpush.msra.mxu0 %v844
      %865 = vmatmul.f32.gmra.mxu0 %v847
      %v866 = vpop.f32.mrf.mxu0
      %v867 = vadd.f32 0.0, %v866
      %868 = vdwg.mxu0
      %869 = vrot.lane.b32.xlu0 %v796, 120
      %v870 = vpop.permute.xlu0 %869
      %871 = vrot.lane.b32.xlu0 %v796, 88
      %v872 = vpop.permute.xlu0 %871
      %v873 = vsel %vm807, %v870, 0
      %v875 = vsel %vm807, %v872, 0
      %877 = vmatpush.xpose.msra.mxu0 0.0
      %878 = vmatpush.xpose.msra.mxu0 0.0
      %879 = vmatpush.xpose.msra.mxu0 0.0
      %880 = vmatpush.xpose.msra.mxu0 0.0
      %881 = vmatpush.xpose.msra.mxu0 0.0
      %882 = vmatpush.xpose.msra.mxu0 0.0
      %883 = vmatpush.xpose.msra.mxu0 0.0
      %884 = vmatpush.xpose.msra.mxu0 0.0
      %885 = vmatpush.xpose.msra.mxu0 0.0
      %886 = vmatpush.xpose.msra.mxu0 0.0
      %887 = vmatpush.xpose.msra.mxu0 0.0
      %888 = vmatpush.xpose.msra.mxu0 0.0
      %889 = vmatpush.xpose.msra.mxu0 0.0
      %890 = vmatpush.xpose.msra.mxu0 0.0
      %891 = vmatpush.xpose.msra.mxu0 0.0
      %892 = vmatpush.xpose.msra.mxu0 %v875
      %893 = vmatmul.f32.gmra.mxu0 %v873
      %v894 = vpop.f32.mrf.mxu0
      %v895 = vadd.f32 %v798, %v894
      %896 = vdwg.mxu0
      %v897 = vsel %vm807, %v895, -inf
      %898 = vmax.xlane.f32.xlu0 %v897
      %v899 = vpop.xlane.xlu0 %898
      %v900 = vsub.f32 %v895, %v899
      %v901 = vmul.f32 %v900, 1.442695
      %v902 = vpow.pop %v901
      %v903 = vsel %vm807, %v902, 0.0
      %904 = vadd.xlane.f32.xlu0 %v903
      %v905 = vpop.xlane.xlu0 %904
      %v906 = vrcp.pop %v905
      %v907 = vmul.f32 %v902, %v906
      %908 = vrot.lane.b32.xlu0 %v796, 56
      %v909 = vpop.permute.xlu0 %908
      %v912 = vsel %vm807, %v907, 0
      %914 = vmatpush.msra.mxu0 0.0
      %915 = vmatpush.msra.mxu0 0.0
      %916 = vmatpush.msra.mxu0 0.0
      %917 = vmatpush.msra.mxu0 0.0
      %918 = vmatpush.msra.mxu0 0.0
      %919 = vmatpush.msra.mxu0 0.0
      %920 = vmatpush.msra.mxu0 0.0
      %921 = vmatpush.msra.mxu0 0.0
      %922 = vmatpush.msra.mxu0 0.0
      %923 = vmatpush.msra.mxu0 0.0
      %924 = vmatpush.msra.mxu0 0.0
      %925 = vmatpush.msra.mxu0 0.0
      %926 = vmatpush.msra.mxu0 0.0
      %927 = vmatpush.msra.mxu0 0.0
      %928 = vmatpush.msra.mxu0 0.0
      %929 = vmatpush.msra.mxu0 %v909
      %930 = vmatmul.f32.gmra.mxu0 %v912
      %v931 = vpop.f32.mrf.mxu0
      %v932 = vadd.f32 0.0, %v931
      %933 = vdwg.mxu0
      %v935 = vsel %vm807, %v932, 0
      %937 = vmatpush.msra.mxu0 0.0
      %938 = vmatpush.msra.mxu0 0.0
      %939 = vmatpush.msra.mxu0 0.0
      %940 = vmatpush.msra.mxu0 0.0
      %941 = vmatpush.msra.mxu0 0.0
      %942 = vmatpush.msra.mxu0 0.0
      %943 = vmatpush.msra.mxu0 0.0
      %944 = vmatpush.msra.mxu0 0.0
      %945 = vmatpush.msra.mxu0 0.0
      %946 = vmatpush.msra.mxu0 0.0
      %947 = vmatpush.msra.mxu0 0.0
      %948 = vmatpush.msra.mxu0 0.0
      %949 = vmatpush.msra.mxu0 0.0
      %950 = vmatpush.msra.mxu0 0.0
      %951 = vmatpush.msra.mxu0 0.0
      %952 = vmatpush.msra.mxu0 %v800
      %953 = vmatmul.f32.gmra.mxu0 %v935
      %v954 = vpop.f32.mrf.mxu0
      %v955 = vadd.f32 0.0, %v954
      %956 = vdwg.mxu0
      %v958 = vsel %vm807, %v867, 0
      %960 = vmatpush.msra.mxu0 0.0
      %961 = vmatpush.msra.mxu0 0.0
      %962 = vmatpush.msra.mxu0 0.0
      %963 = vmatpush.msra.mxu0 0.0
      %964 = vmatpush.msra.mxu0 0.0
      %965 = vmatpush.msra.mxu0 0.0
      %966 = vmatpush.msra.mxu0 0.0
      %967 = vmatpush.msra.mxu0 0.0
      %968 = vmatpush.msra.mxu0 0.0
      %969 = vmatpush.msra.mxu0 0.0
      %970 = vmatpush.msra.mxu0 0.0
      %971 = vmatpush.msra.mxu0 0.0
      %972 = vmatpush.msra.mxu0 0.0
      %973 = vmatpush.msra.mxu0 0.0
      %974 = vmatpush.msra.mxu0 0.0
      %975 = vmatpush.msra.mxu0 %v799
      %976 = vmatmul.f32.gmra.mxu0 %v958
      %v977 = vpop.f32.mrf.mxu0
      %v978 = vadd.f32 %v955, %v977
      %979 = vdwg.mxu0
      %980 = vrot.lane.b32.xlu0 %v796, 112
      %v981 = vpop.permute.xlu0 %980
      %982 = vrot.lane.b32.xlu0 %v796, 80
      %v983 = vpop.permute.xlu0 %982
      %v984 = vsel %vm807, %v981, 0
      %v986 = vsel %vm807, %v983, 0
      %988 = vmatpush.xpose.msra.mxu0 0.0
      %989 = vmatpush.xpose.msra.mxu0 0.0
      %990 = vmatpush.xpose.msra.mxu0 0.0
      %991 = vmatpush.xpose.msra.mxu0 0.0
      %992 = vmatpush.xpose.msra.mxu0 0.0
      %993 = vmatpush.xpose.msra.mxu0 0.0
      %994 = vmatpush.xpose.msra.mxu0 0.0
      %995 = vmatpush.xpose.msra.mxu0 0.0
      %996 = vmatpush.xpose.msra.mxu0 0.0
      %997 = vmatpush.xpose.msra.mxu0 0.0
      %998 = vmatpush.xpose.msra.mxu0 0.0
      %999 = vmatpush.xpose.msra.mxu0 0.0
      %1000 = vmatpush.xpose.msra.mxu0 0.0
      %1001 = vmatpush.xpose.msra.mxu0 0.0
      %1002 = vmatpush.xpose.msra.mxu0 0.0
      %1003 = vmatpush.xpose.msra.mxu0 %v986
      %1004 = vmatmul.f32.gmra.mxu0 %v984
      %v1005 = vpop.f32.mrf.mxu0
      %v1006 = vadd.f32 %v798, %v1005
      %1007 = vdwg.mxu0
      %v1008 = vsel %vm807, %v1006, -inf
      %1009 = vmax.xlane.f32.xlu0 %v1008
      %v1010 = vpop.xlane.xlu0 %1009
      %v1011 = vsub.f32 %v1006, %v1010
      %v1012 = vmul.f32 %v1011, 1.442695
      %v1013 = vpow.pop %v1012
      %v1014 = vsel %vm807, %v1013, 0.0
      %1015 = vadd.xlane.f32.xlu0 %v1014
      %v1016 = vpop.xlane.xlu0 %1015
      %v1017 = vrcp.pop %v1016
      %v1018 = vmul.f32 %v1013, %v1017
      %1019 = vrot.lane.b32.xlu0 %v796, 48
      %v1020 = vpop.permute.xlu0 %1019
      %v1023 = vsel %vm807, %v1018, 0
      %1025 = vmatpush.msra.mxu0 0.0
      %1026 = vmatpush.msra.mxu0 0.0
      %1027 = vmatpush.msra.mxu0 0.0
      %1028 = vmatpush.msra.mxu0 0.0
      %1029 = vmatpush.msra.mxu0 0.0
      %1030 = vmatpush.msra.mxu0 0.0
      %1031 = vmatpush.msra.mxu0 0.0
      %1032 = vmatpush.msra.mxu0 0.0
      %1033 = vmatpush.msra.mxu0 0.0
      %1034 = vmatpush.msra.mxu0 0.0
      %1035 = vmatpush.msra.mxu0 0.0
      %1036 = vmatpush.msra.mxu0 0.0
      %1037 = vmatpush.msra.mxu0 0.0
      %1038 = vmatpush.msra.mxu0 0.0
      %1039 = vmatpush.msra.mxu0 0.0
      %1040 = vmatpush.msra.mxu0 %v1020
      %1041 = vmatmul.f32.gmra.mxu0 %v1023
      %v1042 = vpop.f32.mrf.mxu0
      %v1043 = vadd.f32 0.0, %v1042
      %1044 = vdwg.mxu0
      %v1046 = vsel %vm807, %v1043, 0
      %1048 = vmatpush.msra.mxu0 0.0
      %1049 = vmatpush.msra.mxu0 0.0
      %1050 = vmatpush.msra.mxu0 0.0
      %1051 = vmatpush.msra.mxu0 0.0
      %1052 = vmatpush.msra.mxu0 0.0
      %1053 = vmatpush.msra.mxu0 0.0
      %1054 = vmatpush.msra.mxu0 0.0
      %1055 = vmatpush.msra.mxu0 0.0
      %1056 = vmatpush.msra.mxu0 0.0
      %1057 = vmatpush.msra.mxu0 0.0
      %1058 = vmatpush.msra.mxu0 0.0
      %1059 = vmatpush.msra.mxu0 0.0
      %1060 = vmatpush.msra.mxu0 0.0
      %1061 = vmatpush.msra.mxu0 0.0
      %1062 = vmatpush.msra.mxu0 0.0
      %1063 = vmatpush.msra.mxu0 %v801
      %1064 = vmatmul.f32.gmra.mxu0 %v1046
      %v1065 = vpop.f32.mrf.mxu0
      %v1066 = vadd.f32 0.0, %v1065
      %1067 = vdwg.mxu0
      %v1068 = vadd.f32 %v978, %v1066
      %1069 = vrot.lane.b32.xlu0 %v796, 104
      %v1070 = vpop.permute.xlu0 %1069
      %1071 = vrot.lane.b32.xlu0 %v796, 72
      %v1072 = vpop.permute.xlu0 %1071
      %v1073 = vsel %vm807, %v1070, 0
      %v1075 = vsel %vm807, %v1072, 0
      %1077 = vmatpush.xpose.msra.mxu0 0.0
      %1078 = vmatpush.xpose.msra.mxu0 0.0
      %1079 = vmatpush.xpose.msra.mxu0 0.0
      %1080 = vmatpush.xpose.msra.mxu0 0.0
      %1081 = vmatpush.xpose.msra.mxu0 0.0
      %1082 = vmatpush.xpose.msra.mxu0 0.0
      %1083 = vmatpush.xpose.msra.mxu0 0.0
      %1084 = vmatpush.xpose.msra.mxu0 0.0
      %1085 = vmatpush.xpose.msra.mxu0 0.0
      %1086 = vmatpush.xpose.msra.mxu0 0.0
      %1087 = vmatpush.xpose.msra.mxu0 0.0
      %1088 = vmatpush.xpose.msra.mxu0 0.0
      %1089 = vmatpush.xpose.msra.mxu0 0.0
      %1090 = vmatpush.xpose.msra.mxu0 0.0
      %1091 = vmatpush.xpose.msra.mxu0 0.0
      %1092 = vmatpush.xpose.msra.mxu0 %v1075
      %1093 = vmatmul.f32.gmra.mxu0 %v1073
      %v1094 = vpop.f32.mrf.mxu0
      %v1095 = vadd.f32 %v798, %v1094
      %1096 = vdwg.mxu0
      %v1097 = vsel %vm807, %v1095, -inf
      %1098 = vmax.xlane.f32.xlu0 %v1097
      %v1099 = vpop.xlane.xlu0 %1098
      %v1100 = vsub.f32 %v1095, %v1099
      %v1101 = vmul.f32 %v1100, 1.442695
      %v1102 = vpow.pop %v1101
      %v1103 = vsel %vm807, %v1102, 0.0
      %1104 = vadd.xlane.f32.xlu0 %v1103
      %v1105 = vpop.xlane.xlu0 %1104
      %v1106 = vrcp.pop %v1105
      %v1107 = vmul.f32 %v1102, %v1106
      %1108 = vrot.lane.b32.xlu0 %v796, 40
      %v1109 = vpop.permute.xlu0 %1108
      %v1112 = vsel %vm807, %v1107, 0
      %1114 = vmatpush.msra.mxu0 0.0
      %1115 = vmatpush.msra.mxu0 0.0
      %1116 = vmatpush.msra.mxu0 0.0
      %1117 = vmatpush.msra.mxu0 0.0
      %1118 = vmatpush.msra.mxu0 0.0
      %1119 = vmatpush.msra.mxu0 0.0
      %1120 = vmatpush.msra.mxu0 0.0
      %1121 = vmatpush.msra.mxu0 0.0
      %1122 = vmatpush.msra.mxu0 0.0
      %1123 = vmatpush.msra.mxu0 0.0
      %1124 = vmatpush.msra.mxu0 0.0
      %1125 = vmatpush.msra.mxu0 0.0
      %1126 = vmatpush.msra.mxu0 0.0
      %1127 = vmatpush.msra.mxu0 0.0
      %1128 = vmatpush.msra.mxu0 0.0
      %1129 = vmatpush.msra.mxu0 %v1109
      %1130 = vmatmul.f32.gmra.mxu0 %v1112
      %v1131 = vpop.f32.mrf.mxu0
      %v1132 = vadd.f32 0.0, %v1131
      %1133 = vdwg.mxu0
      %v1135 = vsel %vm807, %v1132, 0
      %1137 = vmatpush.msra.mxu0 0.0
      %1138 = vmatpush.msra.mxu0 0.0
      %1139 = vmatpush.msra.mxu0 0.0
      %1140 = vmatpush.msra.mxu0 0.0
      %1141 = vmatpush.msra.mxu0 0.0
      %1142 = vmatpush.msra.mxu0 0.0
      %1143 = vmatpush.msra.mxu0 0.0
      %1144 = vmatpush.msra.mxu0 0.0
      %1145 = vmatpush.msra.mxu0 0.0
      %1146 = vmatpush.msra.mxu0 0.0
      %1147 = vmatpush.msra.mxu0 0.0
      %1148 = vmatpush.msra.mxu0 0.0
      %1149 = vmatpush.msra.mxu0 0.0
      %1150 = vmatpush.msra.mxu0 0.0
      %1151 = vmatpush.msra.mxu0 0.0
      %1152 = vmatpush.msra.mxu0 %v802
      %1153 = vmatmul.f32.gmra.mxu0 %v1135
      %v1154 = vpop.f32.mrf.mxu0
      %v1155 = vadd.f32 0.0, %v1154
      %1156 = vdwg.mxu0
      %v1157 = vadd.f32 %v1068, %v1155
      %v1159 = vperm.slane %v803, 0
      %v1161 = vadd.f32 %v1157, %v1159
      %v1162 = vadd.f32 %v764, %v1161
      %v1163 = vld [vmem:[%s8] sm:$0x1]
      %v1164 = vld [vmem:[%s9] sm:$0x1]
      %v1165 = vsel %vm774, %v1162, 0.0
      %1166 = vadd.xlane.f32.xlu0 %v1165
      %v1167 = vpop.xlane.xlu0 %1166
      %v1168 = vrcp.pop 32.0
      %v1169 = vmul.f32 32.0, %v1168
      %v1170 = vsub.f32 1.0, %v1169
      %v1171 = vmul.f32 %v1168, %v1170
      %v1172 = vadd.f32 %v1168, %v1171
      %vm1173 = vweird.f32 %v1168
      %v1174 = vsel %vm1173, %v1168, %v1172
      %v1175 = vmul.f32 %v1167, %v1174
      %v1176 = vsub.f32 %v1162, %v1175
      %v1177 = vmul.f32 %v1176, %v1176
      %v1178 = vsel %vm774, %v1177, 0.0
      %1179 = vadd.xlane.f32.xlu0 %v1178
      %v1180 = vpop.xlane.xlu0 %1179
      %v1181 = vmul.f32 %v1180, %v1174
      %v1182 = vadd.f32 %v1181, 1e-05
      %v1183 = vrsqrt.pop %v1182
      %v1184 = vmul.f32 %v1183, %v1182
      %v1185 = vmul.f32 %v1184, %v1183
      %v1186 = vmul.f32 0.5, %v1185
      %v1187 = vsub.f32 1.5, %v1186
      %v1188 = vmul.f32 %v1183, %v1187
      %vm1189 = vweird.f32 %v1182
      %vm1190 = vweird.f32 %v1183
      %vm1191 = vmor %vm1189, %vm1190
      %v1192 = vsel %vm1191, %v1183, %v1188
      %v1193 = vmul.f32 %v1176, %v1192
      %v1195 = vperm.slane %v1163, 0
      %v1197 = vmul.f32 %v1193, %v1195
      %v1199 = vperm.slane %v1164, 0
      %v1201 = vadd.f32 %v1197, %v1199
      %v1202 = vld [vmem:[%s10] sm:$0xff]
      %v1203 = vld [vmem:[%s10 + $0x8] sm:$0xff]
      %v1204 = vld [vmem:[%s10 + $0x10] sm:$0xff]
      %v1205 = vld [vmem:[%s10 + $0x18] sm:$0xff]
      %v1206 = vld [vmem:[%s11] sm:$0x1]
      %v1208 = vperm.slane %v1206, 0
      %v1211 = vsel %vm774, %v1201, 0
      %1213 = vmatpush.msra.mxu0 0.0
      %1214 = vmatpush.msra.mxu0 0.0
      %1215 = vmatpush.msra.mxu0 0.0
      %1216 = vmatpush.msra.mxu0 0.0
      %1217 = vmatpush.msra.mxu0 0.0
      %1218 = vmatpush.msra.mxu0 0.0
      %1219 = vmatpush.msra.mxu0 0.0
      %1220 = vmatpush.msra.mxu0 0.0
      %1221 = vmatpush.msra.mxu0 0.0
      %1222 = vmatpush.msra.mxu0 0.0
      %1223 = vmatpush.msra.mxu0 0.0
      %1224 = vmatpush.msra.mxu0 0.0
      %1225 = vmatpush.msra.mxu0 %v1205
      %1226 = vmatpush.msra.mxu0 %v1204
      %1227 = vmatpush.msra.mxu0 %v1203
      %1228 = vmatpush.msra.mxu0 %v1202
      %1229 = vmatmul.f32.gmra.mxu0 %v1211
      %v1230 = vpop.f32.mrf.mxu0
      %v1231 = vadd.f32 %v1208, %v1230
      %1232 = vdwg.mxu0
      %v1233 = vld [vmem:[%s12] sm:$0xff]
      %v1234 = vld [vmem:[%s12 + $0x8] sm:$0xff]
      %v1235 = vld [vmem:[%s12 + $0x10] sm:$0xff]
      %v1236 = vld [vmem:[%s12 + $0x18] sm:$0xff]
      %v1237 = vld [vmem:[%s13] sm:$0x1]
      %v1239 = vperm.slane %v1237, 0
      %v1242 = vsel %vm774, %v765, 0
      %1244 = vmatpush.msra.mxu0 0.0
      %1245 = vmatpush.msra.mxu0 0.0
      %1246 = vmatpush.msra.mxu0 0.0
      %1247 = vmatpush.msra.mxu0 0.0
      %1248 = vmatpush.msra.mxu0 0.0
      %1249 = vmatpush.msra.mxu0 0.0
      %1250 = vmatpush.msra.mxu0 0.0
      %1251 = vmatpush.msra.mxu0 0.0
      %1252 = vmatpush.msra.mxu0 0.0
      %1253 = vmatpush.msra.mxu0 0.0
      %1254 = vmatpush.msra.mxu0 0.0
      %1255 = vmatpush.msra.mxu0 0.0
      %1256 = vmatpush.msra.mxu0 %v1236
      %1257 = vmatpush.msra.mxu0 %v1235
      %1258 = vmatpush.msra.mxu0 %v1234
      %1259 = vmatpush.msra.mxu0 %v1233
      %1260 = vmatmul.f32.gmra.mxu0 %v1242
      %v1261 = vpop.f32.mrf.mxu0
      %v1262 = vadd.f32 %v1239, %v1261
      %1263 = vdwg.mxu0
      %v1264 = vld [vmem:[%s759] sm:$0x1]
      %v1265 = vld [vmem:[%s14] sm:$0xff]
      %v1266 = vld [vmem:[%s14 + $0x8] sm:$0xff]
      %v1267 = vld [vmem:[%s14 + $0x10] sm:$0xff]
      %v1268 = vld [vmem:[%s14 + $0x18] sm:$0xff]
      %v1269 = vld [vmem:[%s15] sm:$0x1]
      %v1271 = vperm.slane %v1264, 0
      %v1274 = vsel %vm807, %v1231, 0
      %v1277 = vsel %vm807, %v1262, 0
      %1279 = vmatpush.xpose.msra.mxu0 0.0
      %1280 = vmatpush.xpose.msra.mxu0 0.0
      %1281 = vmatpush.xpose.msra.mxu0 0.0
      %1282 = vmatpush.xpose.msra.mxu0 0.0
      %1283 = vmatpush.xpose.msra.mxu0 0.0
      %1284 = vmatpush.xpose.msra.mxu0 0.0
      %1285 = vmatpush.xpose.msra.mxu0 0.0
      %1286 = vmatpush.xpose.msra.mxu0 0.0
      %1287 = vmatpush.xpose.msra.mxu0 0.0
      %1288 = vmatpush.xpose.msra.mxu0 0.0
      %1289 = vmatpush.xpose.msra.mxu0 0.0
      %1290 = vmatpush.xpose.msra.mxu0 0.0
      %1291 = vmatpush.xpose.msra.mxu0 0.0
      %1292 = vmatpush.xpose.msra.mxu0 0.0
      %1293 = vmatpush.xpose.msra.mxu0 0.0
      %1294 = vmatpush.xpose.msra.mxu0 %v1277
      %1295 = vmatmul.f32.gmra.mxu0 %v1274
      %v1296 = vpop.f32.mrf.mxu0
      %v1297 = vadd.f32 %v1271, %v1296
      %1298 = vdwg.mxu0
      %v1299 = vsel %vm807, %v1297, -inf
      %1300 = vmax.xlane.f32.xlu0 %v1299
      %v1301 = vpop.xlane.xlu0 %1300
      %v1302 = vsub.f32 %v1297, %v1301
      %v1303 = vmul.f32 %v1302, 1.442695
      %v1304 = vpow.pop %v1303
      %v1305 = vsel %vm807, %v1304, 0.0
      %1306 = vadd.xlane.f32.xlu0 %v1305
      %v1307 = vpop.xlane.xlu0 %1306
      %v1308 = vrcp.pop %v1307
      %v1309 = vmul.f32 %v1304, %v1308
      %1310 = vrot.lane.b32.xlu0 %v1262, 96
      %v1311 = vpop.permute.xlu0 %1310
      %v1314 = vsel %vm807, %v1309, 0
      %1316 = vmatpush.msra.mxu0 0.0
      %1317 = vmatpush.msra.mxu0 0.0
      %1318 = vmatpush.msra.mxu0 0.0
      %1319 = vmatpush.msra.mxu0 0.0
      %1320 = vmatpush.msra.mxu0 0.0
      %1321 = vmatpush.msra.mxu0 0.0
      %1322 = vmatpush.msra.mxu0 0.0
      %1323 = vmatpush.msra.mxu0 0.0
      %1324 = vmatpush.msra.mxu0 0.0
      %1325 = vmatpush.msra.mxu0 0.0
      %1326 = vmatpush.msra.mxu0 0.0
      %1327 = vmatpush.msra.mxu0 0.0
      %1328 = vmatpush.msra.mxu0 0.0
      %1329 = vmatpush.msra.mxu0 0.0
      %1330 = vmatpush.msra.mxu0 0.0
      %1331 = vmatpush.msra.mxu0 %v1311
      %1332 = vmatmul.f32.gmra.mxu0 %v1314
      %v1333 = vpop.f32.mrf.mxu0
      %v1334 = vadd.f32 0.0, %v1333
      %1335 = vdwg.mxu0
      %1336 = vrot.lane.b32.xlu0 %v1231, 120
      %v1337 = vpop.permute.xlu0 %1336
      %1338 = vrot.lane.b32.xlu0 %v1262, 120
      %v1339 = vpop.permute.xlu0 %1338
      %v1340 = vsel %vm807, %v1337, 0
      %v1342 = vsel %vm807, %v1339, 0
      %1344 = vmatpush.xpose.msra.mxu0 0.0
      %1345 = vmatpush.xpose.msra.mxu0 0.0
      %1346 = vmatpush.xpose.msra.mxu0 0.0
      %1347 = vmatpush.xpose.msra.mxu0 0.0
      %1348 = vmatpush.xpose.msra.mxu0 0.0
      %1349 = vmatpush.xpose.msra.mxu0 0.0
      %1350 = vmatpush.xpose.msra.mxu0 0.0
      %1351 = vmatpush.xpose.msra.mxu0 0.0
      %1352 = vmatpush.xpose.msra.mxu0 0.0
      %1353 = vmatpush.xpose.msra.mxu0 0.0
      %1354 = vmatpush.xpose.msra.mxu0 0.0
      %1355 = vmatpush.xpose.msra.mxu0 0.0
      %1356 = vmatpush.xpose.msra.mxu0 0.0
      %1357 = vmatpush.xpose.msra.mxu0 0.0
      %1358 = vmatpush.xpose.msra.mxu0 0.0
      %1359 = vmatpush.xpose.msra.mxu0 %v1342
      %1360 = vmatmul.f32.gmra.mxu0 %v1340
      %v1361 = vpop.f32.mrf.mxu0
      %v1362 = vadd.f32 %v1271, %v1361
      %1363 = vdwg.mxu0
      %v1364 = vsel %vm807, %v1362, -inf
      %1365 = vmax.xlane.f32.xlu0 %v1364
      %v1366 = vpop.xlane.xlu0 %1365
      %v1367 = vsub.f32 %v1362, %v1366
      %v1368 = vmul.f32 %v1367, 1.442695
      %v1369 = vpow.pop %v1368
      %v1370 = vsel %vm807, %v1369, 0.0
      %1371 = vadd.xlane.f32.xlu0 %v1370
      %v1372 = vpop.xlane.xlu0 %1371
      %v1373 = vrcp.pop %v1372
      %v1374 = vmul.f32 %v1369, %v1373
      %1375 = vrot.lane.b32.xlu0 %v1262, 88
      %v1376 = vpop.permute.xlu0 %1375
      %v1379 = vsel %vm807, %v1374, 0
      %1381 = vmatpush.msra.mxu0 0.0
      %1382 = vmatpush.msra.mxu0 0.0
      %1383 = vmatpush.msra.mxu0 0.0
      %1384 = vmatpush.msra.mxu0 0.0
      %1385 = vmatpush.msra.mxu0 0.0
      %1386 = vmatpush.msra.mxu0 0.0
      %1387 = vmatpush.msra.mxu0 0.0
      %1388 = vmatpush.msra.mxu0 0.0
      %1389 = vmatpush.msra.mxu0 0.0
      %1390 = vmatpush.msra.mxu0 0.0
      %1391 = vmatpush.msra.mxu0 0.0
      %1392 = vmatpush.msra.mxu0 0.0
      %1393 = vmatpush.msra.mxu0 0.0
      %1394 = vmatpush.msra.mxu0 0.0
      %1395 = vmatpush.msra.mxu0 0.0
      %1396 = vmatpush.msra.mxu0 %v1376
      %1397 = vmatmul.f32.gmra.mxu0 %v1379
      %v1398 = vpop.f32.mrf.mxu0
      %v1399 = vadd.f32 0.0, %v1398
      %1400 = vdwg.mxu0
      %v1402 = vsel %vm807, %v1399, 0
      %1404 = vmatpush.msra.mxu0 0.0
      %1405 = vmatpush.msra.mxu0 0.0
      %1406 = vmatpush.msra.mxu0 0.0
      %1407 = vmatpush.msra.mxu0 0.0
      %1408 = vmatpush.msra.mxu0 0.0
      %1409 = vmatpush.msra.mxu0 0.0
      %1410 = vmatpush.msra.mxu0 0.0
      %1411 = vmatpush.msra.mxu0 0.0
      %1412 = vmatpush.msra.mxu0 0.0
      %1413 = vmatpush.msra.mxu0 0.0
      %1414 = vmatpush.msra.mxu0 0.0
      %1415 = vmatpush.msra.mxu0 0.0
      %1416 = vmatpush.msra.mxu0 0.0
      %1417 = vmatpush.msra.mxu0 0.0
      %1418 = vmatpush.msra.mxu0 0.0
      %1419 = vmatpush.msra.mxu0 %v1266
      %1420 = vmatmul.f32.gmra.mxu0 %v1402
      %v1421 = vpop.f32.mrf.mxu0
      %v1422 = vadd.f32 0.0, %v1421
      %1423 = vdwg.mxu0
      %v1425 = vsel %vm807, %v1334, 0
      %1427 = vmatpush.msra.mxu0 0.0
      %1428 = vmatpush.msra.mxu0 0.0
      %1429 = vmatpush.msra.mxu0 0.0
      %1430 = vmatpush.msra.mxu0 0.0
      %1431 = vmatpush.msra.mxu0 0.0
      %1432 = vmatpush.msra.mxu0 0.0
      %1433 = vmatpush.msra.mxu0 0.0
      %1434 = vmatpush.msra.mxu0 0.0
      %1435 = vmatpush.msra.mxu0 0.0
      %1436 = vmatpush.msra.mxu0 0.0
      %1437 = vmatpush.msra.mxu0 0.0
      %1438 = vmatpush.msra.mxu0 0.0
      %1439 = vmatpush.msra.mxu0 0.0
      %1440 = vmatpush.msra.mxu0 0.0
      %1441 = vmatpush.msra.mxu0 0.0
      %1442 = vmatpush.msra.mxu0 %v1265
      %1443 = vmatmul.f32.gmra.mxu0 %v1425
      %v1444 = vpop.f32.mrf.mxu0
      %v1445 = vadd.f32 %v1422, %v1444
      %1446 = vdwg.mxu0
      %1447 = vrot.lane.b32.xlu0 %v1231, 112
      %v1448 = vpop.permute.xlu0 %1447
      %1449 = vrot.lane.b32.xlu0 %v1262, 112
      %v1450 = vpop.permute.xlu0 %1449
      %v1451 = vsel %vm807, %v1448, 0
      %v1453 = vsel %vm807, %v1450, 0
      %1455 = vmatpush.xpose.msra.mxu0 0.0
      %1456 = vmatpush.xpose.msra.mxu0 0.0
      %1457 = vmatpush.xpose.msra.mxu0 0.0
      %1458 = vmatpush.xpose.msra.mxu0 0.0
      %1459 = vmatpush.xpose.msra.mxu0 0.0
      %1460 = vmatpush.xpose.msra.mxu0 0.0
      %1461 = vmatpush.xpose.msra.mxu0 0.0
      %1462 = vmatpush.xpose.msra.mxu0 0.0
      %1463 = vmatpush.xpose.msra.mxu0 0.0
      %1464 = vmatpush.xpose.msra.mxu0 0.0
      %1465 = vmatpush.xpose.msra.mxu0 0.0
      %1466 = vmatpush.xpose.msra.mxu0 0.0
      %1467 = vmatpush.xpose.msra.mxu0 0.0
      %1468 = vmatpush.xpose.msra.mxu0 0.0
      %1469 = vmatpush.xpose.msra.mxu0 0.0
      %1470 = vmatpush.xpose.msra.mxu0 %v1453
      %1471 = vmatmul.f32.gmra.mxu0 %v1451
      %v1472 = vpop.f32.mrf.mxu0
      %v1473 = vadd.f32 %v1271, %v1472
      %1474 = vdwg.mxu0
      %v1475 = vsel %vm807, %v1473, -inf
      %1476 = vmax.xlane.f32.xlu0 %v1475
      %v1477 = vpop.xlane.xlu0 %1476
      %v1478 = vsub.f32 %v1473, %v1477
      %v1479 = vmul.f32 %v1478, 1.442695
      %v1480 = vpow.pop %v1479
      %v1481 = vsel %vm807, %v1480, 0.0
      %1482 = vadd.xlane.f32.xlu0 %v1481
      %v1483 = vpop.xlane.xlu0 %1482
      %v1484 = vrcp.pop %v1483
      %v1485 = vmul.f32 %v1480, %v1484
      %1486 = vrot.lane.b32.xlu0 %v1262, 80
      %v1487 = vpop.permute.xlu0 %1486
      %v1490 = vsel %vm807, %v1485, 0
      %1492 = vmatpush.msra.mxu0 0.0
      %1493 = vmatpush.msra.mxu0 0.0
      %1494 = vmatpush.msra.mxu0 0.0
      %1495 = vmatpush.msra.mxu0 0.0
      %1496 = vmatpush.msra.mxu0 0.0
      %1497 = vmatpush.msra.mxu0 0.0
      %1498 = vmatpush.msra.mxu0 0.0
      %1499 = vmatpush.msra.mxu0 0.0
      %1500 = vmatpush.msra.mxu0 0.0
      %1501 = vmatpush.msra.mxu0 0.0
      %1502 = vmatpush.msra.mxu0 0.0
      %1503 = vmatpush.msra.mxu0 0.0
      %1504 = vmatpush.msra.mxu0 0.0
      %1505 = vmatpush.msra.mxu0 0.0
      %1506 = vmatpush.msra.mxu0 0.0
      %1507 = vmatpush.msra.mxu0 %v1487
      %1508 = vmatmul.f32.gmra.mxu0 %v1490
      %v1509 = vpop.f32.mrf.mxu0
      %v1510 = vadd.f32 0.0, %v1509
      %1511 = vdwg.mxu0
      %v1513 = vsel %vm807, %v1510, 0
      %1515 = vmatpush.msra.mxu0 0.0
      %1516 = vmatpush.msra.mxu0 0.0
      %1517 = vmatpush.msra.mxu0 0.0
      %1518 = vmatpush.msra.mxu0 0.0
      %1519 = vmatpush.msra.mxu0 0.0
      %1520 = vmatpush.msra.mxu0 0.0
      %1521 = vmatpush.msra.mxu0 0.0
      %1522 = vmatpush.msra.mxu0 0.0
      %1523 = vmatpush.msra.mxu0 0.0
      %1524 = vmatpush.msra.mxu0 0.0
      %1525 = vmatpush.msra.mxu0 0.0
      %1526 = vmatpush.msra.mxu0 0.0
      %1527 = vmatpush.msra.mxu0 0.0
      %1528 = vmatpush.msra.mxu0 0.0
      %1529 = vmatpush.msra.mxu0 0.0
      %1530 = vmatpush.msra.mxu0 %v1267
      %1531 = vmatmul.f32.gmra.mxu0 %v1513
      %v1532 = vpop.f32.mrf.mxu0
      %v1533 = vadd.f32 0.0, %v1532
      %1534 = vdwg.mxu0
      %v1535 = vadd.f32 %v1445, %v1533
      %1536 = vrot.lane.b32.xlu0 %v1231, 104
      %v1537 = vpop.permute.xlu0 %1536
      %1538 = vrot.lane.b32.xlu0 %v1262, 104
      %v1539 = vpop.permute.xlu0 %1538
      %v1540 = vsel %vm807, %v1537, 0
      %v1542 = vsel %vm807, %v1539, 0
      %1544 = vmatpush.xpose.msra.mxu0 0.0
      %1545 = vmatpush.xpose.msra.mxu0 0.0
      %1546 = vmatpush.xpose.msra.mxu0 0.0
      %1547 = vmatpush.xpose.msra.mxu0 0.0
      %1548 = vmatpush.xpose.msra.mxu0 0.0
      %1549 = vmatpush.xpose.msra.mxu0 0.0
      %1550 = vmatpush.xpose.msra.mxu0 0.0
      %1551 = vmatpush.xpose.msra.mxu0 0.0
      %1552 = vmatpush.xpose.msra.mxu0 0.0
      %1553 = vmatpush.xpose.msra.mxu0 0.0
      %1554 = vmatpush.xpose.msra.mxu0 0.0
      %1555 = vmatpush.xpose.msra.mxu0 0.0
      %1556 = vmatpush.xpose.msra.mxu0 0.0
      %1557 = vmatpush.xpose.msra.mxu0 0.0
      %1558 = vmatpush.xpose.msra.mxu0 0.0
      %1559 = vmatpush.xpose.msra.mxu0 %v1542
      %1560 = vmatmul.f32.gmra.mxu0 %v1540
      %v1561 = vpop.f32.mrf.mxu0
      %v1562 = vadd.f32 %v1271, %v1561
      %1563 = vdwg.mxu0
      %v1564 = vsel %vm807, %v1562, -inf
      %1565 = vmax.xlane.f32.xlu0 %v1564
      %v1566 = vpop.xlane.xlu0 %1565
      %v1567 = vsub.f32 %v1562, %v1566
      %v1568 = vmul.f32 %v1567, 1.442695
      %v1569 = vpow.pop %v1568
      %v1570 = vsel %vm807, %v1569, 0.0
      %1571 = vadd.xlane.f32.xlu0 %v1570
      %v1572 = vpop.xlane.xlu0 %1571
      %v1573 = vrcp.pop %v1572
      %v1574 = vmul.f32 %v1569, %v1573
      %1575 = vrot.lane.b32.xlu0 %v1262, 72
      %v1576 = vpop.permute.xlu0 %1575
      %v1579 = vsel %vm807, %v1574, 0
      %1581 = vmatpush.msra.mxu0 0.0
      %1582 = vmatpush.msra.mxu0 0.0
      %1583 = vmatpush.msra.mxu0 0.0
      %1584 = vmatpush.msra.mxu0 0.0
      %1585 = vmatpush.msra.mxu0 0.0
      %1586 = vmatpush.msra.mxu0 0.0
      %1587 = vmatpush.msra.mxu0 0.0
      %1588 = vmatpush.msra.mxu0 0.0
      %1589 = vmatpush.msra.mxu0 0.0
      %1590 = vmatpush.msra.mxu0 0.0
      %1591 = vmatpush.msra.mxu0 0.0
      %1592 = vmatpush.msra.mxu0 0.0
      %1593 = vmatpush.msra.mxu0 0.0
      %1594 = vmatpush.msra.mxu0 0.0
      %1595 = vmatpush.msra.mxu0 0.0
      %1596 = vmatpush.msra.mxu0 %v1576
      %1597 = vmatmul.f32.gmra.mxu0 %v1579
      %v1598 = vpop.f32.mrf.mxu0
      %v1599 = vadd.f32 0.0, %v1598
      %1600 = vdwg.mxu0
      %v1602 = vsel %vm807, %v1599, 0
      %1604 = vmatpush.msra.mxu0 0.0
      %1605 = vmatpush.msra.mxu0 0.0
      %1606 = vmatpush.msra.mxu0 0.0
      %1607 = vmatpush.msra.mxu0 0.0
      %1608 = vmatpush.msra.mxu0 0.0
      %1609 = vmatpush.msra.mxu0 0.0
      %1610 = vmatpush.msra.mxu0 0.0
      %1611 = vmatpush.msra.mxu0 0.0
      %1612 = vmatpush.msra.mxu0 0.0
      %1613 = vmatpush.msra.mxu0 0.0
      %1614 = vmatpush.msra.mxu0 0.0
      %1615 = vmatpush.msra.mxu0 0.0
      %1616 = vmatpush.msra.mxu0 0.0
      %1617 = vmatpush.msra.mxu0 0.0
      %1618 = vmatpush.msra.mxu0 0.0
      %1619 = vmatpush.msra.mxu0 %v1268
      %1620 = vmatmul.f32.gmra.mxu0 %v1602
      %v1621 = vpop.f32.mrf.mxu0
      %v1622 = vadd.f32 0.0, %v1621
      %1623 = vdwg.mxu0
      %v1624 = vadd.f32 %v1535, %v1622
      %v1626 = vperm.slane %v1269, 0
      %v1628 = vadd.f32 %v1624, %v1626
      %v1629 = vadd.f32 %v1201, %v1628
      %v1630 = vld [vmem:[%s16] sm:$0x1]
      %v1631 = vld [vmem:[%s17] sm:$0x1]
      %v1632 = vsel %vm774, %v1629, 0.0
      %1633 = vadd.xlane.f32.xlu0 %v1632
      %v1634 = vpop.xlane.xlu0 %1633
      %v1635 = vmul.f32 %v1634, %v1174
      %v1636 = vsub.f32 %v1629, %v1635
      %v1637 = vmul.f32 %v1636, %v1636
      %v1638 = vsel %vm774, %v1637, 0.0
      %1639 = vadd.xlane.f32.xlu0 %v1638
      %v1640 = vpop.xlane.xlu0 %1639
      %v1641 = vmul.f32 %v1640, %v1174
      %v1642 = vadd.f32 %v1641, 1e-05
      %v1643 = vrsqrt.pop %v1642
      %v1644 = vmul.f32 %v1643, %v1642
      %v1645 = vmul.f32 %v1644, %v1643
      %v1646 = vmul.f32 0.5, %v1645
      %v1647 = vsub.f32 1.5, %v1646
      %v1648 = vmul.f32 %v1643, %v1647
      %vm1649 = vweird.f32 %v1642
      %vm1650 = vweird.f32 %v1643
      %vm1651 = vmor %vm1649, %vm1650
      %v1652 = vsel %vm1651, %v1643, %v1648
      %v1653 = vmul.f32 %v1636, %v1652
      %v1655 = vperm.slane %v1630, 0
      %v1657 = vmul.f32 %v1653, %v1655
      %v1659 = vperm.slane %v1631, 0
      %v1661 = vadd.f32 %v1657, %v1659
      %v1662 = vld [vmem:[%s18] sm:$0xff]
      %v1663 = vld [vmem:[%s18 + $0x8] sm:$0xff]
      %v1664 = vld [vmem:[%s18 + $0x10] sm:$0xff]
      %v1665 = vld [vmem:[%s18 + $0x18] sm:$0xff]
      %v1666 = vld [vmem:[%s19] sm:$0x1]
      %v1668 = vperm.slane %v1666, 0
      %v1671 = vsel %vm774, %v1661, 0
      %1673 = vmatpush.msra.mxu0 0.0
      %1674 = vmatpush.msra.mxu0 0.0
      %1675 = vmatpush.msra.mxu0 0.0
      %1676 = vmatpush.msra.mxu0 0.0
      %1677 = vmatpush.msra.mxu0 0.0
      %1678 = vmatpush.msra.mxu0 0.0
      %1679 = vmatpush.msra.mxu0 0.0
      %1680 = vmatpush.msra.mxu0 0.0
      %1681 = vmatpush.msra.mxu0 0.0
      %1682 = vmatpush.msra.mxu0 0.0
      %1683 = vmatpush.msra.mxu0 0.0
      %1684 = vmatpush.msra.mxu0 0.0
      %1685 = vmatpush.msra.mxu0 %v1665
      %1686 = vmatpush.msra.mxu0 %v1664
      %1687 = vmatpush.msra.mxu0 %v1663
      %1688 = vmatpush.msra.mxu0 %v1662
      %1689 = vmatmul.f32.gmra.mxu0 %v1671
      %v1690 = vpop.f32.mrf.mxu0
      %v1691 = vadd.f32 %v1668, %v1690
      %1692 = vdwg.mxu0
      %v1693 = vmax.f32 %v1691, 0.0
      %v1694 = vld [vmem:[%s20] sm:$0xff]
      %v1695 = vld [vmem:[%s20 + $0x8] sm:$0xff]
      %v1696 = vld [vmem:[%s20 + $0x10] sm:$0xff]
      %v1697 = vld [vmem:[%s20 + $0x18] sm:$0xff]
      %v1698 = vld [vmem:[%s20 + $0x20] sm:$0xff]
      %v1699 = vld [vmem:[%s20 + $0x28] sm:$0xff]
      %v1700 = vld [vmem:[%s20 + $0x30] sm:$0xff]
      %v1701 = vld [vmem:[%s20 + $0x38] sm:$0xff]
      %v1702 = vld [vmem:[%s21] sm:$0x1]
      %v1704 = vperm.slane %v1702, 0
      %vm1706 = vcmask 523264
      %v1708 = vsel %vm1706, %v1693, 0
      %1710 = vmatpush.msra.mxu0 0.0
      %1711 = vmatpush.msra.mxu0 0.0
      %1712 = vmatpush.msra.mxu0 0.0
      %1713 = vmatpush.msra.mxu0 0.0
      %1714 = vmatpush.msra.mxu0 0.0
      %1715 = vmatpush.msra.mxu0 0.0
      %1716 = vmatpush.msra.mxu0 0.0
      %1717 = vmatpush.msra.mxu0 0.0
      %1718 = vmatpush.msra.mxu0 %v1701
      %1719 = vmatpush.msra.mxu0 %v1700
      %1720 = vmatpush.msra.mxu0 %v1699
      %1721 = vmatpush.msra.mxu0 %v1698
      %1722 = vmatpush.msra.mxu0 %v1697
      %1723 = vmatpush.msra.mxu0 %v1696
      %1724 = vmatpush.msra.mxu0 %v1695
      %1725 = vmatpush.msra.mxu0 %v1694
      %1726 = vmatmul.f32.gmra.mxu0 %v1708
      %v1727 = vpop.f32.mrf.mxu0
      %v1728 = vadd.f32 %v1704, %v1727
      %1729 = vdwg.mxu0
      %v1730 = vadd.f32 %v1661, %v1728
      %v1731 = vld [vmem:[%s22] sm:$0x1]
      %v1732 = vld [vmem:[%s23] sm:$0x1]
      %v1733 = vsel %vm774, %v1730, 0.0
      %1734 = vadd.xlane.f32.xlu0 %v1733
      %v1735 = vpop.xlane.xlu0 %1734
      %v1736 = vmul.f32 %v1735, %v1174
      %v1737 = vsub.f32 %v1730, %v1736
      %v1738 = vmul.f32 %v1737, %v1737
      %v1739 = vsel %vm774, %v1738, 0.0
      %1740 = vadd.xlane.f32.xlu0 %v1739
      %v1741 = vpop.xlane.xlu0 %1740
      %v1742 = vmul.f32 %v1741, %v1174
      %v1743 = vadd.f32 %v1742, 1e-05
      %v1744 = vrsqrt.pop %v1743
      %v1745 = vmul.f32 %v1744, %v1743
      %v1746 = vmul.f32 %v1745, %v1744
      %v1747 = vmul.f32 0.5, %v1746
      %v1748 = vsub.f32 1.5, %v1747
      %v1749 = vmul.f32 %v1744, %v1748
      %vm1750 = vweird.f32 %v1743
      %vm1751 = vweird.f32 %v1744
      %vm1752 = vmor %vm1750, %vm1751
      %v1753 = vsel %vm1752, %v1744, %v1749
      %v1754 = vmul.f32 %v1737, %v1753
      %v1756 = vperm.slane %v1731, 0
      %v1758 = vmul.f32 %v1754, %v1756
      %v1760 = vperm.slane %v1732, 0
      %v1762 = vadd.f32 %v1758, %v1760
      %1763 = vst.msk [vmem:[%s763] sm:$0xff] %vm774, %v1762
      %p1764 = scmp.lt.s32.totalorder %s35, 1
      %s1765 = scalar_select %p1764, %s35, 1
      %s1766 = smul.addr %s1765, 8
      %s1767 = scalar_lea.vmem %s24, %s1766
      // Predicated region
      $region117: #{sentence_transformer_forward.13} parent=115 // pred_check
        %p1768 = pneg %p572
      $region118: #{sentence_transformer_forward.13} parent=115 // pred_check_branch
        %1770 = sbr.rel (%p1768) target = $region120
      $region119: #{sentence_transformer_forward.13} parent=115 // pred_region
        _
      $region120: #{sentence_transformer_forward.13} parent=115 // pred_fallthru
        _
    $region116: #{sentence_transformer_forward.13} parent=5 // pred_fallthru
      _
    %p1771 = scmp.le.s32.totalorder 2, %s30
    // Predicated region
    $region121: #{sentence_transformer_forward.13} parent=5 // pred_check
      %p1772 = pneg %p1771
    $region122: #{sentence_transformer_forward.13} parent=5 // pred_check_branch
      %1774 = sbr.rel (%p1772) target = $region124
    $region123: #{sentence_transformer_forward.13} parent=5 // pred_region
      %s1775 = ssub.s32 %s30, 2
      // Predicated region
      $region125: #{sentence_transformer_forward.13} parent=123 // pred_check
        %p1776 = pneg %p578
      $region126: #{sentence_transformer_forward.13} parent=123 // pred_check_branch
        %1778 = sbr.rel (%p1776) target = $region128
      $region127: #{sentence_transformer_forward.13} parent=123 // pred_region
        %p1779 = scmp.lt.s32.totalorder %s36, 1
        %s1780 = scalar_select %p1779, %s36, 1
        %s1781 = smul.addr %s1780, 8
        %s1782 = scalar_lea.vmem %s24, %s1781
      $region128: #{sentence_transformer_forward.13} parent=123 // pred_fallthru
        _
    $region124: #{sentence_transformer_forward.13} parent=5 // pred_fallthru
      _
  $region6: #{sentence_transformer_forward.13} parent=0 // loop_footer
    %s34 = sadd.s32 1, %s30
  $region7: #{sentence_transformer_forward.13} parent=0 // loop_footer_branch
    %29 = sbr.rel target = $region3
  $region8: #{sentence_transformer_forward.13} parent=0 // loop_exit
    _

</llo_original>
